<compile_context>
chip_gen: v7x
topology: tpu7x:2x2x1
jax: 0.10.0
libtpu: 0.0.40
codegen_flags: <defaults>
</compile_context>

<pallas_src>
import math

import jax
import jax.numpy as jnp
from jax.experimental import pallas as pl
from jax.experimental.pallas import tpu as pltpu

OBS_LEN = 8     # MYLSTM.obs_len
PRED_LEN = 12   # MYLSTM.pred_len
H_DIM = 8       # LSTM hidden size
IN_EMB = 16     # input embedding size
SPA_EMB = 32    # Pooling_net spatial embedding dim
MLP_HID = 64    # Pooling_net hidden dim

# ---------------------------------------------------------------------------
# Weight slab layout: every (tiny) weight is packed into one (rows, 128) f32
# slab -> one DMA instead of ~20; sliced in-kernel with static 8-row-aligned
# offsets so no slice crosses a sublane tile boundary.
# ---------------------------------------------------------------------------
_SLAB_ENTRIES = (
    ("we",        (2, IN_EMB)),                  # inputLayer_encoder weight
    ("be",        (1, IN_EMB)),                  # inputLayer_encoder bias
    ("w_ih_enc",  (IN_EMB, 4 * H_DIM)),          # traj_lstm W_ih
    ("b_enc",     (1, 4 * H_DIM)),               # traj_lstm b_ih + b_hh
    ("w_hh_enc",  (H_DIM, 4 * H_DIM)),           # traj_lstm W_hh
    ("w_pred",    (IN_EMB + H_DIM, 4 * H_DIM)),  # pred_lstm fused [W_ih; W_hh]
    ("b_pred",    (1, 4 * H_DIM)),
    ("pwse",      (2, MLP_HID)),                 # Wse @ W1_r
    ("cvec",      (1, MLP_HID)),                 # bse @ W1_r + b1
    ("w1_cat",    (H_DIM, 2 * MLP_HID)),         # [W1_hi | W1_hj]
    ("w2",        (MLP_HID, H_DIM)),             # mlp_pre_pool[1]
    ("b2",        (1, H_DIM)),
    ("w_big",     (2 * H_DIM, 4 + 2 * H_DIM)),   # [W_head(16,4) | W_comb(16,16)]
    ("b_head",    (1, 4)),                       # [b_mean | b_var]
    ("wd_o",      (2, IN_EMB)),                  # decoder-input rows for `output`
    ("bias_comb", (1, IN_EMB)),                  # bd + b_mean @ Wd_o
    ("bd",        (1, IN_EMB)),                  # decoder-input bias (step-0 init)
)


def _make_slab_layout():
    layout, off = {}, 0
    for name, (r, c) in _SLAB_ENTRIES:
        layout[name] = (off, r, c)
        off += ((r + 7) // 8) * 8        # keep every operand 8-row (sublane) aligned
    return layout, off


_SLAB_LAYOUT, _SLAB_ROWS = _make_slab_layout()
_SLAB_COLS = 128


def _sigmoid(x):
    # single-EUP sigmoid: sigma(x) = 0.5 * tanh(0.5 x) + 0.5  (no exp + divide)
    return 0.5 * jnp.tanh(0.5 * x) + 0.5


def _lstm_gates(gates, c):
    # PyTorch LSTMCell gate order: i, f, g, o.
    i = _sigmoid(gates[:, 0 * H_DIM:1 * H_DIM])
    f = _sigmoid(gates[:, 1 * H_DIM:2 * H_DIM])
    g = jnp.tanh(gates[:, 2 * H_DIM:3 * H_DIM])
    o = _sigmoid(gates[:, 3 * H_DIM:4 * H_DIM])
    c_new = f * c + i * g
    h_new = o * jnp.tanh(c_new)
    return h_new, c_new


def mylstm_kernel(obs_ref, pos_ref, nei_ref, h0_ref, c0_ref, eps_ref,
                  slab_ref, out_ref):
    B = h0_ref.shape[0]
    f32 = jnp.float32

    def slab(name):
        off, r, c = _SLAB_LAYOUT[name]
        return slab_ref[pl.ds(off, r), :][:, :c]

    # ------- weight loads + loop-invariant bias broadcasts (hoisted) -------
    we, be = slab("we"), slab("be")
    w_ih_enc, b_enc, w_hh_enc = slab("w_ih_enc"), slab("b_enc"), slab("w_hh_enc")
    w_pred = slab("w_pred")
    b_pred_b = jnp.broadcast_to(slab("b_pred"), (B, 4 * H_DIM))
    pwse, cvec = slab("pwse"), slab("cvec")
    w1_cat = slab("w1_cat")
    w2 = slab("w2")
    b2_b = jnp.broadcast_to(slab("b2"), (B * B, H_DIM))
    w_big = slab("w_big")
    b_head_b = jnp.broadcast_to(slab("b_head"), (B, 4))
    wd_o = slab("wd_o")
    bias_comb_b = jnp.broadcast_to(slab("bias_comb"), (B, IN_EMB))
    bd_b = jnp.broadcast_to(slab("bd"), (B, IN_EMB))

    # --------------------------- encoder ---------------------------
    # Non-recurrent work hoisted off the 8-step serial chain: one (T*B,2)x(2,16)
    # embedding matmul and one (T*B,16)x(16,32) x-gate matmul; the loop itself
    # only carries the (B,8)x(8,32) h-recurrence matmul + gate nonlinearities.
    obs2 = obs_ref[...]                                                    # (T*B, 2)
    emb_all = jnp.maximum(jnp.dot(obs2, we, preferred_element_type=f32) + be, 0.0)
    gx_all = jnp.dot(emb_all, w_ih_enc, preferred_element_type=f32) + b_enc

    h = h0_ref[...]
    c = c0_ref[...]
    for t in range(OBS_LEN):
        gates = gx_all[t * B:(t + 1) * B, :] + jnp.dot(
            h, w_hh_enc, preferred_element_type=f32)
        h, c = _lstm_gates(gates, c)

    # ---------------- loop-invariant Pooling_net terms ----------------
    # x1[i,j] = r(pos_i - pos_j)@W1_r + h_j@W1_hj + h_i@W1_hi + b1
    #         = (pw[i] + h_i@W1_hi + cvec) + (h_j@W1_hj - pw[j]),
    # pw = pos @ (Wse@W1_r), cvec = bse@W1_r + b1  (spatial_embedding is linear).
    pos = pos_ref[...]
    pw = jnp.dot(pos, pwse, preferred_element_type=f32)                   # (B, 64)
    pw_a = pw + cvec                                                      # cvec folded once

    # --------------------------- decoder ---------------------------
    pred_h = h
    pred_c = jnp.zeros((B, H_DIM), f32)
    context = jnp.zeros((B, H_DIM), f32)
    # Folded decoder input: co@Wd + bd == hc_prev @ W_comb + noise_prev @ Wd_o + bias_comb.
    emb_pre = bd_b                                                        # step 0: co == 0

    for t in range(PRED_LEN):
        emb = jnp.maximum(emb_pre, 0.0)                                   # (B, 16)
        xh = jnp.concatenate([emb, pred_h], axis=1)                       # (B, 24)
        gates = jnp.dot(xh, w_pred, preferred_element_type=f32) + b_pred_b
        pred_h, pred_c = _lstm_gates(gates, pred_c)

        # ----- Pooling_net -----
        hw = jnp.dot(pred_h, w1_cat, preferred_element_type=f32)          # (B, 128)
        a_i = pw_a + hw[:, :MLP_HID]                                      # (B, 64)
        b_j = hw[:, MLP_HID:] - pw                                        # (B, 64)
        h1 = jnp.maximum(a_i[:, None, :] + b_j[None, :, :], 0.0)          # (B, B, 64)
        h2 = jnp.maximum(
            jnp.dot(h1.reshape(B * B, MLP_HID), w2,
                    preferred_element_type=f32) + b2_b, 0.0)              # (B*B, 8)
        h2 = h2.reshape(B, B, H_DIM)
        # h2 >= 0 after ReLU, so max(h2*mask) == the -inf-masked max with the
        # reference's 0 fallback for empty neighbourhoods.
        mask = nei_ref[t]                                                 # (B, B)
        context = jnp.max(h2 * mask[:, :, None], axis=1)                  # (B, 8)

        # ----- fused [mu|logvar] head + folded next-step decoder input: one matmul -----
        hc = jnp.concatenate([pred_h, context], axis=1)                   # (B, 16)
        big = jnp.dot(hc, w_big, preferred_element_type=f32)              # (B, 20)
        mv = big[:, 0:4] + b_head_b                                       # [mu | logvar]
        out_ref[t] = mv                                                   # (B, 4) store

        if t + 1 < PRED_LEN:
            noise = eps_ref[t] * jnp.exp(0.5 * mv[:, 2:4])                # eps * std
            emb_pre = (big[:, 4:] + bias_comb_b
                       + jnp.dot(noise, wd_o, preferred_element_type=f32))


def _prepare_weights(params):
    """Trace-time weight fusion / composition (outside the kernel)."""
    (we, be, wih_e, whh_e, b_e, wdc, wdo, bd,
     wih_p, whh_p, b_p, wse, bse,
     w1r, w1hj, w1hi, b1, w2, b2,
     wmh, wmc, bm, wvh, wvc, bv) = params

    w_pred = jnp.concatenate([wih_p, whh_p], axis=0)                # (24, 32)
    w1_cat = jnp.concatenate([w1hi, w1hj], axis=1)                  # (8, 128)
    pwse = jnp.dot(wse, w1r)                                        # (2, 64)  Wse @ W1_r
    cvec = jnp.dot(bse, w1r) + b1                                   # (1, 64)

    z42 = jnp.zeros((4, 2), jnp.float32)
    w_head = jnp.concatenate([
        jnp.concatenate([wmh, z42], axis=1),     # pred_h[:, 0:4] -> mu only
        jnp.concatenate([z42, wvh], axis=1),     # pred_h[:, 4:8] -> logvar only
        jnp.concatenate([wmc, wvc], axis=1),     # context        -> both heads
    ], axis=0)                                                      # (16, 4)
    b_head = jnp.concatenate([bm, bv], axis=1)                      # (1, 4)

    # Fold mu -> output -> decoder-input:
    #   co@Wd + bd = hc @ (W_mu@Wd_o + [0; Wd_c]) + noise@Wd_o + (bd + b_mu@Wd_o)
    w_comb = jnp.dot(w_head[:, 0:2], wdo) + jnp.concatenate(
        [jnp.zeros((H_DIM, IN_EMB), jnp.float32), wdc], axis=0)     # (16, 16)
    w_big = jnp.concatenate([w_head, w_comb], axis=1)               # (16, 20)
    bias_comb = bd + jnp.dot(bm, wdo)                               # (1, 16)

    return {
        "we": we, "be": be,
        "w_ih_enc": wih_e, "b_enc": b_e, "w_hh_enc": whh_e,
        "w_pred": w_pred, "b_pred": b_p,
        "pwse": pwse, "cvec": cvec, "w1_cat": w1_cat,
        "w2": w2, "b2": b2,
        "w_big": w_big, "b_head": b_head,
        "wd_o": wdo, "bias_comb": bias_comb, "bd": bd,
    }


def _pack_slab(weights):
    slab = jnp.zeros((_SLAB_ROWS, _SLAB_COLS), jnp.float32)
    for name, arr in weights.items():
        off, r, c = _SLAB_LAYOUT[name]
        slab = slab.at[off:off + r, 0:c].set(arr.astype(jnp.float32))
    return slab


def mylstm_forward(obs_traj, obs_traj_obs, nei_index, nei_num_index,
                   params, h0, c0, eps):
    del nei_num_index  # unused by the reference forward as well
    T, B, _ = obs_traj.shape
    curr_pos_abs = obs_traj_obs[-1]                                  # (B, 2)

    slab = _pack_slab(_prepare_weights(params))
    obs2 = obs_traj.reshape(T * B, 2)          # time-major, so row t*B+b == (t, b)

    inputs = (obs2, curr_pos_abs, nei_index, h0, c0, eps, slab)
    vmem = pl.BlockSpec(memory_space=pltpu.MemorySpace.VMEM)

    mv = pl.pallas_call(
        mylstm_kernel,
        out_shape=jax.ShapeDtypeStruct((PRED_LEN, B, 4), jnp.float32),
        in_specs=[vmem] * len(inputs),
        out_specs=vmem,
    )(*inputs)

    mean = mv[:, :, 0:2]
    var = mv[:, :, 2:4]
    # reparameterize with the same eps the kernel fed back through the recurrence
    pred_traj = mean + eps * jnp.exp(0.5 * var)
    return pred_traj, mean, var


# ---------------------------------------------------------------------------
# Pure-JAX transcription of the PyTorch forward (numerics sanity reference).
# ---------------------------------------------------------------------------
def mylstm_reference(obs_traj, obs_traj_obs, nei_index, params, h0, c0, eps):
    (we, be, wih_e, whh_e, b_e, wdc, wdo, bd,
     wih_p, whh_p, b_p, wse, bse,
     w1r, w1hj, w1hi, b1, w2, b2,
     wmh, wmc, bm, wvh, wvc, bv) = params
    hp = jax.lax.Precision.HIGHEST

    def cell(x, h, c, wih, whh, b):
        g = jnp.dot(x, wih, precision=hp) + jnp.dot(h, whh, precision=hp) + b
        i = jax.nn.sigmoid(g[:, 0:8]); f = jax.nn.sigmoid(g[:, 8:16])
        gg = jnp.tanh(g[:, 16:24]); o = jax.nn.sigmoid(g[:, 24:32])
        c = f * c + i * gg
        return o * jnp.tanh(c), c

    B = obs_traj.shape[1]
    h, c = h0, c0
    for t in range(OBS_LEN):
        emb = jax.nn.relu(jnp.dot(obs_traj[t], we, precision=hp) + be)
        h, c = cell(emb, h, c, wih_e, whh_e, b_e)

    pos = obs_traj_obs[-1]
    wd = jnp.concatenate([wdc, wdo], axis=0)
    w1 = jnp.concatenate([w1r, w1hj, w1hi], axis=0)
    wm = jnp.concatenate([wmh, wmc], axis=0)
    wv = jnp.concatenate([wvh, wvc], axis=0)

    pred_h, pred_c = h, jnp.zeros_like(h)
    output = jnp.zeros((B, 2), jnp.float32)
    context = jnp.zeros((B, H_DIM), jnp.float32)
    preds, mus, lvs = [], [], []
    for t in range(PRED_LEN):
        co = jnp.concatenate([context, output], axis=1)
        emb = jax.nn.relu(jnp.dot(co, wd, precision=hp) + bd)
        pred_h, pred_c = cell(emb, pred_h, pred_c, wih_p, whh_p, b_p)

        corr = pos[:, None, :] - pos[None, :, :]                 # corr[i,j] = pos_i - pos_j
        r = jnp.dot(corr.reshape(B * B, 2), wse, precision=hp) + bse
        hj = jnp.broadcast_to(pred_h[None, :, :], (B, B, H_DIM)).reshape(B * B, H_DIM)
        hi = jnp.broadcast_to(pred_h[:, None, :], (B, B, H_DIM)).reshape(B * B, H_DIM)
        x1 = jnp.concatenate([r, hj, hi], axis=1)
        h1 = jax.nn.relu(jnp.dot(x1, w1, precision=hp) + b1)
        h2 = jax.nn.relu(jnp.dot(h1, w2, precision=hp) + b2).reshape(B, B, H_DIM)
        masked = jnp.where(nei_index[t][:, :, None] > 0, h2, -jnp.inf)
        pool = jnp.max(masked, axis=1)
        context = jnp.where(pool == -jnp.inf, 0.0, pool)

        mu = jnp.dot(jnp.concatenate([pred_h[:, :4], context], axis=1), wm,
                     precision=hp) + bm
        lv = jnp.dot(jnp.concatenate([pred_h[:, 4:], context], axis=1), wv,
                     precision=hp) + bv
        output = mu + eps[t] * jnp.exp(0.5 * lv)
        preds.append(output); mus.append(mu); lvs.append(lv)
    return jnp.stack(preds), jnp.stack(mus), jnp.stack(lvs)


def make_params(key):
    ks = jax.random.split(key, 9)

    def lin(k, fan_in, fan_out):
        k1, k2 = jax.random.split(k)
        bound = 1.0 / math.sqrt(fan_in)
        w = jax.random.uniform(k1, (fan_in, fan_out), jnp.float32, -bound, bound)
        b = jax.random.uniform(k2, (1, fan_out), jnp.float32, -bound, bound)
        return w, b

    def lstm(k, in_dim, hid):
        k1, k2, k3, k4 = jax.random.split(k, 4)
        bound = 1.0 / math.sqrt(hid)
        w_ih = jax.random.uniform(k1, (in_dim, 4 * hid), jnp.float32, -bound, bound)
        w_hh = jax.random.uniform(k2, (hid, 4 * hid), jnp.float32, -bound, bound)
        b_ih = jax.random.uniform(k3, (1, 4 * hid), jnp.float32, -bound, bound)
        b_hh = jax.random.uniform(k4, (1, 4 * hid), jnp.float32, -bound, bound)
        return w_ih, w_hh, b_ih + b_hh

    we, be = lin(ks[0], 2, IN_EMB)                         # inputLayer_encoder
    wih_e, whh_e, b_e = lstm(ks[1], IN_EMB, H_DIM)         # traj_lstm_model
    wd, bd = lin(ks[2], H_DIM + 2, IN_EMB)                 # inputLayer_decoder
    wdc, wdo = wd[:H_DIM], wd[H_DIM:]
    wih_p, whh_p, b_p = lstm(ks[3], IN_EMB, H_DIM)         # pred_lstm_model
    wse, bse = lin(ks[4], 2, SPA_EMB)                      # spatial_embedding
    w1, b1 = lin(ks[5], SPA_EMB + 2 * H_DIM, MLP_HID)      # mlp_pre_pool[0]
    w1r = w1[:SPA_EMB]
    w1hj = w1[SPA_EMB:SPA_EMB + H_DIM]
    w1hi = w1[SPA_EMB + H_DIM:]
    w2, b2 = lin(ks[6], MLP_HID, H_DIM)                    # mlp_pre_pool[1]
    wm, bm = lin(ks[7], 4 + H_DIM, 2)                      # latent_to_position_mean
    wmh, wmc = wm[:4], wm[4:]
    wv, bv = lin(ks[8], 4 + H_DIM, 2)                      # latent_to_position_var
    wvh, wvc = wv[:4], wv[4:]
    # NOTE: pred_position and Pooling_net.attn are defined in the module but
    # never used in forward(), so they are not materialized here.
    return (we, be, wih_e, whh_e, b_e, wdc, wdo, bd,
            wih_p, whh_p, b_p, wse, bse,
            w1r, w1hj, w1hi, b1, w2, b2,
            wmh, wmc, bm, wvh, wvc, bv)


if __name__ == "__main__":
    key = jax.random.PRNGKey(0)
    k_par, k_obs, k_pos, k_nei, k_h, k_c, k_eps = jax.random.split(key, 7)

    B = 8  # batch = number of agents
    params = make_params(k_par)
    obs_traj = jax.random.normal(k_obs, (OBS_LEN, B, 2), jnp.float32)
    obs_traj_obs = jax.random.normal(k_pos, (OBS_LEN, B, 2), jnp.float32)
    nei_index = jax.random.bernoulli(
        k_nei, 0.6, (PRED_LEN, B, B)).astype(jnp.float32)
    nei_num_index = jnp.sum(nei_index[0], axis=1).astype(jnp.int32)
    h0 = jax.random.normal(k_h, (B, H_DIM), jnp.float32)           # torch.randn init
    c0 = jax.random.normal(k_c, (B, H_DIM), jnp.float32)           # torch.randn init
    eps = jax.random.normal(k_eps, (PRED_LEN, B, 2), jnp.float32)  # reparam noise

    pred_traj, mean, var = jax.jit(mylstm_forward)(
        obs_traj, obs_traj_obs, nei_index, nei_num_index, params, h0, c0, eps)
    jax.block_until_ready((pred_traj, mean, var))

    assert pred_traj.shape == (PRED_LEN, B, 2)
    assert mean.shape == (PRED_LEN, B, 2)
    assert var.shape == (PRED_LEN, B, 2)
    assert bool(jnp.all(jnp.isfinite(pred_traj)))

    # sanity check against a pure-JAX transcription of the PyTorch forward
    ref_pred, ref_mean, ref_var = jax.jit(mylstm_reference)(
        obs_traj, obs_traj_obs, nei_index, params, h0, c0, eps)
    jax.block_until_ready((ref_pred, ref_mean, ref_var))
    assert bool(jnp.allclose(mean, ref_mean, rtol=5e-2, atol=1e-2))
    assert bool(jnp.allclose(var, ref_var, rtol=5e-2, atol=1e-2))
    assert bool(jnp.allclose(pred_traj, ref_pred, rtol=5e-2, atol=1e-2))

    print("KERNEL_OK")
</pallas_src>

<mosaic_0001>
module attributes {stable_mosaic.version = 11 : i64} {
  func.func @mylstm_kernel(%arg0: memref<64x2xf32, #tpu.memory_space<vmem>>, %arg1: memref<8x2xf32, #tpu.memory_space<vmem>>, %arg2: memref<12x8x8xf32, #tpu.memory_space<vmem>>, %arg3: memref<8x8xf32, #tpu.memory_space<vmem>>, %arg4: memref<8x8xf32, #tpu.memory_space<vmem>>, %arg5: memref<12x8x2xf32, #tpu.memory_space<vmem>>, %arg6: memref<224x128xf32, #tpu.memory_space<vmem>>, %arg7: memref<12x8x4xf32, #tpu.memory_space<vmem>>) attributes {dimension_semantics = [], scalar_prefetch = 0 : i64, scratch_operands = 0 : i64, tpu.core_type = #tpu.core_type<tc>} {
    %c0 = arith.constant 0 : index
    %c0_0 = arith.constant 0 : index
    %0 = vector.load %arg6[%c0, %c0_0] : memref<224x128xf32, #tpu.memory_space<vmem>>, vector<2x128xf32>
    %1 = vector.extract_strided_slice %0 {offsets = [0, 0], sizes = [2, 16], strides = [1, 1]} : vector<2x128xf32> to vector<2x16xf32>
    %c8 = arith.constant 8 : index
    %c0_1 = arith.constant 0 : index
    %2 = vector.load %arg6[%c8, %c0_1] : memref<224x128xf32, #tpu.memory_space<vmem>>, vector<1x128xf32>
    %3 = vector.extract_strided_slice %2 {offsets = [0, 0], sizes = [1, 16], strides = [1, 1]} : vector<1x128xf32> to vector<1x16xf32>
    %c16 = arith.constant 16 : index
    %c0_2 = arith.constant 0 : index
    %4 = vector.load %arg6[%c16, %c0_2] : memref<224x128xf32, #tpu.memory_space<vmem>>, vector<16x128xf32>
    %5 = vector.extract_strided_slice %4 {offsets = [0, 0], sizes = [16, 32], strides = [1, 1]} : vector<16x128xf32> to vector<16x32xf32>
    %c32 = arith.constant 32 : index
    %c0_3 = arith.constant 0 : index
    %6 = vector.load %arg6[%c32, %c0_3] : memref<224x128xf32, #tpu.memory_space<vmem>>, vector<1x128xf32>
    %7 = vector.extract_strided_slice %6 {offsets = [0, 0], sizes = [1, 32], strides = [1, 1]} : vector<1x128xf32> to vector<1x32xf32>
    %c40 = arith.constant 40 : index
    %c0_4 = arith.constant 0 : index
    %8 = vector.load %arg6[%c40, %c0_4] : memref<224x128xf32, #tpu.memory_space<vmem>>, vector<8x128xf32>
    %9 = vector.extract_strided_slice %8 {offsets = [0, 0], sizes = [8, 32], strides = [1, 1]} : vector<8x128xf32> to vector<8x32xf32>
    %c48 = arith.constant 48 : index
    %c0_5 = arith.constant 0 : index
    %10 = vector.load %arg6[%c48, %c0_5] : memref<224x128xf32, #tpu.memory_space<vmem>>, vector<24x128xf32>
    %11 = vector.extract_strided_slice %10 {offsets = [0, 0], sizes = [24, 32], strides = [1, 1]} : vector<24x128xf32> to vector<24x32xf32>
    %c72 = arith.constant 72 : index
    %c0_6 = arith.constant 0 : index
    %12 = vector.load %arg6[%c72, %c0_6] : memref<224x128xf32, #tpu.memory_space<vmem>>, vector<1x128xf32>
    %13 = vector.extract_strided_slice %12 {offsets = [0, 0], sizes = [1, 32], strides = [1, 1]} : vector<1x128xf32> to vector<1x32xf32>
    %14 = vector.shape_cast %13 : vector<1x32xf32> to vector<1x32xf32>
    %15 = vector.broadcast %14 : vector<1x32xf32> to vector<8x32xf32>
    %c80 = arith.constant 80 : index
    %c0_7 = arith.constant 0 : index
    %16 = vector.load %arg6[%c80, %c0_7] : memref<224x128xf32, #tpu.memory_space<vmem>>, vector<2x128xf32>
    %17 = vector.extract_strided_slice %16 {offsets = [0, 0], sizes = [2, 64], strides = [1, 1]} : vector<2x128xf32> to vector<2x64xf32>
    %c88 = arith.constant 88 : index
    %c0_8 = arith.constant 0 : index
    %18 = vector.load %arg6[%c88, %c0_8] : memref<224x128xf32, #tpu.memory_space<vmem>>, vector<1x128xf32>
    %19 = vector.extract_strided_slice %18 {offsets = [0, 0], sizes = [1, 64], strides = [1, 1]} : vector<1x128xf32> to vector<1x64xf32>
    %c96 = arith.constant 96 : index
    %c0_9 = arith.constant 0 : index
    %20 = vector.load %arg6[%c96, %c0_9] : memref<224x128xf32, #tpu.memory_space<vmem>>, vector<8x128xf32>
    %c104 = arith.constant 104 : index
    %c0_10 = arith.constant 0 : index
    %21 = vector.load %arg6[%c104, %c0_10] : memref<224x128xf32, #tpu.memory_space<vmem>>, vector<64x128xf32>
    %22 = vector.extract_strided_slice %21 {offsets = [0, 0], sizes = [64, 8], strides = [1, 1]} : vector<64x128xf32> to vector<64x8xf32>
    %c168 = arith.constant 168 : index
    %c0_11 = arith.constant 0 : index
    %23 = vector.load %arg6[%c168, %c0_11] : memref<224x128xf32, #tpu.memory_space<vmem>>, vector<1x128xf32>
    %24 = vector.extract_strided_slice %23 {offsets = [0, 0], sizes = [1, 8], strides = [1, 1]} : vector<1x128xf32> to vector<1x8xf32>
    %25 = vector.shape_cast %24 : vector<1x8xf32> to vector<1x8xf32>
    %26 = vector.broadcast %25 : vector<1x8xf32> to vector<64x8xf32>
    %c176 = arith.constant 176 : index
    %c0_12 = arith.constant 0 : index
    %27 = vector.load %arg6[%c176, %c0_12] : memref<224x128xf32, #tpu.memory_space<vmem>>, vector<16x128xf32>
    %28 = vector.extract_strided_slice %27 {offsets = [0, 0], sizes = [16, 20], strides = [1, 1]} : vector<16x128xf32> to vector<16x20xf32>
    %c192 = arith.constant 192 : index
    %c0_13 = arith.constant 0 : index
    %29 = vector.load %arg6[%c192, %c0_13] : memref<224x128xf32, #tpu.memory_space<vmem>>, vector<1x128xf32>
    %30 = vector.extract_strided_slice %29 {offsets = [0, 0], sizes = [1, 4], strides = [1, 1]} : vector<1x128xf32> to vector<1x4xf32>
    %31 = vector.shape_cast %30 : vector<1x4xf32> to vector<1x4xf32>
    %32 = vector.broadcast %31 : vector<1x4xf32> to vector<8x4xf32>
    %c200 = arith.constant 200 : index
    %c0_14 = arith.constant 0 : index
    %33 = vector.load %arg6[%c200, %c0_14] : memref<224x128xf32, #tpu.memory_space<vmem>>, vector<2x128xf32>
    %34 = vector.extract_strided_slice %33 {offsets = [0, 0], sizes = [2, 16], strides = [1, 1]} : vector<2x128xf32> to vector<2x16xf32>
    %c208 = arith.constant 208 : index
    %c0_15 = arith.constant 0 : index
    %35 = vector.load %arg6[%c208, %c0_15] : memref<224x128xf32, #tpu.memory_space<vmem>>, vector<1x128xf32>
    %36 = vector.extract_strided_slice %35 {offsets = [0, 0], sizes = [1, 16], strides = [1, 1]} : vector<1x128xf32> to vector<1x16xf32>
    %37 = vector.shape_cast %36 : vector<1x16xf32> to vector<1x16xf32>
    %38 = vector.broadcast %37 : vector<1x16xf32> to vector<8x16xf32>
    %c216 = arith.constant 216 : index
    %c0_16 = arith.constant 0 : index
    %39 = vector.load %arg6[%c216, %c0_16] : memref<224x128xf32, #tpu.memory_space<vmem>>, vector<1x128xf32>
    %40 = vector.extract_strided_slice %39 {offsets = [0, 0], sizes = [1, 16], strides = [1, 1]} : vector<1x128xf32> to vector<1x16xf32>
    %41 = vector.shape_cast %40 : vector<1x16xf32> to vector<1x16xf32>
    %42 = vector.broadcast %41 : vector<1x16xf32> to vector<8x16xf32>
    %c0_17 = arith.constant 0 : index
    %c0_18 = arith.constant 0 : index
    %43 = vector.load %arg0[%c0_17, %c0_18] : memref<64x2xf32, #tpu.memory_space<vmem>>, vector<64x2xf32>
    %cst = arith.constant dense<0.000000e+00> : vector<64x16xf32>
    %44 = tpu.matmul %43, %1, %cst {dimension_numbers = #tpu.dot_dimension_numbers<[1], [0], [0], [1], [0, 0, 1, 1], [], []>} : vector<64x2xf32>, vector<2x16xf32>, vector<64x16xf32> -> vector<64x16xf32>
    %45 = vector.broadcast %3 : vector<1x16xf32> to vector<64x16xf32>
    %46 = arith.addf %44, %45 : vector<64x16xf32>
    %cst_19 = arith.constant 0.000000e+00 : f32
    %47 = vector.broadcast %cst_19 : f32 to vector<64x16xf32>
    %48 = arith.maximumf %46, %47 : vector<64x16xf32>
    %cst_20 = arith.constant dense<0.000000e+00> : vector<64x32xf32>
    %49 = tpu.matmul %48, %5, %cst_20 {dimension_numbers = #tpu.dot_dimension_numbers<[1], [0], [0], [1], [0, 0, 1, 1], [], []>} : vector<64x16xf32>, vector<16x32xf32>, vector<64x32xf32> -> vector<64x32xf32>
    %50 = vector.broadcast %7 : vector<1x32xf32> to vector<64x32xf32>
    %51 = arith.addf %49, %50 : vector<64x32xf32>
    %c0_21 = arith.constant 0 : index
    %c0_22 = arith.constant 0 : index
    %52 = vector.load %arg3[%c0_21, %c0_22] : memref<8x8xf32, #tpu.memory_space<vmem>>, vector<8x8xf32>
    %c0_23 = arith.constant 0 : index
    %c0_24 = arith.constant 0 : index
    %53 = vector.load %arg4[%c0_23, %c0_24] : memref<8x8xf32, #tpu.memory_space<vmem>>, vector<8x8xf32>
    %54 = vector.extract_strided_slice %51 {offsets = [0, 0], sizes = [8, 32], strides = [1, 1]} : vector<64x32xf32> to vector<8x32xf32>
    %cst_25 = arith.constant dense<0.000000e+00> : vector<8x32xf32>
    %55 = tpu.matmul %52, %9, %cst_25 {dimension_numbers = #tpu.dot_dimension_numbers<[1], [0], [0], [1], [0, 0, 1, 1], [], []>} : vector<8x8xf32>, vector<8x32xf32>, vector<8x32xf32> -> vector<8x32xf32>
    %56 = arith.addf %54, %55 : vector<8x32xf32>
    %57 = vector.extract_strided_slice %56 {offsets = [0, 0], sizes = [8, 8], strides = [1, 1]} : vector<8x32xf32> to vector<8x8xf32>
    %cst_26 = arith.constant 5.000000e-01 : f32
    %58 = vector.broadcast %cst_26 : f32 to vector<8x8xf32>
    %59 = arith.mulf %58, %57 : vector<8x8xf32>
    %60 = math.tanh %59 : vector<8x8xf32>
    %cst_27 = arith.constant 5.000000e-01 : f32
    %61 = vector.broadcast %cst_27 : f32 to vector<8x8xf32>
    %62 = arith.mulf %61, %60 : vector<8x8xf32>
    %cst_28 = arith.constant 5.000000e-01 : f32
    %63 = vector.broadcast %cst_28 : f32 to vector<8x8xf32>
    %64 = arith.addf %62, %63 : vector<8x8xf32>
    %65 = vector.extract_strided_slice %56 {offsets = [0, 8], sizes = [8, 8], strides = [1, 1]} : vector<8x32xf32> to vector<8x8xf32>
    %cst_29 = arith.constant 5.000000e-01 : f32
    %66 = vector.broadcast %cst_29 : f32 to vector<8x8xf32>
    %67 = arith.mulf %66, %65 : vector<8x8xf32>
    %68 = math.tanh %67 : vector<8x8xf32>
    %cst_30 = arith.constant 5.000000e-01 : f32
    %69 = vector.broadcast %cst_30 : f32 to vector<8x8xf32>
    %70 = arith.mulf %69, %68 : vector<8x8xf32>
    %cst_31 = arith.constant 5.000000e-01 : f32
    %71 = vector.broadcast %cst_31 : f32 to vector<8x8xf32>
    %72 = arith.addf %70, %71 : vector<8x8xf32>
    %73 = vector.extract_strided_slice %56 {offsets = [0, 16], sizes = [8, 8], strides = [1, 1]} : vector<8x32xf32> to vector<8x8xf32>
    %74 = math.tanh %73 : vector<8x8xf32>
    %75 = vector.extract_strided_slice %56 {offsets = [0, 24], sizes = [8, 8], strides = [1, 1]} : vector<8x32xf32> to vector<8x8xf32>
    %cst_32 = arith.constant 5.000000e-01 : f32
    %76 = vector.broadcast %cst_32 : f32 to vector<8x8xf32>
    %77 = arith.mulf %76, %75 : vector<8x8xf32>
    %78 = math.tanh %77 : vector<8x8xf32>
    %cst_33 = arith.constant 5.000000e-01 : f32
    %79 = vector.broadcast %cst_33 : f32 to vector<8x8xf32>
    %80 = arith.mulf %79, %78 : vector<8x8xf32>
    %cst_34 = arith.constant 5.000000e-01 : f32
    %81 = vector.broadcast %cst_34 : f32 to vector<8x8xf32>
    %82 = arith.addf %80, %81 : vector<8x8xf32>
    %83 = arith.mulf %72, %53 : vector<8x8xf32>
    %84 = arith.mulf %64, %74 : vector<8x8xf32>
    %85 = arith.addf %83, %84 : vector<8x8xf32>
    %86 = math.tanh %85 : vector<8x8xf32>
    %87 = arith.mulf %82, %86 : vector<8x8xf32>
    %88 = vector.extract_strided_slice %51 {offsets = [8, 0], sizes = [8, 32], strides = [1, 1]} : vector<64x32xf32> to vector<8x32xf32>
    %cst_35 = arith.constant dense<0.000000e+00> : vector<8x32xf32>
    %89 = tpu.matmul %87, %9, %cst_35 {dimension_numbers = #tpu.dot_dimension_numbers<[1], [0], [0], [1], [0, 0, 1, 1], [], []>} : vector<8x8xf32>, vector<8x32xf32>, vector<8x32xf32> -> vector<8x32xf32>
    %90 = arith.addf %88, %89 : vector<8x32xf32>
    %91 = vector.extract_strided_slice %90 {offsets = [0, 0], sizes = [8, 8], strides = [1, 1]} : vector<8x32xf32> to vector<8x8xf32>
    %cst_36 = arith.constant 5.000000e-01 : f32
    %92 = vector.broadcast %cst_36 : f32 to vector<8x8xf32>
    %93 = arith.mulf %92, %91 : vector<8x8xf32>
    %94 = math.tanh %93 : vector<8x8xf32>
    %cst_37 = arith.constant 5.000000e-01 : f32
    %95 = vector.broadcast %cst_37 : f32 to vector<8x8xf32>
    %96 = arith.mulf %95, %94 : vector<8x8xf32>
    %cst_38 = arith.constant 5.000000e-01 : f32
    %97 = vector.broadcast %cst_38 : f32 to vector<8x8xf32>
    %98 = arith.addf %96, %97 : vector<8x8xf32>
    %99 = vector.extract_strided_slice %90 {offsets = [0, 8], sizes = [8, 8], strides = [1, 1]} : vector<8x32xf32> to vector<8x8xf32>
    %cst_39 = arith.constant 5.000000e-01 : f32
    %100 = vector.broadcast %cst_39 : f32 to vector<8x8xf32>
    %101 = arith.mulf %100, %99 : vector<8x8xf32>
    %102 = math.tanh %101 : vector<8x8xf32>
    %cst_40 = arith.constant 5.000000e-01 : f32
    %103 = vector.broadcast %cst_40 : f32 to vector<8x8xf32>
    %104 = arith.mulf %103, %102 : vector<8x8xf32>
    %cst_41 = arith.constant 5.000000e-01 : f32
    %105 = vector.broadcast %cst_41 : f32 to vector<8x8xf32>
    %106 = arith.addf %104, %105 : vector<8x8xf32>
    %107 = vector.extract_strided_slice %90 {offsets = [0, 16], sizes = [8, 8], strides = [1, 1]} : vector<8x32xf32> to vector<8x8xf32>
    %108 = math.tanh %107 : vector<8x8xf32>
    %109 = vector.extract_strided_slice %90 {offsets = [0, 24], sizes = [8, 8], strides = [1, 1]} : vector<8x32xf32> to vector<8x8xf32>
    %cst_42 = arith.constant 5.000000e-01 : f32
    %110 = vector.broadcast %cst_42 : f32 to vector<8x8xf32>
    %111 = arith.mulf %110, %109 : vector<8x8xf32>
    %112 = math.tanh %111 : vector<8x8xf32>
    %cst_43 = arith.constant 5.000000e-01 : f32
    %113 = vector.broadcast %cst_43 : f32 to vector<8x8xf32>
    %114 = arith.mulf %113, %112 : vector<8x8xf32>
    %cst_44 = arith.constant 5.000000e-01 : f32
    %115 = vector.broadcast %cst_44 : f32 to vector<8x8xf32>
    %116 = arith.addf %114, %115 : vector<8x8xf32>
    %117 = arith.mulf %106, %85 : vector<8x8xf32>
    %118 = arith.mulf %98, %108 : vector<8x8xf32>
    %119 = arith.addf %117, %118 : vector<8x8xf32>
    %120 = math.tanh %119 : vector<8x8xf32>
    %121 = arith.mulf %116, %120 : vector<8x8xf32>
    %122 = vector.extract_strided_slice %51 {offsets = [16, 0], sizes = [8, 32], strides = [1, 1]} : vector<64x32xf32> to vector<8x32xf32>
    %cst_45 = arith.constant dense<0.000000e+00> : vector<8x32xf32>
    %123 = tpu.matmul %121, %9, %cst_45 {dimension_numbers = #tpu.dot_dimension_numbers<[1], [0], [0], [1], [0, 0, 1, 1], [], []>} : vector<8x8xf32>, vector<8x32xf32>, vector<8x32xf32> -> vector<8x32xf32>
    %124 = arith.addf %122, %123 : vector<8x32xf32>
    %125 = vector.extract_strided_slice %124 {offsets = [0, 0], sizes = [8, 8], strides = [1, 1]} : vector<8x32xf32> to vector<8x8xf32>
    %cst_46 = arith.constant 5.000000e-01 : f32
    %126 = vector.broadcast %cst_46 : f32 to vector<8x8xf32>
    %127 = arith.mulf %126, %125 : vector<8x8xf32>
    %128 = math.tanh %127 : vector<8x8xf32>
    %cst_47 = arith.constant 5.000000e-01 : f32
    %129 = vector.broadcast %cst_47 : f32 to vector<8x8xf32>
    %130 = arith.mulf %129, %128 : vector<8x8xf32>
    %cst_48 = arith.constant 5.000000e-01 : f32
    %131 = vector.broadcast %cst_48 : f32 to vector<8x8xf32>
    %132 = arith.addf %130, %131 : vector<8x8xf32>
    %133 = vector.extract_strided_slice %124 {offsets = [0, 8], sizes = [8, 8], strides = [1, 1]} : vector<8x32xf32> to vector<8x8xf32>
    %cst_49 = arith.constant 5.000000e-01 : f32
    %134 = vector.broadcast %cst_49 : f32 to vector<8x8xf32>
    %135 = arith.mulf %134, %133 : vector<8x8xf32>
    %136 = math.tanh %135 : vector<8x8xf32>
    %cst_50 = arith.constant 5.000000e-01 : f32
    %137 = vector.broadcast %cst_50 : f32 to vector<8x8xf32>
    %138 = arith.mulf %137, %136 : vector<8x8xf32>
    %cst_51 = arith.constant 5.000000e-01 : f32
    %139 = vector.broadcast %cst_51 : f32 to vector<8x8xf32>
    %140 = arith.addf %138, %139 : vector<8x8xf32>
    %141 = vector.extract_strided_slice %124 {offsets = [0, 16], sizes = [8, 8], strides = [1, 1]} : vector<8x32xf32> to vector<8x8xf32>
    %142 = math.tanh %141 : vector<8x8xf32>
    %143 = vector.extract_strided_slice %124 {offsets = [0, 24], sizes = [8, 8], strides = [1, 1]} : vector<8x32xf32> to vector<8x8xf32>
    %cst_52 = arith.constant 5.000000e-01 : f32
    %144 = vector.broadcast %cst_52 : f32 to vector<8x8xf32>
    %145 = arith.mulf %144, %143 : vector<8x8xf32>
    %146 = math.tanh %145 : vector<8x8xf32>
    %cst_53 = arith.constant 5.000000e-01 : f32
    %147 = vector.broadcast %cst_53 : f32 to vector<8x8xf32>
    %148 = arith.mulf %147, %146 : vector<8x8xf32>
    %cst_54 = arith.constant 5.000000e-01 : f32
    %149 = vector.broadcast %cst_54 : f32 to vector<8x8xf32>
    %150 = arith.addf %148, %149 : vector<8x8xf32>
    %151 = arith.mulf %140, %119 : vector<8x8xf32>
    %152 = arith.mulf %132, %142 : vector<8x8xf32>
    %153 = arith.addf %151, %152 : vector<8x8xf32>
    %154 = math.tanh %153 : vector<8x8xf32>
    %155 = arith.mulf %150, %154 : vector<8x8xf32>
    %156 = vector.extract_strided_slice %51 {offsets = [24, 0], sizes = [8, 32], strides = [1, 1]} : vector<64x32xf32> to vector<8x32xf32>
    %cst_55 = arith.constant dense<0.000000e+00> : vector<8x32xf32>
    %157 = tpu.matmul %155, %9, %cst_55 {dimension_numbers = #tpu.dot_dimension_numbers<[1], [0], [0], [1], [0, 0, 1, 1], [], []>} : vector<8x8xf32>, vector<8x32xf32>, vector<8x32xf32> -> vector<8x32xf32>
    %158 = arith.addf %156, %157 : vector<8x32xf32>
    %159 = vector.extract_strided_slice %158 {offsets = [0, 0], sizes = [8, 8], strides = [1, 1]} : vector<8x32xf32> to vector<8x8xf32>
    %cst_56 = arith.constant 5.000000e-01 : f32
    %160 = vector.broadcast %cst_56 : f32 to vector<8x8xf32>
    %161 = arith.mulf %160, %159 : vector<8x8xf32>
    %162 = math.tanh %161 : vector<8x8xf32>
    %cst_57 = arith.constant 5.000000e-01 : f32
    %163 = vector.broadcast %cst_57 : f32 to vector<8x8xf32>
    %164 = arith.mulf %163, %162 : vector<8x8xf32>
    %cst_58 = arith.constant 5.000000e-01 : f32
    %165 = vector.broadcast %cst_58 : f32 to vector<8x8xf32>
    %166 = arith.addf %164, %165 : vector<8x8xf32>
    %167 = vector.extract_strided_slice %158 {offsets = [0, 8], sizes = [8, 8], strides = [1, 1]} : vector<8x32xf32> to vector<8x8xf32>
    %cst_59 = arith.constant 5.000000e-01 : f32
    %168 = vector.broadcast %cst_59 : f32 to vector<8x8xf32>
    %169 = arith.mulf %168, %167 : vector<8x8xf32>
    %170 = math.tanh %169 : vector<8x8xf32>
    %cst_60 = arith.constant 5.000000e-01 : f32
    %171 = vector.broadcast %cst_60 : f32 to vector<8x8xf32>
    %172 = arith.mulf %171, %170 : vector<8x8xf32>
    %cst_61 = arith.constant 5.000000e-01 : f32
    %173 = vector.broadcast %cst_61 : f32 to vector<8x8xf32>
    %174 = arith.addf %172, %173 : vector<8x8xf32>
    %175 = vector.extract_strided_slice %158 {offsets = [0, 16], sizes = [8, 8], strides = [1, 1]} : vector<8x32xf32> to vector<8x8xf32>
    %176 = math.tanh %175 : vector<8x8xf32>
    %177 = vector.extract_strided_slice %158 {offsets = [0, 24], sizes = [8, 8], strides = [1, 1]} : vector<8x32xf32> to vector<8x8xf32>
    %cst_62 = arith.constant 5.000000e-01 : f32
    %178 = vector.broadcast %cst_62 : f32 to vector<8x8xf32>
    %179 = arith.mulf %178, %177 : vector<8x8xf32>
    %180 = math.tanh %179 : vector<8x8xf32>
    %cst_63 = arith.constant 5.000000e-01 : f32
    %181 = vector.broadcast %cst_63 : f32 to vector<8x8xf32>
    %182 = arith.mulf %181, %180 : vector<8x8xf32>
    %cst_64 = arith.constant 5.000000e-01 : f32
    %183 = vector.broadcast %cst_64 : f32 to vector<8x8xf32>
    %184 = arith.addf %182, %183 : vector<8x8xf32>
    %185 = arith.mulf %174, %153 : vector<8x8xf32>
    %186 = arith.mulf %166, %176 : vector<8x8xf32>
    %187 = arith.addf %185, %186 : vector<8x8xf32>
    %188 = math.tanh %187 : vector<8x8xf32>
    %189 = arith.mulf %184, %188 : vector<8x8xf32>
    %190 = vector.extract_strided_slice %51 {offsets = [32, 0], sizes = [8, 32], strides = [1, 1]} : vector<64x32xf32> to vector<8x32xf32>
    %cst_65 = arith.constant dense<0.000000e+00> : vector<8x32xf32>
    %191 = tpu.matmul %189, %9, %cst_65 {dimension_numbers = #tpu.dot_dimension_numbers<[1], [0], [0], [1], [0, 0, 1, 1], [], []>} : vector<8x8xf32>, vector<8x32xf32>, vector<8x32xf32> -> vector<8x32xf32>
    %192 = arith.addf %190, %191 : vector<8x32xf32>
    %193 = vector.extract_strided_slice %192 {offsets = [0, 0], sizes = [8, 8], strides = [1, 1]} : vector<8x32xf32> to vector<8x8xf32>
    %cst_66 = arith.constant 5.000000e-01 : f32
    %194 = vector.broadcast %cst_66 : f32 to vector<8x8xf32>
    %195 = arith.mulf %194, %193 : vector<8x8xf32>
    %196 = math.tanh %195 : vector<8x8xf32>
    %cst_67 = arith.constant 5.000000e-01 : f32
    %197 = vector.broadcast %cst_67 : f32 to vector<8x8xf32>
    %198 = arith.mulf %197, %196 : vector<8x8xf32>
    %cst_68 = arith.constant 5.000000e-01 : f32
    %199 = vector.broadcast %cst_68 : f32 to vector<8x8xf32>
    %200 = arith.addf %198, %199 : vector<8x8xf32>
    %201 = vector.extract_strided_slice %192 {offsets = [0, 8], sizes = [8, 8], strides = [1, 1]} : vector<8x32xf32> to vector<8x8xf32>
    %cst_69 = arith.constant 5.000000e-01 : f32
    %202 = vector.broadcast %cst_69 : f32 to vector<8x8xf32>
    %203 = arith.mulf %202, %201 : vector<8x8xf32>
    %204 = math.tanh %203 : vector<8x8xf32>
    %cst_70 = arith.constant 5.000000e-01 : f32
    %205 = vector.broadcast %cst_70 : f32 to vector<8x8xf32>
    %206 = arith.mulf %205, %204 : vector<8x8xf32>
    %cst_71 = arith.constant 5.000000e-01 : f32
    %207 = vector.broadcast %cst_71 : f32 to vector<8x8xf32>
    %208 = arith.addf %206, %207 : vector<8x8xf32>
    %209 = vector.extract_strided_slice %192 {offsets = [0, 16], sizes = [8, 8], strides = [1, 1]} : vector<8x32xf32> to vector<8x8xf32>
    %210 = math.tanh %209 : vector<8x8xf32>
    %211 = vector.extract_strided_slice %192 {offsets = [0, 24], sizes = [8, 8], strides = [1, 1]} : vector<8x32xf32> to vector<8x8xf32>
    %cst_72 = arith.constant 5.000000e-01 : f32
    %212 = vector.broadcast %cst_72 : f32 to vector<8x8xf32>
    %213 = arith.mulf %212, %211 : vector<8x8xf32>
    %214 = math.tanh %213 : vector<8x8xf32>
    %cst_73 = arith.constant 5.000000e-01 : f32
    %215 = vector.broadcast %cst_73 : f32 to vector<8x8xf32>
    %216 = arith.mulf %215, %214 : vector<8x8xf32>
    %cst_74 = arith.constant 5.000000e-01 : f32
    %217 = vector.broadcast %cst_74 : f32 to vector<8x8xf32>
    %218 = arith.addf %216, %217 : vector<8x8xf32>
    %219 = arith.mulf %208, %187 : vector<8x8xf32>
    %220 = arith.mulf %200, %210 : vector<8x8xf32>
    %221 = arith.addf %219, %220 : vector<8x8xf32>
    %222 = math.tanh %221 : vector<8x8xf32>
    %223 = arith.mulf %218, %222 : vector<8x8xf32>
    %224 = vector.extract_strided_slice %51 {offsets = [40, 0], sizes = [8, 32], strides = [1, 1]} : vector<64x32xf32> to vector<8x32xf32>
    %cst_75 = arith.constant dense<0.000000e+00> : vector<8x32xf32>
    %225 = tpu.matmul %223, %9, %cst_75 {dimension_numbers = #tpu.dot_dimension_numbers<[1], [0], [0], [1], [0, 0, 1, 1], [], []>} : vector<8x8xf32>, vector<8x32xf32>, vector<8x32xf32> -> vector<8x32xf32>
    %226 = arith.addf %224, %225 : vector<8x32xf32>
    %227 = vector.extract_strided_slice %226 {offsets = [0, 0], sizes = [8, 8], strides = [1, 1]} : vector<8x32xf32> to vector<8x8xf32>
    %cst_76 = arith.constant 5.000000e-01 : f32
    %228 = vector.broadcast %cst_76 : f32 to vector<8x8xf32>
    %229 = arith.mulf %228, %227 : vector<8x8xf32>
    %230 = math.tanh %229 : vector<8x8xf32>
    %cst_77 = arith.constant 5.000000e-01 : f32
    %231 = vector.broadcast %cst_77 : f32 to vector<8x8xf32>
    %232 = arith.mulf %231, %230 : vector<8x8xf32>
    %cst_78 = arith.constant 5.000000e-01 : f32
    %233 = vector.broadcast %cst_78 : f32 to vector<8x8xf32>
    %234 = arith.addf %232, %233 : vector<8x8xf32>
    %235 = vector.extract_strided_slice %226 {offsets = [0, 8], sizes = [8, 8], strides = [1, 1]} : vector<8x32xf32> to vector<8x8xf32>
    %cst_79 = arith.constant 5.000000e-01 : f32
    %236 = vector.broadcast %cst_79 : f32 to vector<8x8xf32>
    %237 = arith.mulf %236, %235 : vector<8x8xf32>
    %238 = math.tanh %237 : vector<8x8xf32>
    %cst_80 = arith.constant 5.000000e-01 : f32
    %239 = vector.broadcast %cst_80 : f32 to vector<8x8xf32>
    %240 = arith.mulf %239, %238 : vector<8x8xf32>
    %cst_81 = arith.constant 5.000000e-01 : f32
    %241 = vector.broadcast %cst_81 : f32 to vector<8x8xf32>
    %242 = arith.addf %240, %241 : vector<8x8xf32>
    %243 = vector.extract_strided_slice %226 {offsets = [0, 16], sizes = [8, 8], strides = [1, 1]} : vector<8x32xf32> to vector<8x8xf32>
    %244 = math.tanh %243 : vector<8x8xf32>
    %245 = vector.extract_strided_slice %226 {offsets = [0, 24], sizes = [8, 8], strides = [1, 1]} : vector<8x32xf32> to vector<8x8xf32>
    %cst_82 = arith.constant 5.000000e-01 : f32
    %246 = vector.broadcast %cst_82 : f32 to vector<8x8xf32>
    %247 = arith.mulf %246, %245 : vector<8x8xf32>
    %248 = math.tanh %247 : vector<8x8xf32>
    %cst_83 = arith.constant 5.000000e-01 : f32
    %249 = vector.broadcast %cst_83 : f32 to vector<8x8xf32>
    %250 = arith.mulf %249, %248 : vector<8x8xf32>
    %cst_84 = arith.constant 5.000000e-01 : f32
    %251 = vector.broadcast %cst_84 : f32 to vector<8x8xf32>
    %252 = arith.addf %250, %251 : vector<8x8xf32>
    %253 = arith.mulf %242, %221 : vector<8x8xf32>
    %254 = arith.mulf %234, %244 : vector<8x8xf32>
    %255 = arith.addf %253, %254 : vector<8x8xf32>
    %256 = math.tanh %255 : vector<8x8xf32>
    %257 = arith.mulf %252, %256 : vector<8x8xf32>
    %258 = vector.extract_strided_slice %51 {offsets = [48, 0], sizes = [8, 32], strides = [1, 1]} : vector<64x32xf32> to vector<8x32xf32>
    %cst_85 = arith.constant dense<0.000000e+00> : vector<8x32xf32>
    %259 = tpu.matmul %257, %9, %cst_85 {dimension_numbers = #tpu.dot_dimension_numbers<[1], [0], [0], [1], [0, 0, 1, 1], [], []>} : vector<8x8xf32>, vector<8x32xf32>, vector<8x32xf32> -> vector<8x32xf32>
    %260 = arith.addf %258, %259 : vector<8x32xf32>
    %261 = vector.extract_strided_slice %260 {offsets = [0, 0], sizes = [8, 8], strides = [1, 1]} : vector<8x32xf32> to vector<8x8xf32>
    %cst_86 = arith.constant 5.000000e-01 : f32
    %262 = vector.broadcast %cst_86 : f32 to vector<8x8xf32>
    %263 = arith.mulf %262, %261 : vector<8x8xf32>
    %264 = math.tanh %263 : vector<8x8xf32>
    %cst_87 = arith.constant 5.000000e-01 : f32
    %265 = vector.broadcast %cst_87 : f32 to vector<8x8xf32>
    %266 = arith.mulf %265, %264 : vector<8x8xf32>
    %cst_88 = arith.constant 5.000000e-01 : f32
    %267 = vector.broadcast %cst_88 : f32 to vector<8x8xf32>
    %268 = arith.addf %266, %267 : vector<8x8xf32>
    %269 = vector.extract_strided_slice %260 {offsets = [0, 8], sizes = [8, 8], strides = [1, 1]} : vector<8x32xf32> to vector<8x8xf32>
    %cst_89 = arith.constant 5.000000e-01 : f32
    %270 = vector.broadcast %cst_89 : f32 to vector<8x8xf32>
    %271 = arith.mulf %270, %269 : vector<8x8xf32>
    %272 = math.tanh %271 : vector<8x8xf32>
    %cst_90 = arith.constant 5.000000e-01 : f32
    %273 = vector.broadcast %cst_90 : f32 to vector<8x8xf32>
    %274 = arith.mulf %273, %272 : vector<8x8xf32>
    %cst_91 = arith.constant 5.000000e-01 : f32
    %275 = vector.broadcast %cst_91 : f32 to vector<8x8xf32>
    %276 = arith.addf %274, %275 : vector<8x8xf32>
    %277 = vector.extract_strided_slice %260 {offsets = [0, 16], sizes = [8, 8], strides = [1, 1]} : vector<8x32xf32> to vector<8x8xf32>
    %278 = math.tanh %277 : vector<8x8xf32>
    %279 = vector.extract_strided_slice %260 {offsets = [0, 24], sizes = [8, 8], strides = [1, 1]} : vector<8x32xf32> to vector<8x8xf32>
    %cst_92 = arith.constant 5.000000e-01 : f32
    %280 = vector.broadcast %cst_92 : f32 to vector<8x8xf32>
    %281 = arith.mulf %280, %279 : vector<8x8xf32>
    %282 = math.tanh %281 : vector<8x8xf32>
    %cst_93 = arith.constant 5.000000e-01 : f32
    %283 = vector.broadcast %cst_93 : f32 to vector<8x8xf32>
    %284 = arith.mulf %283, %282 : vector<8x8xf32>
    %cst_94 = arith.constant 5.000000e-01 : f32
    %285 = vector.broadcast %cst_94 : f32 to vector<8x8xf32>
    %286 = arith.addf %284, %285 : vector<8x8xf32>
    %287 = arith.mulf %276, %255 : vector<8x8xf32>
    %288 = arith.mulf %268, %278 : vector<8x8xf32>
    %289 = arith.addf %287, %288 : vector<8x8xf32>
    %290 = math.tanh %289 : vector<8x8xf32>
    %291 = arith.mulf %286, %290 : vector<8x8xf32>
    %292 = vector.extract_strided_slice %51 {offsets = [56, 0], sizes = [8, 32], strides = [1, 1]} : vector<64x32xf32> to vector<8x32xf32>
    %cst_95 = arith.constant dense<0.000000e+00> : vector<8x32xf32>
    %293 = tpu.matmul %291, %9, %cst_95 {dimension_numbers = #tpu.dot_dimension_numbers<[1], [0], [0], [1], [0, 0, 1, 1], [], []>} : vector<8x8xf32>, vector<8x32xf32>, vector<8x32xf32> -> vector<8x32xf32>
    %294 = arith.addf %292, %293 : vector<8x32xf32>
    %295 = vector.extract_strided_slice %294 {offsets = [0, 0], sizes = [8, 8], strides = [1, 1]} : vector<8x32xf32> to vector<8x8xf32>
    %cst_96 = arith.constant 5.000000e-01 : f32
    %296 = vector.broadcast %cst_96 : f32 to vector<8x8xf32>
    %297 = arith.mulf %296, %295 : vector<8x8xf32>
    %298 = math.tanh %297 : vector<8x8xf32>
    %cst_97 = arith.constant 5.000000e-01 : f32
    %299 = vector.broadcast %cst_97 : f32 to vector<8x8xf32>
    %300 = arith.mulf %299, %298 : vector<8x8xf32>
    %cst_98 = arith.constant 5.000000e-01 : f32
    %301 = vector.broadcast %cst_98 : f32 to vector<8x8xf32>
    %302 = arith.addf %300, %301 : vector<8x8xf32>
    %303 = vector.extract_strided_slice %294 {offsets = [0, 8], sizes = [8, 8], strides = [1, 1]} : vector<8x32xf32> to vector<8x8xf32>
    %cst_99 = arith.constant 5.000000e-01 : f32
    %304 = vector.broadcast %cst_99 : f32 to vector<8x8xf32>
    %305 = arith.mulf %304, %303 : vector<8x8xf32>
    %306 = math.tanh %305 : vector<8x8xf32>
    %cst_100 = arith.constant 5.000000e-01 : f32
    %307 = vector.broadcast %cst_100 : f32 to vector<8x8xf32>
    %308 = arith.mulf %307, %306 : vector<8x8xf32>
    %cst_101 = arith.constant 5.000000e-01 : f32
    %309 = vector.broadcast %cst_101 : f32 to vector<8x8xf32>
    %310 = arith.addf %308, %309 : vector<8x8xf32>
    %311 = vector.extract_strided_slice %294 {offsets = [0, 16], sizes = [8, 8], strides = [1, 1]} : vector<8x32xf32> to vector<8x8xf32>
    %312 = math.tanh %311 : vector<8x8xf32>
    %313 = vector.extract_strided_slice %294 {offsets = [0, 24], sizes = [8, 8], strides = [1, 1]} : vector<8x32xf32> to vector<8x8xf32>
    %cst_102 = arith.constant 5.000000e-01 : f32
    %314 = vector.broadcast %cst_102 : f32 to vector<8x8xf32>
    %315 = arith.mulf %314, %313 : vector<8x8xf32>
    %316 = math.tanh %315 : vector<8x8xf32>
    %cst_103 = arith.constant 5.000000e-01 : f32
    %317 = vector.broadcast %cst_103 : f32 to vector<8x8xf32>
    %318 = arith.mulf %317, %316 : vector<8x8xf32>
    %cst_104 = arith.constant 5.000000e-01 : f32
    %319 = vector.broadcast %cst_104 : f32 to vector<8x8xf32>
    %320 = arith.addf %318, %319 : vector<8x8xf32>
    %321 = arith.mulf %310, %289 : vector<8x8xf32>
    %322 = arith.mulf %302, %312 : vector<8x8xf32>
    %323 = arith.addf %321, %322 : vector<8x8xf32>
    %324 = math.tanh %323 : vector<8x8xf32>
    %325 = arith.mulf %320, %324 : vector<8x8xf32>
    %c0_105 = arith.constant 0 : index
    %c0_106 = arith.constant 0 : index
    %326 = vector.load %arg1[%c0_105, %c0_106] : memref<8x2xf32, #tpu.memory_space<vmem>>, vector<8x2xf32>
    %cst_107 = arith.constant dense<0.000000e+00> : vector<8x64xf32>
    %327 = tpu.matmul %326, %17, %cst_107 {dimension_numbers = #tpu.dot_dimension_numbers<[1], [0], [0], [1], [0, 0, 1, 1], [], []>} : vector<8x2xf32>, vector<2x64xf32>, vector<8x64xf32> -> vector<8x64xf32>
    %328 = vector.broadcast %19 : vector<1x64xf32> to vector<8x64xf32>
    %329 = arith.addf %327, %328 : vector<8x64xf32>
    %cst_108 = arith.constant 0.000000e+00 : f32
    %330 = vector.broadcast %cst_108 : f32 to vector<8x8xf32>
    %cst_109 = arith.constant 0.000000e+00 : f32
    %331 = vector.broadcast %cst_109 : f32 to vector<8x16xf32>
    %332 = arith.maximumf %42, %331 : vector<8x16xf32>
    %333 = tpu.concatenate %332, %325 in 1 : vector<8x16xf32>, vector<8x8xf32> -> vector<8x24xf32>
    %cst_110 = arith.constant dense<0.000000e+00> : vector<8x32xf32>
    %334 = tpu.matmul %333, %11, %cst_110 {dimension_numbers = #tpu.dot_dimension_numbers<[1], [0], [0], [1], [0, 0, 1, 1], [], []>} : vector<8x24xf32>, vector<24x32xf32>, vector<8x32xf32> -> vector<8x32xf32>
    %335 = arith.addf %334, %15 : vector<8x32xf32>
    %336 = vector.extract_strided_slice %335 {offsets = [0, 0], sizes = [8, 8], strides = [1, 1]} : vector<8x32xf32> to vector<8x8xf32>
    %cst_111 = arith.constant 5.000000e-01 : f32
    %337 = vector.broadcast %cst_111 : f32 to vector<8x8xf32>
    %338 = arith.mulf %337, %336 : vector<8x8xf32>
    %339 = math.tanh %338 : vector<8x8xf32>
    %cst_112 = arith.constant 5.000000e-01 : f32
    %340 = vector.broadcast %cst_112 : f32 to vector<8x8xf32>
    %341 = arith.mulf %340, %339 : vector<8x8xf32>
    %cst_113 = arith.constant 5.000000e-01 : f32
    %342 = vector.broadcast %cst_113 : f32 to vector<8x8xf32>
    %343 = arith.addf %341, %342 : vector<8x8xf32>
    %344 = vector.extract_strided_slice %335 {offsets = [0, 8], sizes = [8, 8], strides = [1, 1]} : vector<8x32xf32> to vector<8x8xf32>
    %cst_114 = arith.constant 5.000000e-01 : f32
    %345 = vector.broadcast %cst_114 : f32 to vector<8x8xf32>
    %346 = arith.mulf %345, %344 : vector<8x8xf32>
    %347 = math.tanh %346 : vector<8x8xf32>
    %cst_115 = arith.constant 5.000000e-01 : f32
    %348 = vector.broadcast %cst_115 : f32 to vector<8x8xf32>
    %349 = arith.mulf %348, %347 : vector<8x8xf32>
    %cst_116 = arith.constant 5.000000e-01 : f32
    %350 = vector.broadcast %cst_116 : f32 to vector<8x8xf32>
    %351 = arith.addf %349, %350 : vector<8x8xf32>
    %352 = vector.extract_strided_slice %335 {offsets = [0, 16], sizes = [8, 8], strides = [1, 1]} : vector<8x32xf32> to vector<8x8xf32>
    %353 = math.tanh %352 : vector<8x8xf32>
    %354 = vector.extract_strided_slice %335 {offsets = [0, 24], sizes = [8, 8], strides = [1, 1]} : vector<8x32xf32> to vector<8x8xf32>
    %cst_117 = arith.constant 5.000000e-01 : f32
    %355 = vector.broadcast %cst_117 : f32 to vector<8x8xf32>
    %356 = arith.mulf %355, %354 : vector<8x8xf32>
    %357 = math.tanh %356 : vector<8x8xf32>
    %cst_118 = arith.constant 5.000000e-01 : f32
    %358 = vector.broadcast %cst_118 : f32 to vector<8x8xf32>
    %359 = arith.mulf %358, %357 : vector<8x8xf32>
    %cst_119 = arith.constant 5.000000e-01 : f32
    %360 = vector.broadcast %cst_119 : f32 to vector<8x8xf32>
    %361 = arith.addf %359, %360 : vector<8x8xf32>
    %362 = arith.mulf %351, %330 : vector<8x8xf32>
    %363 = arith.mulf %343, %353 : vector<8x8xf32>
    %364 = arith.addf %362, %363 : vector<8x8xf32>
    %365 = math.tanh %364 : vector<8x8xf32>
    %366 = arith.mulf %361, %365 : vector<8x8xf32>
    %cst_120 = arith.constant dense<0.000000e+00> : vector<8x128xf32>
    %367 = tpu.matmul %366, %20, %cst_120 {dimension_numbers = #tpu.dot_dimension_numbers<[1], [0], [0], [1], [0, 0, 1, 1], [], []>} : vector<8x8xf32>, vector<8x128xf32>, vector<8x128xf32> -> vector<8x128xf32>
    %368 = vector.extract_strided_slice %367 {offsets = [0, 0], sizes = [8, 64], strides = [1, 1]} : vector<8x128xf32> to vector<8x64xf32>
    %369 = arith.addf %329, %368 : vector<8x64xf32>
    %370 = vector.extract_strided_slice %367 {offsets = [0, 64], sizes = [8, 64], strides = [1, 1]} : vector<8x128xf32> to vector<8x64xf32>
    %371 = arith.subf %370, %327 : vector<8x64xf32>
    %372 = vector.shape_cast %369 : vector<8x64xf32> to vector<8x1x64xf32>
    %373 = vector.shape_cast %371 : vector<8x64xf32> to vector<1x8x64xf32>
    %374 = vector.broadcast %372 : vector<8x1x64xf32> to vector<8x8x64xf32>
    %375 = vector.broadcast %373 : vector<1x8x64xf32> to vector<8x8x64xf32>
    %376 = arith.addf %374, %375 : vector<8x8x64xf32>
    %cst_121 = arith.constant 0.000000e+00 : f32
    %377 = vector.broadcast %cst_121 : f32 to vector<8x8x64xf32>
    %378 = arith.maximumf %376, %377 : vector<8x8x64xf32>
    %379 = vector.shape_cast %378 : vector<8x8x64xf32> to vector<64x64xf32>
    %cst_122 = arith.constant dense<0.000000e+00> : vector<64x8xf32>
    %380 = tpu.matmul %379, %22, %cst_122 {dimension_numbers = #tpu.dot_dimension_numbers<[1], [0], [0], [1], [0, 0, 1, 1], [], []>} : vector<64x64xf32>, vector<64x8xf32>, vector<64x8xf32> -> vector<64x8xf32>
    %381 = arith.addf %380, %26 : vector<64x8xf32>
    %cst_123 = arith.constant 0.000000e+00 : f32
    %382 = vector.broadcast %cst_123 : f32 to vector<64x8xf32>
    %383 = arith.maximumf %381, %382 : vector<64x8xf32>
    %384 = vector.shape_cast %383 : vector<64x8xf32> to vector<8x8x8xf32>
    %c0_124 = arith.constant 0 : index
    %c0_125 = arith.constant 0 : index
    %c0_126 = arith.constant 0 : index
    %385 = vector.load %arg2[%c0_124, %c0_125, %c0_126] : memref<12x8x8xf32, #tpu.memory_space<vmem>>, vector<1x8x8xf32>
    %386 = vector.shape_cast %385 : vector<1x8x8xf32> to vector<8x8xf32>
    %387 = vector.shape_cast %386 : vector<8x8xf32> to vector<8x8x1xf32>
    %388 = vector.broadcast %387 : vector<8x8x1xf32> to vector<8x8x8xf32>
    %389 = arith.mulf %384, %388 : vector<8x8x8xf32>
    %cst_127 = arith.constant dense<0xFF800000> : vector<8x8xf32>
    %390 = vector.multi_reduction <maximumf>, %389, %cst_127 [1] : vector<8x8x8xf32> to vector<8x8xf32>
    %391 = tpu.concatenate %366, %390 in 1 : vector<8x8xf32>, vector<8x8xf32> -> vector<8x16xf32>
    %cst_128 = arith.constant dense<0.000000e+00> : vector<8x20xf32>
    %392 = tpu.matmul %391, %28, %cst_128 {dimension_numbers = #tpu.dot_dimension_numbers<[1], [0], [0], [1], [0, 0, 1, 1], [], []>} : vector<8x16xf32>, vector<16x20xf32>, vector<8x20xf32> -> vector<8x20xf32>
    %393 = vector.extract_strided_slice %392 {offsets = [0, 0], sizes = [8, 4], strides = [1, 1]} : vector<8x20xf32> to vector<8x4xf32>
    %394 = arith.addf %393, %32 : vector<8x4xf32>
    %c0_129 = arith.constant 0 : index
    %c0_130 = arith.constant 0 : index
    %c0_131 = arith.constant 0 : index
    %395 = vector.load %arg7[%c0_129, %c0_130, %c0_131] : memref<12x8x4xf32, #tpu.memory_space<vmem>>, vector<1x8x4xf32>
    %396 = vector.shape_cast %395 : vector<1x8x4xf32> to vector<8x4xf32>
    %397 = vector.shape_cast %394 : vector<8x4xf32> to vector<1x8x4xf32>
    tpu.vector_store %arg7[%c0_129, %c0_130, %c0_131], %397 {strides = array<i32>} : memref<12x8x4xf32, #tpu.memory_space<vmem>>, vector<1x8x4xf32>,
    %c0_132 = arith.constant 0 : index
    %c0_133 = arith.constant 0 : index
    %c0_134 = arith.constant 0 : index
    %398 = vector.load %arg5[%c0_132, %c0_133, %c0_134] : memref<12x8x2xf32, #tpu.memory_space<vmem>>, vector<1x8x2xf32>
    %399 = vector.shape_cast %398 : vector<1x8x2xf32> to vector<8x2xf32>
    %400 = vector.extract_strided_slice %394 {offsets = [0, 2], sizes = [8, 2], strides = [1, 1]} : vector<8x4xf32> to vector<8x2xf32>
    %cst_135 = arith.constant 5.000000e-01 : f32
    %401 = vector.broadcast %cst_135 : f32 to vector<8x2xf32>
    %402 = arith.mulf %401, %400 : vector<8x2xf32>
    %403 = math.exp %402 : vector<8x2xf32>
    %404 = arith.mulf %399, %403 : vector<8x2xf32>
    %405 = vector.extract_strided_slice %392 {offsets = [0, 4], sizes = [8, 16], strides = [1, 1]} : vector<8x20xf32> to vector<8x16xf32>
    %406 = arith.addf %405, %38 : vector<8x16xf32>
    %cst_136 = arith.constant dense<0.000000e+00> : vector<8x16xf32>
    %407 = tpu.matmul %404, %34, %cst_136 {dimension_numbers = #tpu.dot_dimension_numbers<[1], [0], [0], [1], [0, 0, 1, 1], [], []>} : vector<8x2xf32>, vector<2x16xf32>, vector<8x16xf32> -> vector<8x16xf32>
    %408 = arith.addf %406, %407 : vector<8x16xf32>
    %cst_137 = arith.constant 0.000000e+00 : f32
    %409 = vector.broadcast %cst_137 : f32 to vector<8x16xf32>
    %410 = arith.maximumf %408, %409 : vector<8x16xf32>
    %411 = tpu.concatenate %410, %366 in 1 : vector<8x16xf32>, vector<8x8xf32> -> vector<8x24xf32>
    %cst_138 = arith.constant dense<0.000000e+00> : vector<8x32xf32>
    %412 = tpu.matmul %411, %11, %cst_138 {dimension_numbers = #tpu.dot_dimension_numbers<[1], [0], [0], [1], [0, 0, 1, 1], [], []>} : vector<8x24xf32>, vector<24x32xf32>, vector<8x32xf32> -> vector<8x32xf32>
    %413 = arith.addf %412, %15 : vector<8x32xf32>
    %414 = vector.extract_strided_slice %413 {offsets = [0, 0], sizes = [8, 8], strides = [1, 1]} : vector<8x32xf32> to vector<8x8xf32>
    %cst_139 = arith.constant 5.000000e-01 : f32
    %415 = vector.broadcast %cst_139 : f32 to vector<8x8xf32>
    %416 = arith.mulf %415, %414 : vector<8x8xf32>
    %417 = math.tanh %416 : vector<8x8xf32>
    %cst_140 = arith.constant 5.000000e-01 : f32
    %418 = vector.broadcast %cst_140 : f32 to vector<8x8xf32>
    %419 = arith.mulf %418, %417 : vector<8x8xf32>
    %cst_141 = arith.constant 5.000000e-01 : f32
    %420 = vector.broadcast %cst_141 : f32 to vector<8x8xf32>
    %421 = arith.addf %419, %420 : vector<8x8xf32>
    %422 = vector.extract_strided_slice %413 {offsets = [0, 8], sizes = [8, 8], strides = [1, 1]} : vector<8x32xf32> to vector<8x8xf32>
    %cst_142 = arith.constant 5.000000e-01 : f32
    %423 = vector.broadcast %cst_142 : f32 to vector<8x8xf32>
    %424 = arith.mulf %423, %422 : vector<8x8xf32>
    %425 = math.tanh %424 : vector<8x8xf32>
    %cst_143 = arith.constant 5.000000e-01 : f32
    %426 = vector.broadcast %cst_143 : f32 to vector<8x8xf32>
    %427 = arith.mulf %426, %425 : vector<8x8xf32>
    %cst_144 = arith.constant 5.000000e-01 : f32
    %428 = vector.broadcast %cst_144 : f32 to vector<8x8xf32>
    %429 = arith.addf %427, %428 : vector<8x8xf32>
    %430 = vector.extract_strided_slice %413 {offsets = [0, 16], sizes = [8, 8], strides = [1, 1]} : vector<8x32xf32> to vector<8x8xf32>
    %431 = math.tanh %430 : vector<8x8xf32>
    %432 = vector.extract_strided_slice %413 {offsets = [0, 24], sizes = [8, 8], strides = [1, 1]} : vector<8x32xf32> to vector<8x8xf32>
    %cst_145 = arith.constant 5.000000e-01 : f32
    %433 = vector.broadcast %cst_145 : f32 to vector<8x8xf32>
    %434 = arith.mulf %433, %432 : vector<8x8xf32>
    %435 = math.tanh %434 : vector<8x8xf32>
    %cst_146 = arith.constant 5.000000e-01 : f32
    %436 = vector.broadcast %cst_146 : f32 to vector<8x8xf32>
    %437 = arith.mulf %436, %435 : vector<8x8xf32>
    %cst_147 = arith.constant 5.000000e-01 : f32
    %438 = vector.broadcast %cst_147 : f32 to vector<8x8xf32>
    %439 = arith.addf %437, %438 : vector<8x8xf32>
    %440 = arith.mulf %429, %364 : vector<8x8xf32>
    %441 = arith.mulf %421, %431 : vector<8x8xf32>
    %442 = arith.addf %440, %441 : vector<8x8xf32>
    %443 = math.tanh %442 : vector<8x8xf32>
    %444 = arith.mulf %439, %443 : vector<8x8xf32>
    %cst_148 = arith.constant dense<0.000000e+00> : vector<8x128xf32>
    %445 = tpu.matmul %444, %20, %cst_148 {dimension_numbers = #tpu.dot_dimension_numbers<[1], [0], [0], [1], [0, 0, 1, 1], [], []>} : vector<8x8xf32>, vector<8x128xf32>, vector<8x128xf32> -> vector<8x128xf32>
    %446 = vector.extract_strided_slice %445 {offsets = [0, 0], sizes = [8, 64], strides = [1, 1]} : vector<8x128xf32> to vector<8x64xf32>
    %447 = arith.addf %329, %446 : vector<8x64xf32>
    %448 = vector.extract_strided_slice %445 {offsets = [0, 64], sizes = [8, 64], strides = [1, 1]} : vector<8x128xf32> to vector<8x64xf32>
    %449 = arith.subf %448, %327 : vector<8x64xf32>
    %450 = vector.shape_cast %447 : vector<8x64xf32> to vector<8x1x64xf32>
    %451 = vector.shape_cast %449 : vector<8x64xf32> to vector<1x8x64xf32>
    %452 = vector.broadcast %450 : vector<8x1x64xf32> to vector<8x8x64xf32>
    %453 = vector.broadcast %451 : vector<1x8x64xf32> to vector<8x8x64xf32>
    %454 = arith.addf %452, %453 : vector<8x8x64xf32>
    %cst_149 = arith.constant 0.000000e+00 : f32
    %455 = vector.broadcast %cst_149 : f32 to vector<8x8x64xf32>
    %456 = arith.maximumf %454, %455 : vector<8x8x64xf32>
    %457 = vector.shape_cast %456 : vector<8x8x64xf32> to vector<64x64xf32>
    %cst_150 = arith.constant dense<0.000000e+00> : vector<64x8xf32>
    %458 = tpu.matmul %457, %22, %cst_150 {dimension_numbers = #tpu.dot_dimension_numbers<[1], [0], [0], [1], [0, 0, 1, 1], [], []>} : vector<64x64xf32>, vector<64x8xf32>, vector<64x8xf32> -> vector<64x8xf32>
    %459 = arith.addf %458, %26 : vector<64x8xf32>
    %cst_151 = arith.constant 0.000000e+00 : f32
    %460 = vector.broadcast %cst_151 : f32 to vector<64x8xf32>
    %461 = arith.maximumf %459, %460 : vector<64x8xf32>
    %462 = vector.shape_cast %461 : vector<64x8xf32> to vector<8x8x8xf32>
    %c1 = arith.constant 1 : index
    %c0_152 = arith.constant 0 : index
    %c0_153 = arith.constant 0 : index
    %463 = vector.load %arg2[%c1, %c0_152, %c0_153] : memref<12x8x8xf32, #tpu.memory_space<vmem>>, vector<1x8x8xf32>
    %464 = vector.shape_cast %463 : vector<1x8x8xf32> to vector<8x8xf32>
    %465 = vector.shape_cast %464 : vector<8x8xf32> to vector<8x8x1xf32>
    %466 = vector.broadcast %465 : vector<8x8x1xf32> to vector<8x8x8xf32>
    %467 = arith.mulf %462, %466 : vector<8x8x8xf32>
    %cst_154 = arith.constant dense<0xFF800000> : vector<8x8xf32>
    %468 = vector.multi_reduction <maximumf>, %467, %cst_154 [1] : vector<8x8x8xf32> to vector<8x8xf32>
    %469 = tpu.concatenate %444, %468 in 1 : vector<8x8xf32>, vector<8x8xf32> -> vector<8x16xf32>
    %cst_155 = arith.constant dense<0.000000e+00> : vector<8x20xf32>
    %470 = tpu.matmul %469, %28, %cst_155 {dimension_numbers = #tpu.dot_dimension_numbers<[1], [0], [0], [1], [0, 0, 1, 1], [], []>} : vector<8x16xf32>, vector<16x20xf32>, vector<8x20xf32> -> vector<8x20xf32>
    %471 = vector.extract_strided_slice %470 {offsets = [0, 0], sizes = [8, 4], strides = [1, 1]} : vector<8x20xf32> to vector<8x4xf32>
    %472 = arith.addf %471, %32 : vector<8x4xf32>
    %c1_156 = arith.constant 1 : index
    %c0_157 = arith.constant 0 : index
    %c0_158 = arith.constant 0 : index
    %473 = vector.load %arg7[%c1_156, %c0_157, %c0_158] : memref<12x8x4xf32, #tpu.memory_space<vmem>>, vector<1x8x4xf32>
    %474 = vector.shape_cast %473 : vector<1x8x4xf32> to vector<8x4xf32>
    %475 = vector.shape_cast %472 : vector<8x4xf32> to vector<1x8x4xf32>
    tpu.vector_store %arg7[%c1_156, %c0_157, %c0_158], %475 {strides = array<i32>} : memref<12x8x4xf32, #tpu.memory_space<vmem>>, vector<1x8x4xf32>,
    %c1_159 = arith.constant 1 : index
    %c0_160 = arith.constant 0 : index
    %c0_161 = arith.constant 0 : index
    %476 = vector.load %arg5[%c1_159, %c0_160, %c0_161] : memref<12x8x2xf32, #tpu.memory_space<vmem>>, vector<1x8x2xf32>
    %477 = vector.shape_cast %476 : vector<1x8x2xf32> to vector<8x2xf32>
    %478 = vector.extract_strided_slice %472 {offsets = [0, 2], sizes = [8, 2], strides = [1, 1]} : vector<8x4xf32> to vector<8x2xf32>
    %cst_162 = arith.constant 5.000000e-01 : f32
    %479 = vector.broadcast %cst_162 : f32 to vector<8x2xf32>
    %480 = arith.mulf %479, %478 : vector<8x2xf32>
    %481 = math.exp %480 : vector<8x2xf32>
    %482 = arith.mulf %477, %481 : vector<8x2xf32>
    %483 = vector.extract_strided_slice %470 {offsets = [0, 4], sizes = [8, 16], strides = [1, 1]} : vector<8x20xf32> to vector<8x16xf32>
    %484 = arith.addf %483, %38 : vector<8x16xf32>
    %cst_163 = arith.constant dense<0.000000e+00> : vector<8x16xf32>
    %485 = tpu.matmul %482, %34, %cst_163 {dimension_numbers = #tpu.dot_dimension_numbers<[1], [0], [0], [1], [0, 0, 1, 1], [], []>} : vector<8x2xf32>, vector<2x16xf32>, vector<8x16xf32> -> vector<8x16xf32>
    %486 = arith.addf %484, %485 : vector<8x16xf32>
    %cst_164 = arith.constant 0.000000e+00 : f32
    %487 = vector.broadcast %cst_164 : f32 to vector<8x16xf32>
    %488 = arith.maximumf %486, %487 : vector<8x16xf32>
    %489 = tpu.concatenate %488, %444 in 1 : vector<8x16xf32>, vector<8x8xf32> -> vector<8x24xf32>
    %cst_165 = arith.constant dense<0.000000e+00> : vector<8x32xf32>
    %490 = tpu.matmul %489, %11, %cst_165 {dimension_numbers = #tpu.dot_dimension_numbers<[1], [0], [0], [1], [0, 0, 1, 1], [], []>} : vector<8x24xf32>, vector<24x32xf32>, vector<8x32xf32> -> vector<8x32xf32>
    %491 = arith.addf %490, %15 : vector<8x32xf32>
    %492 = vector.extract_strided_slice %491 {offsets = [0, 0], sizes = [8, 8], strides = [1, 1]} : vector<8x32xf32> to vector<8x8xf32>
    %cst_166 = arith.constant 5.000000e-01 : f32
    %493 = vector.broadcast %cst_166 : f32 to vector<8x8xf32>
    %494 = arith.mulf %493, %492 : vector<8x8xf32>
    %495 = math.tanh %494 : vector<8x8xf32>
    %cst_167 = arith.constant 5.000000e-01 : f32
    %496 = vector.broadcast %cst_167 : f32 to vector<8x8xf32>
    %497 = arith.mulf %496, %495 : vector<8x8xf32>
    %cst_168 = arith.constant 5.000000e-01 : f32
    %498 = vector.broadcast %cst_168 : f32 to vector<8x8xf32>
    %499 = arith.addf %497, %498 : vector<8x8xf32>
    %500 = vector.extract_strided_slice %491 {offsets = [0, 8], sizes = [8, 8], strides = [1, 1]} : vector<8x32xf32> to vector<8x8xf32>
    %cst_169 = arith.constant 5.000000e-01 : f32
    %501 = vector.broadcast %cst_169 : f32 to vector<8x8xf32>
    %502 = arith.mulf %501, %500 : vector<8x8xf32>
    %503 = math.tanh %502 : vector<8x8xf32>
    %cst_170 = arith.constant 5.000000e-01 : f32
    %504 = vector.broadcast %cst_170 : f32 to vector<8x8xf32>
    %505 = arith.mulf %504, %503 : vector<8x8xf32>
    %cst_171 = arith.constant 5.000000e-01 : f32
    %506 = vector.broadcast %cst_171 : f32 to vector<8x8xf32>
    %507 = arith.addf %505, %506 : vector<8x8xf32>
    %508 = vector.extract_strided_slice %491 {offsets = [0, 16], sizes = [8, 8], strides = [1, 1]} : vector<8x32xf32> to vector<8x8xf32>
    %509 = math.tanh %508 : vector<8x8xf32>
    %510 = vector.extract_strided_slice %491 {offsets = [0, 24], sizes = [8, 8], strides = [1, 1]} : vector<8x32xf32> to vector<8x8xf32>
    %cst_172 = arith.constant 5.000000e-01 : f32
    %511 = vector.broadcast %cst_172 : f32 to vector<8x8xf32>
    %512 = arith.mulf %511, %510 : vector<8x8xf32>
    %513 = math.tanh %512 : vector<8x8xf32>
    %cst_173 = arith.constant 5.000000e-01 : f32
    %514 = vector.broadcast %cst_173 : f32 to vector<8x8xf32>
    %515 = arith.mulf %514, %513 : vector<8x8xf32>
    %cst_174 = arith.constant 5.000000e-01 : f32
    %516 = vector.broadcast %cst_174 : f32 to vector<8x8xf32>
    %517 = arith.addf %515, %516 : vector<8x8xf32>
    %518 = arith.mulf %507, %442 : vector<8x8xf32>
    %519 = arith.mulf %499, %509 : vector<8x8xf32>
    %520 = arith.addf %518, %519 : vector<8x8xf32>
    %521 = math.tanh %520 : vector<8x8xf32>
    %522 = arith.mulf %517, %521 : vector<8x8xf32>
    %cst_175 = arith.constant dense<0.000000e+00> : vector<8x128xf32>
    %523 = tpu.matmul %522, %20, %cst_175 {dimension_numbers = #tpu.dot_dimension_numbers<[1], [0], [0], [1], [0, 0, 1, 1], [], []>} : vector<8x8xf32>, vector<8x128xf32>, vector<8x128xf32> -> vector<8x128xf32>
    %524 = vector.extract_strided_slice %523 {offsets = [0, 0], sizes = [8, 64], strides = [1, 1]} : vector<8x128xf32> to vector<8x64xf32>
    %525 = arith.addf %329, %524 : vector<8x64xf32>
    %526 = vector.extract_strided_slice %523 {offsets = [0, 64], sizes = [8, 64], strides = [1, 1]} : vector<8x128xf32> to vector<8x64xf32>
    %527 = arith.subf %526, %327 : vector<8x64xf32>
    %528 = vector.shape_cast %525 : vector<8x64xf32> to vector<8x1x64xf32>
    %529 = vector.shape_cast %527 : vector<8x64xf32> to vector<1x8x64xf32>
    %530 = vector.broadcast %528 : vector<8x1x64xf32> to vector<8x8x64xf32>
    %531 = vector.broadcast %529 : vector<1x8x64xf32> to vector<8x8x64xf32>
    %532 = arith.addf %530, %531 : vector<8x8x64xf32>
    %cst_176 = arith.constant 0.000000e+00 : f32
    %533 = vector.broadcast %cst_176 : f32 to vector<8x8x64xf32>
    %534 = arith.maximumf %532, %533 : vector<8x8x64xf32>
    %535 = vector.shape_cast %534 : vector<8x8x64xf32> to vector<64x64xf32>
    %cst_177 = arith.constant dense<0.000000e+00> : vector<64x8xf32>
    %536 = tpu.matmul %535, %22, %cst_177 {dimension_numbers = #tpu.dot_dimension_numbers<[1], [0], [0], [1], [0, 0, 1, 1], [], []>} : vector<64x64xf32>, vector<64x8xf32>, vector<64x8xf32> -> vector<64x8xf32>
    %537 = arith.addf %536, %26 : vector<64x8xf32>
    %cst_178 = arith.constant 0.000000e+00 : f32
    %538 = vector.broadcast %cst_178 : f32 to vector<64x8xf32>
    %539 = arith.maximumf %537, %538 : vector<64x8xf32>
    %540 = vector.shape_cast %539 : vector<64x8xf32> to vector<8x8x8xf32>
    %c2 = arith.constant 2 : index
    %c0_179 = arith.constant 0 : index
    %c0_180 = arith.constant 0 : index
    %541 = vector.load %arg2[%c2, %c0_179, %c0_180] : memref<12x8x8xf32, #tpu.memory_space<vmem>>, vector<1x8x8xf32>
    %542 = vector.shape_cast %541 : vector<1x8x8xf32> to vector<8x8xf32>
    %543 = vector.shape_cast %542 : vector<8x8xf32> to vector<8x8x1xf32>
    %544 = vector.broadcast %543 : vector<8x8x1xf32> to vector<8x8x8xf32>
    %545 = arith.mulf %540, %544 : vector<8x8x8xf32>
    %cst_181 = arith.constant dense<0xFF800000> : vector<8x8xf32>
    %546 = vector.multi_reduction <maximumf>, %545, %cst_181 [1] : vector<8x8x8xf32> to vector<8x8xf32>
    %547 = tpu.concatenate %522, %546 in 1 : vector<8x8xf32>, vector<8x8xf32> -> vector<8x16xf32>
    %cst_182 = arith.constant dense<0.000000e+00> : vector<8x20xf32>
    %548 = tpu.matmul %547, %28, %cst_182 {dimension_numbers = #tpu.dot_dimension_numbers<[1], [0], [0], [1], [0, 0, 1, 1], [], []>} : vector<8x16xf32>, vector<16x20xf32>, vector<8x20xf32> -> vector<8x20xf32>
    %549 = vector.extract_strided_slice %548 {offsets = [0, 0], sizes = [8, 4], strides = [1, 1]} : vector<8x20xf32> to vector<8x4xf32>
    %550 = arith.addf %549, %32 : vector<8x4xf32>
    %c2_183 = arith.constant 2 : index
    %c0_184 = arith.constant 0 : index
    %c0_185 = arith.constant 0 : index
    %551 = vector.load %arg7[%c2_183, %c0_184, %c0_185] : memref<12x8x4xf32, #tpu.memory_space<vmem>>, vector<1x8x4xf32>
    %552 = vector.shape_cast %551 : vector<1x8x4xf32> to vector<8x4xf32>
    %553 = vector.shape_cast %550 : vector<8x4xf32> to vector<1x8x4xf32>
    tpu.vector_store %arg7[%c2_183, %c0_184, %c0_185], %553 {strides = array<i32>} : memref<12x8x4xf32, #tpu.memory_space<vmem>>, vector<1x8x4xf32>,
    %c2_186 = arith.constant 2 : index
    %c0_187 = arith.constant 0 : index
    %c0_188 = arith.constant 0 : index
    %554 = vector.load %arg5[%c2_186, %c0_187, %c0_188] : memref<12x8x2xf32, #tpu.memory_space<vmem>>, vector<1x8x2xf32>
    %555 = vector.shape_cast %554 : vector<1x8x2xf32> to vector<8x2xf32>
    %556 = vector.extract_strided_slice %550 {offsets = [0, 2], sizes = [8, 2], strides = [1, 1]} : vector<8x4xf32> to vector<8x2xf32>
    %cst_189 = arith.constant 5.000000e-01 : f32
    %557 = vector.broadcast %cst_189 : f32 to vector<8x2xf32>
    %558 = arith.mulf %557, %556 : vector<8x2xf32>
    %559 = math.exp %558 : vector<8x2xf32>
    %560 = arith.mulf %555, %559 : vector<8x2xf32>
    %561 = vector.extract_strided_slice %548 {offsets = [0, 4], sizes = [8, 16], strides = [1, 1]} : vector<8x20xf32> to vector<8x16xf32>
    %562 = arith.addf %561, %38 : vector<8x16xf32>
    %cst_190 = arith.constant dense<0.000000e+00> : vector<8x16xf32>
    %563 = tpu.matmul %560, %34, %cst_190 {dimension_numbers = #tpu.dot_dimension_numbers<[1], [0], [0], [1], [0, 0, 1, 1], [], []>} : vector<8x2xf32>, vector<2x16xf32>, vector<8x16xf32> -> vector<8x16xf32>
    %564 = arith.addf %562, %563 : vector<8x16xf32>
    %cst_191 = arith.constant 0.000000e+00 : f32
    %565 = vector.broadcast %cst_191 : f32 to vector<8x16xf32>
    %566 = arith.maximumf %564, %565 : vector<8x16xf32>
    %567 = tpu.concatenate %566, %522 in 1 : vector<8x16xf32>, vector<8x8xf32> -> vector<8x24xf32>
    %cst_192 = arith.constant dense<0.000000e+00> : vector<8x32xf32>
    %568 = tpu.matmul %567, %11, %cst_192 {dimension_numbers = #tpu.dot_dimension_numbers<[1], [0], [0], [1], [0, 0, 1, 1], [], []>} : vector<8x24xf32>, vector<24x32xf32>, vector<8x32xf32> -> vector<8x32xf32>
    %569 = arith.addf %568, %15 : vector<8x32xf32>
    %570 = vector.extract_strided_slice %569 {offsets = [0, 0], sizes = [8, 8], strides = [1, 1]} : vector<8x32xf32> to vector<8x8xf32>
    %cst_193 = arith.constant 5.000000e-01 : f32
    %571 = vector.broadcast %cst_193 : f32 to vector<8x8xf32>
    %572 = arith.mulf %571, %570 : vector<8x8xf32>
    %573 = math.tanh %572 : vector<8x8xf32>
    %cst_194 = arith.constant 5.000000e-01 : f32
    %574 = vector.broadcast %cst_194 : f32 to vector<8x8xf32>
    %575 = arith.mulf %574, %573 : vector<8x8xf32>
    %cst_195 = arith.constant 5.000000e-01 : f32
    %576 = vector.broadcast %cst_195 : f32 to vector<8x8xf32>
    %577 = arith.addf %575, %576 : vector<8x8xf32>
    %578 = vector.extract_strided_slice %569 {offsets = [0, 8], sizes = [8, 8], strides = [1, 1]} : vector<8x32xf32> to vector<8x8xf32>
    %cst_196 = arith.constant 5.000000e-01 : f32
    %579 = vector.broadcast %cst_196 : f32 to vector<8x8xf32>
    %580 = arith.mulf %579, %578 : vector<8x8xf32>
    %581 = math.tanh %580 : vector<8x8xf32>
    %cst_197 = arith.constant 5.000000e-01 : f32
    %582 = vector.broadcast %cst_197 : f32 to vector<8x8xf32>
    %583 = arith.mulf %582, %581 : vector<8x8xf32>
    %cst_198 = arith.constant 5.000000e-01 : f32
    %584 = vector.broadcast %cst_198 : f32 to vector<8x8xf32>
    %585 = arith.addf %583, %584 : vector<8x8xf32>
    %586 = vector.extract_strided_slice %569 {offsets = [0, 16], sizes = [8, 8], strides = [1, 1]} : vector<8x32xf32> to vector<8x8xf32>
    %587 = math.tanh %586 : vector<8x8xf32>
    %588 = vector.extract_strided_slice %569 {offsets = [0, 24], sizes = [8, 8], strides = [1, 1]} : vector<8x32xf32> to vector<8x8xf32>
    %cst_199 = arith.constant 5.000000e-01 : f32
    %589 = vector.broadcast %cst_199 : f32 to vector<8x8xf32>
    %590 = arith.mulf %589, %588 : vector<8x8xf32>
    %591 = math.tanh %590 : vector<8x8xf32>
    %cst_200 = arith.constant 5.000000e-01 : f32
    %592 = vector.broadcast %cst_200 : f32 to vector<8x8xf32>
    %593 = arith.mulf %592, %591 : vector<8x8xf32>
    %cst_201 = arith.constant 5.000000e-01 : f32
    %594 = vector.broadcast %cst_201 : f32 to vector<8x8xf32>
    %595 = arith.addf %593, %594 : vector<8x8xf32>
    %596 = arith.mulf %585, %520 : vector<8x8xf32>
    %597 = arith.mulf %577, %587 : vector<8x8xf32>
    %598 = arith.addf %596, %597 : vector<8x8xf32>
    %599 = math.tanh %598 : vector<8x8xf32>
    %600 = arith.mulf %595, %599 : vector<8x8xf32>
    %cst_202 = arith.constant dense<0.000000e+00> : vector<8x128xf32>
    %601 = tpu.matmul %600, %20, %cst_202 {dimension_numbers = #tpu.dot_dimension_numbers<[1], [0], [0], [1], [0, 0, 1, 1], [], []>} : vector<8x8xf32>, vector<8x128xf32>, vector<8x128xf32> -> vector<8x128xf32>
    %602 = vector.extract_strided_slice %601 {offsets = [0, 0], sizes = [8, 64], strides = [1, 1]} : vector<8x128xf32> to vector<8x64xf32>
    %603 = arith.addf %329, %602 : vector<8x64xf32>
    %604 = vector.extract_strided_slice %601 {offsets = [0, 64], sizes = [8, 64], strides = [1, 1]} : vector<8x128xf32> to vector<8x64xf32>
    %605 = arith.subf %604, %327 : vector<8x64xf32>
    %606 = vector.shape_cast %603 : vector<8x64xf32> to vector<8x1x64xf32>
    %607 = vector.shape_cast %605 : vector<8x64xf32> to vector<1x8x64xf32>
    %608 = vector.broadcast %606 : vector<8x1x64xf32> to vector<8x8x64xf32>
    %609 = vector.broadcast %607 : vector<1x8x64xf32> to vector<8x8x64xf32>
    %610 = arith.addf %608, %609 : vector<8x8x64xf32>
    %cst_203 = arith.constant 0.000000e+00 : f32
    %611 = vector.broadcast %cst_203 : f32 to vector<8x8x64xf32>
    %612 = arith.maximumf %610, %611 : vector<8x8x64xf32>
    %613 = vector.shape_cast %612 : vector<8x8x64xf32> to vector<64x64xf32>
    %cst_204 = arith.constant dense<0.000000e+00> : vector<64x8xf32>
    %614 = tpu.matmul %613, %22, %cst_204 {dimension_numbers = #tpu.dot_dimension_numbers<[1], [0], [0], [1], [0, 0, 1, 1], [], []>} : vector<64x64xf32>, vector<64x8xf32>, vector<64x8xf32> -> vector<64x8xf32>
    %615 = arith.addf %614, %26 : vector<64x8xf32>
    %cst_205 = arith.constant 0.000000e+00 : f32
    %616 = vector.broadcast %cst_205 : f32 to vector<64x8xf32>
    %617 = arith.maximumf %615, %616 : vector<64x8xf32>
    %618 = vector.shape_cast %617 : vector<64x8xf32> to vector<8x8x8xf32>
    %c3 = arith.constant 3 : index
    %c0_206 = arith.constant 0 : index
    %c0_207 = arith.constant 0 : index
    %619 = vector.load %arg2[%c3, %c0_206, %c0_207] : memref<12x8x8xf32, #tpu.memory_space<vmem>>, vector<1x8x8xf32>
    %620 = vector.shape_cast %619 : vector<1x8x8xf32> to vector<8x8xf32>
    %621 = vector.shape_cast %620 : vector<8x8xf32> to vector<8x8x1xf32>
    %622 = vector.broadcast %621 : vector<8x8x1xf32> to vector<8x8x8xf32>
    %623 = arith.mulf %618, %622 : vector<8x8x8xf32>
    %cst_208 = arith.constant dense<0xFF800000> : vector<8x8xf32>
    %624 = vector.multi_reduction <maximumf>, %623, %cst_208 [1] : vector<8x8x8xf32> to vector<8x8xf32>
    %625 = tpu.concatenate %600, %624 in 1 : vector<8x8xf32>, vector<8x8xf32> -> vector<8x16xf32>
    %cst_209 = arith.constant dense<0.000000e+00> : vector<8x20xf32>
    %626 = tpu.matmul %625, %28, %cst_209 {dimension_numbers = #tpu.dot_dimension_numbers<[1], [0], [0], [1], [0, 0, 1, 1], [], []>} : vector<8x16xf32>, vector<16x20xf32>, vector<8x20xf32> -> vector<8x20xf32>
    %627 = vector.extract_strided_slice %626 {offsets = [0, 0], sizes = [8, 4], strides = [1, 1]} : vector<8x20xf32> to vector<8x4xf32>
    %628 = arith.addf %627, %32 : vector<8x4xf32>
    %c3_210 = arith.constant 3 : index
    %c0_211 = arith.constant 0 : index
    %c0_212 = arith.constant 0 : index
    %629 = vector.load %arg7[%c3_210, %c0_211, %c0_212] : memref<12x8x4xf32, #tpu.memory_space<vmem>>, vector<1x8x4xf32>
    %630 = vector.shape_cast %629 : vector<1x8x4xf32> to vector<8x4xf32>
    %631 = vector.shape_cast %628 : vector<8x4xf32> to vector<1x8x4xf32>
    tpu.vector_store %arg7[%c3_210, %c0_211, %c0_212], %631 {strides = array<i32>} : memref<12x8x4xf32, #tpu.memory_space<vmem>>, vector<1x8x4xf32>,
    %c3_213 = arith.constant 3 : index
    %c0_214 = arith.constant 0 : index
    %c0_215 = arith.constant 0 : index
    %632 = vector.load %arg5[%c3_213, %c0_214, %c0_215] : memref<12x8x2xf32, #tpu.memory_space<vmem>>, vector<1x8x2xf32>
    %633 = vector.shape_cast %632 : vector<1x8x2xf32> to vector<8x2xf32>
    %634 = vector.extract_strided_slice %628 {offsets = [0, 2], sizes = [8, 2], strides = [1, 1]} : vector<8x4xf32> to vector<8x2xf32>
    %cst_216 = arith.constant 5.000000e-01 : f32
    %635 = vector.broadcast %cst_216 : f32 to vector<8x2xf32>
    %636 = arith.mulf %635, %634 : vector<8x2xf32>
    %637 = math.exp %636 : vector<8x2xf32>
    %638 = arith.mulf %633, %637 : vector<8x2xf32>
    %639 = vector.extract_strided_slice %626 {offsets = [0, 4], sizes = [8, 16], strides = [1, 1]} : vector<8x20xf32> to vector<8x16xf32>
    %640 = arith.addf %639, %38 : vector<8x16xf32>
    %cst_217 = arith.constant dense<0.000000e+00> : vector<8x16xf32>
    %641 = tpu.matmul %638, %34, %cst_217 {dimension_numbers = #tpu.dot_dimension_numbers<[1], [0], [0], [1], [0, 0, 1, 1], [], []>} : vector<8x2xf32>, vector<2x16xf32>, vector<8x16xf32> -> vector<8x16xf32>
    %642 = arith.addf %640, %641 : vector<8x16xf32>
    %cst_218 = arith.constant 0.000000e+00 : f32
    %643 = vector.broadcast %cst_218 : f32 to vector<8x16xf32>
    %644 = arith.maximumf %642, %643 : vector<8x16xf32>
    %645 = tpu.concatenate %644, %600 in 1 : vector<8x16xf32>, vector<8x8xf32> -> vector<8x24xf32>
    %cst_219 = arith.constant dense<0.000000e+00> : vector<8x32xf32>
    %646 = tpu.matmul %645, %11, %cst_219 {dimension_numbers = #tpu.dot_dimension_numbers<[1], [0], [0], [1], [0, 0, 1, 1], [], []>} : vector<8x24xf32>, vector<24x32xf32>, vector<8x32xf32> -> vector<8x32xf32>
    %647 = arith.addf %646, %15 : vector<8x32xf32>
    %648 = vector.extract_strided_slice %647 {offsets = [0, 0], sizes = [8, 8], strides = [1, 1]} : vector<8x32xf32> to vector<8x8xf32>
    %cst_220 = arith.constant 5.000000e-01 : f32
    %649 = vector.broadcast %cst_220 : f32 to vector<8x8xf32>
    %650 = arith.mulf %649, %648 : vector<8x8xf32>
    %651 = math.tanh %650 : vector<8x8xf32>
    %cst_221 = arith.constant 5.000000e-01 : f32
    %652 = vector.broadcast %cst_221 : f32 to vector<8x8xf32>
    %653 = arith.mulf %652, %651 : vector<8x8xf32>
    %cst_222 = arith.constant 5.000000e-01 : f32
    %654 = vector.broadcast %cst_222 : f32 to vector<8x8xf32>
    %655 = arith.addf %653, %654 : vector<8x8xf32>
    %656 = vector.extract_strided_slice %647 {offsets = [0, 8], sizes = [8, 8], strides = [1, 1]} : vector<8x32xf32> to vector<8x8xf32>
    %cst_223 = arith.constant 5.000000e-01 : f32
    %657 = vector.broadcast %cst_223 : f32 to vector<8x8xf32>
    %658 = arith.mulf %657, %656 : vector<8x8xf32>
    %659 = math.tanh %658 : vector<8x8xf32>
    %cst_224 = arith.constant 5.000000e-01 : f32
    %660 = vector.broadcast %cst_224 : f32 to vector<8x8xf32>
    %661 = arith.mulf %660, %659 : vector<8x8xf32>
    %cst_225 = arith.constant 5.000000e-01 : f32
    %662 = vector.broadcast %cst_225 : f32 to vector<8x8xf32>
    %663 = arith.addf %661, %662 : vector<8x8xf32>
    %664 = vector.extract_strided_slice %647 {offsets = [0, 16], sizes = [8, 8], strides = [1, 1]} : vector<8x32xf32> to vector<8x8xf32>
    %665 = math.tanh %664 : vector<8x8xf32>
    %666 = vector.extract_strided_slice %647 {offsets = [0, 24], sizes = [8, 8], strides = [1, 1]} : vector<8x32xf32> to vector<8x8xf32>
    %cst_226 = arith.constant 5.000000e-01 : f32
    %667 = vector.broadcast %cst_226 : f32 to vector<8x8xf32>
    %668 = arith.mulf %667, %666 : vector<8x8xf32>
    %669 = math.tanh %668 : vector<8x8xf32>
    %cst_227 = arith.constant 5.000000e-01 : f32
    %670 = vector.broadcast %cst_227 : f32 to vector<8x8xf32>
    %671 = arith.mulf %670, %669 : vector<8x8xf32>
    %cst_228 = arith.constant 5.000000e-01 : f32
    %672 = vector.broadcast %cst_228 : f32 to vector<8x8xf32>
    %673 = arith.addf %671, %672 : vector<8x8xf32>
    %674 = arith.mulf %663, %598 : vector<8x8xf32>
    %675 = arith.mulf %655, %665 : vector<8x8xf32>
    %676 = arith.addf %674, %675 : vector<8x8xf32>
    %677 = math.tanh %676 : vector<8x8xf32>
    %678 = arith.mulf %673, %677 : vector<8x8xf32>
    %cst_229 = arith.constant dense<0.000000e+00> : vector<8x128xf32>
    %679 = tpu.matmul %678, %20, %cst_229 {dimension_numbers = #tpu.dot_dimension_numbers<[1], [0], [0], [1], [0, 0, 1, 1], [], []>} : vector<8x8xf32>, vector<8x128xf32>, vector<8x128xf32> -> vector<8x128xf32>
    %680 = vector.extract_strided_slice %679 {offsets = [0, 0], sizes = [8, 64], strides = [1, 1]} : vector<8x128xf32> to vector<8x64xf32>
    %681 = arith.addf %329, %680 : vector<8x64xf32>
    %682 = vector.extract_strided_slice %679 {offsets = [0, 64], sizes = [8, 64], strides = [1, 1]} : vector<8x128xf32> to vector<8x64xf32>
    %683 = arith.subf %682, %327 : vector<8x64xf32>
    %684 = vector.shape_cast %681 : vector<8x64xf32> to vector<8x1x64xf32>
    %685 = vector.shape_cast %683 : vector<8x64xf32> to vector<1x8x64xf32>
    %686 = vector.broadcast %684 : vector<8x1x64xf32> to vector<8x8x64xf32>
    %687 = vector.broadcast %685 : vector<1x8x64xf32> to vector<8x8x64xf32>
    %688 = arith.addf %686, %687 : vector<8x8x64xf32>
    %cst_230 = arith.constant 0.000000e+00 : f32
    %689 = vector.broadcast %cst_230 : f32 to vector<8x8x64xf32>
    %690 = arith.maximumf %688, %689 : vector<8x8x64xf32>
    %691 = vector.shape_cast %690 : vector<8x8x64xf32> to vector<64x64xf32>
    %cst_231 = arith.constant dense<0.000000e+00> : vector<64x8xf32>
    %692 = tpu.matmul %691, %22, %cst_231 {dimension_numbers = #tpu.dot_dimension_numbers<[1], [0], [0], [1], [0, 0, 1, 1], [], []>} : vector<64x64xf32>, vector<64x8xf32>, vector<64x8xf32> -> vector<64x8xf32>
    %693 = arith.addf %692, %26 : vector<64x8xf32>
    %cst_232 = arith.constant 0.000000e+00 : f32
    %694 = vector.broadcast %cst_232 : f32 to vector<64x8xf32>
    %695 = arith.maximumf %693, %694 : vector<64x8xf32>
    %696 = vector.shape_cast %695 : vector<64x8xf32> to vector<8x8x8xf32>
    %c4 = arith.constant 4 : index
    %c0_233 = arith.constant 0 : index
    %c0_234 = arith.constant 0 : index
    %697 = vector.load %arg2[%c4, %c0_233, %c0_234] : memref<12x8x8xf32, #tpu.memory_space<vmem>>, vector<1x8x8xf32>
    %698 = vector.shape_cast %697 : vector<1x8x8xf32> to vector<8x8xf32>
    %699 = vector.shape_cast %698 : vector<8x8xf32> to vector<8x8x1xf32>
    %700 = vector.broadcast %699 : vector<8x8x1xf32> to vector<8x8x8xf32>
    %701 = arith.mulf %696, %700 : vector<8x8x8xf32>
    %cst_235 = arith.constant dense<0xFF800000> : vector<8x8xf32>
    %702 = vector.multi_reduction <maximumf>, %701, %cst_235 [1] : vector<8x8x8xf32> to vector<8x8xf32>
    %703 = tpu.concatenate %678, %702 in 1 : vector<8x8xf32>, vector<8x8xf32> -> vector<8x16xf32>
    %cst_236 = arith.constant dense<0.000000e+00> : vector<8x20xf32>
    %704 = tpu.matmul %703, %28, %cst_236 {dimension_numbers = #tpu.dot_dimension_numbers<[1], [0], [0], [1], [0, 0, 1, 1], [], []>} : vector<8x16xf32>, vector<16x20xf32>, vector<8x20xf32> -> vector<8x20xf32>
    %705 = vector.extract_strided_slice %704 {offsets = [0, 0], sizes = [8, 4], strides = [1, 1]} : vector<8x20xf32> to vector<8x4xf32>
    %706 = arith.addf %705, %32 : vector<8x4xf32>
    %c4_237 = arith.constant 4 : index
    %c0_238 = arith.constant 0 : index
    %c0_239 = arith.constant 0 : index
    %707 = vector.load %arg7[%c4_237, %c0_238, %c0_239] : memref<12x8x4xf32, #tpu.memory_space<vmem>>, vector<1x8x4xf32>
    %708 = vector.shape_cast %707 : vector<1x8x4xf32> to vector<8x4xf32>
    %709 = vector.shape_cast %706 : vector<8x4xf32> to vector<1x8x4xf32>
    tpu.vector_store %arg7[%c4_237, %c0_238, %c0_239], %709 {strides = array<i32>} : memref<12x8x4xf32, #tpu.memory_space<vmem>>, vector<1x8x4xf32>,
    %c4_240 = arith.constant 4 : index
    %c0_241 = arith.constant 0 : index
    %c0_242 = arith.constant 0 : index
    %710 = vector.load %arg5[%c4_240, %c0_241, %c0_242] : memref<12x8x2xf32, #tpu.memory_space<vmem>>, vector<1x8x2xf32>
    %711 = vector.shape_cast %710 : vector<1x8x2xf32> to vector<8x2xf32>
    %712 = vector.extract_strided_slice %706 {offsets = [0, 2], sizes = [8, 2], strides = [1, 1]} : vector<8x4xf32> to vector<8x2xf32>
    %cst_243 = arith.constant 5.000000e-01 : f32
    %713 = vector.broadcast %cst_243 : f32 to vector<8x2xf32>
    %714 = arith.mulf %713, %712 : vector<8x2xf32>
    %715 = math.exp %714 : vector<8x2xf32>
    %716 = arith.mulf %711, %715 : vector<8x2xf32>
    %717 = vector.extract_strided_slice %704 {offsets = [0, 4], sizes = [8, 16], strides = [1, 1]} : vector<8x20xf32> to vector<8x16xf32>
    %718 = arith.addf %717, %38 : vector<8x16xf32>
    %cst_244 = arith.constant dense<0.000000e+00> : vector<8x16xf32>
    %719 = tpu.matmul %716, %34, %cst_244 {dimension_numbers = #tpu.dot_dimension_numbers<[1], [0], [0], [1], [0, 0, 1, 1], [], []>} : vector<8x2xf32>, vector<2x16xf32>, vector<8x16xf32> -> vector<8x16xf32>
    %720 = arith.addf %718, %719 : vector<8x16xf32>
    %cst_245 = arith.constant 0.000000e+00 : f32
    %721 = vector.broadcast %cst_245 : f32 to vector<8x16xf32>
    %722 = arith.maximumf %720, %721 : vector<8x16xf32>
    %723 = tpu.concatenate %722, %678 in 1 : vector<8x16xf32>, vector<8x8xf32> -> vector<8x24xf32>
    %cst_246 = arith.constant dense<0.000000e+00> : vector<8x32xf32>
    %724 = tpu.matmul %723, %11, %cst_246 {dimension_numbers = #tpu.dot_dimension_numbers<[1], [0], [0], [1], [0, 0, 1, 1], [], []>} : vector<8x24xf32>, vector<24x32xf32>, vector<8x32xf32> -> vector<8x32xf32>
    %725 = arith.addf %724, %15 : vector<8x32xf32>
    %726 = vector.extract_strided_slice %725 {offsets = [0, 0], sizes = [8, 8], strides = [1, 1]} : vector<8x32xf32> to vector<8x8xf32>
    %cst_247 = arith.constant 5.000000e-01 : f32
    %727 = vector.broadcast %cst_247 : f32 to vector<8x8xf32>
    %728 = arith.mulf %727, %726 : vector<8x8xf32>
    %729 = math.tanh %728 : vector<8x8xf32>
    %cst_248 = arith.constant 5.000000e-01 : f32
    %730 = vector.broadcast %cst_248 : f32 to vector<8x8xf32>
    %731 = arith.mulf %730, %729 : vector<8x8xf32>
    %cst_249 = arith.constant 5.000000e-01 : f32
    %732 = vector.broadcast %cst_249 : f32 to vector<8x8xf32>
    %733 = arith.addf %731, %732 : vector<8x8xf32>
    %734 = vector.extract_strided_slice %725 {offsets = [0, 8], sizes = [8, 8], strides = [1, 1]} : vector<8x32xf32> to vector<8x8xf32>
    %cst_250 = arith.constant 5.000000e-01 : f32
    %735 = vector.broadcast %cst_250 : f32 to vector<8x8xf32>
    %736 = arith.mulf %735, %734 : vector<8x8xf32>
    %737 = math.tanh %736 : vector<8x8xf32>
    %cst_251 = arith.constant 5.000000e-01 : f32
    %738 = vector.broadcast %cst_251 : f32 to vector<8x8xf32>
    %739 = arith.mulf %738, %737 : vector<8x8xf32>
    %cst_252 = arith.constant 5.000000e-01 : f32
    %740 = vector.broadcast %cst_252 : f32 to vector<8x8xf32>
    %741 = arith.addf %739, %740 : vector<8x8xf32>
    %742 = vector.extract_strided_slice %725 {offsets = [0, 16], sizes = [8, 8], strides = [1, 1]} : vector<8x32xf32> to vector<8x8xf32>
    %743 = math.tanh %742 : vector<8x8xf32>
    %744 = vector.extract_strided_slice %725 {offsets = [0, 24], sizes = [8, 8], strides = [1, 1]} : vector<8x32xf32> to vector<8x8xf32>
    %cst_253 = arith.constant 5.000000e-01 : f32
    %745 = vector.broadcast %cst_253 : f32 to vector<8x8xf32>
    %746 = arith.mulf %745, %744 : vector<8x8xf32>
    %747 = math.tanh %746 : vector<8x8xf32>
    %cst_254 = arith.constant 5.000000e-01 : f32
    %748 = vector.broadcast %cst_254 : f32 to vector<8x8xf32>
    %749 = arith.mulf %748, %747 : vector<8x8xf32>
    %cst_255 = arith.constant 5.000000e-01 : f32
    %750 = vector.broadcast %cst_255 : f32 to vector<8x8xf32>
    %751 = arith.addf %749, %750 : vector<8x8xf32>
    %752 = arith.mulf %741, %676 : vector<8x8xf32>
    %753 = arith.mulf %733, %743 : vector<8x8xf32>
    %754 = arith.addf %752, %753 : vector<8x8xf32>
    %755 = math.tanh %754 : vector<8x8xf32>
    %756 = arith.mulf %751, %755 : vector<8x8xf32>
    %cst_256 = arith.constant dense<0.000000e+00> : vector<8x128xf32>
    %757 = tpu.matmul %756, %20, %cst_256 {dimension_numbers = #tpu.dot_dimension_numbers<[1], [0], [0], [1], [0, 0, 1, 1], [], []>} : vector<8x8xf32>, vector<8x128xf32>, vector<8x128xf32> -> vector<8x128xf32>
    %758 = vector.extract_strided_slice %757 {offsets = [0, 0], sizes = [8, 64], strides = [1, 1]} : vector<8x128xf32> to vector<8x64xf32>
    %759 = arith.addf %329, %758 : vector<8x64xf32>
    %760 = vector.extract_strided_slice %757 {offsets = [0, 64], sizes = [8, 64], strides = [1, 1]} : vector<8x128xf32> to vector<8x64xf32>
    %761 = arith.subf %760, %327 : vector<8x64xf32>
    %762 = vector.shape_cast %759 : vector<8x64xf32> to vector<8x1x64xf32>
    %763 = vector.shape_cast %761 : vector<8x64xf32> to vector<1x8x64xf32>
    %764 = vector.broadcast %762 : vector<8x1x64xf32> to vector<8x8x64xf32>
    %765 = vector.broadcast %763 : vector<1x8x64xf32> to vector<8x8x64xf32>
    %766 = arith.addf %764, %765 : vector<8x8x64xf32>
    %cst_257 = arith.constant 0.000000e+00 : f32
    %767 = vector.broadcast %cst_257 : f32 to vector<8x8x64xf32>
    %768 = arith.maximumf %766, %767 : vector<8x8x64xf32>
    %769 = vector.shape_cast %768 : vector<8x8x64xf32> to vector<64x64xf32>
    %cst_258 = arith.constant dense<0.000000e+00> : vector<64x8xf32>
    %770 = tpu.matmul %769, %22, %cst_258 {dimension_numbers = #tpu.dot_dimension_numbers<[1], [0], [0], [1], [0, 0, 1, 1], [], []>} : vector<64x64xf32>, vector<64x8xf32>, vector<64x8xf32> -> vector<64x8xf32>
    %771 = arith.addf %770, %26 : vector<64x8xf32>
    %cst_259 = arith.constant 0.000000e+00 : f32
    %772 = vector.broadcast %cst_259 : f32 to vector<64x8xf32>
    %773 = arith.maximumf %771, %772 : vector<64x8xf32>
    %774 = vector.shape_cast %773 : vector<64x8xf32> to vector<8x8x8xf32>
    %c5 = arith.constant 5 : index
    %c0_260 = arith.constant 0 : index
    %c0_261 = arith.constant 0 : index
    %775 = vector.load %arg2[%c5, %c0_260, %c0_261] : memref<12x8x8xf32, #tpu.memory_space<vmem>>, vector<1x8x8xf32>
    %776 = vector.shape_cast %775 : vector<1x8x8xf32> to vector<8x8xf32>
    %777 = vector.shape_cast %776 : vector<8x8xf32> to vector<8x8x1xf32>
    %778 = vector.broadcast %777 : vector<8x8x1xf32> to vector<8x8x8xf32>
    %779 = arith.mulf %774, %778 : vector<8x8x8xf32>
    %cst_262 = arith.constant dense<0xFF800000> : vector<8x8xf32>
    %780 = vector.multi_reduction <maximumf>, %779, %cst_262 [1] : vector<8x8x8xf32> to vector<8x8xf32>
    %781 = tpu.concatenate %756, %780 in 1 : vector<8x8xf32>, vector<8x8xf32> -> vector<8x16xf32>
    %cst_263 = arith.constant dense<0.000000e+00> : vector<8x20xf32>
    %782 = tpu.matmul %781, %28, %cst_263 {dimension_numbers = #tpu.dot_dimension_numbers<[1], [0], [0], [1], [0, 0, 1, 1], [], []>} : vector<8x16xf32>, vector<16x20xf32>, vector<8x20xf32> -> vector<8x20xf32>
    %783 = vector.extract_strided_slice %782 {offsets = [0, 0], sizes = [8, 4], strides = [1, 1]} : vector<8x20xf32> to vector<8x4xf32>
    %784 = arith.addf %783, %32 : vector<8x4xf32>
    %c5_264 = arith.constant 5 : index
    %c0_265 = arith.constant 0 : index
    %c0_266 = arith.constant 0 : index
    %785 = vector.load %arg7[%c5_264, %c0_265, %c0_266] : memref<12x8x4xf32, #tpu.memory_space<vmem>>, vector<1x8x4xf32>
    %786 = vector.shape_cast %785 : vector<1x8x4xf32> to vector<8x4xf32>
    %787 = vector.shape_cast %784 : vector<8x4xf32> to vector<1x8x4xf32>
    tpu.vector_store %arg7[%c5_264, %c0_265, %c0_266], %787 {strides = array<i32>} : memref<12x8x4xf32, #tpu.memory_space<vmem>>, vector<1x8x4xf32>,
    %c5_267 = arith.constant 5 : index
    %c0_268 = arith.constant 0 : index
    %c0_269 = arith.constant 0 : index
    %788 = vector.load %arg5[%c5_267, %c0_268, %c0_269] : memref<12x8x2xf32, #tpu.memory_space<vmem>>, vector<1x8x2xf32>
    %789 = vector.shape_cast %788 : vector<1x8x2xf32> to vector<8x2xf32>
    %790 = vector.extract_strided_slice %784 {offsets = [0, 2], sizes = [8, 2], strides = [1, 1]} : vector<8x4xf32> to vector<8x2xf32>
    %cst_270 = arith.constant 5.000000e-01 : f32
    %791 = vector.broadcast %cst_270 : f32 to vector<8x2xf32>
    %792 = arith.mulf %791, %790 : vector<8x2xf32>
    %793 = math.exp %792 : vector<8x2xf32>
    %794 = arith.mulf %789, %793 : vector<8x2xf32>
    %795 = vector.extract_strided_slice %782 {offsets = [0, 4], sizes = [8, 16], strides = [1, 1]} : vector<8x20xf32> to vector<8x16xf32>
    %796 = arith.addf %795, %38 : vector<8x16xf32>
    %cst_271 = arith.constant dense<0.000000e+00> : vector<8x16xf32>
    %797 = tpu.matmul %794, %34, %cst_271 {dimension_numbers = #tpu.dot_dimension_numbers<[1], [0], [0], [1], [0, 0, 1, 1], [], []>} : vector<8x2xf32>, vector<2x16xf32>, vector<8x16xf32> -> vector<8x16xf32>
    %798 = arith.addf %796, %797 : vector<8x16xf32>
    %cst_272 = arith.constant 0.000000e+00 : f32
    %799 = vector.broadcast %cst_272 : f32 to vector<8x16xf32>
    %800 = arith.maximumf %798, %799 : vector<8x16xf32>
    %801 = tpu.concatenate %800, %756 in 1 : vector<8x16xf32>, vector<8x8xf32> -> vector<8x24xf32>
    %cst_273 = arith.constant dense<0.000000e+00> : vector<8x32xf32>
    %802 = tpu.matmul %801, %11, %cst_273 {dimension_numbers = #tpu.dot_dimension_numbers<[1], [0], [0], [1], [0, 0, 1, 1], [], []>} : vector<8x24xf32>, vector<24x32xf32>, vector<8x32xf32> -> vector<8x32xf32>
    %803 = arith.addf %802, %15 : vector<8x32xf32>
    %804 = vector.extract_strided_slice %803 {offsets = [0, 0], sizes = [8, 8], strides = [1, 1]} : vector<8x32xf32> to vector<8x8xf32>
    %cst_274 = arith.constant 5.000000e-01 : f32
    %805 = vector.broadcast %cst_274 : f32 to vector<8x8xf32>
    %806 = arith.mulf %805, %804 : vector<8x8xf32>
    %807 = math.tanh %806 : vector<8x8xf32>
    %cst_275 = arith.constant 5.000000e-01 : f32
    %808 = vector.broadcast %cst_275 : f32 to vector<8x8xf32>
    %809 = arith.mulf %808, %807 : vector<8x8xf32>
    %cst_276 = arith.constant 5.000000e-01 : f32
    %810 = vector.broadcast %cst_276 : f32 to vector<8x8xf32>
    %811 = arith.addf %809, %810 : vector<8x8xf32>
    %812 = vector.extract_strided_slice %803 {offsets = [0, 8], sizes = [8, 8], strides = [1, 1]} : vector<8x32xf32> to vector<8x8xf32>
    %cst_277 = arith.constant 5.000000e-01 : f32
    %813 = vector.broadcast %cst_277 : f32 to vector<8x8xf32>
    %814 = arith.mulf %813, %812 : vector<8x8xf32>
    %815 = math.tanh %814 : vector<8x8xf32>
    %cst_278 = arith.constant 5.000000e-01 : f32
    %816 = vector.broadcast %cst_278 : f32 to vector<8x8xf32>
    %817 = arith.mulf %816, %815 : vector<8x8xf32>
    %cst_279 = arith.constant 5.000000e-01 : f32
    %818 = vector.broadcast %cst_279 : f32 to vector<8x8xf32>
    %819 = arith.addf %817, %818 : vector<8x8xf32>
    %820 = vector.extract_strided_slice %803 {offsets = [0, 16], sizes = [8, 8], strides = [1, 1]} : vector<8x32xf32> to vector<8x8xf32>
    %821 = math.tanh %820 : vector<8x8xf32>
    %822 = vector.extract_strided_slice %803 {offsets = [0, 24], sizes = [8, 8], strides = [1, 1]} : vector<8x32xf32> to vector<8x8xf32>
    %cst_280 = arith.constant 5.000000e-01 : f32
    %823 = vector.broadcast %cst_280 : f32 to vector<8x8xf32>
    %824 = arith.mulf %823, %822 : vector<8x8xf32>
    %825 = math.tanh %824 : vector<8x8xf32>
    %cst_281 = arith.constant 5.000000e-01 : f32
    %826 = vector.broadcast %cst_281 : f32 to vector<8x8xf32>
    %827 = arith.mulf %826, %825 : vector<8x8xf32>
    %cst_282 = arith.constant 5.000000e-01 : f32
    %828 = vector.broadcast %cst_282 : f32 to vector<8x8xf32>
    %829 = arith.addf %827, %828 : vector<8x8xf32>
    %830 = arith.mulf %819, %754 : vector<8x8xf32>
    %831 = arith.mulf %811, %821 : vector<8x8xf32>
    %832 = arith.addf %830, %831 : vector<8x8xf32>
    %833 = math.tanh %832 : vector<8x8xf32>
    %834 = arith.mulf %829, %833 : vector<8x8xf32>
    %cst_283 = arith.constant dense<0.000000e+00> : vector<8x128xf32>
    %835 = tpu.matmul %834, %20, %cst_283 {dimension_numbers = #tpu.dot_dimension_numbers<[1], [0], [0], [1], [0, 0, 1, 1], [], []>} : vector<8x8xf32>, vector<8x128xf32>, vector<8x128xf32> -> vector<8x128xf32>
    %836 = vector.extract_strided_slice %835 {offsets = [0, 0], sizes = [8, 64], strides = [1, 1]} : vector<8x128xf32> to vector<8x64xf32>
    %837 = arith.addf %329, %836 : vector<8x64xf32>
    %838 = vector.extract_strided_slice %835 {offsets = [0, 64], sizes = [8, 64], strides = [1, 1]} : vector<8x128xf32> to vector<8x64xf32>
    %839 = arith.subf %838, %327 : vector<8x64xf32>
    %840 = vector.shape_cast %837 : vector<8x64xf32> to vector<8x1x64xf32>
    %841 = vector.shape_cast %839 : vector<8x64xf32> to vector<1x8x64xf32>
    %842 = vector.broadcast %840 : vector<8x1x64xf32> to vector<8x8x64xf32>
    %843 = vector.broadcast %841 : vector<1x8x64xf32> to vector<8x8x64xf32>
    %844 = arith.addf %842, %843 : vector<8x8x64xf32>
    %cst_284 = arith.constant 0.000000e+00 : f32
    %845 = vector.broadcast %cst_284 : f32 to vector<8x8x64xf32>
    %846 = arith.maximumf %844, %845 : vector<8x8x64xf32>
    %847 = vector.shape_cast %846 : vector<8x8x64xf32> to vector<64x64xf32>
    %cst_285 = arith.constant dense<0.000000e+00> : vector<64x8xf32>
    %848 = tpu.matmul %847, %22, %cst_285 {dimension_numbers = #tpu.dot_dimension_numbers<[1], [0], [0], [1], [0, 0, 1, 1], [], []>} : vector<64x64xf32>, vector<64x8xf32>, vector<64x8xf32> -> vector<64x8xf32>
    %849 = arith.addf %848, %26 : vector<64x8xf32>
    %cst_286 = arith.constant 0.000000e+00 : f32
    %850 = vector.broadcast %cst_286 : f32 to vector<64x8xf32>
    %851 = arith.maximumf %849, %850 : vector<64x8xf32>
    %852 = vector.shape_cast %851 : vector<64x8xf32> to vector<8x8x8xf32>
    %c6 = arith.constant 6 : index
    %c0_287 = arith.constant 0 : index
    %c0_288 = arith.constant 0 : index
    %853 = vector.load %arg2[%c6, %c0_287, %c0_288] : memref<12x8x8xf32, #tpu.memory_space<vmem>>, vector<1x8x8xf32>
    %854 = vector.shape_cast %853 : vector<1x8x8xf32> to vector<8x8xf32>
    %855 = vector.shape_cast %854 : vector<8x8xf32> to vector<8x8x1xf32>
    %856 = vector.broadcast %855 : vector<8x8x1xf32> to vector<8x8x8xf32>
    %857 = arith.mulf %852, %856 : vector<8x8x8xf32>
    %cst_289 = arith.constant dense<0xFF800000> : vector<8x8xf32>
    %858 = vector.multi_reduction <maximumf>, %857, %cst_289 [1] : vector<8x8x8xf32> to vector<8x8xf32>
    %859 = tpu.concatenate %834, %858 in 1 : vector<8x8xf32>, vector<8x8xf32> -> vector<8x16xf32>
    %cst_290 = arith.constant dense<0.000000e+00> : vector<8x20xf32>
    %860 = tpu.matmul %859, %28, %cst_290 {dimension_numbers = #tpu.dot_dimension_numbers<[1], [0], [0], [1], [0, 0, 1, 1], [], []>} : vector<8x16xf32>, vector<16x20xf32>, vector<8x20xf32> -> vector<8x20xf32>
    %861 = vector.extract_strided_slice %860 {offsets = [0, 0], sizes = [8, 4], strides = [1, 1]} : vector<8x20xf32> to vector<8x4xf32>
    %862 = arith.addf %861, %32 : vector<8x4xf32>
    %c6_291 = arith.constant 6 : index
    %c0_292 = arith.constant 0 : index
    %c0_293 = arith.constant 0 : index
    %863 = vector.load %arg7[%c6_291, %c0_292, %c0_293] : memref<12x8x4xf32, #tpu.memory_space<vmem>>, vector<1x8x4xf32>
    %864 = vector.shape_cast %863 : vector<1x8x4xf32> to vector<8x4xf32>
    %865 = vector.shape_cast %862 : vector<8x4xf32> to vector<1x8x4xf32>
    tpu.vector_store %arg7[%c6_291, %c0_292, %c0_293], %865 {strides = array<i32>} : memref<12x8x4xf32, #tpu.memory_space<vmem>>, vector<1x8x4xf32>,
    %c6_294 = arith.constant 6 : index
    %c0_295 = arith.constant 0 : index
    %c0_296 = arith.constant 0 : index
    %866 = vector.load %arg5[%c6_294, %c0_295, %c0_296] : memref<12x8x2xf32, #tpu.memory_space<vmem>>, vector<1x8x2xf32>
    %867 = vector.shape_cast %866 : vector<1x8x2xf32> to vector<8x2xf32>
    %868 = vector.extract_strided_slice %862 {offsets = [0, 2], sizes = [8, 2], strides = [1, 1]} : vector<8x4xf32> to vector<8x2xf32>
    %cst_297 = arith.constant 5.000000e-01 : f32
    %869 = vector.broadcast %cst_297 : f32 to vector<8x2xf32>
    %870 = arith.mulf %869, %868 : vector<8x2xf32>
    %871 = math.exp %870 : vector<8x2xf32>
    %872 = arith.mulf %867, %871 : vector<8x2xf32>
    %873 = vector.extract_strided_slice %860 {offsets = [0, 4], sizes = [8, 16], strides = [1, 1]} : vector<8x20xf32> to vector<8x16xf32>
    %874 = arith.addf %873, %38 : vector<8x16xf32>
    %cst_298 = arith.constant dense<0.000000e+00> : vector<8x16xf32>
    %875 = tpu.matmul %872, %34, %cst_298 {dimension_numbers = #tpu.dot_dimension_numbers<[1], [0], [0], [1], [0, 0, 1, 1], [], []>} : vector<8x2xf32>, vector<2x16xf32>, vector<8x16xf32> -> vector<8x16xf32>
    %876 = arith.addf %874, %875 : vector<8x16xf32>
    %cst_299 = arith.constant 0.000000e+00 : f32
    %877 = vector.broadcast %cst_299 : f32 to vector<8x16xf32>
    %878 = arith.maximumf %876, %877 : vector<8x16xf32>
    %879 = tpu.concatenate %878, %834 in 1 : vector<8x16xf32>, vector<8x8xf32> -> vector<8x24xf32>
    %cst_300 = arith.constant dense<0.000000e+00> : vector<8x32xf32>
    %880 = tpu.matmul %879, %11, %cst_300 {dimension_numbers = #tpu.dot_dimension_numbers<[1], [0], [0], [1], [0, 0, 1, 1], [], []>} : vector<8x24xf32>, vector<24x32xf32>, vector<8x32xf32> -> vector<8x32xf32>
    %881 = arith.addf %880, %15 : vector<8x32xf32>
    %882 = vector.extract_strided_slice %881 {offsets = [0, 0], sizes = [8, 8], strides = [1, 1]} : vector<8x32xf32> to vector<8x8xf32>
    %cst_301 = arith.constant 5.000000e-01 : f32
    %883 = vector.broadcast %cst_301 : f32 to vector<8x8xf32>
    %884 = arith.mulf %883, %882 : vector<8x8xf32>
    %885 = math.tanh %884 : vector<8x8xf32>
    %cst_302 = arith.constant 5.000000e-01 : f32
    %886 = vector.broadcast %cst_302 : f32 to vector<8x8xf32>
    %887 = arith.mulf %886, %885 : vector<8x8xf32>
    %cst_303 = arith.constant 5.000000e-01 : f32
    %888 = vector.broadcast %cst_303 : f32 to vector<8x8xf32>
    %889 = arith.addf %887, %888 : vector<8x8xf32>
    %890 = vector.extract_strided_slice %881 {offsets = [0, 8], sizes = [8, 8], strides = [1, 1]} : vector<8x32xf32> to vector<8x8xf32>
    %cst_304 = arith.constant 5.000000e-01 : f32
    %891 = vector.broadcast %cst_304 : f32 to vector<8x8xf32>
    %892 = arith.mulf %891, %890 : vector<8x8xf32>
    %893 = math.tanh %892 : vector<8x8xf32>
    %cst_305 = arith.constant 5.000000e-01 : f32
    %894 = vector.broadcast %cst_305 : f32 to vector<8x8xf32>
    %895 = arith.mulf %894, %893 : vector<8x8xf32>
    %cst_306 = arith.constant 5.000000e-01 : f32
    %896 = vector.broadcast %cst_306 : f32 to vector<8x8xf32>
    %897 = arith.addf %895, %896 : vector<8x8xf32>
    %898 = vector.extract_strided_slice %881 {offsets = [0, 16], sizes = [8, 8], strides = [1, 1]} : vector<8x32xf32> to vector<8x8xf32>
    %899 = math.tanh %898 : vector<8x8xf32>
    %900 = vector.extract_strided_slice %881 {offsets = [0, 24], sizes = [8, 8], strides = [1, 1]} : vector<8x32xf32> to vector<8x8xf32>
    %cst_307 = arith.constant 5.000000e-01 : f32
    %901 = vector.broadcast %cst_307 : f32 to vector<8x8xf32>
    %902 = arith.mulf %901, %900 : vector<8x8xf32>
    %903 = math.tanh %902 : vector<8x8xf32>
    %cst_308 = arith.constant 5.000000e-01 : f32
    %904 = vector.broadcast %cst_308 : f32 to vector<8x8xf32>
    %905 = arith.mulf %904, %903 : vector<8x8xf32>
    %cst_309 = arith.constant 5.000000e-01 : f32
    %906 = vector.broadcast %cst_309 : f32 to vector<8x8xf32>
    %907 = arith.addf %905, %906 : vector<8x8xf32>
    %908 = arith.mulf %897, %832 : vector<8x8xf32>
    %909 = arith.mulf %889, %899 : vector<8x8xf32>
    %910 = arith.addf %908, %909 : vector<8x8xf32>
    %911 = math.tanh %910 : vector<8x8xf32>
    %912 = arith.mulf %907, %911 : vector<8x8xf32>
    %cst_310 = arith.constant dense<0.000000e+00> : vector<8x128xf32>
    %913 = tpu.matmul %912, %20, %cst_310 {dimension_numbers = #tpu.dot_dimension_numbers<[1], [0], [0], [1], [0, 0, 1, 1], [], []>} : vector<8x8xf32>, vector<8x128xf32>, vector<8x128xf32> -> vector<8x128xf32>
    %914 = vector.extract_strided_slice %913 {offsets = [0, 0], sizes = [8, 64], strides = [1, 1]} : vector<8x128xf32> to vector<8x64xf32>
    %915 = arith.addf %329, %914 : vector<8x64xf32>
    %916 = vector.extract_strided_slice %913 {offsets = [0, 64], sizes = [8, 64], strides = [1, 1]} : vector<8x128xf32> to vector<8x64xf32>
    %917 = arith.subf %916, %327 : vector<8x64xf32>
    %918 = vector.shape_cast %915 : vector<8x64xf32> to vector<8x1x64xf32>
    %919 = vector.shape_cast %917 : vector<8x64xf32> to vector<1x8x64xf32>
    %920 = vector.broadcast %918 : vector<8x1x64xf32> to vector<8x8x64xf32>
    %921 = vector.broadcast %919 : vector<1x8x64xf32> to vector<8x8x64xf32>
    %922 = arith.addf %920, %921 : vector<8x8x64xf32>
    %cst_311 = arith.constant 0.000000e+00 : f32
    %923 = vector.broadcast %cst_311 : f32 to vector<8x8x64xf32>
    %924 = arith.maximumf %922, %923 : vector<8x8x64xf32>
    %925 = vector.shape_cast %924 : vector<8x8x64xf32> to vector<64x64xf32>
    %cst_312 = arith.constant dense<0.000000e+00> : vector<64x8xf32>
    %926 = tpu.matmul %925, %22, %cst_312 {dimension_numbers = #tpu.dot_dimension_numbers<[1], [0], [0], [1], [0, 0, 1, 1], [], []>} : vector<64x64xf32>, vector<64x8xf32>, vector<64x8xf32> -> vector<64x8xf32>
    %927 = arith.addf %926, %26 : vector<64x8xf32>
    %cst_313 = arith.constant 0.000000e+00 : f32
    %928 = vector.broadcast %cst_313 : f32 to vector<64x8xf32>
    %929 = arith.maximumf %927, %928 : vector<64x8xf32>
    %930 = vector.shape_cast %929 : vector<64x8xf32> to vector<8x8x8xf32>
    %c7 = arith.constant 7 : index
    %c0_314 = arith.constant 0 : index
    %c0_315 = arith.constant 0 : index
    %931 = vector.load %arg2[%c7, %c0_314, %c0_315] : memref<12x8x8xf32, #tpu.memory_space<vmem>>, vector<1x8x8xf32>
    %932 = vector.shape_cast %931 : vector<1x8x8xf32> to vector<8x8xf32>
    %933 = vector.shape_cast %932 : vector<8x8xf32> to vector<8x8x1xf32>
    %934 = vector.broadcast %933 : vector<8x8x1xf32> to vector<8x8x8xf32>
    %935 = arith.mulf %930, %934 : vector<8x8x8xf32>
    %cst_316 = arith.constant dense<0xFF800000> : vector<8x8xf32>
    %936 = vector.multi_reduction <maximumf>, %935, %cst_316 [1] : vector<8x8x8xf32> to vector<8x8xf32>
    %937 = tpu.concatenate %912, %936 in 1 : vector<8x8xf32>, vector<8x8xf32> -> vector<8x16xf32>
    %cst_317 = arith.constant dense<0.000000e+00> : vector<8x20xf32>
    %938 = tpu.matmul %937, %28, %cst_317 {dimension_numbers = #tpu.dot_dimension_numbers<[1], [0], [0], [1], [0, 0, 1, 1], [], []>} : vector<8x16xf32>, vector<16x20xf32>, vector<8x20xf32> -> vector<8x20xf32>
    %939 = vector.extract_strided_slice %938 {offsets = [0, 0], sizes = [8, 4], strides = [1, 1]} : vector<8x20xf32> to vector<8x4xf32>
    %940 = arith.addf %939, %32 : vector<8x4xf32>
    %c7_318 = arith.constant 7 : index
    %c0_319 = arith.constant 0 : index
    %c0_320 = arith.constant 0 : index
    %941 = vector.load %arg7[%c7_318, %c0_319, %c0_320] : memref<12x8x4xf32, #tpu.memory_space<vmem>>, vector<1x8x4xf32>
    %942 = vector.shape_cast %941 : vector<1x8x4xf32> to vector<8x4xf32>
    %943 = vector.shape_cast %940 : vector<8x4xf32> to vector<1x8x4xf32>
    tpu.vector_store %arg7[%c7_318, %c0_319, %c0_320], %943 {strides = array<i32>} : memref<12x8x4xf32, #tpu.memory_space<vmem>>, vector<1x8x4xf32>,
    %c7_321 = arith.constant 7 : index
    %c0_322 = arith.constant 0 : index
    %c0_323 = arith.constant 0 : index
    %944 = vector.load %arg5[%c7_321, %c0_322, %c0_323] : memref<12x8x2xf32, #tpu.memory_space<vmem>>, vector<1x8x2xf32>
    %945 = vector.shape_cast %944 : vector<1x8x2xf32> to vector<8x2xf32>
    %946 = vector.extract_strided_slice %940 {offsets = [0, 2], sizes = [8, 2], strides = [1, 1]} : vector<8x4xf32> to vector<8x2xf32>
    %cst_324 = arith.constant 5.000000e-01 : f32
    %947 = vector.broadcast %cst_324 : f32 to vector<8x2xf32>
    %948 = arith.mulf %947, %946 : vector<8x2xf32>
    %949 = math.exp %948 : vector<8x2xf32>
    %950 = arith.mulf %945, %949 : vector<8x2xf32>
    %951 = vector.extract_strided_slice %938 {offsets = [0, 4], sizes = [8, 16], strides = [1, 1]} : vector<8x20xf32> to vector<8x16xf32>
    %952 = arith.addf %951, %38 : vector<8x16xf32>
    %cst_325 = arith.constant dense<0.000000e+00> : vector<8x16xf32>
    %953 = tpu.matmul %950, %34, %cst_325 {dimension_numbers = #tpu.dot_dimension_numbers<[1], [0], [0], [1], [0, 0, 1, 1], [], []>} : vector<8x2xf32>, vector<2x16xf32>, vector<8x16xf32> -> vector<8x16xf32>
    %954 = arith.addf %952, %953 : vector<8x16xf32>
    %cst_326 = arith.constant 0.000000e+00 : f32
    %955 = vector.broadcast %cst_326 : f32 to vector<8x16xf32>
    %956 = arith.maximumf %954, %955 : vector<8x16xf32>
    %957 = tpu.concatenate %956, %912 in 1 : vector<8x16xf32>, vector<8x8xf32> -> vector<8x24xf32>
    %cst_327 = arith.constant dense<0.000000e+00> : vector<8x32xf32>
    %958 = tpu.matmul %957, %11, %cst_327 {dimension_numbers = #tpu.dot_dimension_numbers<[1], [0], [0], [1], [0, 0, 1, 1], [], []>} : vector<8x24xf32>, vector<24x32xf32>, vector<8x32xf32> -> vector<8x32xf32>
    %959 = arith.addf %958, %15 : vector<8x32xf32>
    %960 = vector.extract_strided_slice %959 {offsets = [0, 0], sizes = [8, 8], strides = [1, 1]} : vector<8x32xf32> to vector<8x8xf32>
    %cst_328 = arith.constant 5.000000e-01 : f32
    %961 = vector.broadcast %cst_328 : f32 to vector<8x8xf32>
    %962 = arith.mulf %961, %960 : vector<8x8xf32>
    %963 = math.tanh %962 : vector<8x8xf32>
    %cst_329 = arith.constant 5.000000e-01 : f32
    %964 = vector.broadcast %cst_329 : f32 to vector<8x8xf32>
    %965 = arith.mulf %964, %963 : vector<8x8xf32>
    %cst_330 = arith.constant 5.000000e-01 : f32
    %966 = vector.broadcast %cst_330 : f32 to vector<8x8xf32>
    %967 = arith.addf %965, %966 : vector<8x8xf32>
    %968 = vector.extract_strided_slice %959 {offsets = [0, 8], sizes = [8, 8], strides = [1, 1]} : vector<8x32xf32> to vector<8x8xf32>
    %cst_331 = arith.constant 5.000000e-01 : f32
    %969 = vector.broadcast %cst_331 : f32 to vector<8x8xf32>
    %970 = arith.mulf %969, %968 : vector<8x8xf32>
    %971 = math.tanh %970 : vector<8x8xf32>
    %cst_332 = arith.constant 5.000000e-01 : f32
    %972 = vector.broadcast %cst_332 : f32 to vector<8x8xf32>
    %973 = arith.mulf %972, %971 : vector<8x8xf32>
    %cst_333 = arith.constant 5.000000e-01 : f32
    %974 = vector.broadcast %cst_333 : f32 to vector<8x8xf32>
    %975 = arith.addf %973, %974 : vector<8x8xf32>
    %976 = vector.extract_strided_slice %959 {offsets = [0, 16], sizes = [8, 8], strides = [1, 1]} : vector<8x32xf32> to vector<8x8xf32>
    %977 = math.tanh %976 : vector<8x8xf32>
    %978 = vector.extract_strided_slice %959 {offsets = [0, 24], sizes = [8, 8], strides = [1, 1]} : vector<8x32xf32> to vector<8x8xf32>
    %cst_334 = arith.constant 5.000000e-01 : f32
    %979 = vector.broadcast %cst_334 : f32 to vector<8x8xf32>
    %980 = arith.mulf %979, %978 : vector<8x8xf32>
    %981 = math.tanh %980 : vector<8x8xf32>
    %cst_335 = arith.constant 5.000000e-01 : f32
    %982 = vector.broadcast %cst_335 : f32 to vector<8x8xf32>
    %983 = arith.mulf %982, %981 : vector<8x8xf32>
    %cst_336 = arith.constant 5.000000e-01 : f32
    %984 = vector.broadcast %cst_336 : f32 to vector<8x8xf32>
    %985 = arith.addf %983, %984 : vector<8x8xf32>
    %986 = arith.mulf %975, %910 : vector<8x8xf32>
    %987 = arith.mulf %967, %977 : vector<8x8xf32>
    %988 = arith.addf %986, %987 : vector<8x8xf32>
    %989 = math.tanh %988 : vector<8x8xf32>
    %990 = arith.mulf %985, %989 : vector<8x8xf32>
    %cst_337 = arith.constant dense<0.000000e+00> : vector<8x128xf32>
    %991 = tpu.matmul %990, %20, %cst_337 {dimension_numbers = #tpu.dot_dimension_numbers<[1], [0], [0], [1], [0, 0, 1, 1], [], []>} : vector<8x8xf32>, vector<8x128xf32>, vector<8x128xf32> -> vector<8x128xf32>
    %992 = vector.extract_strided_slice %991 {offsets = [0, 0], sizes = [8, 64], strides = [1, 1]} : vector<8x128xf32> to vector<8x64xf32>
    %993 = arith.addf %329, %992 : vector<8x64xf32>
    %994 = vector.extract_strided_slice %991 {offsets = [0, 64], sizes = [8, 64], strides = [1, 1]} : vector<8x128xf32> to vector<8x64xf32>
    %995 = arith.subf %994, %327 : vector<8x64xf32>
    %996 = vector.shape_cast %993 : vector<8x64xf32> to vector<8x1x64xf32>
    %997 = vector.shape_cast %995 : vector<8x64xf32> to vector<1x8x64xf32>
    %998 = vector.broadcast %996 : vector<8x1x64xf32> to vector<8x8x64xf32>
    %999 = vector.broadcast %997 : vector<1x8x64xf32> to vector<8x8x64xf32>
    %1000 = arith.addf %998, %999 : vector<8x8x64xf32>
    %cst_338 = arith.constant 0.000000e+00 : f32
    %1001 = vector.broadcast %cst_338 : f32 to vector<8x8x64xf32>
    %1002 = arith.maximumf %1000, %1001 : vector<8x8x64xf32>
    %1003 = vector.shape_cast %1002 : vector<8x8x64xf32> to vector<64x64xf32>
    %cst_339 = arith.constant dense<0.000000e+00> : vector<64x8xf32>
    %1004 = tpu.matmul %1003, %22, %cst_339 {dimension_numbers = #tpu.dot_dimension_numbers<[1], [0], [0], [1], [0, 0, 1, 1], [], []>} : vector<64x64xf32>, vector<64x8xf32>, vector<64x8xf32> -> vector<64x8xf32>
    %1005 = arith.addf %1004, %26 : vector<64x8xf32>
    %cst_340 = arith.constant 0.000000e+00 : f32
    %1006 = vector.broadcast %cst_340 : f32 to vector<64x8xf32>
    %1007 = arith.maximumf %1005, %1006 : vector<64x8xf32>
    %1008 = vector.shape_cast %1007 : vector<64x8xf32> to vector<8x8x8xf32>
    %c8_341 = arith.constant 8 : index
    %c0_342 = arith.constant 0 : index
    %c0_343 = arith.constant 0 : index
    %1009 = vector.load %arg2[%c8_341, %c0_342, %c0_343] : memref<12x8x8xf32, #tpu.memory_space<vmem>>, vector<1x8x8xf32>
    %1010 = vector.shape_cast %1009 : vector<1x8x8xf32> to vector<8x8xf32>
    %1011 = vector.shape_cast %1010 : vector<8x8xf32> to vector<8x8x1xf32>
    %1012 = vector.broadcast %1011 : vector<8x8x1xf32> to vector<8x8x8xf32>
    %1013 = arith.mulf %1008, %1012 : vector<8x8x8xf32>
    %cst_344 = arith.constant dense<0xFF800000> : vector<8x8xf32>
    %1014 = vector.multi_reduction <maximumf>, %1013, %cst_344 [1] : vector<8x8x8xf32> to vector<8x8xf32>
    %1015 = tpu.concatenate %990, %1014 in 1 : vector<8x8xf32>, vector<8x8xf32> -> vector<8x16xf32>
    %cst_345 = arith.constant dense<0.000000e+00> : vector<8x20xf32>
    %1016 = tpu.matmul %1015, %28, %cst_345 {dimension_numbers = #tpu.dot_dimension_numbers<[1], [0], [0], [1], [0, 0, 1, 1], [], []>} : vector<8x16xf32>, vector<16x20xf32>, vector<8x20xf32> -> vector<8x20xf32>
    %1017 = vector.extract_strided_slice %1016 {offsets = [0, 0], sizes = [8, 4], strides = [1, 1]} : vector<8x20xf32> to vector<8x4xf32>
    %1018 = arith.addf %1017, %32 : vector<8x4xf32>
    %c8_346 = arith.constant 8 : index
    %c0_347 = arith.constant 0 : index
    %c0_348 = arith.constant 0 : index
    %1019 = vector.load %arg7[%c8_346, %c0_347, %c0_348] : memref<12x8x4xf32, #tpu.memory_space<vmem>>, vector<1x8x4xf32>
    %1020 = vector.shape_cast %1019 : vector<1x8x4xf32> to vector<8x4xf32>
    %1021 = vector.shape_cast %1018 : vector<8x4xf32> to vector<1x8x4xf32>
    tpu.vector_store %arg7[%c8_346, %c0_347, %c0_348], %1021 {strides = array<i32>} : memref<12x8x4xf32, #tpu.memory_space<vmem>>, vector<1x8x4xf32>,
    %c8_349 = arith.constant 8 : index
    %c0_350 = arith.constant 0 : index
    %c0_351 = arith.constant 0 : index
    %1022 = vector.load %arg5[%c8_349, %c0_350, %c0_351] : memref<12x8x2xf32, #tpu.memory_space<vmem>>, vector<1x8x2xf32>
    %1023 = vector.shape_cast %1022 : vector<1x8x2xf32> to vector<8x2xf32>
    %1024 = vector.extract_strided_slice %1018 {offsets = [0, 2], sizes = [8, 2], strides = [1, 1]} : vector<8x4xf32> to vector<8x2xf32>
    %cst_352 = arith.constant 5.000000e-01 : f32
    %1025 = vector.broadcast %cst_352 : f32 to vector<8x2xf32>
    %1026 = arith.mulf %1025, %1024 : vector<8x2xf32>
    %1027 = math.exp %1026 : vector<8x2xf32>
    %1028 = arith.mulf %1023, %1027 : vector<8x2xf32>
    %1029 = vector.extract_strided_slice %1016 {offsets = [0, 4], sizes = [8, 16], strides = [1, 1]} : vector<8x20xf32> to vector<8x16xf32>
    %1030 = arith.addf %1029, %38 : vector<8x16xf32>
    %cst_353 = arith.constant dense<0.000000e+00> : vector<8x16xf32>
    %1031 = tpu.matmul %1028, %34, %cst_353 {dimension_numbers = #tpu.dot_dimension_numbers<[1], [0], [0], [1], [0, 0, 1, 1], [], []>} : vector<8x2xf32>, vector<2x16xf32>, vector<8x16xf32> -> vector<8x16xf32>
    %1032 = arith.addf %1030, %1031 : vector<8x16xf32>
    %cst_354 = arith.constant 0.000000e+00 : f32
    %1033 = vector.broadcast %cst_354 : f32 to vector<8x16xf32>
    %1034 = arith.maximumf %1032, %1033 : vector<8x16xf32>
    %1035 = tpu.concatenate %1034, %990 in 1 : vector<8x16xf32>, vector<8x8xf32> -> vector<8x24xf32>
    %cst_355 = arith.constant dense<0.000000e+00> : vector<8x32xf32>
    %1036 = tpu.matmul %1035, %11, %cst_355 {dimension_numbers = #tpu.dot_dimension_numbers<[1], [0], [0], [1], [0, 0, 1, 1], [], []>} : vector<8x24xf32>, vector<24x32xf32>, vector<8x32xf32> -> vector<8x32xf32>
    %1037 = arith.addf %1036, %15 : vector<8x32xf32>
    %1038 = vector.extract_strided_slice %1037 {offsets = [0, 0], sizes = [8, 8], strides = [1, 1]} : vector<8x32xf32> to vector<8x8xf32>
    %cst_356 = arith.constant 5.000000e-01 : f32
    %1039 = vector.broadcast %cst_356 : f32 to vector<8x8xf32>
    %1040 = arith.mulf %1039, %1038 : vector<8x8xf32>
    %1041 = math.tanh %1040 : vector<8x8xf32>
    %cst_357 = arith.constant 5.000000e-01 : f32
    %1042 = vector.broadcast %cst_357 : f32 to vector<8x8xf32>
    %1043 = arith.mulf %1042, %1041 : vector<8x8xf32>
    %cst_358 = arith.constant 5.000000e-01 : f32
    %1044 = vector.broadcast %cst_358 : f32 to vector<8x8xf32>
    %1045 = arith.addf %1043, %1044 : vector<8x8xf32>
    %1046 = vector.extract_strided_slice %1037 {offsets = [0, 8], sizes = [8, 8], strides = [1, 1]} : vector<8x32xf32> to vector<8x8xf32>
    %cst_359 = arith.constant 5.000000e-01 : f32
    %1047 = vector.broadcast %cst_359 : f32 to vector<8x8xf32>
    %1048 = arith.mulf %1047, %1046 : vector<8x8xf32>
    %1049 = math.tanh %1048 : vector<8x8xf32>
    %cst_360 = arith.constant 5.000000e-01 : f32
    %1050 = vector.broadcast %cst_360 : f32 to vector<8x8xf32>
    %1051 = arith.mulf %1050, %1049 : vector<8x8xf32>
    %cst_361 = arith.constant 5.000000e-01 : f32
    %1052 = vector.broadcast %cst_361 : f32 to vector<8x8xf32>
    %1053 = arith.addf %1051, %1052 : vector<8x8xf32>
    %1054 = vector.extract_strided_slice %1037 {offsets = [0, 16], sizes = [8, 8], strides = [1, 1]} : vector<8x32xf32> to vector<8x8xf32>
    %1055 = math.tanh %1054 : vector<8x8xf32>
    %1056 = vector.extract_strided_slice %1037 {offsets = [0, 24], sizes = [8, 8], strides = [1, 1]} : vector<8x32xf32> to vector<8x8xf32>
    %cst_362 = arith.constant 5.000000e-01 : f32
    %1057 = vector.broadcast %cst_362 : f32 to vector<8x8xf32>
    %1058 = arith.mulf %1057, %1056 : vector<8x8xf32>
    %1059 = math.tanh %1058 : vector<8x8xf32>
    %cst_363 = arith.constant 5.000000e-01 : f32
    %1060 = vector.broadcast %cst_363 : f32 to vector<8x8xf32>
    %1061 = arith.mulf %1060, %1059 : vector<8x8xf32>
    %cst_364 = arith.constant 5.000000e-01 : f32
    %1062 = vector.broadcast %cst_364 : f32 to vector<8x8xf32>
    %1063 = arith.addf %1061, %1062 : vector<8x8xf32>
    %1064 = arith.mulf %1053, %988 : vector<8x8xf32>
    %1065 = arith.mulf %1045, %1055 : vector<8x8xf32>
    %1066 = arith.addf %1064, %1065 : vector<8x8xf32>
    %1067 = math.tanh %1066 : vector<8x8xf32>
    %1068 = arith.mulf %1063, %1067 : vector<8x8xf32>
    %cst_365 = arith.constant dense<0.000000e+00> : vector<8x128xf32>
    %1069 = tpu.matmul %1068, %20, %cst_365 {dimension_numbers = #tpu.dot_dimension_numbers<[1], [0], [0], [1], [0, 0, 1, 1], [], []>} : vector<8x8xf32>, vector<8x128xf32>, vector<8x128xf32> -> vector<8x128xf32>
    %1070 = vector.extract_strided_slice %1069 {offsets = [0, 0], sizes = [8, 64], strides = [1, 1]} : vector<8x128xf32> to vector<8x64xf32>
    %1071 = arith.addf %329, %1070 : vector<8x64xf32>
    %1072 = vector.extract_strided_slice %1069 {offsets = [0, 64], sizes = [8, 64], strides = [1, 1]} : vector<8x128xf32> to vector<8x64xf32>
    %1073 = arith.subf %1072, %327 : vector<8x64xf32>
    %1074 = vector.shape_cast %1071 : vector<8x64xf32> to vector<8x1x64xf32>
    %1075 = vector.shape_cast %1073 : vector<8x64xf32> to vector<1x8x64xf32>
    %1076 = vector.broadcast %1074 : vector<8x1x64xf32> to vector<8x8x64xf32>
    %1077 = vector.broadcast %1075 : vector<1x8x64xf32> to vector<8x8x64xf32>
    %1078 = arith.addf %1076, %1077 : vector<8x8x64xf32>
    %cst_366 = arith.constant 0.000000e+00 : f32
    %1079 = vector.broadcast %cst_366 : f32 to vector<8x8x64xf32>
    %1080 = arith.maximumf %1078, %1079 : vector<8x8x64xf32>
    %1081 = vector.shape_cast %1080 : vector<8x8x64xf32> to vector<64x64xf32>
    %cst_367 = arith.constant dense<0.000000e+00> : vector<64x8xf32>
    %1082 = tpu.matmul %1081, %22, %cst_367 {dimension_numbers = #tpu.dot_dimension_numbers<[1], [0], [0], [1], [0, 0, 1, 1], [], []>} : vector<64x64xf32>, vector<64x8xf32>, vector<64x8xf32> -> vector<64x8xf32>
    %1083 = arith.addf %1082, %26 : vector<64x8xf32>
    %cst_368 = arith.constant 0.000000e+00 : f32
    %1084 = vector.broadcast %cst_368 : f32 to vector<64x8xf32>
    %1085 = arith.maximumf %1083, %1084 : vector<64x8xf32>
    %1086 = vector.shape_cast %1085 : vector<64x8xf32> to vector<8x8x8xf32>
    %c9 = arith.constant 9 : index
    %c0_369 = arith.constant 0 : index
    %c0_370 = arith.constant 0 : index
    %1087 = vector.load %arg2[%c9, %c0_369, %c0_370] : memref<12x8x8xf32, #tpu.memory_space<vmem>>, vector<1x8x8xf32>
    %1088 = vector.shape_cast %1087 : vector<1x8x8xf32> to vector<8x8xf32>
    %1089 = vector.shape_cast %1088 : vector<8x8xf32> to vector<8x8x1xf32>
    %1090 = vector.broadcast %1089 : vector<8x8x1xf32> to vector<8x8x8xf32>
    %1091 = arith.mulf %1086, %1090 : vector<8x8x8xf32>
    %cst_371 = arith.constant dense<0xFF800000> : vector<8x8xf32>
    %1092 = vector.multi_reduction <maximumf>, %1091, %cst_371 [1] : vector<8x8x8xf32> to vector<8x8xf32>
    %1093 = tpu.concatenate %1068, %1092 in 1 : vector<8x8xf32>, vector<8x8xf32> -> vector<8x16xf32>
    %cst_372 = arith.constant dense<0.000000e+00> : vector<8x20xf32>
    %1094 = tpu.matmul %1093, %28, %cst_372 {dimension_numbers = #tpu.dot_dimension_numbers<[1], [0], [0], [1], [0, 0, 1, 1], [], []>} : vector<8x16xf32>, vector<16x20xf32>, vector<8x20xf32> -> vector<8x20xf32>
    %1095 = vector.extract_strided_slice %1094 {offsets = [0, 0], sizes = [8, 4], strides = [1, 1]} : vector<8x20xf32> to vector<8x4xf32>
    %1096 = arith.addf %1095, %32 : vector<8x4xf32>
    %c9_373 = arith.constant 9 : index
    %c0_374 = arith.constant 0 : index
    %c0_375 = arith.constant 0 : index
    %1097 = vector.load %arg7[%c9_373, %c0_374, %c0_375] : memref<12x8x4xf32, #tpu.memory_space<vmem>>, vector<1x8x4xf32>
    %1098 = vector.shape_cast %1097 : vector<1x8x4xf32> to vector<8x4xf32>
    %1099 = vector.shape_cast %1096 : vector<8x4xf32> to vector<1x8x4xf32>
    tpu.vector_store %arg7[%c9_373, %c0_374, %c0_375], %1099 {strides = array<i32>} : memref<12x8x4xf32, #tpu.memory_space<vmem>>, vector<1x8x4xf32>,
    %c9_376 = arith.constant 9 : index
    %c0_377 = arith.constant 0 : index
    %c0_378 = arith.constant 0 : index
    %1100 = vector.load %arg5[%c9_376, %c0_377, %c0_378] : memref<12x8x2xf32, #tpu.memory_space<vmem>>, vector<1x8x2xf32>
    %1101 = vector.shape_cast %1100 : vector<1x8x2xf32> to vector<8x2xf32>
    %1102 = vector.extract_strided_slice %1096 {offsets = [0, 2], sizes = [8, 2], strides = [1, 1]} : vector<8x4xf32> to vector<8x2xf32>
    %cst_379 = arith.constant 5.000000e-01 : f32
    %1103 = vector.broadcast %cst_379 : f32 to vector<8x2xf32>
    %1104 = arith.mulf %1103, %1102 : vector<8x2xf32>
    %1105 = math.exp %1104 : vector<8x2xf32>
    %1106 = arith.mulf %1101, %1105 : vector<8x2xf32>
    %1107 = vector.extract_strided_slice %1094 {offsets = [0, 4], sizes = [8, 16], strides = [1, 1]} : vector<8x20xf32> to vector<8x16xf32>
    %1108 = arith.addf %1107, %38 : vector<8x16xf32>
    %cst_380 = arith.constant dense<0.000000e+00> : vector<8x16xf32>
    %1109 = tpu.matmul %1106, %34, %cst_380 {dimension_numbers = #tpu.dot_dimension_numbers<[1], [0], [0], [1], [0, 0, 1, 1], [], []>} : vector<8x2xf32>, vector<2x16xf32>, vector<8x16xf32> -> vector<8x16xf32>
    %1110 = arith.addf %1108, %1109 : vector<8x16xf32>
    %cst_381 = arith.constant 0.000000e+00 : f32
    %1111 = vector.broadcast %cst_381 : f32 to vector<8x16xf32>
    %1112 = arith.maximumf %1110, %1111 : vector<8x16xf32>
    %1113 = tpu.concatenate %1112, %1068 in 1 : vector<8x16xf32>, vector<8x8xf32> -> vector<8x24xf32>
    %cst_382 = arith.constant dense<0.000000e+00> : vector<8x32xf32>
    %1114 = tpu.matmul %1113, %11, %cst_382 {dimension_numbers = #tpu.dot_dimension_numbers<[1], [0], [0], [1], [0, 0, 1, 1], [], []>} : vector<8x24xf32>, vector<24x32xf32>, vector<8x32xf32> -> vector<8x32xf32>
    %1115 = arith.addf %1114, %15 : vector<8x32xf32>
    %1116 = vector.extract_strided_slice %1115 {offsets = [0, 0], sizes = [8, 8], strides = [1, 1]} : vector<8x32xf32> to vector<8x8xf32>
    %cst_383 = arith.constant 5.000000e-01 : f32
    %1117 = vector.broadcast %cst_383 : f32 to vector<8x8xf32>
    %1118 = arith.mulf %1117, %1116 : vector<8x8xf32>
    %1119 = math.tanh %1118 : vector<8x8xf32>
    %cst_384 = arith.constant 5.000000e-01 : f32
    %1120 = vector.broadcast %cst_384 : f32 to vector<8x8xf32>
    %1121 = arith.mulf %1120, %1119 : vector<8x8xf32>
    %cst_385 = arith.constant 5.000000e-01 : f32
    %1122 = vector.broadcast %cst_385 : f32 to vector<8x8xf32>
    %1123 = arith.addf %1121, %1122 : vector<8x8xf32>
    %1124 = vector.extract_strided_slice %1115 {offsets = [0, 8], sizes = [8, 8], strides = [1, 1]} : vector<8x32xf32> to vector<8x8xf32>
    %cst_386 = arith.constant 5.000000e-01 : f32
    %1125 = vector.broadcast %cst_386 : f32 to vector<8x8xf32>
    %1126 = arith.mulf %1125, %1124 : vector<8x8xf32>
    %1127 = math.tanh %1126 : vector<8x8xf32>
    %cst_387 = arith.constant 5.000000e-01 : f32
    %1128 = vector.broadcast %cst_387 : f32 to vector<8x8xf32>
    %1129 = arith.mulf %1128, %1127 : vector<8x8xf32>
    %cst_388 = arith.constant 5.000000e-01 : f32
    %1130 = vector.broadcast %cst_388 : f32 to vector<8x8xf32>
    %1131 = arith.addf %1129, %1130 : vector<8x8xf32>
    %1132 = vector.extract_strided_slice %1115 {offsets = [0, 16], sizes = [8, 8], strides = [1, 1]} : vector<8x32xf32> to vector<8x8xf32>
    %1133 = math.tanh %1132 : vector<8x8xf32>
    %1134 = vector.extract_strided_slice %1115 {offsets = [0, 24], sizes = [8, 8], strides = [1, 1]} : vector<8x32xf32> to vector<8x8xf32>
    %cst_389 = arith.constant 5.000000e-01 : f32
    %1135 = vector.broadcast %cst_389 : f32 to vector<8x8xf32>
    %1136 = arith.mulf %1135, %1134 : vector<8x8xf32>
    %1137 = math.tanh %1136 : vector<8x8xf32>
    %cst_390 = arith.constant 5.000000e-01 : f32
    %1138 = vector.broadcast %cst_390 : f32 to vector<8x8xf32>
    %1139 = arith.mulf %1138, %1137 : vector<8x8xf32>
    %cst_391 = arith.constant 5.000000e-01 : f32
    %1140 = vector.broadcast %cst_391 : f32 to vector<8x8xf32>
    %1141 = arith.addf %1139, %1140 : vector<8x8xf32>
    %1142 = arith.mulf %1131, %1066 : vector<8x8xf32>
    %1143 = arith.mulf %1123, %1133 : vector<8x8xf32>
    %1144 = arith.addf %1142, %1143 : vector<8x8xf32>
    %1145 = math.tanh %1144 : vector<8x8xf32>
    %1146 = arith.mulf %1141, %1145 : vector<8x8xf32>
    %cst_392 = arith.constant dense<0.000000e+00> : vector<8x128xf32>
    %1147 = tpu.matmul %1146, %20, %cst_392 {dimension_numbers = #tpu.dot_dimension_numbers<[1], [0], [0], [1], [0, 0, 1, 1], [], []>} : vector<8x8xf32>, vector<8x128xf32>, vector<8x128xf32> -> vector<8x128xf32>
    %1148 = vector.extract_strided_slice %1147 {offsets = [0, 0], sizes = [8, 64], strides = [1, 1]} : vector<8x128xf32> to vector<8x64xf32>
    %1149 = arith.addf %329, %1148 : vector<8x64xf32>
    %1150 = vector.extract_strided_slice %1147 {offsets = [0, 64], sizes = [8, 64], strides = [1, 1]} : vector<8x128xf32> to vector<8x64xf32>
    %1151 = arith.subf %1150, %327 : vector<8x64xf32>
    %1152 = vector.shape_cast %1149 : vector<8x64xf32> to vector<8x1x64xf32>
    %1153 = vector.shape_cast %1151 : vector<8x64xf32> to vector<1x8x64xf32>
    %1154 = vector.broadcast %1152 : vector<8x1x64xf32> to vector<8x8x64xf32>
    %1155 = vector.broadcast %1153 : vector<1x8x64xf32> to vector<8x8x64xf32>
    %1156 = arith.addf %1154, %1155 : vector<8x8x64xf32>
    %cst_393 = arith.constant 0.000000e+00 : f32
    %1157 = vector.broadcast %cst_393 : f32 to vector<8x8x64xf32>
    %1158 = arith.maximumf %1156, %1157 : vector<8x8x64xf32>
    %1159 = vector.shape_cast %1158 : vector<8x8x64xf32> to vector<64x64xf32>
    %cst_394 = arith.constant dense<0.000000e+00> : vector<64x8xf32>
    %1160 = tpu.matmul %1159, %22, %cst_394 {dimension_numbers = #tpu.dot_dimension_numbers<[1], [0], [0], [1], [0, 0, 1, 1], [], []>} : vector<64x64xf32>, vector<64x8xf32>, vector<64x8xf32> -> vector<64x8xf32>
    %1161 = arith.addf %1160, %26 : vector<64x8xf32>
    %cst_395 = arith.constant 0.000000e+00 : f32
    %1162 = vector.broadcast %cst_395 : f32 to vector<64x8xf32>
    %1163 = arith.maximumf %1161, %1162 : vector<64x8xf32>
    %1164 = vector.shape_cast %1163 : vector<64x8xf32> to vector<8x8x8xf32>
    %c10 = arith.constant 10 : index
    %c0_396 = arith.constant 0 : index
    %c0_397 = arith.constant 0 : index
    %1165 = vector.load %arg2[%c10, %c0_396, %c0_397] : memref<12x8x8xf32, #tpu.memory_space<vmem>>, vector<1x8x8xf32>
    %1166 = vector.shape_cast %1165 : vector<1x8x8xf32> to vector<8x8xf32>
    %1167 = vector.shape_cast %1166 : vector<8x8xf32> to vector<8x8x1xf32>
    %1168 = vector.broadcast %1167 : vector<8x8x1xf32> to vector<8x8x8xf32>
    %1169 = arith.mulf %1164, %1168 : vector<8x8x8xf32>
    %cst_398 = arith.constant dense<0xFF800000> : vector<8x8xf32>
    %1170 = vector.multi_reduction <maximumf>, %1169, %cst_398 [1] : vector<8x8x8xf32> to vector<8x8xf32>
    %1171 = tpu.concatenate %1146, %1170 in 1 : vector<8x8xf32>, vector<8x8xf32> -> vector<8x16xf32>
    %cst_399 = arith.constant dense<0.000000e+00> : vector<8x20xf32>
    %1172 = tpu.matmul %1171, %28, %cst_399 {dimension_numbers = #tpu.dot_dimension_numbers<[1], [0], [0], [1], [0, 0, 1, 1], [], []>} : vector<8x16xf32>, vector<16x20xf32>, vector<8x20xf32> -> vector<8x20xf32>
    %1173 = vector.extract_strided_slice %1172 {offsets = [0, 0], sizes = [8, 4], strides = [1, 1]} : vector<8x20xf32> to vector<8x4xf32>
    %1174 = arith.addf %1173, %32 : vector<8x4xf32>
    %c10_400 = arith.constant 10 : index
    %c0_401 = arith.constant 0 : index
    %c0_402 = arith.constant 0 : index
    %1175 = vector.load %arg7[%c10_400, %c0_401, %c0_402] : memref<12x8x4xf32, #tpu.memory_space<vmem>>, vector<1x8x4xf32>
    %1176 = vector.shape_cast %1175 : vector<1x8x4xf32> to vector<8x4xf32>
    %1177 = vector.shape_cast %1174 : vector<8x4xf32> to vector<1x8x4xf32>
    tpu.vector_store %arg7[%c10_400, %c0_401, %c0_402], %1177 {strides = array<i32>} : memref<12x8x4xf32, #tpu.memory_space<vmem>>, vector<1x8x4xf32>,
    %c10_403 = arith.constant 10 : index
    %c0_404 = arith.constant 0 : index
    %c0_405 = arith.constant 0 : index
    %1178 = vector.load %arg5[%c10_403, %c0_404, %c0_405] : memref<12x8x2xf32, #tpu.memory_space<vmem>>, vector<1x8x2xf32>
    %1179 = vector.shape_cast %1178 : vector<1x8x2xf32> to vector<8x2xf32>
    %1180 = vector.extract_strided_slice %1174 {offsets = [0, 2], sizes = [8, 2], strides = [1, 1]} : vector<8x4xf32> to vector<8x2xf32>
    %cst_406 = arith.constant 5.000000e-01 : f32
    %1181 = vector.broadcast %cst_406 : f32 to vector<8x2xf32>
    %1182 = arith.mulf %1181, %1180 : vector<8x2xf32>
    %1183 = math.exp %1182 : vector<8x2xf32>
    %1184 = arith.mulf %1179, %1183 : vector<8x2xf32>
    %1185 = vector.extract_strided_slice %1172 {offsets = [0, 4], sizes = [8, 16], strides = [1, 1]} : vector<8x20xf32> to vector<8x16xf32>
    %1186 = arith.addf %1185, %38 : vector<8x16xf32>
    %cst_407 = arith.constant dense<0.000000e+00> : vector<8x16xf32>
    %1187 = tpu.matmul %1184, %34, %cst_407 {dimension_numbers = #tpu.dot_dimension_numbers<[1], [0], [0], [1], [0, 0, 1, 1], [], []>} : vector<8x2xf32>, vector<2x16xf32>, vector<8x16xf32> -> vector<8x16xf32>
    %1188 = arith.addf %1186, %1187 : vector<8x16xf32>
    %cst_408 = arith.constant 0.000000e+00 : f32
    %1189 = vector.broadcast %cst_408 : f32 to vector<8x16xf32>
    %1190 = arith.maximumf %1188, %1189 : vector<8x16xf32>
    %1191 = tpu.concatenate %1190, %1146 in 1 : vector<8x16xf32>, vector<8x8xf32> -> vector<8x24xf32>
    %cst_409 = arith.constant dense<0.000000e+00> : vector<8x32xf32>
    %1192 = tpu.matmul %1191, %11, %cst_409 {dimension_numbers = #tpu.dot_dimension_numbers<[1], [0], [0], [1], [0, 0, 1, 1], [], []>} : vector<8x24xf32>, vector<24x32xf32>, vector<8x32xf32> -> vector<8x32xf32>
    %1193 = arith.addf %1192, %15 : vector<8x32xf32>
    %1194 = vector.extract_strided_slice %1193 {offsets = [0, 0], sizes = [8, 8], strides = [1, 1]} : vector<8x32xf32> to vector<8x8xf32>
    %cst_410 = arith.constant 5.000000e-01 : f32
    %1195 = vector.broadcast %cst_410 : f32 to vector<8x8xf32>
    %1196 = arith.mulf %1195, %1194 : vector<8x8xf32>
    %1197 = math.tanh %1196 : vector<8x8xf32>
    %cst_411 = arith.constant 5.000000e-01 : f32
    %1198 = vector.broadcast %cst_411 : f32 to vector<8x8xf32>
    %1199 = arith.mulf %1198, %1197 : vector<8x8xf32>
    %cst_412 = arith.constant 5.000000e-01 : f32
    %1200 = vector.broadcast %cst_412 : f32 to vector<8x8xf32>
    %1201 = arith.addf %1199, %1200 : vector<8x8xf32>
    %1202 = vector.extract_strided_slice %1193 {offsets = [0, 8], sizes = [8, 8], strides = [1, 1]} : vector<8x32xf32> to vector<8x8xf32>
    %cst_413 = arith.constant 5.000000e-01 : f32
    %1203 = vector.broadcast %cst_413 : f32 to vector<8x8xf32>
    %1204 = arith.mulf %1203, %1202 : vector<8x8xf32>
    %1205 = math.tanh %1204 : vector<8x8xf32>
    %cst_414 = arith.constant 5.000000e-01 : f32
    %1206 = vector.broadcast %cst_414 : f32 to vector<8x8xf32>
    %1207 = arith.mulf %1206, %1205 : vector<8x8xf32>
    %cst_415 = arith.constant 5.000000e-01 : f32
    %1208 = vector.broadcast %cst_415 : f32 to vector<8x8xf32>
    %1209 = arith.addf %1207, %1208 : vector<8x8xf32>
    %1210 = vector.extract_strided_slice %1193 {offsets = [0, 16], sizes = [8, 8], strides = [1, 1]} : vector<8x32xf32> to vector<8x8xf32>
    %1211 = math.tanh %1210 : vector<8x8xf32>
    %1212 = vector.extract_strided_slice %1193 {offsets = [0, 24], sizes = [8, 8], strides = [1, 1]} : vector<8x32xf32> to vector<8x8xf32>
    %cst_416 = arith.constant 5.000000e-01 : f32
    %1213 = vector.broadcast %cst_416 : f32 to vector<8x8xf32>
    %1214 = arith.mulf %1213, %1212 : vector<8x8xf32>
    %1215 = math.tanh %1214 : vector<8x8xf32>
    %cst_417 = arith.constant 5.000000e-01 : f32
    %1216 = vector.broadcast %cst_417 : f32 to vector<8x8xf32>
    %1217 = arith.mulf %1216, %1215 : vector<8x8xf32>
    %cst_418 = arith.constant 5.000000e-01 : f32
    %1218 = vector.broadcast %cst_418 : f32 to vector<8x8xf32>
    %1219 = arith.addf %1217, %1218 : vector<8x8xf32>
    %1220 = arith.mulf %1209, %1144 : vector<8x8xf32>
    %1221 = arith.mulf %1201, %1211 : vector<8x8xf32>
    %1222 = arith.addf %1220, %1221 : vector<8x8xf32>
    %1223 = math.tanh %1222 : vector<8x8xf32>
    %1224 = arith.mulf %1219, %1223 : vector<8x8xf32>
    %cst_419 = arith.constant dense<0.000000e+00> : vector<8x128xf32>
    %1225 = tpu.matmul %1224, %20, %cst_419 {dimension_numbers = #tpu.dot_dimension_numbers<[1], [0], [0], [1], [0, 0, 1, 1], [], []>} : vector<8x8xf32>, vector<8x128xf32>, vector<8x128xf32> -> vector<8x128xf32>
    %1226 = vector.extract_strided_slice %1225 {offsets = [0, 0], sizes = [8, 64], strides = [1, 1]} : vector<8x128xf32> to vector<8x64xf32>
    %1227 = arith.addf %329, %1226 : vector<8x64xf32>
    %1228 = vector.extract_strided_slice %1225 {offsets = [0, 64], sizes = [8, 64], strides = [1, 1]} : vector<8x128xf32> to vector<8x64xf32>
    %1229 = arith.subf %1228, %327 : vector<8x64xf32>
    %1230 = vector.shape_cast %1227 : vector<8x64xf32> to vector<8x1x64xf32>
    %1231 = vector.shape_cast %1229 : vector<8x64xf32> to vector<1x8x64xf32>
    %1232 = vector.broadcast %1230 : vector<8x1x64xf32> to vector<8x8x64xf32>
    %1233 = vector.broadcast %1231 : vector<1x8x64xf32> to vector<8x8x64xf32>
    %1234 = arith.addf %1232, %1233 : vector<8x8x64xf32>
    %cst_420 = arith.constant 0.000000e+00 : f32
    %1235 = vector.broadcast %cst_420 : f32 to vector<8x8x64xf32>
    %1236 = arith.maximumf %1234, %1235 : vector<8x8x64xf32>
    %1237 = vector.shape_cast %1236 : vector<8x8x64xf32> to vector<64x64xf32>
    %cst_421 = arith.constant dense<0.000000e+00> : vector<64x8xf32>
    %1238 = tpu.matmul %1237, %22, %cst_421 {dimension_numbers = #tpu.dot_dimension_numbers<[1], [0], [0], [1], [0, 0, 1, 1], [], []>} : vector<64x64xf32>, vector<64x8xf32>, vector<64x8xf32> -> vector<64x8xf32>
    %1239 = arith.addf %1238, %26 : vector<64x8xf32>
    %cst_422 = arith.constant 0.000000e+00 : f32
    %1240 = vector.broadcast %cst_422 : f32 to vector<64x8xf32>
    %1241 = arith.maximumf %1239, %1240 : vector<64x8xf32>
    %1242 = vector.shape_cast %1241 : vector<64x8xf32> to vector<8x8x8xf32>
    %c11 = arith.constant 11 : index
    %c0_423 = arith.constant 0 : index
    %c0_424 = arith.constant 0 : index
    %1243 = vector.load %arg2[%c11, %c0_423, %c0_424] : memref<12x8x8xf32, #tpu.memory_space<vmem>>, vector<1x8x8xf32>
    %1244 = vector.shape_cast %1243 : vector<1x8x8xf32> to vector<8x8xf32>
    %1245 = vector.shape_cast %1244 : vector<8x8xf32> to vector<8x8x1xf32>
    %1246 = vector.broadcast %1245 : vector<8x8x1xf32> to vector<8x8x8xf32>
    %1247 = arith.mulf %1242, %1246 : vector<8x8x8xf32>
    %cst_425 = arith.constant dense<0xFF800000> : vector<8x8xf32>
    %1248 = vector.multi_reduction <maximumf>, %1247, %cst_425 [1] : vector<8x8x8xf32> to vector<8x8xf32>
    %1249 = tpu.concatenate %1224, %1248 in 1 : vector<8x8xf32>, vector<8x8xf32> -> vector<8x16xf32>
    %cst_426 = arith.constant dense<0.000000e+00> : vector<8x20xf32>
    %1250 = tpu.matmul %1249, %28, %cst_426 {dimension_numbers = #tpu.dot_dimension_numbers<[1], [0], [0], [1], [0, 0, 1, 1], [], []>} : vector<8x16xf32>, vector<16x20xf32>, vector<8x20xf32> -> vector<8x20xf32>
    %1251 = vector.extract_strided_slice %1250 {offsets = [0, 0], sizes = [8, 4], strides = [1, 1]} : vector<8x20xf32> to vector<8x4xf32>
    %1252 = arith.addf %1251, %32 : vector<8x4xf32>
    %c11_427 = arith.constant 11 : index
    %c0_428 = arith.constant 0 : index
    %c0_429 = arith.constant 0 : index
    %1253 = vector.load %arg7[%c11_427, %c0_428, %c0_429] : memref<12x8x4xf32, #tpu.memory_space<vmem>>, vector<1x8x4xf32>
    %1254 = vector.shape_cast %1253 : vector<1x8x4xf32> to vector<8x4xf32>
    %1255 = vector.shape_cast %1252 : vector<8x4xf32> to vector<1x8x4xf32>
    tpu.vector_store %arg7[%c11_427, %c0_428, %c0_429], %1255 {strides = array<i32>} : memref<12x8x4xf32, #tpu.memory_space<vmem>>, vector<1x8x4xf32>,
    return
  }
}

</mosaic_0001>

<llo_original>
// kernel: mylstm_forward.1
$region0: #{mylstm_forward.1}
  #allocation0 [shape = 'u32[]', space=smem, size = 0x4, offset = 0x4, fixed_abs, tag = 'smem constant byte address 0x4 - core index']
  #allocation1 [shape = 'u32[144,128]{1,0:T(1,128)}', space=vmem, size = 0x12000, scoped, tag = 'internal scratch']
  %s0 = inlined_call_operand.vmem [shape: f32[64,2], index: 0, kind: input, shape index: {}]
  %s1 = inlined_call_operand.vmem [shape: f32[8,2], index: 1, kind: input, shape index: {}]
  %s2 = inlined_call_operand.vmem [shape: f32[12,8,8], index: 2, kind: input, shape index: {}]
  %s3 = inlined_call_operand.vmem [shape: f32[8,8], index: 3, kind: input, shape index: {}]
  %s4 = inlined_call_operand.vmem [shape: f32[8,8], index: 4, kind: input, shape index: {}]
  %s5 = inlined_call_operand.vmem [shape: f32[12,8,2], index: 5, kind: input, shape index: {}]
  %s6 = inlined_call_operand.vmem [shape: f32[224,128], index: 6, kind: input, shape index: {}]
  %s7 = inlined_call_operand.vmem [shape: f32[12,8,4], index: 7, kind: output, shape index: {}]
  %s8 = sld [smem:[#allocation0]]
  $region38: #{mylstm_forward.1} parent=0
    _
  %s10 = ssub.s32 1, %s8
  %s11 = scalar_select 0, %s10, %s8
  // Predicated region
  $region2: #{mylstm_forward.1} parent=0 // pred_check
    _
  $region3: #{mylstm_forward.1} parent=0 // pred_check_branch
    %13 = sbr.rel (0) target = $region5
  $region4: #{mylstm_forward.1} parent=0 // pred_region
    _
  $region5: #{mylstm_forward.1} parent=0 // pred_fallthru
    _
  // Predicated region
  $region6: #{mylstm_forward.1} parent=0 // pred_check
    _
  $region7: #{mylstm_forward.1} parent=0 // pred_check_branch
    %15 = sbr.rel (0) target = $region9
  $region8: #{mylstm_forward.1} parent=0 // pred_region
    _
  $region9: #{mylstm_forward.1} parent=0 // pred_fallthru
    _
  // Predicated region
  $region10: #{mylstm_forward.1} parent=0 // pred_check
    _
  $region11: #{mylstm_forward.1} parent=0 // pred_check_branch
    %17 = sbr.rel (0) target = $region13
  $region12: #{mylstm_forward.1} parent=0 // pred_region
    _
  $region13: #{mylstm_forward.1} parent=0 // pred_fallthru
    _
  // Predicated region
  $region14: #{mylstm_forward.1} parent=0 // pred_check
    _
  $region15: #{mylstm_forward.1} parent=0 // pred_check_branch
    %19 = sbr.rel (0) target = $region17
  $region16: #{mylstm_forward.1} parent=0 // pred_region
    _
  $region17: #{mylstm_forward.1} parent=0 // pred_fallthru
    _
  // Predicated region
  $region18: #{mylstm_forward.1} parent=0 // pred_check
    _
  $region19: #{mylstm_forward.1} parent=0 // pred_check_branch
    %21 = sbr.rel (0) target = $region21
  $region20: #{mylstm_forward.1} parent=0 // pred_region
    _
  $region21: #{mylstm_forward.1} parent=0 // pred_fallthru
    _
  // Predicated region
  $region22: #{mylstm_forward.1} parent=0 // pred_check
    _
  $region23: #{mylstm_forward.1} parent=0 // pred_check_branch
    %23 = sbr.rel (0) target = $region25
  $region24: #{mylstm_forward.1} parent=0 // pred_region
    _
  $region25: #{mylstm_forward.1} parent=0 // pred_fallthru
    _
  // Predicated region
  $region26: #{mylstm_forward.1} parent=0 // pred_check
    _
  $region27: #{mylstm_forward.1} parent=0 // pred_check_branch
    %25 = sbr.rel (0) target = $region29
  $region28: #{mylstm_forward.1} parent=0 // pred_region
    _
  $region29: #{mylstm_forward.1} parent=0 // pred_fallthru
    _
  %v26 = vld [vmem:[%s6] sm:$0x3]
  %v27 = vld [vmem:[%s6 + $0x8] sm:$0x1]
  %v28 = vld [vmem:[%s6 + $0x10] sm:$0xff]
  %v29 = vld [vmem:[%s6 + $0x18] sm:$0xff]
  %v30 = vld [vmem:[%s6 + $0x20] sm:$0x1]
  %v31 = vld [vmem:[%s6 + $0x28] sm:$0xff]
  %v32 = vld [vmem:[%s6 + $0x30] sm:$0xff]
  %v33 = vld [vmem:[%s6 + $0x38] sm:$0xff]
  %v34 = vld [vmem:[%s6 + $0x40] sm:$0xff]
  %v35 = vld [vmem:[%s6 + $0x48] sm:$0x1]
  %v36 = vlaneseq
  %v37 = vshrl.u32 %v36, 7
  %v38 = vsub.s32 0, %v37
  %v39 = vrot.slane %v35, %v38
  %v40 = vld [vmem:[%s6 + $0x50] sm:$0x3]
  %v41 = vld [vmem:[%s6 + $0x58] sm:$0x1]
  %v42 = vld [vmem:[%s6 + $0x60] sm:$0xff]
  %v43 = vld [vmem:[%s6 + $0x68] sm:$0xff]
  %v44 = vld [vmem:[%s6 + $0x70] sm:$0xff]
  %v45 = vld [vmem:[%s6 + $0x78] sm:$0xff]
  %v46 = vld [vmem:[%s6 + $0x80] sm:$0xff]
  %v47 = vld [vmem:[%s6 + $0x88] sm:$0xff]
  %v48 = vld [vmem:[%s6 + $0x90] sm:$0xff]
  %v49 = vld [vmem:[%s6 + $0x98] sm:$0xff]
  %v50 = vld [vmem:[%s6 + $0xa0] sm:$0xff]
  %v51 = vld [vmem:[%s6 + $0xa8] sm:$0x1]
  %v52 = vlaneseq
  %v53 = vshrl.u32 %v52, 7
  %v54 = vsub.s32 0, %v53
  %v55 = vrot.slane %v51, %v54
  %v56 = vld [vmem:[%s6 + $0xb0] sm:$0xff]
  %v57 = vld [vmem:[%s6 + $0xb8] sm:$0xff]
  %v58 = vld [vmem:[%s6 + $0xc0] sm:$0x1]
  %v59 = vlaneseq
  %v60 = vshrl.u32 %v59, 7
  %v61 = vsub.s32 0, %v60
  %v62 = vrot.slane %v58, %v61
  %v63 = vld [vmem:[%s6 + $0xc8] sm:$0x3]
  %v64 = vld [vmem:[%s6 + $0xd0] sm:$0x1]
  %v65 = vlaneseq
  %v66 = vshrl.u32 %v65, 7
  %v67 = vsub.s32 0, %v66
  %v68 = vrot.slane %v64, %v67
  %v69 = vld [vmem:[%s6 + $0xd8] sm:$0x1]
  %v70 = vlaneseq
  %v71 = vshrl.u32 %v70, 7
  %v72 = vsub.s32 0, %v71
  %v73 = vrot.slane %v69, %v72
  %v74 = vld [vmem:[%s0] sm:$0xff]
  %v75 = vld [vmem:[%s0 + $0x8] sm:$0xff]
  %v76 = vld [vmem:[%s0 + $0x10] sm:$0xff]
  %v77 = vld [vmem:[%s0 + $0x18] sm:$0xff]
  %v78 = vld [vmem:[%s0 + $0x20] sm:$0xff]
  %v79 = vld [vmem:[%s0 + $0x28] sm:$0xff]
  %v80 = vld [vmem:[%s0 + $0x30] sm:$0xff]
  %v81 = vld [vmem:[%s0 + $0x38] sm:$0xff]
  %v82 = vlaneseq
  %v83 = vshrl.u32 %v82, 7
  %v84 = vsub.s32 0, %v83
  %v85 = vrot.slane %v27, %v84
  %vm86 = vcmask 15360
  %v88 = vsel %vm86, %v74, 0
  %v91 = vsel %vm86, %v75, 0
  %v94 = vsel %vm86, %v76, 0
  %v97 = vsel %vm86, %v77, 0
  %v100 = vsel %vm86, %v78, 0
  %v103 = vsel %vm86, %v79, 0
  %v106 = vsel %vm86, %v80, 0
  %v109 = vsel %vm86, %v81, 0
  %vm111 = vcmask 1041408
  %v113 = vsel %vm111, %v26, 0
  %115 = vmatprep.subr.mxu0 0.0
  %116 = vmatpush1.msra.mxu0 %v113
  %117 = vmatprep.subr.mxu0 0.0
  %118 = vmatpush1.msra.mxu0 0.0
  %119 = vmatprep.subr.mxu0 0.0
  %120 = vmatpush1.msra.mxu0 0.0
  %121 = vmatprep.subr.mxu0 0.0
  %122 = vmatpush1.msra.mxu0 0.0
  %123 = vmatprep.subr.mxu0 0.0
  %124 = vmatpush1.msra.mxu0 0.0
  %125 = vmatprep.subr.mxu0 0.0
  %126 = vmatpush1.msra.mxu0 0.0
  %127 = vmatprep.subr.mxu0 0.0
  %128 = vmatpush1.msra.mxu0 0.0
  %129 = vmatprep.subr.mxu0 0.0
  %130 = vmatpush1.msra.mxu0 0.0
  %131 = vmatprep.subr.mxu0 0.0
  %132 = vmatpush1.msra.mxu0 0.0
  %133 = vmatprep.subr.mxu0 0.0
  %134 = vmatpush1.msra.mxu0 0.0
  %135 = vmatprep.subr.mxu0 0.0
  %136 = vmatpush1.msra.mxu0 0.0
  %137 = vmatprep.subr.mxu0 0.0
  %138 = vmatpush1.msra.mxu0 0.0
  %139 = vmatprep.subr.mxu0 0.0
  %140 = vmatpush1.msra.mxu0 0.0
  %141 = vmatprep.subr.mxu0 0.0
  %142 = vmatpush1.msra.mxu0 0.0
  %143 = vmatprep.subr.mxu0 0.0
  %144 = vmatpush1.msra.mxu0 0.0
  %145 = vmatprep.subr.mxu0 0.0
  %146 = vmatpush1.msra.mxu0 0.0
  %147 = vmatprep.subr.mxu0 0.0
  %148 = vmatpush1.msra.mxu0 0.0
  %149 = vmatprep.subr.mxu0 0.0
  %150 = vmatpush1.msra.mxu0 0.0
  %151 = vmatprep.subr.mxu0 0.0
  %152 = vmatpush1.msra.mxu0 0.0
  %153 = vmatprep.subr.mxu0 0.0
  %154 = vmatpush1.msra.mxu0 0.0
  %155 = vmatprep.subr.mxu0 0.0
  %156 = vmatpush1.msra.mxu0 0.0
  %157 = vmatprep.subr.mxu0 0.0
  %158 = vmatpush1.msra.mxu0 0.0
  %159 = vmatprep.subr.mxu0 0.0
  %160 = vmatpush1.msra.mxu0 0.0
  %161 = vmatprep.subr.mxu0 0.0
  %162 = vmatpush1.msra.mxu0 0.0
  %163 = vmatprep.subr.mxu0 0.0
  %164 = vmatpush1.msra.mxu0 0.0
  %165 = vmatprep.subr.mxu0 0.0
  %166 = vmatpush1.msra.mxu0 0.0
  %167 = vmatprep.subr.mxu0 0.0
  %168 = vmatpush1.msra.mxu0 0.0
  %169 = vmatprep.subr.mxu0 0.0
  %170 = vmatpush1.msra.mxu0 0.0
  %171 = vmatprep.subr.mxu0 0.0
  %172 = vmatpush1.msra.mxu0 0.0
  %173 = vmatprep.subr.mxu0 0.0
  %174 = vmatpush1.msra.mxu0 0.0
  %175 = vmatprep.subr.mxu0 0.0
  %176 = vmatpush1.msra.mxu0 0.0
  %177 = vmatprep.subr.mxu0 0.0
  %178 = vmatpush1.msra.mxu0 0.0
  %179 = vmatprep.mubr.f32.mxu0 0.0
  %180 = vmatmul.mubr.f32.gmra.mrb[0].mxu0 %v88
  %v181 = vpop.f32.mrb[0].mxu0
  %v182 = vadd.f32 %v85, %v181
  %v183 = vpop.f32.mrb[0].mxu0
  %184 = vmatprep.mubr.f32.mxu0 0.0
  %185 = vmatmul.mubr.f32.gmra.mrb[0].mxu0 %v91
  %v186 = vpop.f32.mrb[0].mxu0
  %v187 = vadd.f32 %v85, %v186
  %v188 = vpop.f32.mrb[0].mxu0
  %189 = vmatprep.mubr.f32.mxu0 0.0
  %190 = vmatmul.mubr.f32.gmra.mrb[0].mxu0 %v94
  %v191 = vpop.f32.mrb[0].mxu0
  %v192 = vadd.f32 %v85, %v191
  %v193 = vpop.f32.mrb[0].mxu0
  %194 = vmatprep.mubr.f32.mxu0 0.0
  %195 = vmatmul.mubr.f32.gmra.mrb[0].mxu0 %v97
  %v196 = vpop.f32.mrb[0].mxu0
  %v197 = vadd.f32 %v85, %v196
  %v198 = vpop.f32.mrb[0].mxu0
  %199 = vmatprep.mubr.f32.mxu0 0.0
  %200 = vmatmul.mubr.f32.gmra.mrb[0].mxu0 %v100
  %v201 = vpop.f32.mrb[0].mxu0
  %v202 = vadd.f32 %v85, %v201
  %v203 = vpop.f32.mrb[0].mxu0
  %204 = vmatprep.mubr.f32.mxu0 0.0
  %205 = vmatmul.mubr.f32.gmra.mrb[0].mxu0 %v103
  %v206 = vpop.f32.mrb[0].mxu0
  %v207 = vadd.f32 %v85, %v206
  %v208 = vpop.f32.mrb[0].mxu0
  %209 = vmatprep.mubr.f32.mxu0 0.0
  %210 = vmatmul.mubr.f32.gmra.mrb[0].mxu0 %v106
  %v211 = vpop.f32.mrb[0].mxu0
  %v212 = vadd.f32 %v85, %v211
  %v213 = vpop.f32.mrb[0].mxu0
  %214 = vmatprep.mubr.f32.mxu0 0.0
  %215 = vmatmul.mubr.f32.gmra.mrb[0].mxu0 %v109
  %v216 = vpop.f32.mrb[0].mxu0
  %v217 = vadd.f32 %v85, %v216
  %v218 = vpop.f32.mrb[0].mxu0
  %219 = vdwg.mxu0
  %v220 = vmax.f32 %v182, 0.0
  %v221 = vmax.f32 %v187, 0.0
  %v222 = vmax.f32 %v192, 0.0
  %v223 = vmax.f32 %v197, 0.0
  %v224 = vmax.f32 %v202, 0.0
  %v225 = vmax.f32 %v207, 0.0
  %v226 = vmax.f32 %v212, 0.0
  %v227 = vmax.f32 %v217, 0.0
  %v228 = vlaneseq
  %v229 = vshrl.u32 %v228, 7
  %v230 = vsub.s32 0, %v229
  %v231 = vrot.slane %v30, %v230
  %vm232 = vcmask 130048
  %v234 = vsel %vm232, %v220, 0
  %v237 = vsel %vm232, %v221, 0
  %v240 = vsel %vm232, %v222, 0
  %v243 = vsel %vm232, %v223, 0
  %v246 = vsel %vm232, %v224, 0
  %v249 = vsel %vm232, %v225, 0
  %v252 = vsel %vm232, %v226, 0
  %v255 = vsel %vm232, %v227, 0
  %257 = vmatprep.subr.mxu0 0.0
  %258 = vmatpush1.msra.mxu0 %v28
  %259 = vmatprep.subr.mxu0 0.0
  %260 = vmatpush1.msra.mxu0 %v29
  %261 = vmatprep.subr.mxu0 0.0
  %262 = vmatpush1.msra.mxu0 0.0
  %263 = vmatprep.subr.mxu0 0.0
  %264 = vmatpush1.msra.mxu0 0.0
  %265 = vmatprep.subr.mxu0 0.0
  %266 = vmatpush1.msra.mxu0 0.0
  %267 = vmatprep.subr.mxu0 0.0
  %268 = vmatpush1.msra.mxu0 0.0
  %269 = vmatprep.subr.mxu0 0.0
  %270 = vmatpush1.msra.mxu0 0.0
  %271 = vmatprep.subr.mxu0 0.0
  %272 = vmatpush1.msra.mxu0 0.0
  %273 = vmatprep.subr.mxu0 0.0
  %274 = vmatpush1.msra.mxu0 0.0
  %275 = vmatprep.subr.mxu0 0.0
  %276 = vmatpush1.msra.mxu0 0.0
  %277 = vmatprep.subr.mxu0 0.0
  %278 = vmatpush1.msra.mxu0 0.0
  %279 = vmatprep.subr.mxu0 0.0
  %280 = vmatpush1.msra.mxu0 0.0
  %281 = vmatprep.subr.mxu0 0.0
  %282 = vmatpush1.msra.mxu0 0.0
  %283 = vmatprep.subr.mxu0 0.0
  %284 = vmatpush1.msra.mxu0 0.0
  %285 = vmatprep.subr.mxu0 0.0
  %286 = vmatpush1.msra.mxu0 0.0
  %287 = vmatprep.subr.mxu0 0.0
  %288 = vmatpush1.msra.mxu0 0.0
  %289 = vmatprep.subr.mxu0 0.0
  %290 = vmatpush1.msra.mxu0 0.0
  %291 = vmatprep.subr.mxu0 0.0
  %292 = vmatpush1.msra.mxu0 0.0
  %293 = vmatprep.subr.mxu0 0.0
  %294 = vmatpush1.msra.mxu0 0.0
  %295 = vmatprep.subr.mxu0 0.0
  %296 = vmatpush1.msra.mxu0 0.0
  %297 = vmatprep.subr.mxu0 0.0
  %298 = vmatpush1.msra.mxu0 0.0
  %299 = vmatprep.subr.mxu0 0.0
  %300 = vmatpush1.msra.mxu0 0.0
  %301 = vmatprep.subr.mxu0 0.0
  %302 = vmatpush1.msra.mxu0 0.0
  %303 = vmatprep.subr.mxu0 0.0
  %304 = vmatpush1.msra.mxu0 0.0
  %305 = vmatprep.subr.mxu0 0.0
  %306 = vmatpush1.msra.mxu0 0.0
  %307 = vmatprep.subr.mxu0 0.0
  %308 = vmatpush1.msra.mxu0 0.0
  %309 = vmatprep.subr.mxu0 0.0
  %310 = vmatpush1.msra.mxu0 0.0
  %311 = vmatprep.subr.mxu0 0.0
  %312 = vmatpush1.msra.mxu0 0.0
  %313 = vmatprep.subr.mxu0 0.0
  %314 = vmatpush1.msra.mxu0 0.0
  %315 = vmatprep.subr.mxu0 0.0
  %316 = vmatpush1.msra.mxu0 0.0
  %317 = vmatprep.subr.mxu0 0.0
  %318 = vmatpush1.msra.mxu0 0.0
  %319 = vmatprep.subr.mxu0 0.0
  %320 = vmatpush1.msra.mxu0 0.0
  %321 = vmatprep.mubr.f32.mxu0 0.0
  %322 = vmatmul.mubr.f32.gmra.mrb[0].mxu0 %v234
  %v323 = vpop.f32.mrb[0].mxu0
  %v324 = vadd.f32 %v231, %v323
  %v325 = vpop.f32.mrb[0].mxu0
  %326 = vmatprep.mubr.f32.mxu0 0.0
  %327 = vmatmul.mubr.f32.gmra.mrb[0].mxu0 %v237
  %v328 = vpop.f32.mrb[0].mxu0
  %v329 = vadd.f32 %v231, %v328
  %v330 = vpop.f32.mrb[0].mxu0
  %331 = vmatprep.mubr.f32.mxu0 0.0
  %332 = vmatmul.mubr.f32.gmra.mrb[0].mxu0 %v240
  %v333 = vpop.f32.mrb[0].mxu0
  %v334 = vadd.f32 %v231, %v333
  %v335 = vpop.f32.mrb[0].mxu0
  %336 = vmatprep.mubr.f32.mxu0 0.0
  %337 = vmatmul.mubr.f32.gmra.mrb[0].mxu0 %v243
  %v338 = vpop.f32.mrb[0].mxu0
  %v339 = vadd.f32 %v231, %v338
  %v340 = vpop.f32.mrb[0].mxu0
  %341 = vmatprep.mubr.f32.mxu0 0.0
  %342 = vmatmul.mubr.f32.gmra.mrb[0].mxu0 %v246
  %v343 = vpop.f32.mrb[0].mxu0
  %v344 = vadd.f32 %v231, %v343
  %v345 = vpop.f32.mrb[0].mxu0
  %346 = vmatprep.mubr.f32.mxu0 0.0
  %347 = vmatmul.mubr.f32.gmra.mrb[0].mxu0 %v249
  %v348 = vpop.f32.mrb[0].mxu0
  %v349 = vadd.f32 %v231, %v348
  %v350 = vpop.f32.mrb[0].mxu0
  %351 = vmatprep.mubr.f32.mxu0 0.0
  %352 = vmatmul.mubr.f32.gmra.mrb[0].mxu0 %v252
  %v353 = vpop.f32.mrb[0].mxu0
  %v354 = vadd.f32 %v231, %v353
  %v355 = vpop.f32.mrb[0].mxu0
  %356 = vmatprep.mubr.f32.mxu0 0.0
  %357 = vmatmul.mubr.f32.gmra.mrb[0].mxu0 %v255
  %v358 = vpop.f32.mrb[0].mxu0
  %v359 = vadd.f32 %v231, %v358
  %v360 = vpop.f32.mrb[0].mxu0
  %361 = vdwg.mxu0
  %v362 = vld [vmem:[%s3] sm:$0xff]
  %v363 = vld [vmem:[%s4] sm:$0xff]
  %vm364 = vcmask 64512
  %v366 = vsel %vm364, %v362, 0
  %368 = vmatprep.subr.mxu0 0.0
  %369 = vmatpush1.msra.mxu0 %v31
  %370 = vmatprep.subr.mxu0 0.0
  %371 = vmatpush1.msra.mxu0 0.0
  %372 = vmatprep.subr.mxu0 0.0
  %373 = vmatpush1.msra.mxu0 0.0
  %374 = vmatprep.subr.mxu0 0.0
  %375 = vmatpush1.msra.mxu0 0.0
  %376 = vmatprep.subr.mxu0 0.0
  %377 = vmatpush1.msra.mxu0 0.0
  %378 = vmatprep.subr.mxu0 0.0
  %379 = vmatpush1.msra.mxu0 0.0
  %380 = vmatprep.subr.mxu0 0.0
  %381 = vmatpush1.msra.mxu0 0.0
  %382 = vmatprep.subr.mxu0 0.0
  %383 = vmatpush1.msra.mxu0 0.0
  %384 = vmatprep.subr.mxu0 0.0
  %385 = vmatpush1.msra.mxu0 0.0
  %386 = vmatprep.subr.mxu0 0.0
  %387 = vmatpush1.msra.mxu0 0.0
  %388 = vmatprep.subr.mxu0 0.0
  %389 = vmatpush1.msra.mxu0 0.0
  %390 = vmatprep.subr.mxu0 0.0
  %391 = vmatpush1.msra.mxu0 0.0
  %392 = vmatprep.subr.mxu0 0.0
  %393 = vmatpush1.msra.mxu0 0.0
  %394 = vmatprep.subr.mxu0 0.0
  %395 = vmatpush1.msra.mxu0 0.0
  %396 = vmatprep.subr.mxu0 0.0
  %397 = vmatpush1.msra.mxu0 0.0
  %398 = vmatprep.subr.mxu0 0.0
  %399 = vmatpush1.msra.mxu0 0.0
  %400 = vmatprep.subr.mxu0 0.0
  %401 = vmatpush1.msra.mxu0 0.0
  %402 = vmatprep.subr.mxu0 0.0
  %403 = vmatpush1.msra.mxu0 0.0
  %404 = vmatprep.subr.mxu0 0.0
  %405 = vmatpush1.msra.mxu0 0.0
  %406 = vmatprep.subr.mxu0 0.0
  %407 = vmatpush1.msra.mxu0 0.0
  %408 = vmatprep.subr.mxu0 0.0
  %409 = vmatpush1.msra.mxu0 0.0
  %410 = vmatprep.subr.mxu0 0.0
  %411 = vmatpush1.msra.mxu0 0.0
  %412 = vmatprep.subr.mxu0 0.0
  %413 = vmatpush1.msra.mxu0 0.0
  %414 = vmatprep.subr.mxu0 0.0
  %415 = vmatpush1.msra.mxu0 0.0
  %416 = vmatprep.subr.mxu0 0.0
  %417 = vmatpush1.msra.mxu0 0.0
  %418 = vmatprep.subr.mxu0 0.0
  %419 = vmatpush1.msra.mxu0 0.0
  %420 = vmatprep.subr.mxu0 0.0
  %421 = vmatpush1.msra.mxu0 0.0
  %422 = vmatprep.subr.mxu0 0.0
  %423 = vmatpush1.msra.mxu0 0.0
  %424 = vmatprep.subr.mxu0 0.0
  %425 = vmatpush1.msra.mxu0 0.0
  %426 = vmatprep.subr.mxu0 0.0
  %427 = vmatpush1.msra.mxu0 0.0
  %428 = vmatprep.subr.mxu0 0.0
  %429 = vmatpush1.msra.mxu0 0.0
  %430 = vmatprep.subr.mxu0 0.0
  %431 = vmatpush1.msra.mxu0 0.0
  %432 = vmatprep.mubr.f32.mxu0 0.0
  %433 = vmatmul.mubr.f32.gmra.mrb[0].mxu0 %v366
  %v434 = vpop.f32.mrb[0].mxu0
  %v435 = vadd.f32 0.0, %v434
  %v436 = vpop.f32.mrb[0].mxu0
  %437 = vdwg.mxu0
  %v438 = vadd.f32 %v324, %v435
  %v439 = vmul.f32 %v438, 0.5
  %v440 = vtanh.pop %v439
  %v441 = vmul.f32 %v440, 0.5
  %v442 = vadd.f32 %v441, 0.5
  %v443 = vtanh.pop %v438
  %445 = vrot.lane.b32.xlu0 %v363, 8
  %v446 = vpop.permute.xlu0 %445
  %v448 = vmul.f32 %v442, %v446
  %450 = vrot.lane.b32.xlu0 %v443, 112
  %v451 = vpop.permute.xlu0 %450
  %v453 = vmul.f32 %v442, %v451
  %455 = vrot.lane.b32.xlu0 %v453, 8
  %v456 = vpop.permute.xlu0 %455
  %v458 = vadd.f32 %v448, %v456
  %v459 = vtanh.pop %v458
  %461 = vrot.lane.b32.xlu0 %v459, 16
  %v462 = vpop.permute.xlu0 %461
  %v464 = vmul.f32 %v442, %v462
  %466 = vrot.lane.b32.xlu0 %v464, 104
  %v467 = vpop.permute.xlu0 %466
  %v468 = vsel %vm364, %v467, 0
  %470 = vmatprep.subr.mxu0 0.0
  %471 = vmatpush1.msra.mxu0 %v31
  %472 = vmatprep.subr.mxu0 0.0
  %473 = vmatpush1.msra.mxu0 0.0
  %474 = vmatprep.subr.mxu0 0.0
  %475 = vmatpush1.msra.mxu0 0.0
  %476 = vmatprep.subr.mxu0 0.0
  %477 = vmatpush1.msra.mxu0 0.0
  %478 = vmatprep.subr.mxu0 0.0
  %479 = vmatpush1.msra.mxu0 0.0
  %480 = vmatprep.subr.mxu0 0.0
  %481 = vmatpush1.msra.mxu0 0.0
  %482 = vmatprep.subr.mxu0 0.0
  %483 = vmatpush1.msra.mxu0 0.0
  %484 = vmatprep.subr.mxu0 0.0
  %485 = vmatpush1.msra.mxu0 0.0
  %486 = vmatprep.subr.mxu0 0.0
  %487 = vmatpush1.msra.mxu0 0.0
  %488 = vmatprep.subr.mxu0 0.0
  %489 = vmatpush1.msra.mxu0 0.0
  %490 = vmatprep.subr.mxu0 0.0
  %491 = vmatpush1.msra.mxu0 0.0
  %492 = vmatprep.subr.mxu0 0.0
  %493 = vmatpush1.msra.mxu0 0.0
  %494 = vmatprep.subr.mxu0 0.0
  %495 = vmatpush1.msra.mxu0 0.0
  %496 = vmatprep.subr.mxu0 0.0
  %497 = vmatpush1.msra.mxu0 0.0
  %498 = vmatprep.subr.mxu0 0.0
  %499 = vmatpush1.msra.mxu0 0.0
  %500 = vmatprep.subr.mxu0 0.0
  %501 = vmatpush1.msra.mxu0 0.0
  %502 = vmatprep.subr.mxu0 0.0
  %503 = vmatpush1.msra.mxu0 0.0
  %504 = vmatprep.subr.mxu0 0.0
  %505 = vmatpush1.msra.mxu0 0.0
  %506 = vmatprep.subr.mxu0 0.0
  %507 = vmatpush1.msra.mxu0 0.0
  %508 = vmatprep.subr.mxu0 0.0
  %509 = vmatpush1.msra.mxu0 0.0
  %510 = vmatprep.subr.mxu0 0.0
  %511 = vmatpush1.msra.mxu0 0.0
  %512 = vmatprep.subr.mxu0 0.0
  %513 = vmatpush1.msra.mxu0 0.0
  %514 = vmatprep.subr.mxu0 0.0
  %515 = vmatpush1.msra.mxu0 0.0
  %516 = vmatprep.subr.mxu0 0.0
  %517 = vmatpush1.msra.mxu0 0.0
  %518 = vmatprep.subr.mxu0 0.0
  %519 = vmatpush1.msra.mxu0 0.0
  %520 = vmatprep.subr.mxu0 0.0
  %521 = vmatpush1.msra.mxu0 0.0
  %522 = vmatprep.subr.mxu0 0.0
  %523 = vmatpush1.msra.mxu0 0.0
  %524 = vmatprep.subr.mxu0 0.0
  %525 = vmatpush1.msra.mxu0 0.0
  %526 = vmatprep.subr.mxu0 0.0
  %527 = vmatpush1.msra.mxu0 0.0
  %528 = vmatprep.subr.mxu0 0.0
  %529 = vmatpush1.msra.mxu0 0.0
  %530 = vmatprep.subr.mxu0 0.0
  %531 = vmatpush1.msra.mxu0 0.0
  %532 = vmatprep.subr.mxu0 0.0
  %533 = vmatpush1.msra.mxu0 0.0
  %534 = vmatprep.mubr.f32.mxu0 0.0
  %535 = vmatmul.mubr.f32.gmra.mrb[0].mxu0 %v468
  %v536 = vpop.f32.mrb[0].mxu0
  %v537 = vadd.f32 0.0, %v536
  %v538 = vpop.f32.mrb[0].mxu0
  %539 = vdwg.mxu0
  %v540 = vadd.f32 %v329, %v537
  %v541 = vmul.f32 %v540, 0.5
  %v542 = vtanh.pop %v541
  %v543 = vmul.f32 %v542, 0.5
  %v544 = vadd.f32 %v543, 0.5
  %v545 = vtanh.pop %v540
  %v546 = vmul.f32 %v544, %v458
  %548 = vrot.lane.b32.xlu0 %v545, 112
  %v549 = vpop.permute.xlu0 %548
  %v551 = vmul.f32 %v544, %v549
  %553 = vrot.lane.b32.xlu0 %v551, 8
  %v554 = vpop.permute.xlu0 %553
  %v556 = vadd.f32 %v546, %v554
  %v557 = vtanh.pop %v556
  %559 = vrot.lane.b32.xlu0 %v557, 16
  %v560 = vpop.permute.xlu0 %559
  %v562 = vmul.f32 %v544, %v560
  %564 = vrot.lane.b32.xlu0 %v562, 104
  %v565 = vpop.permute.xlu0 %564
  %v566 = vsel %vm364, %v565, 0
  %568 = vmatprep.subr.mxu0 0.0
  %569 = vmatpush1.msra.mxu0 %v31
  %570 = vmatprep.subr.mxu0 0.0
  %571 = vmatpush1.msra.mxu0 0.0
  %572 = vmatprep.subr.mxu0 0.0
  %573 = vmatpush1.msra.mxu0 0.0
  %574 = vmatprep.subr.mxu0 0.0
  %575 = vmatpush1.msra.mxu0 0.0
  %576 = vmatprep.subr.mxu0 0.0
  %577 = vmatpush1.msra.mxu0 0.0
  %578 = vmatprep.subr.mxu0 0.0
  %579 = vmatpush1.msra.mxu0 0.0
  %580 = vmatprep.subr.mxu0 0.0
  %581 = vmatpush1.msra.mxu0 0.0
  %582 = vmatprep.subr.mxu0 0.0
  %583 = vmatpush1.msra.mxu0 0.0
  %584 = vmatprep.subr.mxu0 0.0
  %585 = vmatpush1.msra.mxu0 0.0
  %586 = vmatprep.subr.mxu0 0.0
  %587 = vmatpush1.msra.mxu0 0.0
  %588 = vmatprep.subr.mxu0 0.0
  %589 = vmatpush1.msra.mxu0 0.0
  %590 = vmatprep.subr.mxu0 0.0
  %591 = vmatpush1.msra.mxu0 0.0
  %592 = vmatprep.subr.mxu0 0.0
  %593 = vmatpush1.msra.mxu0 0.0
  %594 = vmatprep.subr.mxu0 0.0
  %595 = vmatpush1.msra.mxu0 0.0
  %596 = vmatprep.subr.mxu0 0.0
  %597 = vmatpush1.msra.mxu0 0.0
  %598 = vmatprep.subr.mxu0 0.0
  %599 = vmatpush1.msra.mxu0 0.0
  %600 = vmatprep.subr.mxu0 0.0
  %601 = vmatpush1.msra.mxu0 0.0
  %602 = vmatprep.subr.mxu0 0.0
  %603 = vmatpush1.msra.mxu0 0.0
  %604 = vmatprep.subr.mxu0 0.0
  %605 = vmatpush1.msra.mxu0 0.0
  %606 = vmatprep.subr.mxu0 0.0
  %607 = vmatpush1.msra.mxu0 0.0
  %608 = vmatprep.subr.mxu0 0.0
  %609 = vmatpush1.msra.mxu0 0.0
  %610 = vmatprep.subr.mxu0 0.0
  %611 = vmatpush1.msra.mxu0 0.0
  %612 = vmatprep.subr.mxu0 0.0
  %613 = vmatpush1.msra.mxu0 0.0
  %614 = vmatprep.subr.mxu0 0.0
  %615 = vmatpush1.msra.mxu0 0.0
  %616 = vmatprep.subr.mxu0 0.0
  %617 = vmatpush1.msra.mxu0 0.0
  %618 = vmatprep.subr.mxu0 0.0
  %619 = vmatpush1.msra.mxu0 0.0
  %620 = vmatprep.subr.mxu0 0.0
  %621 = vmatpush1.msra.mxu0 0.0
  %622 = vmatprep.subr.mxu0 0.0
  %623 = vmatpush1.msra.mxu0 0.0
  %624 = vmatprep.subr.mxu0 0.0
  %625 = vmatpush1.msra.mxu0 0.0
  %626 = vmatprep.subr.mxu0 0.0
  %627 = vmatpush1.msra.mxu0 0.0
  %628 = vmatprep.subr.mxu0 0.0
  %629 = vmatpush1.msra.mxu0 0.0
  %630 = vmatprep.subr.mxu0 0.0
  %631 = vmatpush1.msra.mxu0 0.0
  %632 = vmatprep.mubr.f32.mxu0 0.0
  %633 = vmatmul.mubr.f32.gmra.mrb[0].mxu0 %v566
  %v634 = vpop.f32.mrb[0].mxu0
  %v635 = vadd.f32 0.0, %v634
  %v636 = vpop.f32.mrb[0].mxu0
  %637 = vdwg.mxu0
  %v638 = vadd.f32 %v334, %v635
  %v639 = vmul.f32 %v638, 0.5
  %v640 = vtanh.pop %v639
  %v641 = vmul.f32 %v640, 0.5
  %v642 = vadd.f32 %v641, 0.5
  %v643 = vtanh.pop %v638
  %v644 = vmul.f32 %v642, %v556
  %646 = vrot.lane.b32.xlu0 %v643, 112
  %v647 = vpop.permute.xlu0 %646
  %v649 = vmul.f32 %v642, %v647
  %651 = vrot.lane.b32.xlu0 %v649, 8
  %v652 = vpop.permute.xlu0 %651
  %v654 = vadd.f32 %v644, %v652
  %v655 = vtanh.pop %v654
  %657 = vrot.lane.b32.xlu0 %v655, 16
  %v658 = vpop.permute.xlu0 %657
  %v660 = vmul.f32 %v642, %v658
  %662 = vrot.lane.b32.xlu0 %v660, 104
  %v663 = vpop.permute.xlu0 %662
  %v664 = vsel %vm364, %v663, 0
  %666 = vmatprep.subr.mxu0 0.0
  %667 = vmatpush1.msra.mxu0 %v31
  %668 = vmatprep.subr.mxu0 0.0
  %669 = vmatpush1.msra.mxu0 0.0
  %670 = vmatprep.subr.mxu0 0.0
  %671 = vmatpush1.msra.mxu0 0.0
  %672 = vmatprep.subr.mxu0 0.0
  %673 = vmatpush1.msra.mxu0 0.0
  %674 = vmatprep.subr.mxu0 0.0
  %675 = vmatpush1.msra.mxu0 0.0
  %676 = vmatprep.subr.mxu0 0.0
  %677 = vmatpush1.msra.mxu0 0.0
  %678 = vmatprep.subr.mxu0 0.0
  %679 = vmatpush1.msra.mxu0 0.0
  %680 = vmatprep.subr.mxu0 0.0
  %681 = vmatpush1.msra.mxu0 0.0
  %682 = vmatprep.subr.mxu0 0.0
  %683 = vmatpush1.msra.mxu0 0.0
  %684 = vmatprep.subr.mxu0 0.0
  %685 = vmatpush1.msra.mxu0 0.0
  %686 = vmatprep.subr.mxu0 0.0
  %687 = vmatpush1.msra.mxu0 0.0
  %688 = vmatprep.subr.mxu0 0.0
  %689 = vmatpush1.msra.mxu0 0.0
  %690 = vmatprep.subr.mxu0 0.0
  %691 = vmatpush1.msra.mxu0 0.0
  %692 = vmatprep.subr.mxu0 0.0
  %693 = vmatpush1.msra.mxu0 0.0
  %694 = vmatprep.subr.mxu0 0.0
  %695 = vmatpush1.msra.mxu0 0.0
  %696 = vmatprep.subr.mxu0 0.0
  %697 = vmatpush1.msra.mxu0 0.0
  %698 = vmatprep.subr.mxu0 0.0
  %699 = vmatpush1.msra.mxu0 0.0
  %700 = vmatprep.subr.mxu0 0.0
  %701 = vmatpush1.msra.mxu0 0.0
  %702 = vmatprep.subr.mxu0 0.0
  %703 = vmatpush1.msra.mxu0 0.0
  %704 = vmatprep.subr.mxu0 0.0
  %705 = vmatpush1.msra.mxu0 0.0
  %706 = vmatprep.subr.mxu0 0.0
  %707 = vmatpush1.msra.mxu0 0.0
  %708 = vmatprep.subr.mxu0 0.0
  %709 = vmatpush1.msra.mxu0 0.0
  %710 = vmatprep.subr.mxu0 0.0
  %711 = vmatpush1.msra.mxu0 0.0
  %712 = vmatprep.subr.mxu0 0.0
  %713 = vmatpush1.msra.mxu0 0.0
  %714 = vmatprep.subr.mxu0 0.0
  %715 = vmatpush1.msra.mxu0 0.0
  %716 = vmatprep.subr.mxu0 0.0
  %717 = vmatpush1.msra.mxu0 0.0
  %718 = vmatprep.subr.mxu0 0.0
  %719 = vmatpush1.msra.mxu0 0.0
  %720 = vmatprep.subr.mxu0 0.0
  %721 = vmatpush1.msra.mxu0 0.0
  %722 = vmatprep.subr.mxu0 0.0
  %723 = vmatpush1.msra.mxu0 0.0
  %724 = vmatprep.subr.mxu0 0.0
  %725 = vmatpush1.msra.mxu0 0.0
  %726 = vmatprep.subr.mxu0 0.0
  %727 = vmatpush1.msra.mxu0 0.0
  %728 = vmatprep.subr.mxu0 0.0
  %729 = vmatpush1.msra.mxu0 0.0
  %730 = vmatprep.mubr.f32.mxu0 0.0
  %731 = vmatmul.mubr.f32.gmra.mrb[0].mxu0 %v664
  %v732 = vpop.f32.mrb[0].mxu0
  %v733 = vadd.f32 0.0, %v732
  %v734 = vpop.f32.mrb[0].mxu0
  %735 = vdwg.mxu0
  %v736 = vadd.f32 %v339, %v733
  %v737 = vmul.f32 %v736, 0.5
  %v738 = vtanh.pop %v737
  %v739 = vmul.f32 %v738, 0.5
  %v740 = vadd.f32 %v739, 0.5
  %v741 = vtanh.pop %v736
  %v742 = vmul.f32 %v740, %v654
  %744 = vrot.lane.b32.xlu0 %v741, 112
  %v745 = vpop.permute.xlu0 %744
  %v747 = vmul.f32 %v740, %v745
  %749 = vrot.lane.b32.xlu0 %v747, 8
  %v750 = vpop.permute.xlu0 %749
  %v752 = vadd.f32 %v742, %v750
  %v753 = vtanh.pop %v752
  %755 = vrot.lane.b32.xlu0 %v753, 16
  %v756 = vpop.permute.xlu0 %755
  %v758 = vmul.f32 %v740, %v756
  %760 = vrot.lane.b32.xlu0 %v758, 104
  %v761 = vpop.permute.xlu0 %760
  %v762 = vsel %vm364, %v761, 0
  %764 = vmatprep.subr.mxu0 0.0
  %765 = vmatpush1.msra.mxu0 %v31
  %766 = vmatprep.subr.mxu0 0.0
  %767 = vmatpush1.msra.mxu0 0.0
  %768 = vmatprep.subr.mxu0 0.0
  %769 = vmatpush1.msra.mxu0 0.0
  %770 = vmatprep.subr.mxu0 0.0
  %771 = vmatpush1.msra.mxu0 0.0
  %772 = vmatprep.subr.mxu0 0.0
  %773 = vmatpush1.msra.mxu0 0.0
  %774 = vmatprep.subr.mxu0 0.0
  %775 = vmatpush1.msra.mxu0 0.0
  %776 = vmatprep.subr.mxu0 0.0
  %777 = vmatpush1.msra.mxu0 0.0
  %778 = vmatprep.subr.mxu0 0.0
  %779 = vmatpush1.msra.mxu0 0.0
  %780 = vmatprep.subr.mxu0 0.0
  %781 = vmatpush1.msra.mxu0 0.0
  %782 = vmatprep.subr.mxu0 0.0
  %783 = vmatpush1.msra.mxu0 0.0
  %784 = vmatprep.subr.mxu0 0.0
  %785 = vmatpush1.msra.mxu0 0.0
  %786 = vmatprep.subr.mxu0 0.0
  %787 = vmatpush1.msra.mxu0 0.0
  %788 = vmatprep.subr.mxu0 0.0
  %789 = vmatpush1.msra.mxu0 0.0
  %790 = vmatprep.subr.mxu0 0.0
  %791 = vmatpush1.msra.mxu0 0.0
  %792 = vmatprep.subr.mxu0 0.0
  %793 = vmatpush1.msra.mxu0 0.0
  %794 = vmatprep.subr.mxu0 0.0
  %795 = vmatpush1.msra.mxu0 0.0
  %796 = vmatprep.subr.mxu0 0.0
  %797 = vmatpush1.msra.mxu0 0.0
  %798 = vmatprep.subr.mxu0 0.0
  %799 = vmatpush1.msra.mxu0 0.0
  %800 = vmatprep.subr.mxu0 0.0
  %801 = vmatpush1.msra.mxu0 0.0
  %802 = vmatprep.subr.mxu0 0.0
  %803 = vmatpush1.msra.mxu0 0.0
  %804 = vmatprep.subr.mxu0 0.0
  %805 = vmatpush1.msra.mxu0 0.0
  %806 = vmatprep.subr.mxu0 0.0
  %807 = vmatpush1.msra.mxu0 0.0
  %808 = vmatprep.subr.mxu0 0.0
  %809 = vmatpush1.msra.mxu0 0.0
  %810 = vmatprep.subr.mxu0 0.0
  %811 = vmatpush1.msra.mxu0 0.0
  %812 = vmatprep.subr.mxu0 0.0
  %813 = vmatpush1.msra.mxu0 0.0
  %814 = vmatprep.subr.mxu0 0.0
  %815 = vmatpush1.msra.mxu0 0.0
  %816 = vmatprep.subr.mxu0 0.0
  %817 = vmatpush1.msra.mxu0 0.0
  %818 = vmatprep.subr.mxu0 0.0
  %819 = vmatpush1.msra.mxu0 0.0
  %820 = vmatprep.subr.mxu0 0.0
  %821 = vmatpush1.msra.mxu0 0.0
  %822 = vmatprep.subr.mxu0 0.0
  %823 = vmatpush1.msra.mxu0 0.0
  %824 = vmatprep.subr.mxu0 0.0
  %825 = vmatpush1.msra.mxu0 0.0
  %826 = vmatprep.subr.mxu0 0.0
  %827 = vmatpush1.msra.mxu0 0.0
  %828 = vmatprep.mubr.f32.mxu0 0.0
  %829 = vmatmul.mubr.f32.gmra.mrb[0].mxu0 %v762
  %v830 = vpop.f32.mrb[0].mxu0
  %v831 = vadd.f32 0.0, %v830
  %v832 = vpop.f32.mrb[0].mxu0
  %833 = vdwg.mxu0
  %v834 = vadd.f32 %v344, %v831
  %v835 = vmul.f32 %v834, 0.5
  %v836 = vtanh.pop %v835
  %v837 = vmul.f32 %v836, 0.5
  %v838 = vadd.f32 %v837, 0.5
  %v839 = vtanh.pop %v834
  %v840 = vmul.f32 %v838, %v752
  %842 = vrot.lane.b32.xlu0 %v839, 112
  %v843 = vpop.permute.xlu0 %842
  %v845 = vmul.f32 %v838, %v843
  %847 = vrot.lane.b32.xlu0 %v845, 8
  %v848 = vpop.permute.xlu0 %847
  %v850 = vadd.f32 %v840, %v848
  %v851 = vtanh.pop %v850
  %853 = vrot.lane.b32.xlu0 %v851, 16
  %v854 = vpop.permute.xlu0 %853
  %v856 = vmul.f32 %v838, %v854
  %858 = vrot.lane.b32.xlu0 %v856, 104
  %v859 = vpop.permute.xlu0 %858
  %v860 = vsel %vm364, %v859, 0
  %862 = vmatprep.subr.mxu0 0.0
  %863 = vmatpush1.msra.mxu0 %v31
  %864 = vmatprep.subr.mxu0 0.0
  %865 = vmatpush1.msra.mxu0 0.0
  %866 = vmatprep.subr.mxu0 0.0
  %867 = vmatpush1.msra.mxu0 0.0
  %868 = vmatprep.subr.mxu0 0.0
  %869 = vmatpush1.msra.mxu0 0.0
  %870 = vmatprep.subr.mxu0 0.0
  %871 = vmatpush1.msra.mxu0 0.0
  %872 = vmatprep.subr.mxu0 0.0
  %873 = vmatpush1.msra.mxu0 0.0
  %874 = vmatprep.subr.mxu0 0.0
  %875 = vmatpush1.msra.mxu0 0.0
  %876 = vmatprep.subr.mxu0 0.0
  %877 = vmatpush1.msra.mxu0 0.0
  %878 = vmatprep.subr.mxu0 0.0
  %879 = vmatpush1.msra.mxu0 0.0
  %880 = vmatprep.subr.mxu0 0.0
  %881 = vmatpush1.msra.mxu0 0.0
  %882 = vmatprep.subr.mxu0 0.0
  %883 = vmatpush1.msra.mxu0 0.0
  %884 = vmatprep.subr.mxu0 0.0
  %885 = vmatpush1.msra.mxu0 0.0
  %886 = vmatprep.subr.mxu0 0.0
  %887 = vmatpush1.msra.mxu0 0.0
  %888 = vmatprep.subr.mxu0 0.0
  %889 = vmatpush1.msra.mxu0 0.0
  %890 = vmatprep.subr.mxu0 0.0
  %891 = vmatpush1.msra.mxu0 0.0
  %892 = vmatprep.subr.mxu0 0.0
  %893 = vmatpush1.msra.mxu0 0.0
  %894 = vmatprep.subr.mxu0 0.0
  %895 = vmatpush1.msra.mxu0 0.0
  %896 = vmatprep.subr.mxu0 0.0
  %897 = vmatpush1.msra.mxu0 0.0
  %898 = vmatprep.subr.mxu0 0.0
  %899 = vmatpush1.msra.mxu0 0.0
  %900 = vmatprep.subr.mxu0 0.0
  %901 = vmatpush1.msra.mxu0 0.0
  %902 = vmatprep.subr.mxu0 0.0
  %903 = vmatpush1.msra.mxu0 0.0
  %904 = vmatprep.subr.mxu0 0.0
  %905 = vmatpush1.msra.mxu0 0.0
  %906 = vmatprep.subr.mxu0 0.0
  %907 = vmatpush1.msra.mxu0 0.0
  %908 = vmatprep.subr.mxu0 0.0
  %909 = vmatpush1.msra.mxu0 0.0
  %910 = vmatprep.subr.mxu0 0.0
  %911 = vmatpush1.msra.mxu0 0.0
  %912 = vmatprep.subr.mxu0 0.0
  %913 = vmatpush1.msra.mxu0 0.0
  %914 = vmatprep.subr.mxu0 0.0
  %915 = vmatpush1.msra.mxu0 0.0
  %916 = vmatprep.subr.mxu0 0.0
  %917 = vmatpush1.msra.mxu0 0.0
  %918 = vmatprep.subr.mxu0 0.0
  %919 = vmatpush1.msra.mxu0 0.0
  %920 = vmatprep.subr.mxu0 0.0
  %921 = vmatpush1.msra.mxu0 0.0
  %922 = vmatprep.subr.mxu0 0.0
  %923 = vmatpush1.msra.mxu0 0.0
  %924 = vmatprep.subr.mxu0 0.0
  %925 = vmatpush1.msra.mxu0 0.0
  %926 = vmatprep.mubr.f32.mxu0 0.0
  %927 = vmatmul.mubr.f32.gmra.mrb[0].mxu0 %v860
  %v928 = vpop.f32.mrb[0].mxu0
  %v929 = vadd.f32 0.0, %v928
  %v930 = vpop.f32.mrb[0].mxu0
  %931 = vdwg.mxu0
  %v932 = vadd.f32 %v349, %v929
  %v933 = vmul.f32 %v932, 0.5
  %v934 = vtanh.pop %v933
  %v935 = vmul.f32 %v934, 0.5
  %v936 = vadd.f32 %v935, 0.5
  %v937 = vtanh.pop %v932
  %v938 = vmul.f32 %v936, %v850
  %940 = vrot.lane.b32.xlu0 %v937, 112
  %v941 = vpop.permute.xlu0 %940
  %v943 = vmul.f32 %v936, %v941
  %945 = vrot.lane.b32.xlu0 %v943, 8
  %v946 = vpop.permute.xlu0 %945
  %v948 = vadd.f32 %v938, %v946
  %v949 = vtanh.pop %v948
  %951 = vrot.lane.b32.xlu0 %v949, 16
  %v952 = vpop.permute.xlu0 %951
  %v954 = vmul.f32 %v936, %v952
  %956 = vrot.lane.b32.xlu0 %v954, 104
  %v957 = vpop.permute.xlu0 %956
  %v958 = vsel %vm364, %v957, 0
  %960 = vmatprep.subr.mxu0 0.0
  %961 = vmatpush1.msra.mxu0 %v31
  %962 = vmatprep.subr.mxu0 0.0
  %963 = vmatpush1.msra.mxu0 0.0
  %964 = vmatprep.subr.mxu0 0.0
  %965 = vmatpush1.msra.mxu0 0.0
  %966 = vmatprep.subr.mxu0 0.0
  %967 = vmatpush1.msra.mxu0 0.0
  %968 = vmatprep.subr.mxu0 0.0
  %969 = vmatpush1.msra.mxu0 0.0
  %970 = vmatprep.subr.mxu0 0.0
  %971 = vmatpush1.msra.mxu0 0.0
  %972 = vmatprep.subr.mxu0 0.0
  %973 = vmatpush1.msra.mxu0 0.0
  %974 = vmatprep.subr.mxu0 0.0
  %975 = vmatpush1.msra.mxu0 0.0
  %976 = vmatprep.subr.mxu0 0.0
  %977 = vmatpush1.msra.mxu0 0.0
  %978 = vmatprep.subr.mxu0 0.0
  %979 = vmatpush1.msra.mxu0 0.0
  %980 = vmatprep.subr.mxu0 0.0
  %981 = vmatpush1.msra.mxu0 0.0
  %982 = vmatprep.subr.mxu0 0.0
  %983 = vmatpush1.msra.mxu0 0.0
  %984 = vmatprep.subr.mxu0 0.0
  %985 = vmatpush1.msra.mxu0 0.0
  %986 = vmatprep.subr.mxu0 0.0
  %987 = vmatpush1.msra.mxu0 0.0
  %988 = vmatprep.subr.mxu0 0.0
  %989 = vmatpush1.msra.mxu0 0.0
  %990 = vmatprep.subr.mxu0 0.0
  %991 = vmatpush1.msra.mxu0 0.0
  %992 = vmatprep.subr.mxu0 0.0
  %993 = vmatpush1.msra.mxu0 0.0
  %994 = vmatprep.subr.mxu0 0.0
  %995 = vmatpush1.msra.mxu0 0.0
  %996 = vmatprep.subr.mxu0 0.0
  %997 = vmatpush1.msra.mxu0 0.0
  %998 = vmatprep.subr.mxu0 0.0
  %999 = vmatpush1.msra.mxu0 0.0
  %1000 = vmatprep.subr.mxu0 0.0
  %1001 = vmatpush1.msra.mxu0 0.0
  %1002 = vmatprep.subr.mxu0 0.0
  %1003 = vmatpush1.msra.mxu0 0.0
  %1004 = vmatprep.subr.mxu0 0.0
  %1005 = vmatpush1.msra.mxu0 0.0
  %1006 = vmatprep.subr.mxu0 0.0
  %1007 = vmatpush1.msra.mxu0 0.0
  %1008 = vmatprep.subr.mxu0 0.0
  %1009 = vmatpush1.msra.mxu0 0.0
  %1010 = vmatprep.subr.mxu0 0.0
  %1011 = vmatpush1.msra.mxu0 0.0
  %1012 = vmatprep.subr.mxu0 0.0
  %1013 = vmatpush1.msra.mxu0 0.0
  %1014 = vmatprep.subr.mxu0 0.0
  %1015 = vmatpush1.msra.mxu0 0.0
  %1016 = vmatprep.subr.mxu0 0.0
  %1017 = vmatpush1.msra.mxu0 0.0
  %1018 = vmatprep.subr.mxu0 0.0
  %1019 = vmatpush1.msra.mxu0 0.0
  %1020 = vmatprep.subr.mxu0 0.0
  %1021 = vmatpush1.msra.mxu0 0.0
  %1022 = vmatprep.subr.mxu0 0.0
  %1023 = vmatpush1.msra.mxu0 0.0
  %1024 = vmatprep.mubr.f32.mxu0 0.0
  %1025 = vmatmul.mubr.f32.gmra.mrb[0].mxu0 %v958
  %v1026 = vpop.f32.mrb[0].mxu0
  %v1027 = vadd.f32 0.0, %v1026
  %v1028 = vpop.f32.mrb[0].mxu0
  %1029 = vdwg.mxu0
  %v1030 = vadd.f32 %v354, %v1027
  %v1031 = vmul.f32 %v1030, 0.5
  %v1032 = vtanh.pop %v1031
  %v1033 = vmul.f32 %v1032, 0.5
  %v1034 = vadd.f32 %v1033, 0.5
  %v1035 = vtanh.pop %v1030
  %v1036 = vmul.f32 %v1034, %v948
  %1038 = vrot.lane.b32.xlu0 %v1035, 112
  %v1039 = vpop.permute.xlu0 %1038
  %v1041 = vmul.f32 %v1034, %v1039
  %1043 = vrot.lane.b32.xlu0 %v1041, 8
  %v1044 = vpop.permute.xlu0 %1043
  %v1046 = vadd.f32 %v1036, %v1044
  %v1047 = vtanh.pop %v1046
  %1049 = vrot.lane.b32.xlu0 %v1047, 16
  %v1050 = vpop.permute.xlu0 %1049
  %v1052 = vmul.f32 %v1034, %v1050
  %1054 = vrot.lane.b32.xlu0 %v1052, 104
  %v1055 = vpop.permute.xlu0 %1054
  %v1056 = vsel %vm364, %v1055, 0
  %1058 = vmatprep.subr.mxu0 0.0
  %1059 = vmatpush1.msra.mxu0 %v31
  %1060 = vmatprep.subr.mxu0 0.0
  %1061 = vmatpush1.msra.mxu0 0.0
  %1062 = vmatprep.subr.mxu0 0.0
  %1063 = vmatpush1.msra.mxu0 0.0
  %1064 = vmatprep.subr.mxu0 0.0
  %1065 = vmatpush1.msra.mxu0 0.0
  %1066 = vmatprep.subr.mxu0 0.0
  %1067 = vmatpush1.msra.mxu0 0.0
  %1068 = vmatprep.subr.mxu0 0.0
  %1069 = vmatpush1.msra.mxu0 0.0
  %1070 = vmatprep.subr.mxu0 0.0
  %1071 = vmatpush1.msra.mxu0 0.0
  %1072 = vmatprep.subr.mxu0 0.0
  %1073 = vmatpush1.msra.mxu0 0.0
  %1074 = vmatprep.subr.mxu0 0.0
  %1075 = vmatpush1.msra.mxu0 0.0
  %1076 = vmatprep.subr.mxu0 0.0
  %1077 = vmatpush1.msra.mxu0 0.0
  %1078 = vmatprep.subr.mxu0 0.0
  %1079 = vmatpush1.msra.mxu0 0.0
  %1080 = vmatprep.subr.mxu0 0.0
  %1081 = vmatpush1.msra.mxu0 0.0
  %1082 = vmatprep.subr.mxu0 0.0
  %1083 = vmatpush1.msra.mxu0 0.0
  %1084 = vmatprep.subr.mxu0 0.0
  %1085 = vmatpush1.msra.mxu0 0.0
  %1086 = vmatprep.subr.mxu0 0.0
  %1087 = vmatpush1.msra.mxu0 0.0
  %1088 = vmatprep.subr.mxu0 0.0
  %1089 = vmatpush1.msra.mxu0 0.0
  %1090 = vmatprep.subr.mxu0 0.0
  %1091 = vmatpush1.msra.mxu0 0.0
  %1092 = vmatprep.subr.mxu0 0.0
  %1093 = vmatpush1.msra.mxu0 0.0
  %1094 = vmatprep.subr.mxu0 0.0
  %1095 = vmatpush1.msra.mxu0 0.0
  %1096 = vmatprep.subr.mxu0 0.0
  %1097 = vmatpush1.msra.mxu0 0.0
  %1098 = vmatprep.subr.mxu0 0.0
  %1099 = vmatpush1.msra.mxu0 0.0
  %1100 = vmatprep.subr.mxu0 0.0
  %1101 = vmatpush1.msra.mxu0 0.0
  %1102 = vmatprep.subr.mxu0 0.0
  %1103 = vmatpush1.msra.mxu0 0.0
  %1104 = vmatprep.subr.mxu0 0.0
  %1105 = vmatpush1.msra.mxu0 0.0
  %1106 = vmatprep.subr.mxu0 0.0
  %1107 = vmatpush1.msra.mxu0 0.0
  %1108 = vmatprep.subr.mxu0 0.0
  %1109 = vmatpush1.msra.mxu0 0.0
  %1110 = vmatprep.subr.mxu0 0.0
  %1111 = vmatpush1.msra.mxu0 0.0
  %1112 = vmatprep.subr.mxu0 0.0
  %1113 = vmatpush1.msra.mxu0 0.0
  %1114 = vmatprep.subr.mxu0 0.0
  %1115 = vmatpush1.msra.mxu0 0.0
  %1116 = vmatprep.subr.mxu0 0.0
  %1117 = vmatpush1.msra.mxu0 0.0
  %1118 = vmatprep.subr.mxu0 0.0
  %1119 = vmatpush1.msra.mxu0 0.0
  %1120 = vmatprep.subr.mxu0 0.0
  %1121 = vmatpush1.msra.mxu0 0.0
  %1122 = vmatprep.mubr.f32.mxu0 0.0
  %1123 = vmatmul.mubr.f32.gmra.mrb[0].mxu0 %v1056
  %v1124 = vpop.f32.mrb[0].mxu0
  %v1125 = vadd.f32 0.0, %v1124
  %v1126 = vpop.f32.mrb[0].mxu0
  %1127 = vdwg.mxu0
  %v1128 = vadd.f32 %v359, %v1125
  %v1129 = vmul.f32 %v1128, 0.5
  %v1130 = vtanh.pop %v1129
  %v1131 = vmul.f32 %v1130, 0.5
  %v1132 = vadd.f32 %v1131, 0.5
  %v1133 = vtanh.pop %v1128
  %v1134 = vmul.f32 %v1132, %v1046
  %1136 = vrot.lane.b32.xlu0 %v1133, 112
  %v1137 = vpop.permute.xlu0 %1136
  %v1139 = vmul.f32 %v1132, %v1137
  %1141 = vrot.lane.b32.xlu0 %v1139, 8
  %v1142 = vpop.permute.xlu0 %1141
  %v1144 = vadd.f32 %v1134, %v1142
  %v1145 = vtanh.pop %v1144
  %1147 = vrot.lane.b32.xlu0 %v1145, 16
  %v1148 = vpop.permute.xlu0 %1147
  %v1150 = vmul.f32 %v1132, %v1148
  %v1151 = vld [vmem:[%s1] sm:$0xff]
  %v1153 = vsel %vm86, %v1151, 0
  %v1156 = vsel %vm111, %v40, 0
  %1158 = vmatprep.subr.mxu0 0.0
  %1159 = vmatpush1.msra.mxu0 %v1156
  %1160 = vmatprep.subr.mxu0 0.0
  %1161 = vmatpush1.msra.mxu0 0.0
  %1162 = vmatprep.subr.mxu0 0.0
  %1163 = vmatpush1.msra.mxu0 0.0
  %1164 = vmatprep.subr.mxu0 0.0
  %1165 = vmatpush1.msra.mxu0 0.0
  %1166 = vmatprep.subr.mxu0 0.0
  %1167 = vmatpush1.msra.mxu0 0.0
  %1168 = vmatprep.subr.mxu0 0.0
  %1169 = vmatpush1.msra.mxu0 0.0
  %1170 = vmatprep.subr.mxu0 0.0
  %1171 = vmatpush1.msra.mxu0 0.0
  %1172 = vmatprep.subr.mxu0 0.0
  %1173 = vmatpush1.msra.mxu0 0.0
  %1174 = vmatprep.subr.mxu0 0.0
  %1175 = vmatpush1.msra.mxu0 0.0
  %1176 = vmatprep.subr.mxu0 0.0
  %1177 = vmatpush1.msra.mxu0 0.0
  %1178 = vmatprep.subr.mxu0 0.0
  %1179 = vmatpush1.msra.mxu0 0.0
  %1180 = vmatprep.subr.mxu0 0.0
  %1181 = vmatpush1.msra.mxu0 0.0
  %1182 = vmatprep.subr.mxu0 0.0
  %1183 = vmatpush1.msra.mxu0 0.0
  %1184 = vmatprep.subr.mxu0 0.0
  %1185 = vmatpush1.msra.mxu0 0.0
  %1186 = vmatprep.subr.mxu0 0.0
  %1187 = vmatpush1.msra.mxu0 0.0
  %1188 = vmatprep.subr.mxu0 0.0
  %1189 = vmatpush1.msra.mxu0 0.0
  %1190 = vmatprep.subr.mxu0 0.0
  %1191 = vmatpush1.msra.mxu0 0.0
  %1192 = vmatprep.subr.mxu0 0.0
  %1193 = vmatpush1.msra.mxu0 0.0
  %1194 = vmatprep.subr.mxu0 0.0
  %1195 = vmatpush1.msra.mxu0 0.0
  %1196 = vmatprep.subr.mxu0 0.0
  %1197 = vmatpush1.msra.mxu0 0.0
  %1198 = vmatprep.subr.mxu0 0.0
  %1199 = vmatpush1.msra.mxu0 0.0
  %1200 = vmatprep.subr.mxu0 0.0
  %1201 = vmatpush1.msra.mxu0 0.0
  %1202 = vmatprep.subr.mxu0 0.0
  %1203 = vmatpush1.msra.mxu0 0.0
  %1204 = vmatprep.subr.mxu0 0.0
  %1205 = vmatpush1.msra.mxu0 0.0
  %1206 = vmatprep.subr.mxu0 0.0
  %1207 = vmatpush1.msra.mxu0 0.0
  %1208 = vmatprep.subr.mxu0 0.0
  %1209 = vmatpush1.msra.mxu0 0.0
  %1210 = vmatprep.subr.mxu0 0.0
  %1211 = vmatpush1.msra.mxu0 0.0
  %1212 = vmatprep.subr.mxu0 0.0
  %1213 = vmatpush1.msra.mxu0 0.0
  %1214 = vmatprep.subr.mxu0 0.0
  %1215 = vmatpush1.msra.mxu0 0.0
  %1216 = vmatprep.subr.mxu0 0.0
  %1217 = vmatpush1.msra.mxu0 0.0
  %1218 = vmatprep.subr.mxu0 0.0
  %1219 = vmatpush1.msra.mxu0 0.0
  %1220 = vmatprep.subr.mxu0 0.0
  %1221 = vmatpush1.msra.mxu0 0.0
  %1222 = vmatprep.mubr.f32.mxu0 0.0
  %1223 = vmatmul.mubr.f32.gmra.mrb[0].mxu0 %v1153
  %v1224 = vpop.f32.mrb[0].mxu0
  %v1225 = vadd.f32 0.0, %v1224
  %v1226 = vpop.f32.mrb[0].mxu0
  %1227 = vdwg.mxu0
  %v1228 = vlaneseq
  %v1229 = vshrl.u32 %v1228, 7
  %v1230 = vsub.s32 0, %v1229
  %v1231 = vrot.slane %v41, %v1230
  %v1232 = vadd.f32 %v1225, %v1231
  %v1233 = vmax.f32 %v73, 0.0
  %1235 = vrot.lane.b32.xlu0 %v1150, 120
  %v1236 = vpop.permute.xlu0 %1235
  %v1238 = vsel %vm232, %v1233, %v1236
  %vm1239 = vcmask 195584
  %v1241 = vsel %vm1239, %v1238, 0
  %1243 = vmatprep.subr.mxu0 0.0
  %1244 = vmatpush1.msra.mxu0 %v32
  %1245 = vmatprep.subr.mxu0 0.0
  %1246 = vmatpush1.msra.mxu0 %v33
  %1247 = vmatprep.subr.mxu0 0.0
  %1248 = vmatpush1.msra.mxu0 %v34
  %1249 = vmatprep.subr.mxu0 0.0
  %1250 = vmatpush1.msra.mxu0 0.0
  %1251 = vmatprep.subr.mxu0 0.0
  %1252 = vmatpush1.msra.mxu0 0.0
  %1253 = vmatprep.subr.mxu0 0.0
  %1254 = vmatpush1.msra.mxu0 0.0
  %1255 = vmatprep.subr.mxu0 0.0
  %1256 = vmatpush1.msra.mxu0 0.0
  %1257 = vmatprep.subr.mxu0 0.0
  %1258 = vmatpush1.msra.mxu0 0.0
  %1259 = vmatprep.subr.mxu0 0.0
  %1260 = vmatpush1.msra.mxu0 0.0
  %1261 = vmatprep.subr.mxu0 0.0
  %1262 = vmatpush1.msra.mxu0 0.0
  %1263 = vmatprep.subr.mxu0 0.0
  %1264 = vmatpush1.msra.mxu0 0.0
  %1265 = vmatprep.subr.mxu0 0.0
  %1266 = vmatpush1.msra.mxu0 0.0
  %1267 = vmatprep.subr.mxu0 0.0
  %1268 = vmatpush1.msra.mxu0 0.0
  %1269 = vmatprep.subr.mxu0 0.0
  %1270 = vmatpush1.msra.mxu0 0.0
  %1271 = vmatprep.subr.mxu0 0.0
  %1272 = vmatpush1.msra.mxu0 0.0
  %1273 = vmatprep.subr.mxu0 0.0
  %1274 = vmatpush1.msra.mxu0 0.0
  %1275 = vmatprep.subr.mxu0 0.0
  %1276 = vmatpush1.msra.mxu0 0.0
  %1277 = vmatprep.subr.mxu0 0.0
  %1278 = vmatpush1.msra.mxu0 0.0
  %1279 = vmatprep.subr.mxu0 0.0
  %1280 = vmatpush1.msra.mxu0 0.0
  %1281 = vmatprep.subr.mxu0 0.0
  %1282 = vmatpush1.msra.mxu0 0.0
  %1283 = vmatprep.subr.mxu0 0.0
  %1284 = vmatpush1.msra.mxu0 0.0
  %1285 = vmatprep.subr.mxu0 0.0
  %1286 = vmatpush1.msra.mxu0 0.0
  %1287 = vmatprep.subr.mxu0 0.0
  %1288 = vmatpush1.msra.mxu0 0.0
  %1289 = vmatprep.subr.mxu0 0.0
  %1290 = vmatpush1.msra.mxu0 0.0
  %1291 = vmatprep.subr.mxu0 0.0
  %1292 = vmatpush1.msra.mxu0 0.0
  %1293 = vmatprep.subr.mxu0 0.0
  %1294 = vmatpush1.msra.mxu0 0.0
  %1295 = vmatprep.subr.mxu0 0.0
  %1296 = vmatpush1.msra.mxu0 0.0
  %1297 = vmatprep.subr.mxu0 0.0
  %1298 = vmatpush1.msra.mxu0 0.0
  %1299 = vmatprep.subr.mxu0 0.0
  %1300 = vmatpush1.msra.mxu0 0.0
  %1301 = vmatprep.subr.mxu0 0.0
  %1302 = vmatpush1.msra.mxu0 0.0
  %1303 = vmatprep.subr.mxu0 0.0
  %1304 = vmatpush1.msra.mxu0 0.0
  %1305 = vmatprep.subr.mxu0 0.0
  %1306 = vmatpush1.msra.mxu0 0.0
  %1307 = vmatprep.mubr.f32.mxu0 0.0
  %1308 = vmatmul.mubr.f32.gmra.mrb[0].mxu0 %v1241
  %v1309 = vpop.f32.mrb[0].mxu0
  %v1310 = vadd.f32 %v39, %v1309
  %v1311 = vpop.f32.mrb[0].mxu0
  %1312 = vdwg.mxu0
  %v1313 = vmul.f32 %v1310, 0.5
  %v1314 = vtanh.pop %v1313
  %v1315 = vmul.f32 %v1314, 0.5
  %v1316 = vadd.f32 %v1315, 0.5
  %v1317 = vtanh.pop %v1310
  %v1318 = vmul.f32 %v1316, 0.0
  %1320 = vrot.lane.b32.xlu0 %v1317, 112
  %v1321 = vpop.permute.xlu0 %1320
  %v1323 = vmul.f32 %v1316, %v1321
  %1325 = vrot.lane.b32.xlu0 %v1323, 8
  %v1326 = vpop.permute.xlu0 %1325
  %v1328 = vadd.f32 %v1318, %v1326
  %v1329 = vtanh.pop %v1328
  %1331 = vrot.lane.b32.xlu0 %v1329, 16
  %v1332 = vpop.permute.xlu0 %1331
  %v1334 = vmul.f32 %v1316, %v1332
  %1336 = vrot.lane.b32.xlu0 %v1334, 104
  %v1337 = vpop.permute.xlu0 %1336
  %v1338 = vsel %vm364, %v1337, 0
  %1340 = vmatprep.subr.mxu0 0.0
  %1341 = vmatpush1.msra.mxu0 %v42
  %1342 = vmatprep.subr.mxu0 0.0
  %1343 = vmatpush1.msra.mxu0 0.0
  %1344 = vmatprep.subr.mxu0 0.0
  %1345 = vmatpush1.msra.mxu0 0.0
  %1346 = vmatprep.subr.mxu0 0.0
  %1347 = vmatpush1.msra.mxu0 0.0
  %1348 = vmatprep.subr.mxu0 0.0
  %1349 = vmatpush1.msra.mxu0 0.0
  %1350 = vmatprep.subr.mxu0 0.0
  %1351 = vmatpush1.msra.mxu0 0.0
  %1352 = vmatprep.subr.mxu0 0.0
  %1353 = vmatpush1.msra.mxu0 0.0
  %1354 = vmatprep.subr.mxu0 0.0
  %1355 = vmatpush1.msra.mxu0 0.0
  %1356 = vmatprep.subr.mxu0 0.0
  %1357 = vmatpush1.msra.mxu0 0.0
  %1358 = vmatprep.subr.mxu0 0.0
  %1359 = vmatpush1.msra.mxu0 0.0
  %1360 = vmatprep.subr.mxu0 0.0
  %1361 = vmatpush1.msra.mxu0 0.0
  %1362 = vmatprep.subr.mxu0 0.0
  %1363 = vmatpush1.msra.mxu0 0.0
  %1364 = vmatprep.subr.mxu0 0.0
  %1365 = vmatpush1.msra.mxu0 0.0
  %1366 = vmatprep.subr.mxu0 0.0
  %1367 = vmatpush1.msra.mxu0 0.0
  %1368 = vmatprep.subr.mxu0 0.0
  %1369 = vmatpush1.msra.mxu0 0.0
  %1370 = vmatprep.subr.mxu0 0.0
  %1371 = vmatpush1.msra.mxu0 0.0
  %1372 = vmatprep.subr.mxu0 0.0
  %1373 = vmatpush1.msra.mxu0 0.0
  %1374 = vmatprep.subr.mxu0 0.0
  %1375 = vmatpush1.msra.mxu0 0.0
  %1376 = vmatprep.subr.mxu0 0.0
  %1377 = vmatpush1.msra.mxu0 0.0
  %1378 = vmatprep.subr.mxu0 0.0
  %1379 = vmatpush1.msra.mxu0 0.0
  %1380 = vmatprep.subr.mxu0 0.0
  %1381 = vmatpush1.msra.mxu0 0.0
  %1382 = vmatprep.subr.mxu0 0.0
  %1383 = vmatpush1.msra.mxu0 0.0
  %1384 = vmatprep.subr.mxu0 0.0
  %1385 = vmatpush1.msra.mxu0 0.0
  %1386 = vmatprep.subr.mxu0 0.0
  %1387 = vmatpush1.msra.mxu0 0.0
  %1388 = vmatprep.subr.mxu0 0.0
  %1389 = vmatpush1.msra.mxu0 0.0
  %1390 = vmatprep.subr.mxu0 0.0
  %1391 = vmatpush1.msra.mxu0 0.0
  %1392 = vmatprep.subr.mxu0 0.0
  %1393 = vmatpush1.msra.mxu0 0.0
  %1394 = vmatprep.subr.mxu0 0.0
  %1395 = vmatpush1.msra.mxu0 0.0
  %1396 = vmatprep.subr.mxu0 0.0
  %1397 = vmatpush1.msra.mxu0 0.0
  %1398 = vmatprep.subr.mxu0 0.0
  %1399 = vmatpush1.msra.mxu0 0.0
  %1400 = vmatprep.subr.mxu0 0.0
  %1401 = vmatpush1.msra.mxu0 0.0
  %1402 = vmatprep.subr.mxu0 0.0
  %1403 = vmatpush1.msra.mxu0 0.0
  %1404 = vmatprep.mubr.f32.mxu0 0.0
  %1405 = vmatmul.mubr.f32.gmra.mrb[0].mxu0 %v1338
  %v1406 = vpop.f32.mrb[0].mxu0
  %v1407 = vadd.f32 0.0, %v1406
  %v1408 = vpop.f32.mrb[0].mxu0
  %1409 = vdwg.mxu0
  %v1410 = vadd.f32 %v1232, %v1407
  %1412 = vrot.lane.b32.xlu0 %v1225, 64
  %v1413 = vpop.permute.xlu0 %1412
  %v1415 = vsub.f32 %v1407, %v1413
  %v1417 = vcombine.high %v1410, %v1410
  %v1419 = vunpack.c.l.s4 1966171168
  %v1420 = vunpack.c.0.s8 %v1419
  %v1421 = vlaneseq
  %v1422 = vshrl.u32 %v1421, 7
  %v1423 = vsub.s32 %v1420, %v1422
  %v1424 = vrot.slane %v1410, %v1423
  %v1426 = vunpack.c.l.s4 1966171168
  %v1427 = vunpack.c.0.s8 %v1426
  %v1428 = vlaneseq
  %v1429 = vshrl.u32 %v1428, 7
  %v1430 = vsub.s32 %v1427, %v1429
  %v1431 = vrot.slane %v1417, %v1430
  %v1432 = vcombine.high %v1424, %v1424
  %v1433 = vcombine.high %v1431, %v1431
  %v1435 = vunpack.c.l.s4 1966171168
  %v1436 = vunpack.c.0.s8 %v1435
  %v1437 = vlaneseq
  %v1438 = vshrl.u32 %v1437, 7
  %v1439 = vsub.s32 %v1436, %v1438
  %v1440 = vrot.slane %v1424, %v1439
  %v1442 = vunpack.c.l.s4 1966171168
  %v1443 = vunpack.c.0.s8 %v1442
  %v1444 = vlaneseq
  %v1445 = vshrl.u32 %v1444, 7
  %v1446 = vsub.s32 %v1443, %v1445
  %v1447 = vrot.slane %v1431, %v1446
  %v1449 = vunpack.c.l.s4 1966171168
  %v1450 = vunpack.c.0.s8 %v1449
  %v1451 = vlaneseq
  %v1452 = vshrl.u32 %v1451, 7
  %v1453 = vsub.s32 %v1450, %v1452
  %v1454 = vrot.slane %v1432, %v1453
  %v1456 = vunpack.c.l.s4 1966171168
  %v1457 = vunpack.c.0.s8 %v1456
  %v1458 = vlaneseq
  %v1459 = vshrl.u32 %v1458, 7
  %v1460 = vsub.s32 %v1457, %v1459
  %v1461 = vrot.slane %v1433, %v1460
  %v1462 = vcombine.high %v1440, %v1440
  %v1463 = vcombine.high %v1447, %v1447
  %v1464 = vcombine.high %v1454, %v1454
  %v1465 = vcombine.high %v1461, %v1461
  %v1466 = vlaneseq
  %v1467 = vshrl.u32 %v1466, 7
  %v1468 = vsub.s32 0, %v1467
  %v1469 = vrot.slane %v1440, %v1468
  %v1470 = vlaneseq
  %v1471 = vshrl.u32 %v1470, 7
  %v1472 = vsub.s32 0, %v1471
  %v1473 = vrot.slane %v1454, %v1472
  %v1474 = vlaneseq
  %v1475 = vshrl.u32 %v1474, 7
  %v1476 = vsub.s32 0, %v1475
  %v1477 = vrot.slane %v1462, %v1476
  %v1478 = vlaneseq
  %v1479 = vshrl.u32 %v1478, 7
  %v1480 = vsub.s32 0, %v1479
  %v1481 = vrot.slane %v1464, %v1480
  %v1482 = vlaneseq
  %v1483 = vshrl.u32 %v1482, 7
  %v1484 = vsub.s32 0, %v1483
  %v1485 = vrot.slane %v1447, %v1484
  %v1486 = vlaneseq
  %v1487 = vshrl.u32 %v1486, 7
  %v1488 = vsub.s32 0, %v1487
  %v1489 = vrot.slane %v1461, %v1488
  %v1490 = vlaneseq
  %v1491 = vshrl.u32 %v1490, 7
  %v1492 = vsub.s32 0, %v1491
  %v1493 = vrot.slane %v1463, %v1492
  %v1494 = vlaneseq
  %v1495 = vshrl.u32 %v1494, 7
  %v1496 = vsub.s32 0, %v1495
  %v1497 = vrot.slane %v1465, %v1496
  %1507 = vrot.lane.b32.xlu0 %v1415, 64
  %v1508 = vpop.permute.xlu0 %1507
  %v1510 = vadd.f32 %v1469, %v1508
  %v1511 = vadd.f32 %v1473, %v1508
  %v1512 = vadd.f32 %v1477, %v1508
  %v1513 = vadd.f32 %v1481, %v1508
  %v1514 = vadd.f32 %v1485, %v1508
  %v1515 = vadd.f32 %v1489, %v1508
  %v1516 = vadd.f32 %v1493, %v1508
  %v1517 = vadd.f32 %v1497, %v1508
  %v1518 = vmax.f32 %v1510, 0.0
  %v1519 = vmax.f32 %v1511, 0.0
  %v1520 = vmax.f32 %v1512, 0.0
  %v1521 = vmax.f32 %v1513, 0.0
  %v1522 = vmax.f32 %v1514, 0.0
  %v1523 = vmax.f32 %v1515, 0.0
  %v1524 = vmax.f32 %v1516, 0.0
  %v1525 = vmax.f32 %v1517, 0.0
  %vm1526 = vcmask 523264
  %v1528 = vsel %vm1526, %v1518, 0
  %v1531 = vsel %vm1526, %v1519, 0
  %v1534 = vsel %vm1526, %v1520, 0
  %v1537 = vsel %vm1526, %v1521, 0
  %v1540 = vsel %vm1526, %v1522, 0
  %v1543 = vsel %vm1526, %v1523, 0
  %v1546 = vsel %vm1526, %v1524, 0
  %v1549 = vsel %vm1526, %v1525, 0
  %1551 = vmatprep.subr.mxu0 0.0
  %1552 = vmatpush1.msra.mxu0 %v43
  %1553 = vmatprep.subr.mxu0 0.0
  %1554 = vmatpush1.msra.mxu0 %v44
  %1555 = vmatprep.subr.mxu0 0.0
  %1556 = vmatpush1.msra.mxu0 %v45
  %1557 = vmatprep.subr.mxu0 0.0
  %1558 = vmatpush1.msra.mxu0 %v46
  %1559 = vmatprep.subr.mxu0 0.0
  %1560 = vmatpush1.msra.mxu0 %v47
  %1561 = vmatprep.subr.mxu0 0.0
  %1562 = vmatpush1.msra.mxu0 %v48
  %1563 = vmatprep.subr.mxu0 0.0
  %1564 = vmatpush1.msra.mxu0 %v49
  %1565 = vmatprep.subr.mxu0 0.0
  %1566 = vmatpush1.msra.mxu0 %v50
  %1567 = vmatprep.subr.mxu0 0.0
  %1568 = vmatpush1.msra.mxu0 0.0
  %1569 = vmatprep.subr.mxu0 0.0
  %1570 = vmatpush1.msra.mxu0 0.0
  %1571 = vmatprep.subr.mxu0 0.0
  %1572 = vmatpush1.msra.mxu0 0.0
  %1573 = vmatprep.subr.mxu0 0.0
  %1574 = vmatpush1.msra.mxu0 0.0
  %1575 = vmatprep.subr.mxu0 0.0
  %1576 = vmatpush1.msra.mxu0 0.0
  %1577 = vmatprep.subr.mxu0 0.0
  %1578 = vmatpush1.msra.mxu0 0.0
  %1579 = vmatprep.subr.mxu0 0.0
  %1580 = vmatpush1.msra.mxu0 0.0
  %1581 = vmatprep.subr.mxu0 0.0
  %1582 = vmatpush1.msra.mxu0 0.0
  %1583 = vmatprep.subr.mxu0 0.0
  %1584 = vmatpush1.msra.mxu0 0.0
  %1585 = vmatprep.subr.mxu0 0.0
  %1586 = vmatpush1.msra.mxu0 0.0
  %1587 = vmatprep.subr.mxu0 0.0
  %1588 = vmatpush1.msra.mxu0 0.0
  %1589 = vmatprep.subr.mxu0 0.0
  %1590 = vmatpush1.msra.mxu0 0.0
  %1591 = vmatprep.subr.mxu0 0.0
  %1592 = vmatpush1.msra.mxu0 0.0
  %1593 = vmatprep.subr.mxu0 0.0
  %1594 = vmatpush1.msra.mxu0 0.0
  %1595 = vmatprep.subr.mxu0 0.0
  %1596 = vmatpush1.msra.mxu0 0.0
  %1597 = vmatprep.subr.mxu0 0.0
  %1598 = vmatpush1.msra.mxu0 0.0
  %1599 = vmatprep.subr.mxu0 0.0
  %1600 = vmatpush1.msra.mxu0 0.0
  %1601 = vmatprep.subr.mxu0 0.0
  %1602 = vmatpush1.msra.mxu0 0.0
  %1603 = vmatprep.subr.mxu0 0.0
  %1604 = vmatpush1.msra.mxu0 0.0
  %1605 = vmatprep.subr.mxu0 0.0
  %1606 = vmatpush1.msra.mxu0 0.0
  %1607 = vmatprep.subr.mxu0 0.0
  %1608 = vmatpush1.msra.mxu0 0.0
  %1609 = vmatprep.subr.mxu0 0.0
  %1610 = vmatpush1.msra.mxu0 0.0
  %1611 = vmatprep.subr.mxu0 0.0
  %1612 = vmatpush1.msra.mxu0 0.0
  %1613 = vmatprep.subr.mxu0 0.0
  %1614 = vmatpush1.msra.mxu0 0.0
  %1615 = vmatprep.mubr.f32.mxu0 0.0
  %1616 = vmatmul.mubr.f32.gmra.mrb[0].mxu0 %v1528
  %v1617 = vpop.f32.mrb[0].mxu0
  %v1618 = vadd.f32 %v55, %v1617
  %v1619 = vpop.f32.mrb[0].mxu0
  %1620 = vmatprep.mubr.f32.mxu0 0.0
  %1621 = vmatmul.mubr.f32.gmra.mrb[0].mxu0 %v1531
  %v1622 = vpop.f32.mrb[0].mxu0
  %v1623 = vadd.f32 %v55, %v1622
  %v1624 = vpop.f32.mrb[0].mxu0
  %1625 = vmatprep.mubr.f32.mxu0 0.0
  %1626 = vmatmul.mubr.f32.gmra.mrb[0].mxu0 %v1534
  %v1627 = vpop.f32.mrb[0].mxu0
  %v1628 = vadd.f32 %v55, %v1627
  %v1629 = vpop.f32.mrb[0].mxu0
  %1630 = vmatprep.mubr.f32.mxu0 0.0
  %1631 = vmatmul.mubr.f32.gmra.mrb[0].mxu0 %v1537
  %v1632 = vpop.f32.mrb[0].mxu0
  %v1633 = vadd.f32 %v55, %v1632
  %v1634 = vpop.f32.mrb[0].mxu0
  %1635 = vmatprep.mubr.f32.mxu0 0.0
  %1636 = vmatmul.mubr.f32.gmra.mrb[0].mxu0 %v1540
  %v1637 = vpop.f32.mrb[0].mxu0
  %v1638 = vadd.f32 %v55, %v1637
  %v1639 = vpop.f32.mrb[0].mxu0
  %1640 = vmatprep.mubr.f32.mxu0 0.0
  %1641 = vmatmul.mubr.f32.gmra.mrb[0].mxu0 %v1543
  %v1642 = vpop.f32.mrb[0].mxu0
  %v1643 = vadd.f32 %v55, %v1642
  %v1644 = vpop.f32.mrb[0].mxu0
  %1645 = vmatprep.mubr.f32.mxu0 0.0
  %1646 = vmatmul.mubr.f32.gmra.mrb[0].mxu0 %v1546
  %v1647 = vpop.f32.mrb[0].mxu0
  %v1648 = vadd.f32 %v55, %v1647
  %v1649 = vpop.f32.mrb[0].mxu0
  %1650 = vmatprep.mubr.f32.mxu0 0.0
  %1651 = vmatmul.mubr.f32.gmra.mrb[0].mxu0 %v1549
  %v1652 = vpop.f32.mrb[0].mxu0
  %v1653 = vadd.f32 %v55, %v1652
  %v1654 = vpop.f32.mrb[0].mxu0
  %1655 = vdwg.mxu0
  %v1656 = vmax.f32 %v1618, 0.0
  %v1657 = vmax.f32 %v1623, 0.0
  %v1658 = vmax.f32 %v1628, 0.0
  %v1659 = vmax.f32 %v1633, 0.0
  %v1660 = vmax.f32 %v1638, 0.0
  %v1661 = vmax.f32 %v1643, 0.0
  %v1662 = vmax.f32 %v1648, 0.0
  %v1663 = vmax.f32 %v1653, 0.0
  %v1664 = vld [vmem:[%s2] sm:$0xff]
  %v1665 = vlaneseq
  %v1666 = vshrl.u32 %v1665, 7
  %v1667 = vsub.s32 0, %v1666
  %v1668 = vrot.slane %v1664, %v1667
  %1670 = vbcast.lane.b32.xlu0 %v1668, 256
  %v1671 = vpop.permute.xlu0 %1670
  %v1672 = vlaneseq
  %v1673 = vshrl.u32 %v1672, 7
  %v1674 = vsub.s32 1, %v1673
  %v1675 = vrot.slane %v1664, %v1674
  %1677 = vbcast.lane.b32.xlu0 %v1675, 256
  %v1678 = vpop.permute.xlu0 %1677
  %v1679 = vlaneseq
  %v1680 = vshrl.u32 %v1679, 7
  %v1681 = vsub.s32 2, %v1680
  %v1682 = vrot.slane %v1664, %v1681
  %1684 = vbcast.lane.b32.xlu0 %v1682, 256
  %v1685 = vpop.permute.xlu0 %1684
  %v1686 = vlaneseq
  %v1687 = vshrl.u32 %v1686, 7
  %v1688 = vsub.s32 3, %v1687
  %v1689 = vrot.slane %v1664, %v1688
  %1691 = vbcast.lane.b32.xlu0 %v1689, 256
  %v1692 = vpop.permute.xlu0 %1691
  %v1693 = vlaneseq
  %v1694 = vshrl.u32 %v1693, 7
  %v1695 = vsub.s32 4, %v1694
  %v1696 = vrot.slane %v1664, %v1695
  %1698 = vbcast.lane.b32.xlu0 %v1696, 256
  %v1699 = vpop.permute.xlu0 %1698
  %v1700 = vlaneseq
  %v1701 = vshrl.u32 %v1700, 7
  %v1702 = vsub.s32 5, %v1701
  %v1703 = vrot.slane %v1664, %v1702
  %1705 = vbcast.lane.b32.xlu0 %v1703, 256
  %v1706 = vpop.permute.xlu0 %1705
  %v1707 = vlaneseq
  %v1708 = vshrl.u32 %v1707, 7
  %v1709 = vsub.s32 6, %v1708
  %v1710 = vrot.slane %v1664, %v1709
  %1712 = vbcast.lane.b32.xlu0 %v1710, 256
  %v1713 = vpop.permute.xlu0 %1712
  %v1714 = vlaneseq
  %v1715 = vshrl.u32 %v1714, 7
  %v1716 = vsub.s32 7, %v1715
  %v1717 = vrot.slane %v1664, %v1716
  %1719 = vbcast.lane.b32.xlu0 %v1717, 256
  %v1720 = vpop.permute.xlu0 %1719
  %v1721 = vmul.f32 %v1656, %v1671
  %v1722 = vmul.f32 %v1657, %v1678
  %v1723 = vmul.f32 %v1658, %v1685
  %v1724 = vmul.f32 %v1659, %v1692
  %v1725 = vmul.f32 %v1660, %v1699
  %v1726 = vmul.f32 %v1661, %v1706
  %v1727 = vmul.f32 %v1662, %v1713
  %v1728 = vmul.f32 %v1663, %v1720
  %v1729 = vsel %vm364, %v1721, -inf
  %v1730 = vrot.slane %v1729, 4
  %v1731 = vmax.f32 %v1729, %v1730
  %v1732 = vrot.slane %v1731, 2
  %v1733 = vmax.f32 %v1731, %v1732
  %v1734 = vrot.slane %v1733, 1
  %v1735 = vmax.f32 %v1733, %v1734
  %v1736 = vsel %vm364, %v1722, -inf
  %v1737 = vrot.slane %v1736, 4
  %v1738 = vmax.f32 %v1736, %v1737
  %v1739 = vrot.slane %v1738, 2
  %v1740 = vmax.f32 %v1738, %v1739
  %v1741 = vrot.slane %v1740, 1
  %v1742 = vmax.f32 %v1740, %v1741
  %v1743 = vsel %vm364, %v1723, -inf
  %v1744 = vrot.slane %v1743, 4
  %v1745 = vmax.f32 %v1743, %v1744
  %v1746 = vrot.slane %v1745, 2
  %v1747 = vmax.f32 %v1745, %v1746
  %v1748 = vrot.slane %v1747, 1
  %v1749 = vmax.f32 %v1747, %v1748
  %v1750 = vsel %vm364, %v1724, -inf
  %v1751 = vrot.slane %v1750, 4
  %v1752 = vmax.f32 %v1750, %v1751
  %v1753 = vrot.slane %v1752, 2
  %v1754 = vmax.f32 %v1752, %v1753
  %v1755 = vrot.slane %v1754, 1
  %v1756 = vmax.f32 %v1754, %v1755
  %v1757 = vsel %vm364, %v1725, -inf
  %v1758 = vrot.slane %v1757, 4
  %v1759 = vmax.f32 %v1757, %v1758
  %v1760 = vrot.slane %v1759, 2
  %v1761 = vmax.f32 %v1759, %v1760
  %v1762 = vrot.slane %v1761, 1
  %v1763 = vmax.f32 %v1761, %v1762
  %v1764 = vsel %vm364, %v1726, -inf
  %v1765 = vrot.slane %v1764, 4
  %v1766 = vmax.f32 %v1764, %v1765
  %v1767 = vrot.slane %v1766, 2
  %v1768 = vmax.f32 %v1766, %v1767
  %v1769 = vrot.slane %v1768, 1
  %v1770 = vmax.f32 %v1768, %v1769
  %v1771 = vsel %vm364, %v1727, -inf
  %v1772 = vrot.slane %v1771, 4
  %v1773 = vmax.f32 %v1771, %v1772
  %v1774 = vrot.slane %v1773, 2
  %v1775 = vmax.f32 %v1773, %v1774
  %v1776 = vrot.slane %v1775, 1
  %v1777 = vmax.f32 %v1775, %v1776
  %v1778 = vsel %vm364, %v1728, -inf
  %v1779 = vrot.slane %v1778, 4
  %v1780 = vmax.f32 %v1778, %v1779
  %v1781 = vrot.slane %v1780, 2
  %v1782 = vmax.f32 %v1780, %v1781
  %v1783 = vrot.slane %v1782, 1
  %v1784 = vmax.f32 %v1782, %v1783
  %vm1794 = vcmask 1041409
  %v1795 = vsel %vm1794, %v1742, %v1735
  %vm1796 = vcmask 1042434
  %v1797 = vsel %vm1796, %v1749, %v1795
  %vm1798 = vcmask 1043459
  %v1799 = vsel %vm1798, %v1756, %v1797
  %vm1800 = vcmask 1044484
  %v1801 = vsel %vm1800, %v1763, %v1799
  %vm1802 = vcmask 1045509
  %v1803 = vsel %vm1802, %v1770, %v1801
  %vm1804 = vcmask 1046534
  %v1805 = vsel %vm1804, %v1777, %v1803
  %vm1806 = vcmask 1047559
  %v1807 = vsel %vm1806, %v1784, %v1805
  %1808 = vrot.lane.b32.xlu0 %v1807, 8
  %v1809 = vpop.permute.xlu0 %1808
  %v1811 = vsel %vm364, %v1337, %v1809
  %v1813 = vsel %vm232, %v1811, 0
  %1815 = vmatprep.subr.mxu0 0.0
  %1816 = vmatpush1.msra.mxu0 %v56
  %1817 = vmatprep.subr.mxu0 0.0
  %1818 = vmatpush1.msra.mxu0 %v57
  %1819 = vmatprep.subr.mxu0 0.0
  %1820 = vmatpush1.msra.mxu0 0.0
  %1821 = vmatprep.subr.mxu0 0.0
  %1822 = vmatpush1.msra.mxu0 0.0
  %1823 = vmatprep.subr.mxu0 0.0
  %1824 = vmatpush1.msra.mxu0 0.0
  %1825 = vmatprep.subr.mxu0 0.0
  %1826 = vmatpush1.msra.mxu0 0.0
  %1827 = vmatprep.subr.mxu0 0.0
  %1828 = vmatpush1.msra.mxu0 0.0
  %1829 = vmatprep.subr.mxu0 0.0
  %1830 = vmatpush1.msra.mxu0 0.0
  %1831 = vmatprep.subr.mxu0 0.0
  %1832 = vmatpush1.msra.mxu0 0.0
  %1833 = vmatprep.subr.mxu0 0.0
  %1834 = vmatpush1.msra.mxu0 0.0
  %1835 = vmatprep.subr.mxu0 0.0
  %1836 = vmatpush1.msra.mxu0 0.0
  %1837 = vmatprep.subr.mxu0 0.0
  %1838 = vmatpush1.msra.mxu0 0.0
  %1839 = vmatprep.subr.mxu0 0.0
  %1840 = vmatpush1.msra.mxu0 0.0
  %1841 = vmatprep.subr.mxu0 0.0
  %1842 = vmatpush1.msra.mxu0 0.0
  %1843 = vmatprep.subr.mxu0 0.0
  %1844 = vmatpush1.msra.mxu0 0.0
  %1845 = vmatprep.subr.mxu0 0.0
  %1846 = vmatpush1.msra.mxu0 0.0
  %1847 = vmatprep.subr.mxu0 0.0
  %1848 = vmatpush1.msra.mxu0 0.0
  %1849 = vmatprep.subr.mxu0 0.0
  %1850 = vmatpush1.msra.mxu0 0.0
  %1851 = vmatprep.subr.mxu0 0.0
  %1852 = vmatpush1.msra.mxu0 0.0
  %1853 = vmatprep.subr.mxu0 0.0
  %1854 = vmatpush1.msra.mxu0 0.0
  %1855 = vmatprep.subr.mxu0 0.0
  %1856 = vmatpush1.msra.mxu0 0.0
  %1857 = vmatprep.subr.mxu0 0.0
  %1858 = vmatpush1.msra.mxu0 0.0
  %1859 = vmatprep.subr.mxu0 0.0
  %1860 = vmatpush1.msra.mxu0 0.0
  %1861 = vmatprep.subr.mxu0 0.0
  %1862 = vmatpush1.msra.mxu0 0.0
  %1863 = vmatprep.subr.mxu0 0.0
  %1864 = vmatpush1.msra.mxu0 0.0
  %1865 = vmatprep.subr.mxu0 0.0
  %1866 = vmatpush1.msra.mxu0 0.0
  %1867 = vmatprep.subr.mxu0 0.0
  %1868 = vmatpush1.msra.mxu0 0.0
  %1869 = vmatprep.subr.mxu0 0.0
  %1870 = vmatpush1.msra.mxu0 0.0
  %1871 = vmatprep.subr.mxu0 0.0
  %1872 = vmatpush1.msra.mxu0 0.0
  %1873 = vmatprep.subr.mxu0 0.0
  %1874 = vmatpush1.msra.mxu0 0.0
  %1875 = vmatprep.subr.mxu0 0.0
  %1876 = vmatpush1.msra.mxu0 0.0
  %1877 = vmatprep.subr.mxu0 0.0
  %1878 = vmatpush1.msra.mxu0 0.0
  %1879 = vmatprep.mubr.f32.mxu0 0.0
  %1880 = vmatmul.mubr.f32.gmra.mrb[0].mxu0 %v1813
  %v1881 = vpop.f32.mrb[0].mxu0
  %v1882 = vadd.f32 0.0, %v1881
  %v1883 = vpop.f32.mrb[0].mxu0
  %1884 = vdwg.mxu0
  %v1885 = vadd.f32 %v1882, %v62
  %vm1886 = vcmask 31744
  %1887 = vst.msk [vmem:[%s7] sm:$0xff] %vm1886, %v1885
  %v1888 = vld [vmem:[%s5] sm:$0xff]
  %v1889 = vmul.f32 %v1885, 0.5
  %v1890 = vmul.f32 %v1889, 1.442695
  %v1891 = vpow.pop %v1890
  %1893 = vrot.lane.b32.xlu0 %v1891, 126
  %v1894 = vpop.permute.xlu0 %1893
  %v1896 = vmul.f32 %v1888, %v1894
  %1898 = vrot.lane.b32.xlu0 %v68, 4
  %v1899 = vpop.permute.xlu0 %1898
  %v1901 = vadd.f32 %v1882, %v1899
  %v1903 = vsel %vm86, %v1896, 0
  %v1906 = vsel %vm111, %v63, 0
  %1908 = vmatprep.subr.mxu0 0.0
  %1909 = vmatpush1.msra.mxu0 %v1906
  %1910 = vmatprep.subr.mxu0 0.0
  %1911 = vmatpush1.msra.mxu0 0.0
  %1912 = vmatprep.subr.mxu0 0.0
  %1913 = vmatpush1.msra.mxu0 0.0
  %1914 = vmatprep.subr.mxu0 0.0
  %1915 = vmatpush1.msra.mxu0 0.0
  %1916 = vmatprep.subr.mxu0 0.0
  %1917 = vmatpush1.msra.mxu0 0.0
  %1918 = vmatprep.subr.mxu0 0.0
  %1919 = vmatpush1.msra.mxu0 0.0
  %1920 = vmatprep.subr.mxu0 0.0
  %1921 = vmatpush1.msra.mxu0 0.0
  %1922 = vmatprep.subr.mxu0 0.0
  %1923 = vmatpush1.msra.mxu0 0.0
  %1924 = vmatprep.subr.mxu0 0.0
  %1925 = vmatpush1.msra.mxu0 0.0
  %1926 = vmatprep.subr.mxu0 0.0
  %1927 = vmatpush1.msra.mxu0 0.0
  %1928 = vmatprep.subr.mxu0 0.0
  %1929 = vmatpush1.msra.mxu0 0.0
  %1930 = vmatprep.subr.mxu0 0.0
  %1931 = vmatpush1.msra.mxu0 0.0
  %1932 = vmatprep.subr.mxu0 0.0
  %1933 = vmatpush1.msra.mxu0 0.0
  %1934 = vmatprep.subr.mxu0 0.0
  %1935 = vmatpush1.msra.mxu0 0.0
  %1936 = vmatprep.subr.mxu0 0.0
  %1937 = vmatpush1.msra.mxu0 0.0
  %1938 = vmatprep.subr.mxu0 0.0
  %1939 = vmatpush1.msra.mxu0 0.0
  %1940 = vmatprep.subr.mxu0 0.0
  %1941 = vmatpush1.msra.mxu0 0.0
  %1942 = vmatprep.subr.mxu0 0.0
  %1943 = vmatpush1.msra.mxu0 0.0
  %1944 = vmatprep.subr.mxu0 0.0
  %1945 = vmatpush1.msra.mxu0 0.0
  %1946 = vmatprep.subr.mxu0 0.0
  %1947 = vmatpush1.msra.mxu0 0.0
  %1948 = vmatprep.subr.mxu0 0.0
  %1949 = vmatpush1.msra.mxu0 0.0
  %1950 = vmatprep.subr.mxu0 0.0
  %1951 = vmatpush1.msra.mxu0 0.0
  %1952 = vmatprep.subr.mxu0 0.0
  %1953 = vmatpush1.msra.mxu0 0.0
  %1954 = vmatprep.subr.mxu0 0.0
  %1955 = vmatpush1.msra.mxu0 0.0
  %1956 = vmatprep.subr.mxu0 0.0
  %1957 = vmatpush1.msra.mxu0 0.0
  %1958 = vmatprep.subr.mxu0 0.0
  %1959 = vmatpush1.msra.mxu0 0.0
  %1960 = vmatprep.subr.mxu0 0.0
  %1961 = vmatpush1.msra.mxu0 0.0
  %1962 = vmatprep.subr.mxu0 0.0
  %1963 = vmatpush1.msra.mxu0 0.0
  %1964 = vmatprep.subr.mxu0 0.0
  %1965 = vmatpush1.msra.mxu0 0.0
  %1966 = vmatprep.subr.mxu0 0.0
  %1967 = vmatpush1.msra.mxu0 0.0
  %1968 = vmatprep.subr.mxu0 0.0
  %1969 = vmatpush1.msra.mxu0 0.0
  %1970 = vmatprep.subr.mxu0 0.0
  %1971 = vmatpush1.msra.mxu0 0.0
  %1972 = vmatprep.mubr.f32.mxu0 0.0
  %1973 = vmatmul.mubr.f32.gmra.mrb[0].mxu0 %v1903
  %v1974 = vpop.f32.mrb[0].mxu0
  %v1975 = vadd.f32 0.0, %v1974
  %v1976 = vpop.f32.mrb[0].mxu0
  %1977 = vdwg.mxu0
  %1979 = vrot.lane.b32.xlu0 %v1975, 4
  %v1980 = vpop.permute.xlu0 %1979
  %v1982 = vadd.f32 %v1901, %v1980
  %v1983 = vmax.f32 %v1982, 0.0
  %1985 = vrot.lane.b32.xlu0 %v1983, 124
  %v1986 = vpop.permute.xlu0 %1985
  %1988 = vrot.lane.b32.xlu0 %v1334, 120
  %v1989 = vpop.permute.xlu0 %1988
  %v1991 = vsel %vm232, %v1986, %v1989
  %v1993 = vsel %vm1239, %v1991, 0
  %1995 = vmatprep.subr.mxu0 0.0
  %1996 = vmatpush1.msra.mxu0 %v32
  %1997 = vmatprep.subr.mxu0 0.0
  %1998 = vmatpush1.msra.mxu0 %v33
  %1999 = vmatprep.subr.mxu0 0.0
  %2000 = vmatpush1.msra.mxu0 %v34
  %2001 = vmatprep.subr.mxu0 0.0
  %2002 = vmatpush1.msra.mxu0 0.0
  %2003 = vmatprep.subr.mxu0 0.0
  %2004 = vmatpush1.msra.mxu0 0.0
  %2005 = vmatprep.subr.mxu0 0.0
  %2006 = vmatpush1.msra.mxu0 0.0
  %2007 = vmatprep.subr.mxu0 0.0
  %2008 = vmatpush1.msra.mxu0 0.0
  %2009 = vmatprep.subr.mxu0 0.0
  %2010 = vmatpush1.msra.mxu0 0.0
  %2011 = vmatprep.subr.mxu0 0.0
  %2012 = vmatpush1.msra.mxu0 0.0
  %2013 = vmatprep.subr.mxu0 0.0
  %2014 = vmatpush1.msra.mxu0 0.0
  %2015 = vmatprep.subr.mxu0 0.0
  %2016 = vmatpush1.msra.mxu0 0.0
  %2017 = vmatprep.subr.mxu0 0.0
  %2018 = vmatpush1.msra.mxu0 0.0
  %2019 = vmatprep.subr.mxu0 0.0
  %2020 = vmatpush1.msra.mxu0 0.0
  %2021 = vmatprep.subr.mxu0 0.0
  %2022 = vmatpush1.msra.mxu0 0.0
  %2023 = vmatprep.subr.mxu0 0.0
  %2024 = vmatpush1.msra.mxu0 0.0
  %2025 = vmatprep.subr.mxu0 0.0
  %2026 = vmatpush1.msra.mxu0 0.0
  %2027 = vmatprep.subr.mxu0 0.0
  %2028 = vmatpush1.msra.mxu0 0.0
  %2029 = vmatprep.subr.mxu0 0.0
  %2030 = vmatpush1.msra.mxu0 0.0
  %2031 = vmatprep.subr.mxu0 0.0
  %2032 = vmatpush1.msra.mxu0 0.0
  %2033 = vmatprep.subr.mxu0 0.0
  %2034 = vmatpush1.msra.mxu0 0.0
  %2035 = vmatprep.subr.mxu0 0.0
  %2036 = vmatpush1.msra.mxu0 0.0
  %2037 = vmatprep.subr.mxu0 0.0
  %2038 = vmatpush1.msra.mxu0 0.0
  %2039 = vmatprep.subr.mxu0 0.0
  %2040 = vmatpush1.msra.mxu0 0.0
  %2041 = vmatprep.subr.mxu0 0.0
  %2042 = vmatpush1.msra.mxu0 0.0
  %2043 = vmatprep.subr.mxu0 0.0
  %2044 = vmatpush1.msra.mxu0 0.0
  %2045 = vmatprep.subr.mxu0 0.0
  %2046 = vmatpush1.msra.mxu0 0.0
  %2047 = vmatprep.subr.mxu0 0.0
  %2048 = vmatpush1.msra.mxu0 0.0
  %2049 = vmatprep.subr.mxu0 0.0
  %2050 = vmatpush1.msra.mxu0 0.0
  %2051 = vmatprep.subr.mxu0 0.0
  %2052 = vmatpush1.msra.mxu0 0.0
  %2053 = vmatprep.subr.mxu0 0.0
  %2054 = vmatpush1.msra.mxu0 0.0
  %2055 = vmatprep.subr.mxu0 0.0
  %2056 = vmatpush1.msra.mxu0 0.0
  %2057 = vmatprep.subr.mxu0 0.0
  %2058 = vmatpush1.msra.mxu0 0.0
  %2059 = vmatprep.mubr.f32.mxu0 0.0
  %2060 = vmatmul.mubr.f32.gmra.mrb[0].mxu0 %v1993
  %v2061 = vpop.f32.mrb[0].mxu0
  %v2062 = vadd.f32 %v39, %v2061
  %v2063 = vpop.f32.mrb[0].mxu0
  %2064 = vdwg.mxu0
  %v2065 = vmul.f32 %v2062, 0.5
  %v2066 = vtanh.pop %v2065
  %v2067 = vmul.f32 %v2066, 0.5
  %v2068 = vadd.f32 %v2067, 0.5
  %v2069 = vtanh.pop %v2062
  %v2070 = vmul.f32 %v2068, %v1328
  %2072 = vrot.lane.b32.xlu0 %v2069, 112
  %v2073 = vpop.permute.xlu0 %2072
  %v2075 = vmul.f32 %v2068, %v2073
  %2077 = vrot.lane.b32.xlu0 %v2075, 8
  %v2078 = vpop.permute.xlu0 %2077
  %v2080 = vadd.f32 %v2070, %v2078
  %v2081 = vtanh.pop %v2080
  %2083 = vrot.lane.b32.xlu0 %v2081, 16
  %v2084 = vpop.permute.xlu0 %2083
  %v2086 = vmul.f32 %v2068, %v2084
  %2088 = vrot.lane.b32.xlu0 %v2086, 104
  %v2089 = vpop.permute.xlu0 %2088
  %v2090 = vsel %vm364, %v2089, 0
  %2092 = vmatprep.subr.mxu0 0.0
  %2093 = vmatpush1.msra.mxu0 %v42
  %2094 = vmatprep.subr.mxu0 0.0
  %2095 = vmatpush1.msra.mxu0 0.0
  %2096 = vmatprep.subr.mxu0 0.0
  %2097 = vmatpush1.msra.mxu0 0.0
  %2098 = vmatprep.subr.mxu0 0.0
  %2099 = vmatpush1.msra.mxu0 0.0
  %2100 = vmatprep.subr.mxu0 0.0
  %2101 = vmatpush1.msra.mxu0 0.0
  %2102 = vmatprep.subr.mxu0 0.0
  %2103 = vmatpush1.msra.mxu0 0.0
  %2104 = vmatprep.subr.mxu0 0.0
  %2105 = vmatpush1.msra.mxu0 0.0
  %2106 = vmatprep.subr.mxu0 0.0
  %2107 = vmatpush1.msra.mxu0 0.0
  %2108 = vmatprep.subr.mxu0 0.0
  %2109 = vmatpush1.msra.mxu0 0.0
  %2110 = vmatprep.subr.mxu0 0.0
  %2111 = vmatpush1.msra.mxu0 0.0
  %2112 = vmatprep.subr.mxu0 0.0
  %2113 = vmatpush1.msra.mxu0 0.0
  %2114 = vmatprep.subr.mxu0 0.0
  %2115 = vmatpush1.msra.mxu0 0.0
  %2116 = vmatprep.subr.mxu0 0.0
  %2117 = vmatpush1.msra.mxu0 0.0
  %2118 = vmatprep.subr.mxu0 0.0
  %2119 = vmatpush1.msra.mxu0 0.0
  %2120 = vmatprep.subr.mxu0 0.0
  %2121 = vmatpush1.msra.mxu0 0.0
  %2122 = vmatprep.subr.mxu0 0.0
  %2123 = vmatpush1.msra.mxu0 0.0
  %2124 = vmatprep.subr.mxu0 0.0
  %2125 = vmatpush1.msra.mxu0 0.0
  %2126 = vmatprep.subr.mxu0 0.0
  %2127 = vmatpush1.msra.mxu0 0.0
  %2128 = vmatprep.subr.mxu0 0.0
  %2129 = vmatpush1.msra.mxu0 0.0
  %2130 = vmatprep.subr.mxu0 0.0
  %2131 = vmatpush1.msra.mxu0 0.0
  %2132 = vmatprep.subr.mxu0 0.0
  %2133 = vmatpush1.msra.mxu0 0.0
  %2134 = vmatprep.subr.mxu0 0.0
  %2135 = vmatpush1.msra.mxu0 0.0
  %2136 = vmatprep.subr.mxu0 0.0
  %2137 = vmatpush1.msra.mxu0 0.0
  %2138 = vmatprep.subr.mxu0 0.0
  %2139 = vmatpush1.msra.mxu0 0.0
  %2140 = vmatprep.subr.mxu0 0.0
  %2141 = vmatpush1.msra.mxu0 0.0
  %2142 = vmatprep.subr.mxu0 0.0
  %2143 = vmatpush1.msra.mxu0 0.0
  %2144 = vmatprep.subr.mxu0 0.0
  %2145 = vmatpush1.msra.mxu0 0.0
  %2146 = vmatprep.subr.mxu0 0.0
  %2147 = vmatpush1.msra.mxu0 0.0
  %2148 = vmatprep.subr.mxu0 0.0
  %2149 = vmatpush1.msra.mxu0 0.0
  %2150 = vmatprep.subr.mxu0 0.0
  %2151 = vmatpush1.msra.mxu0 0.0
  %2152 = vmatprep.subr.mxu0 0.0
  %2153 = vmatpush1.msra.mxu0 0.0
  %2154 = vmatprep.subr.mxu0 0.0
  %2155 = vmatpush1.msra.mxu0 0.0
  %2156 = vmatprep.mubr.f32.mxu0 0.0
  %2157 = vmatmul.mubr.f32.gmra.mrb[0].mxu0 %v2090
  %v2158 = vpop.f32.mrb[0].mxu0
  %v2159 = vadd.f32 0.0, %v2158
  %v2160 = vpop.f32.mrb[0].mxu0
  %2161 = vdwg.mxu0
  %v2162 = vadd.f32 %v1232, %v2159
  %v2163 = vsub.f32 %v2159, %v1413
  %v2165 = vcombine.high %v2162, %v2162
  %v2167 = vunpack.c.l.s4 1966171168
  %v2168 = vunpack.c.0.s8 %v2167
  %v2169 = vlaneseq
  %v2170 = vshrl.u32 %v2169, 7
  %v2171 = vsub.s32 %v2168, %v2170
  %v2172 = vrot.slane %v2162, %v2171
  %v2174 = vunpack.c.l.s4 1966171168
  %v2175 = vunpack.c.0.s8 %v2174
  %v2176 = vlaneseq
  %v2177 = vshrl.u32 %v2176, 7
  %v2178 = vsub.s32 %v2175, %v2177
  %v2179 = vrot.slane %v2165, %v2178
  %v2180 = vcombine.high %v2172, %v2172
  %v2181 = vcombine.high %v2179, %v2179
  %v2183 = vunpack.c.l.s4 1966171168
  %v2184 = vunpack.c.0.s8 %v2183
  %v2185 = vlaneseq
  %v2186 = vshrl.u32 %v2185, 7
  %v2187 = vsub.s32 %v2184, %v2186
  %v2188 = vrot.slane %v2172, %v2187
  %v2190 = vunpack.c.l.s4 1966171168
  %v2191 = vunpack.c.0.s8 %v2190
  %v2192 = vlaneseq
  %v2193 = vshrl.u32 %v2192, 7
  %v2194 = vsub.s32 %v2191, %v2193
  %v2195 = vrot.slane %v2179, %v2194
  %v2197 = vunpack.c.l.s4 1966171168
  %v2198 = vunpack.c.0.s8 %v2197
  %v2199 = vlaneseq
  %v2200 = vshrl.u32 %v2199, 7
  %v2201 = vsub.s32 %v2198, %v2200
  %v2202 = vrot.slane %v2180, %v2201
  %v2204 = vunpack.c.l.s4 1966171168
  %v2205 = vunpack.c.0.s8 %v2204
  %v2206 = vlaneseq
  %v2207 = vshrl.u32 %v2206, 7
  %v2208 = vsub.s32 %v2205, %v2207
  %v2209 = vrot.slane %v2181, %v2208
  %v2210 = vcombine.high %v2188, %v2188
  %v2211 = vcombine.high %v2195, %v2195
  %v2212 = vcombine.high %v2202, %v2202
  %v2213 = vcombine.high %v2209, %v2209
  %v2214 = vlaneseq
  %v2215 = vshrl.u32 %v2214, 7
  %v2216 = vsub.s32 0, %v2215
  %v2217 = vrot.slane %v2188, %v2216
  %v2218 = vlaneseq
  %v2219 = vshrl.u32 %v2218, 7
  %v2220 = vsub.s32 0, %v2219
  %v2221 = vrot.slane %v2202, %v2220
  %v2222 = vlaneseq
  %v2223 = vshrl.u32 %v2222, 7
  %v2224 = vsub.s32 0, %v2223
  %v2225 = vrot.slane %v2210, %v2224
  %v2226 = vlaneseq
  %v2227 = vshrl.u32 %v2226, 7
  %v2228 = vsub.s32 0, %v2227
  %v2229 = vrot.slane %v2212, %v2228
  %v2230 = vlaneseq
  %v2231 = vshrl.u32 %v2230, 7
  %v2232 = vsub.s32 0, %v2231
  %v2233 = vrot.slane %v2195, %v2232
  %v2234 = vlaneseq
  %v2235 = vshrl.u32 %v2234, 7
  %v2236 = vsub.s32 0, %v2235
  %v2237 = vrot.slane %v2209, %v2236
  %v2238 = vlaneseq
  %v2239 = vshrl.u32 %v2238, 7
  %v2240 = vsub.s32 0, %v2239
  %v2241 = vrot.slane %v2211, %v2240
  %v2242 = vlaneseq
  %v2243 = vshrl.u32 %v2242, 7
  %v2244 = vsub.s32 0, %v2243
  %v2245 = vrot.slane %v2213, %v2244
  %2255 = vrot.lane.b32.xlu0 %v2163, 64
  %v2256 = vpop.permute.xlu0 %2255
  %v2258 = vadd.f32 %v2217, %v2256
  %v2259 = vadd.f32 %v2221, %v2256
  %v2260 = vadd.f32 %v2225, %v2256
  %v2261 = vadd.f32 %v2229, %v2256
  %v2262 = vadd.f32 %v2233, %v2256
  %v2263 = vadd.f32 %v2237, %v2256
  %v2264 = vadd.f32 %v2241, %v2256
  %v2265 = vadd.f32 %v2245, %v2256
  %v2266 = vmax.f32 %v2258, 0.0
  %v2267 = vmax.f32 %v2259, 0.0
  %v2268 = vmax.f32 %v2260, 0.0
  %v2269 = vmax.f32 %v2261, 0.0
  %v2270 = vmax.f32 %v2262, 0.0
  %v2271 = vmax.f32 %v2263, 0.0
  %v2272 = vmax.f32 %v2264, 0.0
  %v2273 = vmax.f32 %v2265, 0.0
  %v2275 = vsel %vm1526, %v2266, 0
  %v2278 = vsel %vm1526, %v2267, 0
  %v2281 = vsel %vm1526, %v2268, 0
  %v2284 = vsel %vm1526, %v2269, 0
  %v2287 = vsel %vm1526, %v2270, 0
  %v2290 = vsel %vm1526, %v2271, 0
  %v2293 = vsel %vm1526, %v2272, 0
  %v2296 = vsel %vm1526, %v2273, 0
  %2298 = vmatprep.subr.mxu0 0.0
  %2299 = vmatpush1.msra.mxu0 %v43
  %2300 = vmatprep.subr.mxu0 0.0
  %2301 = vmatpush1.msra.mxu0 %v44
  %2302 = vmatprep.subr.mxu0 0.0
  %2303 = vmatpush1.msra.mxu0 %v45
  %2304 = vmatprep.subr.mxu0 0.0
  %2305 = vmatpush1.msra.mxu0 %v46
  %2306 = vmatprep.subr.mxu0 0.0
  %2307 = vmatpush1.msra.mxu0 %v47
  %2308 = vmatprep.subr.mxu0 0.0
  %2309 = vmatpush1.msra.mxu0 %v48
  %2310 = vmatprep.subr.mxu0 0.0
  %2311 = vmatpush1.msra.mxu0 %v49
  %2312 = vmatprep.subr.mxu0 0.0
  %2313 = vmatpush1.msra.mxu0 %v50
  %2314 = vmatprep.subr.mxu0 0.0
  %2315 = vmatpush1.msra.mxu0 0.0
  %2316 = vmatprep.subr.mxu0 0.0
  %2317 = vmatpush1.msra.mxu0 0.0
  %2318 = vmatprep.subr.mxu0 0.0
  %2319 = vmatpush1.msra.mxu0 0.0
  %2320 = vmatprep.subr.mxu0 0.0
  %2321 = vmatpush1.msra.mxu0 0.0
  %2322 = vmatprep.subr.mxu0 0.0
  %2323 = vmatpush1.msra.mxu0 0.0
  %2324 = vmatprep.subr.mxu0 0.0
  %2325 = vmatpush1.msra.mxu0 0.0
  %2326 = vmatprep.subr.mxu0 0.0
  %2327 = vmatpush1.msra.mxu0 0.0
  %2328 = vmatprep.subr.mxu0 0.0
  %2329 = vmatpush1.msra.mxu0 0.0
  %2330 = vmatprep.subr.mxu0 0.0
  %2331 = vmatpush1.msra.mxu0 0.0
  %2332 = vmatprep.subr.mxu0 0.0
  %2333 = vmatpush1.msra.mxu0 0.0
  %2334 = vmatprep.subr.mxu0 0.0
  %2335 = vmatpush1.msra.mxu0 0.0
  %2336 = vmatprep.subr.mxu0 0.0
  %2337 = vmatpush1.msra.mxu0 0.0
  %2338 = vmatprep.subr.mxu0 0.0
  %2339 = vmatpush1.msra.mxu0 0.0
  %2340 = vmatprep.subr.mxu0 0.0
  %2341 = vmatpush1.msra.mxu0 0.0
  %2342 = vmatprep.subr.mxu0 0.0
  %2343 = vmatpush1.msra.mxu0 0.0
  %2344 = vmatprep.subr.mxu0 0.0
  %2345 = vmatpush1.msra.mxu0 0.0
  %2346 = vmatprep.subr.mxu0 0.0
  %2347 = vmatpush1.msra.mxu0 0.0
  %2348 = vmatprep.subr.mxu0 0.0
  %2349 = vmatpush1.msra.mxu0 0.0
  %2350 = vmatprep.subr.mxu0 0.0
  %2351 = vmatpush1.msra.mxu0 0.0
  %2352 = vmatprep.subr.mxu0 0.0
  %2353 = vmatpush1.msra.mxu0 0.0
  %2354 = vmatprep.subr.mxu0 0.0
  %2355 = vmatpush1.msra.mxu0 0.0
  %2356 = vmatprep.subr.mxu0 0.0
  %2357 = vmatpush1.msra.mxu0 0.0
  %2358 = vmatprep.subr.mxu0 0.0
  %2359 = vmatpush1.msra.mxu0 0.0
  %2360 = vmatprep.subr.mxu0 0.0
  %2361 = vmatpush1.msra.mxu0 0.0
  %2362 = vmatprep.mubr.f32.mxu0 0.0
  %2363 = vmatmul.mubr.f32.gmra.mrb[0].mxu0 %v2275
  %v2364 = vpop.f32.mrb[0].mxu0
  %v2365 = vadd.f32 %v55, %v2364
  %v2366 = vpop.f32.mrb[0].mxu0
  %2367 = vmatprep.mubr.f32.mxu0 0.0
  %2368 = vmatmul.mubr.f32.gmra.mrb[0].mxu0 %v2278
  %v2369 = vpop.f32.mrb[0].mxu0
  %v2370 = vadd.f32 %v55, %v2369
  %v2371 = vpop.f32.mrb[0].mxu0
  %2372 = vmatprep.mubr.f32.mxu0 0.0
  %2373 = vmatmul.mubr.f32.gmra.mrb[0].mxu0 %v2281
  %v2374 = vpop.f32.mrb[0].mxu0
  %v2375 = vadd.f32 %v55, %v2374
  %v2376 = vpop.f32.mrb[0].mxu0
  %2377 = vmatprep.mubr.f32.mxu0 0.0
  %2378 = vmatmul.mubr.f32.gmra.mrb[0].mxu0 %v2284
  %v2379 = vpop.f32.mrb[0].mxu0
  %v2380 = vadd.f32 %v55, %v2379
  %v2381 = vpop.f32.mrb[0].mxu0
  %2382 = vmatprep.mubr.f32.mxu0 0.0
  %2383 = vmatmul.mubr.f32.gmra.mrb[0].mxu0 %v2287
  %v2384 = vpop.f32.mrb[0].mxu0
  %v2385 = vadd.f32 %v55, %v2384
  %v2386 = vpop.f32.mrb[0].mxu0
  %2387 = vmatprep.mubr.f32.mxu0 0.0
  %2388 = vmatmul.mubr.f32.gmra.mrb[0].mxu0 %v2290
  %v2389 = vpop.f32.mrb[0].mxu0
  %v2390 = vadd.f32 %v55, %v2389
  %v2391 = vpop.f32.mrb[0].mxu0
  %2392 = vmatprep.mubr.f32.mxu0 0.0
  %2393 = vmatmul.mubr.f32.gmra.mrb[0].mxu0 %v2293
  %v2394 = vpop.f32.mrb[0].mxu0
  %v2395 = vadd.f32 %v55, %v2394
  %v2396 = vpop.f32.mrb[0].mxu0
  %2397 = vmatprep.mubr.f32.mxu0 0.0
  %2398 = vmatmul.mubr.f32.gmra.mrb[0].mxu0 %v2296
  %v2399 = vpop.f32.mrb[0].mxu0
  %v2400 = vadd.f32 %v55, %v2399
  %v2401 = vpop.f32.mrb[0].mxu0
  %2402 = vdwg.mxu0
  %v2403 = vmax.f32 %v2365, 0.0
  %v2404 = vmax.f32 %v2370, 0.0
  %v2405 = vmax.f32 %v2375, 0.0
  %v2406 = vmax.f32 %v2380, 0.0
  %v2407 = vmax.f32 %v2385, 0.0
  %v2408 = vmax.f32 %v2390, 0.0
  %v2409 = vmax.f32 %v2395, 0.0
  %v2410 = vmax.f32 %v2400, 0.0
  %s2411 = scalar_lea.vmem %s2, 8
  %v2412 = vld [vmem:[%s2411] sm:$0xff]
  %v2413 = vlaneseq
  %v2414 = vshrl.u32 %v2413, 7
  %v2415 = vsub.s32 0, %v2414
  %v2416 = vrot.slane %v2412, %v2415
  %2418 = vbcast.lane.b32.xlu0 %v2416, 256
  %v2419 = vpop.permute.xlu0 %2418
  %v2420 = vlaneseq
  %v2421 = vshrl.u32 %v2420, 7
  %v2422 = vsub.s32 1, %v2421
  %v2423 = vrot.slane %v2412, %v2422
  %2425 = vbcast.lane.b32.xlu0 %v2423, 256
  %v2426 = vpop.permute.xlu0 %2425
  %v2427 = vlaneseq
  %v2428 = vshrl.u32 %v2427, 7
  %v2429 = vsub.s32 2, %v2428
  %v2430 = vrot.slane %v2412, %v2429
  %2432 = vbcast.lane.b32.xlu0 %v2430, 256
  %v2433 = vpop.permute.xlu0 %2432
  %v2434 = vlaneseq
  %v2435 = vshrl.u32 %v2434, 7
  %v2436 = vsub.s32 3, %v2435
  %v2437 = vrot.slane %v2412, %v2436
  %2439 = vbcast.lane.b32.xlu0 %v2437, 256
  %v2440 = vpop.permute.xlu0 %2439
  %v2441 = vlaneseq
  %v2442 = vshrl.u32 %v2441, 7
  %v2443 = vsub.s32 4, %v2442
  %v2444 = vrot.slane %v2412, %v2443
  %2446 = vbcast.lane.b32.xlu0 %v2444, 256
  %v2447 = vpop.permute.xlu0 %2446
  %v2448 = vlaneseq
  %v2449 = vshrl.u32 %v2448, 7
  %v2450 = vsub.s32 5, %v2449
  %v2451 = vrot.slane %v2412, %v2450
  %2453 = vbcast.lane.b32.xlu0 %v2451, 256
  %v2454 = vpop.permute.xlu0 %2453
  %v2455 = vlaneseq
  %v2456 = vshrl.u32 %v2455, 7
  %v2457 = vsub.s32 6, %v2456
  %v2458 = vrot.slane %v2412, %v2457
  %2460 = vbcast.lane.b32.xlu0 %v2458, 256
  %v2461 = vpop.permute.xlu0 %2460
  %v2462 = vlaneseq
  %v2463 = vshrl.u32 %v2462, 7
  %v2464 = vsub.s32 7, %v2463
  %v2465 = vrot.slane %v2412, %v2464
  %2467 = vbcast.lane.b32.xlu0 %v2465, 256
  %v2468 = vpop.permute.xlu0 %2467
  %v2469 = vmul.f32 %v2403, %v2419
  %v2470 = vmul.f32 %v2404, %v2426
  %v2471 = vmul.f32 %v2405, %v2433
  %v2472 = vmul.f32 %v2406, %v2440
  %v2473 = vmul.f32 %v2407, %v2447
  %v2474 = vmul.f32 %v2408, %v2454
  %v2475 = vmul.f32 %v2409, %v2461
  %v2476 = vmul.f32 %v2410, %v2468
  %v2477 = vsel %vm364, %v2469, -inf
  %v2478 = vrot.slane %v2477, 4
  %v2479 = vmax.f32 %v2477, %v2478
  %v2480 = vrot.slane %v2479, 2
  %v2481 = vmax.f32 %v2479, %v2480
  %v2482 = vrot.slane %v2481, 1
  %v2483 = vmax.f32 %v2481, %v2482
  %v2484 = vsel %vm364, %v2470, -inf
  %v2485 = vrot.slane %v2484, 4
  %v2486 = vmax.f32 %v2484, %v2485
  %v2487 = vrot.slane %v2486, 2
  %v2488 = vmax.f32 %v2486, %v2487
  %v2489 = vrot.slane %v2488, 1
  %v2490 = vmax.f32 %v2488, %v2489
  %v2491 = vsel %vm364, %v2471, -inf
  %v2492 = vrot.slane %v2491, 4
  %v2493 = vmax.f32 %v2491, %v2492
  %v2494 = vrot.slane %v2493, 2
  %v2495 = vmax.f32 %v2493, %v2494
  %v2496 = vrot.slane %v2495, 1
  %v2497 = vmax.f32 %v2495, %v2496
  %v2498 = vsel %vm364, %v2472, -inf
  %v2499 = vrot.slane %v2498, 4
  %v2500 = vmax.f32 %v2498, %v2499
  %v2501 = vrot.slane %v2500, 2
  %v2502 = vmax.f32 %v2500, %v2501
  %v2503 = vrot.slane %v2502, 1
  %v2504 = vmax.f32 %v2502, %v2503
  %v2505 = vsel %vm364, %v2473, -inf
  %v2506 = vrot.slane %v2505, 4
  %v2507 = vmax.f32 %v2505, %v2506
  %v2508 = vrot.slane %v2507, 2
  %v2509 = vmax.f32 %v2507, %v2508
  %v2510 = vrot.slane %v2509, 1
  %v2511 = vmax.f32 %v2509, %v2510
  %v2512 = vsel %vm364, %v2474, -inf
  %v2513 = vrot.slane %v2512, 4
  %v2514 = vmax.f32 %v2512, %v2513
  %v2515 = vrot.slane %v2514, 2
  %v2516 = vmax.f32 %v2514, %v2515
  %v2517 = vrot.slane %v2516, 1
  %v2518 = vmax.f32 %v2516, %v2517
  %v2519 = vsel %vm364, %v2475, -inf
  %v2520 = vrot.slane %v2519, 4
  %v2521 = vmax.f32 %v2519, %v2520
  %v2522 = vrot.slane %v2521, 2
  %v2523 = vmax.f32 %v2521, %v2522
  %v2524 = vrot.slane %v2523, 1
  %v2525 = vmax.f32 %v2523, %v2524
  %v2526 = vsel %vm364, %v2476, -inf
  %v2527 = vrot.slane %v2526, 4
  %v2528 = vmax.f32 %v2526, %v2527
  %v2529 = vrot.slane %v2528, 2
  %v2530 = vmax.f32 %v2528, %v2529
  %v2531 = vrot.slane %v2530, 1
  %v2532 = vmax.f32 %v2530, %v2531
  %v2542 = vsel %vm1794, %v2490, %v2483
  %v2543 = vsel %vm1796, %v2497, %v2542
  %v2544 = vsel %vm1798, %v2504, %v2543
  %v2545 = vsel %vm1800, %v2511, %v2544
  %v2546 = vsel %vm1802, %v2518, %v2545
  %v2547 = vsel %vm1804, %v2525, %v2546
  %v2548 = vsel %vm1806, %v2532, %v2547
  %2549 = vrot.lane.b32.xlu0 %v2548, 8
  %v2550 = vpop.permute.xlu0 %2549
  %v2552 = vsel %vm364, %v2089, %v2550
  %v2554 = vsel %vm232, %v2552, 0
  %2556 = vmatprep.subr.mxu0 0.0
  %2557 = vmatpush1.msra.mxu0 %v56
  %2558 = vmatprep.subr.mxu0 0.0
  %2559 = vmatpush1.msra.mxu0 %v57
  %2560 = vmatprep.subr.mxu0 0.0
  %2561 = vmatpush1.msra.mxu0 0.0
  %2562 = vmatprep.subr.mxu0 0.0
  %2563 = vmatpush1.msra.mxu0 0.0
  %2564 = vmatprep.subr.mxu0 0.0
  %2565 = vmatpush1.msra.mxu0 0.0
  %2566 = vmatprep.subr.mxu0 0.0
  %2567 = vmatpush1.msra.mxu0 0.0
  %2568 = vmatprep.subr.mxu0 0.0
  %2569 = vmatpush1.msra.mxu0 0.0
  %2570 = vmatprep.subr.mxu0 0.0
  %2571 = vmatpush1.msra.mxu0 0.0
  %2572 = vmatprep.subr.mxu0 0.0
  %2573 = vmatpush1.msra.mxu0 0.0
  %2574 = vmatprep.subr.mxu0 0.0
  %2575 = vmatpush1.msra.mxu0 0.0
  %2576 = vmatprep.subr.mxu0 0.0
  %2577 = vmatpush1.msra.mxu0 0.0
  %2578 = vmatprep.subr.mxu0 0.0
  %2579 = vmatpush1.msra.mxu0 0.0
  %2580 = vmatprep.subr.mxu0 0.0
  %2581 = vmatpush1.msra.mxu0 0.0
  %2582 = vmatprep.subr.mxu0 0.0
  %2583 = vmatpush1.msra.mxu0 0.0
  %2584 = vmatprep.subr.mxu0 0.0
  %2585 = vmatpush1.msra.mxu0 0.0
  %2586 = vmatprep.subr.mxu0 0.0
  %2587 = vmatpush1.msra.mxu0 0.0
  %2588 = vmatprep.subr.mxu0 0.0
  %2589 = vmatpush1.msra.mxu0 0.0
  %2590 = vmatprep.subr.mxu0 0.0
  %2591 = vmatpush1.msra.mxu0 0.0
  %2592 = vmatprep.subr.mxu0 0.0
  %2593 = vmatpush1.msra.mxu0 0.0
  %2594 = vmatprep.subr.mxu0 0.0
  %2595 = vmatpush1.msra.mxu0 0.0
  %2596 = vmatprep.subr.mxu0 0.0
  %2597 = vmatpush1.msra.mxu0 0.0
  %2598 = vmatprep.subr.mxu0 0.0
  %2599 = vmatpush1.msra.mxu0 0.0
  %2600 = vmatprep.subr.mxu0 0.0
  %2601 = vmatpush1.msra.mxu0 0.0
  %2602 = vmatprep.subr.mxu0 0.0
  %2603 = vmatpush1.msra.mxu0 0.0
  %2604 = vmatprep.subr.mxu0 0.0
  %2605 = vmatpush1.msra.mxu0 0.0
  %2606 = vmatprep.subr.mxu0 0.0
  %2607 = vmatpush1.msra.mxu0 0.0
  %2608 = vmatprep.subr.mxu0 0.0
  %2609 = vmatpush1.msra.mxu0 0.0
  %2610 = vmatprep.subr.mxu0 0.0
  %2611 = vmatpush1.msra.mxu0 0.0
  %2612 = vmatprep.subr.mxu0 0.0
  %2613 = vmatpush1.msra.mxu0 0.0
  %2614 = vmatprep.subr.mxu0 0.0
  %2615 = vmatpush1.msra.mxu0 0.0
  %2616 = vmatprep.subr.mxu0 0.0
  %2617 = vmatpush1.msra.mxu0 0.0
  %2618 = vmatprep.subr.mxu0 0.0
  %2619 = vmatpush1.msra.mxu0 0.0
  %2620 = vmatprep.mubr.f32.mxu0 0.0
  %2621 = vmatmul.mubr.f32.gmra.mrb[0].mxu0 %v2554
  %v2622 = vpop.f32.mrb[0].mxu0
  %v2623 = vadd.f32 0.0, %v2622
  %v2624 = vpop.f32.mrb[0].mxu0
  %2625 = vdwg.mxu0
  %v2626 = vadd.f32 %v2623, %v62
  %s2627 = scalar_lea.vmem %s7, 8
  %2628 = vst.msk [vmem:[%s2627] sm:$0xff] %vm1886, %v2626
  %s2629 = scalar_lea.vmem %s5, 8
  %v2630 = vld [vmem:[%s2629] sm:$0xff]
  %v2631 = vmul.f32 %v2626, 0.5
  %v2632 = vmul.f32 %v2631, 1.442695
  %v2633 = vpow.pop %v2632
  %2635 = vrot.lane.b32.xlu0 %v2633, 126
  %v2636 = vpop.permute.xlu0 %2635
  %v2638 = vmul.f32 %v2630, %v2636
  %v2639 = vadd.f32 %v2623, %v1899
  %v2641 = vsel %vm86, %v2638, 0
  %2643 = vmatprep.subr.mxu0 0.0
  %2644 = vmatpush1.msra.mxu0 %v1906
  %2645 = vmatprep.subr.mxu0 0.0
  %2646 = vmatpush1.msra.mxu0 0.0
  %2647 = vmatprep.subr.mxu0 0.0
  %2648 = vmatpush1.msra.mxu0 0.0
  %2649 = vmatprep.subr.mxu0 0.0
  %2650 = vmatpush1.msra.mxu0 0.0
  %2651 = vmatprep.subr.mxu0 0.0
  %2652 = vmatpush1.msra.mxu0 0.0
  %2653 = vmatprep.subr.mxu0 0.0
  %2654 = vmatpush1.msra.mxu0 0.0
  %2655 = vmatprep.subr.mxu0 0.0
  %2656 = vmatpush1.msra.mxu0 0.0
  %2657 = vmatprep.subr.mxu0 0.0
  %2658 = vmatpush1.msra.mxu0 0.0
  %2659 = vmatprep.subr.mxu0 0.0
  %2660 = vmatpush1.msra.mxu0 0.0
  %2661 = vmatprep.subr.mxu0 0.0
  %2662 = vmatpush1.msra.mxu0 0.0
  %2663 = vmatprep.subr.mxu0 0.0
  %2664 = vmatpush1.msra.mxu0 0.0
  %2665 = vmatprep.subr.mxu0 0.0
  %2666 = vmatpush1.msra.mxu0 0.0
  %2667 = vmatprep.subr.mxu0 0.0
  %2668 = vmatpush1.msra.mxu0 0.0
  %2669 = vmatprep.subr.mxu0 0.0
  %2670 = vmatpush1.msra.mxu0 0.0
  %2671 = vmatprep.subr.mxu0 0.0
  %2672 = vmatpush1.msra.mxu0 0.0
  %2673 = vmatprep.subr.mxu0 0.0
  %2674 = vmatpush1.msra.mxu0 0.0
  %2675 = vmatprep.subr.mxu0 0.0
  %2676 = vmatpush1.msra.mxu0 0.0
  %2677 = vmatprep.subr.mxu0 0.0
  %2678 = vmatpush1.msra.mxu0 0.0
  %2679 = vmatprep.subr.mxu0 0.0
  %2680 = vmatpush1.msra.mxu0 0.0
  %2681 = vmatprep.subr.mxu0 0.0
  %2682 = vmatpush1.msra.mxu0 0.0
  %2683 = vmatprep.subr.mxu0 0.0
  %2684 = vmatpush1.msra.mxu0 0.0
  %2685 = vmatprep.subr.mxu0 0.0
  %2686 = vmatpush1.msra.mxu0 0.0
  %2687 = vmatprep.subr.mxu0 0.0
  %2688 = vmatpush1.msra.mxu0 0.0
  %2689 = vmatprep.subr.mxu0 0.0
  %2690 = vmatpush1.msra.mxu0 0.0
  %2691 = vmatprep.subr.mxu0 0.0
  %2692 = vmatpush1.msra.mxu0 0.0
  %2693 = vmatprep.subr.mxu0 0.0
  %2694 = vmatpush1.msra.mxu0 0.0
  %2695 = vmatprep.subr.mxu0 0.0
  %2696 = vmatpush1.msra.mxu0 0.0
  %2697 = vmatprep.subr.mxu0 0.0
  %2698 = vmatpush1.msra.mxu0 0.0
  %2699 = vmatprep.subr.mxu0 0.0
  %2700 = vmatpush1.msra.mxu0 0.0
  %2701 = vmatprep.subr.mxu0 0.0
  %2702 = vmatpush1.msra.mxu0 0.0
  %2703 = vmatprep.subr.mxu0 0.0
  %2704 = vmatpush1.msra.mxu0 0.0
  %2705 = vmatprep.subr.mxu0 0.0
  %2706 = vmatpush1.msra.mxu0 0.0
  %2707 = vmatprep.mubr.f32.mxu0 0.0
  %2708 = vmatmul.mubr.f32.gmra.mrb[0].mxu0 %v2641
  %v2709 = vpop.f32.mrb[0].mxu0
  %v2710 = vadd.f32 0.0, %v2709
  %v2711 = vpop.f32.mrb[0].mxu0
  %2712 = vdwg.mxu0
  %2714 = vrot.lane.b32.xlu0 %v2710, 4
  %v2715 = vpop.permute.xlu0 %2714
  %v2717 = vadd.f32 %v2639, %v2715
  %v2718 = vmax.f32 %v2717, 0.0
  %2720 = vrot.lane.b32.xlu0 %v2718, 124
  %v2721 = vpop.permute.xlu0 %2720
  %2723 = vrot.lane.b32.xlu0 %v2086, 120
  %v2724 = vpop.permute.xlu0 %2723
  %v2726 = vsel %vm232, %v2721, %v2724
  %v2728 = vsel %vm1239, %v2726, 0
  %2730 = vmatprep.subr.mxu0 0.0
  %2731 = vmatpush1.msra.mxu0 %v32
  %2732 = vmatprep.subr.mxu0 0.0
  %2733 = vmatpush1.msra.mxu0 %v33
  %2734 = vmatprep.subr.mxu0 0.0
  %2735 = vmatpush1.msra.mxu0 %v34
  %2736 = vmatprep.subr.mxu0 0.0
  %2737 = vmatpush1.msra.mxu0 0.0
  %2738 = vmatprep.subr.mxu0 0.0
  %2739 = vmatpush1.msra.mxu0 0.0
  %2740 = vmatprep.subr.mxu0 0.0
  %2741 = vmatpush1.msra.mxu0 0.0
  %2742 = vmatprep.subr.mxu0 0.0
  %2743 = vmatpush1.msra.mxu0 0.0
  %2744 = vmatprep.subr.mxu0 0.0
  %2745 = vmatpush1.msra.mxu0 0.0
  %2746 = vmatprep.subr.mxu0 0.0
  %2747 = vmatpush1.msra.mxu0 0.0
  %2748 = vmatprep.subr.mxu0 0.0
  %2749 = vmatpush1.msra.mxu0 0.0
  %2750 = vmatprep.subr.mxu0 0.0
  %2751 = vmatpush1.msra.mxu0 0.0
  %2752 = vmatprep.subr.mxu0 0.0
  %2753 = vmatpush1.msra.mxu0 0.0
  %2754 = vmatprep.subr.mxu0 0.0
  %2755 = vmatpush1.msra.mxu0 0.0
  %2756 = vmatprep.subr.mxu0 0.0
  %2757 = vmatpush1.msra.mxu0 0.0
  %2758 = vmatprep.subr.mxu0 0.0
  %2759 = vmatpush1.msra.mxu0 0.0
  %2760 = vmatprep.subr.mxu0 0.0
  %2761 = vmatpush1.msra.mxu0 0.0
  %2762 = vmatprep.subr.mxu0 0.0
  %2763 = vmatpush1.msra.mxu0 0.0
  %2764 = vmatprep.subr.mxu0 0.0
  %2765 = vmatpush1.msra.mxu0 0.0
  %2766 = vmatprep.subr.mxu0 0.0
  %2767 = vmatpush1.msra.mxu0 0.0
  %2768 = vmatprep.subr.mxu0 0.0
  %2769 = vmatpush1.msra.mxu0 0.0
  %2770 = vmatprep.subr.mxu0 0.0
  %2771 = vmatpush1.msra.mxu0 0.0
  %2772 = vmatprep.subr.mxu0 0.0
  %2773 = vmatpush1.msra.mxu0 0.0
  %2774 = vmatprep.subr.mxu0 0.0
  %2775 = vmatpush1.msra.mxu0 0.0
  %2776 = vmatprep.subr.mxu0 0.0
  %2777 = vmatpush1.msra.mxu0 0.0
  %2778 = vmatprep.subr.mxu0 0.0
  %2779 = vmatpush1.msra.mxu0 0.0
  %2780 = vmatprep.subr.mxu0 0.0
  %2781 = vmatpush1.msra.mxu0 0.0
  %2782 = vmatprep.subr.mxu0 0.0
  %2783 = vmatpush1.msra.mxu0 0.0
  %2784 = vmatprep.subr.mxu0 0.0
  %2785 = vmatpush1.msra.mxu0 0.0
  %2786 = vmatprep.subr.mxu0 0.0
  %2787 = vmatpush1.msra.mxu0 0.0
  %2788 = vmatprep.subr.mxu0 0.0
  %2789 = vmatpush1.msra.mxu0 0.0
  %2790 = vmatprep.subr.mxu0 0.0
  %2791 = vmatpush1.msra.mxu0 0.0
  %2792 = vmatprep.subr.mxu0 0.0
  %2793 = vmatpush1.msra.mxu0 0.0
  %2794 = vmatprep.mubr.f32.mxu0 0.0
  %2795 = vmatmul.mubr.f32.gmra.mrb[0].mxu0 %v2728
  %v2796 = vpop.f32.mrb[0].mxu0
  %v2797 = vadd.f32 %v39, %v2796
  %v2798 = vpop.f32.mrb[0].mxu0
  %2799 = vdwg.mxu0
  %v2800 = vmul.f32 %v2797, 0.5
  %v2801 = vtanh.pop %v2800
  %v2802 = vmul.f32 %v2801, 0.5
  %v2803 = vadd.f32 %v2802, 0.5
  %v2804 = vtanh.pop %v2797
  %v2805 = vmul.f32 %v2803, %v2080
  %2807 = vrot.lane.b32.xlu0 %v2804, 112
  %v2808 = vpop.permute.xlu0 %2807
  %v2810 = vmul.f32 %v2803, %v2808
  %2812 = vrot.lane.b32.xlu0 %v2810, 8
  %v2813 = vpop.permute.xlu0 %2812
  %v2815 = vadd.f32 %v2805, %v2813
  %v2816 = vtanh.pop %v2815
  %2818 = vrot.lane.b32.xlu0 %v2816, 16
  %v2819 = vpop.permute.xlu0 %2818
  %v2821 = vmul.f32 %v2803, %v2819
  %2823 = vrot.lane.b32.xlu0 %v2821, 104
  %v2824 = vpop.permute.xlu0 %2823
  %v2825 = vsel %vm364, %v2824, 0
  %2827 = vmatprep.subr.mxu0 0.0
  %2828 = vmatpush1.msra.mxu0 %v42
  %2829 = vmatprep.subr.mxu0 0.0
  %2830 = vmatpush1.msra.mxu0 0.0
  %2831 = vmatprep.subr.mxu0 0.0
  %2832 = vmatpush1.msra.mxu0 0.0
  %2833 = vmatprep.subr.mxu0 0.0
  %2834 = vmatpush1.msra.mxu0 0.0
  %2835 = vmatprep.subr.mxu0 0.0
  %2836 = vmatpush1.msra.mxu0 0.0
  %2837 = vmatprep.subr.mxu0 0.0
  %2838 = vmatpush1.msra.mxu0 0.0
  %2839 = vmatprep.subr.mxu0 0.0
  %2840 = vmatpush1.msra.mxu0 0.0
  %2841 = vmatprep.subr.mxu0 0.0
  %2842 = vmatpush1.msra.mxu0 0.0
  %2843 = vmatprep.subr.mxu0 0.0
  %2844 = vmatpush1.msra.mxu0 0.0
  %2845 = vmatprep.subr.mxu0 0.0
  %2846 = vmatpush1.msra.mxu0 0.0
  %2847 = vmatprep.subr.mxu0 0.0
  %2848 = vmatpush1.msra.mxu0 0.0
  %2849 = vmatprep.subr.mxu0 0.0
  %2850 = vmatpush1.msra.mxu0 0.0
  %2851 = vmatprep.subr.mxu0 0.0
  %2852 = vmatpush1.msra.mxu0 0.0
  %2853 = vmatprep.subr.mxu0 0.0
  %2854 = vmatpush1.msra.mxu0 0.0
  %2855 = vmatprep.subr.mxu0 0.0
  %2856 = vmatpush1.msra.mxu0 0.0
  %2857 = vmatprep.subr.mxu0 0.0
  %2858 = vmatpush1.msra.mxu0 0.0
  %2859 = vmatprep.subr.mxu0 0.0
  %2860 = vmatpush1.msra.mxu0 0.0
  %2861 = vmatprep.subr.mxu0 0.0
  %2862 = vmatpush1.msra.mxu0 0.0
  %2863 = vmatprep.subr.mxu0 0.0
  %2864 = vmatpush1.msra.mxu0 0.0
  %2865 = vmatprep.subr.mxu0 0.0
  %2866 = vmatpush1.msra.mxu0 0.0
  %2867 = vmatprep.subr.mxu0 0.0
  %2868 = vmatpush1.msra.mxu0 0.0
  %2869 = vmatprep.subr.mxu0 0.0
  %2870 = vmatpush1.msra.mxu0 0.0
  %2871 = vmatprep.subr.mxu0 0.0
  %2872 = vmatpush1.msra.mxu0 0.0
  %2873 = vmatprep.subr.mxu0 0.0
  %2874 = vmatpush1.msra.mxu0 0.0
  %2875 = vmatprep.subr.mxu0 0.0
  %2876 = vmatpush1.msra.mxu0 0.0
  %2877 = vmatprep.subr.mxu0 0.0
  %2878 = vmatpush1.msra.mxu0 0.0
  %2879 = vmatprep.subr.mxu0 0.0
  %2880 = vmatpush1.msra.mxu0 0.0
  %2881 = vmatprep.subr.mxu0 0.0
  %2882 = vmatpush1.msra.mxu0 0.0
  %2883 = vmatprep.subr.mxu0 0.0
  %2884 = vmatpush1.msra.mxu0 0.0
  %2885 = vmatprep.subr.mxu0 0.0
  %2886 = vmatpush1.msra.mxu0 0.0
  %2887 = vmatprep.subr.mxu0 0.0
  %2888 = vmatpush1.msra.mxu0 0.0
  %2889 = vmatprep.subr.mxu0 0.0
  %2890 = vmatpush1.msra.mxu0 0.0
  %2891 = vmatprep.mubr.f32.mxu0 0.0
  %2892 = vmatmul.mubr.f32.gmra.mrb[0].mxu0 %v2825
  %v2893 = vpop.f32.mrb[0].mxu0
  %v2894 = vadd.f32 0.0, %v2893
  %v2895 = vpop.f32.mrb[0].mxu0
  %2896 = vdwg.mxu0
  %v2897 = vadd.f32 %v1232, %v2894
  %v2898 = vsub.f32 %v2894, %v1413
  %v2900 = vcombine.high %v2897, %v2897
  %v2902 = vunpack.c.l.s4 1966171168
  %v2903 = vunpack.c.0.s8 %v2902
  %v2904 = vlaneseq
  %v2905 = vshrl.u32 %v2904, 7
  %v2906 = vsub.s32 %v2903, %v2905
  %v2907 = vrot.slane %v2897, %v2906
  %v2909 = vunpack.c.l.s4 1966171168
  %v2910 = vunpack.c.0.s8 %v2909
  %v2911 = vlaneseq
  %v2912 = vshrl.u32 %v2911, 7
  %v2913 = vsub.s32 %v2910, %v2912
  %v2914 = vrot.slane %v2900, %v2913
  %v2915 = vcombine.high %v2907, %v2907
  %v2916 = vcombine.high %v2914, %v2914
  %v2918 = vunpack.c.l.s4 1966171168
  %v2919 = vunpack.c.0.s8 %v2918
  %v2920 = vlaneseq
  %v2921 = vshrl.u32 %v2920, 7
  %v2922 = vsub.s32 %v2919, %v2921
  %v2923 = vrot.slane %v2907, %v2922
  %v2925 = vunpack.c.l.s4 1966171168
  %v2926 = vunpack.c.0.s8 %v2925
  %v2927 = vlaneseq
  %v2928 = vshrl.u32 %v2927, 7
  %v2929 = vsub.s32 %v2926, %v2928
  %v2930 = vrot.slane %v2914, %v2929
  %v2932 = vunpack.c.l.s4 1966171168
  %v2933 = vunpack.c.0.s8 %v2932
  %v2934 = vlaneseq
  %v2935 = vshrl.u32 %v2934, 7
  %v2936 = vsub.s32 %v2933, %v2935
  %v2937 = vrot.slane %v2915, %v2936
  %v2939 = vunpack.c.l.s4 1966171168
  %v2940 = vunpack.c.0.s8 %v2939
  %v2941 = vlaneseq
  %v2942 = vshrl.u32 %v2941, 7
  %v2943 = vsub.s32 %v2940, %v2942
  %v2944 = vrot.slane %v2916, %v2943
  %v2945 = vcombine.high %v2923, %v2923
  %v2946 = vcombine.high %v2930, %v2930
  %v2947 = vcombine.high %v2937, %v2937
  %v2948 = vcombine.high %v2944, %v2944
  %v2949 = vlaneseq
  %v2950 = vshrl.u32 %v2949, 7
  %v2951 = vsub.s32 0, %v2950
  %v2952 = vrot.slane %v2923, %v2951
  %v2953 = vlaneseq
  %v2954 = vshrl.u32 %v2953, 7
  %v2955 = vsub.s32 0, %v2954
  %v2956 = vrot.slane %v2937, %v2955
  %v2957 = vlaneseq
  %v2958 = vshrl.u32 %v2957, 7
  %v2959 = vsub.s32 0, %v2958
  %v2960 = vrot.slane %v2945, %v2959
  %v2961 = vlaneseq
  %v2962 = vshrl.u32 %v2961, 7
  %v2963 = vsub.s32 0, %v2962
  %v2964 = vrot.slane %v2947, %v2963
  %v2965 = vlaneseq
  %v2966 = vshrl.u32 %v2965, 7
  %v2967 = vsub.s32 0, %v2966
  %v2968 = vrot.slane %v2930, %v2967
  %v2969 = vlaneseq
  %v2970 = vshrl.u32 %v2969, 7
  %v2971 = vsub.s32 0, %v2970
  %v2972 = vrot.slane %v2944, %v2971
  %v2973 = vlaneseq
  %v2974 = vshrl.u32 %v2973, 7
  %v2975 = vsub.s32 0, %v2974
  %v2976 = vrot.slane %v2946, %v2975
  %v2977 = vlaneseq
  %v2978 = vshrl.u32 %v2977, 7
  %v2979 = vsub.s32 0, %v2978
  %v2980 = vrot.slane %v2948, %v2979
  %2990 = vrot.lane.b32.xlu0 %v2898, 64
  %v2991 = vpop.permute.xlu0 %2990
  %v2993 = vadd.f32 %v2952, %v2991
  %v2994 = vadd.f32 %v2956, %v2991
  %v2995 = vadd.f32 %v2960, %v2991
  %v2996 = vadd.f32 %v2964, %v2991
  %v2997 = vadd.f32 %v2968, %v2991
  %v2998 = vadd.f32 %v2972, %v2991
  %v2999 = vadd.f32 %v2976, %v2991
  %v3000 = vadd.f32 %v2980, %v2991
  %v3001 = vmax.f32 %v2993, 0.0
  %v3002 = vmax.f32 %v2994, 0.0
  %v3003 = vmax.f32 %v2995, 0.0
  %v3004 = vmax.f32 %v2996, 0.0
  %v3005 = vmax.f32 %v2997, 0.0
  %v3006 = vmax.f32 %v2998, 0.0
  %v3007 = vmax.f32 %v2999, 0.0
  %v3008 = vmax.f32 %v3000, 0.0
  %v3010 = vsel %vm1526, %v3001, 0
  %v3013 = vsel %vm1526, %v3002, 0
  %v3016 = vsel %vm1526, %v3003, 0
  %v3019 = vsel %vm1526, %v3004, 0
  %v3022 = vsel %vm1526, %v3005, 0
  %v3025 = vsel %vm1526, %v3006, 0
  %v3028 = vsel %vm1526, %v3007, 0
  %v3031 = vsel %vm1526, %v3008, 0
  %3033 = vmatprep.subr.mxu0 0.0
  %3034 = vmatpush1.msra.mxu0 %v43
  %3035 = vmatprep.subr.mxu0 0.0
  %3036 = vmatpush1.msra.mxu0 %v44
  %3037 = vmatprep.subr.mxu0 0.0
  %3038 = vmatpush1.msra.mxu0 %v45
  %3039 = vmatprep.subr.mxu0 0.0
  %3040 = vmatpush1.msra.mxu0 %v46
  %3041 = vmatprep.subr.mxu0 0.0
  %3042 = vmatpush1.msra.mxu0 %v47
  %3043 = vmatprep.subr.mxu0 0.0
  %3044 = vmatpush1.msra.mxu0 %v48
  %3045 = vmatprep.subr.mxu0 0.0
  %3046 = vmatpush1.msra.mxu0 %v49
  %3047 = vmatprep.subr.mxu0 0.0
  %3048 = vmatpush1.msra.mxu0 %v50
  %3049 = vmatprep.subr.mxu0 0.0
  %3050 = vmatpush1.msra.mxu0 0.0
  %3051 = vmatprep.subr.mxu0 0.0
  %3052 = vmatpush1.msra.mxu0 0.0
  %3053 = vmatprep.subr.mxu0 0.0
  %3054 = vmatpush1.msra.mxu0 0.0
  %3055 = vmatprep.subr.mxu0 0.0
  %3056 = vmatpush1.msra.mxu0 0.0
  %3057 = vmatprep.subr.mxu0 0.0
  %3058 = vmatpush1.msra.mxu0 0.0
  %3059 = vmatprep.subr.mxu0 0.0
  %3060 = vmatpush1.msra.mxu0 0.0
  %3061 = vmatprep.subr.mxu0 0.0
  %3062 = vmatpush1.msra.mxu0 0.0
  %3063 = vmatprep.subr.mxu0 0.0
  %3064 = vmatpush1.msra.mxu0 0.0
  %3065 = vmatprep.subr.mxu0 0.0
  %3066 = vmatpush1.msra.mxu0 0.0
  %3067 = vmatprep.subr.mxu0 0.0
  %3068 = vmatpush1.msra.mxu0 0.0
  %3069 = vmatprep.subr.mxu0 0.0
  %3070 = vmatpush1.msra.mxu0 0.0
  %3071 = vmatprep.subr.mxu0 0.0
  %3072 = vmatpush1.msra.mxu0 0.0
  %3073 = vmatprep.subr.mxu0 0.0
  %3074 = vmatpush1.msra.mxu0 0.0
  %3075 = vmatprep.subr.mxu0 0.0
  %3076 = vmatpush1.msra.mxu0 0.0
  %3077 = vmatprep.subr.mxu0 0.0
  %3078 = vmatpush1.msra.mxu0 0.0
  %3079 = vmatprep.subr.mxu0 0.0
  %3080 = vmatpush1.msra.mxu0 0.0
  %3081 = vmatprep.subr.mxu0 0.0
  %3082 = vmatpush1.msra.mxu0 0.0
  %3083 = vmatprep.subr.mxu0 0.0
  %3084 = vmatpush1.msra.mxu0 0.0
  %3085 = vmatprep.subr.mxu0 0.0
  %3086 = vmatpush1.msra.mxu0 0.0
  %3087 = vmatprep.subr.mxu0 0.0
  %3088 = vmatpush1.msra.mxu0 0.0
  %3089 = vmatprep.subr.mxu0 0.0
  %3090 = vmatpush1.msra.mxu0 0.0
  %3091 = vmatprep.subr.mxu0 0.0
  %3092 = vmatpush1.msra.mxu0 0.0
  %3093 = vmatprep.subr.mxu0 0.0
  %3094 = vmatpush1.msra.mxu0 0.0
  %3095 = vmatprep.subr.mxu0 0.0
  %3096 = vmatpush1.msra.mxu0 0.0
  %3097 = vmatprep.mubr.f32.mxu0 0.0
  %3098 = vmatmul.mubr.f32.gmra.mrb[0].mxu0 %v3010
  %v3099 = vpop.f32.mrb[0].mxu0
  %v3100 = vadd.f32 %v55, %v3099
  %v3101 = vpop.f32.mrb[0].mxu0
  %3102 = vmatprep.mubr.f32.mxu0 0.0
  %3103 = vmatmul.mubr.f32.gmra.mrb[0].mxu0 %v3013
  %v3104 = vpop.f32.mrb[0].mxu0
  %v3105 = vadd.f32 %v55, %v3104
  %v3106 = vpop.f32.mrb[0].mxu0
  %3107 = vmatprep.mubr.f32.mxu0 0.0
  %3108 = vmatmul.mubr.f32.gmra.mrb[0].mxu0 %v3016
  %v3109 = vpop.f32.mrb[0].mxu0
  %v3110 = vadd.f32 %v55, %v3109
  %v3111 = vpop.f32.mrb[0].mxu0
  %3112 = vmatprep.mubr.f32.mxu0 0.0
  %3113 = vmatmul.mubr.f32.gmra.mrb[0].mxu0 %v3019
  %v3114 = vpop.f32.mrb[0].mxu0
  %v3115 = vadd.f32 %v55, %v3114
  %v3116 = vpop.f32.mrb[0].mxu0
  %3117 = vmatprep.mubr.f32.mxu0 0.0
  %3118 = vmatmul.mubr.f32.gmra.mrb[0].mxu0 %v3022
  %v3119 = vpop.f32.mrb[0].mxu0
  %v3120 = vadd.f32 %v55, %v3119
  %v3121 = vpop.f32.mrb[0].mxu0
  %3122 = vmatprep.mubr.f32.mxu0 0.0
  %3123 = vmatmul.mubr.f32.gmra.mrb[0].mxu0 %v3025
  %v3124 = vpop.f32.mrb[0].mxu0
  %v3125 = vadd.f32 %v55, %v3124
  %v3126 = vpop.f32.mrb[0].mxu0
  %3127 = vmatprep.mubr.f32.mxu0 0.0
  %3128 = vmatmul.mubr.f32.gmra.mrb[0].mxu0 %v3028
  %v3129 = vpop.f32.mrb[0].mxu0
  %v3130 = vadd.f32 %v55, %v3129
  %v3131 = vpop.f32.mrb[0].mxu0
  %3132 = vmatprep.mubr.f32.mxu0 0.0
  %3133 = vmatmul.mubr.f32.gmra.mrb[0].mxu0 %v3031
  %v3134 = vpop.f32.mrb[0].mxu0
  %v3135 = vadd.f32 %v55, %v3134
  %v3136 = vpop.f32.mrb[0].mxu0
  %3137 = vdwg.mxu0
  %v3138 = vmax.f32 %v3100, 0.0
  %v3139 = vmax.f32 %v3105, 0.0
  %v3140 = vmax.f32 %v3110, 0.0
  %v3141 = vmax.f32 %v3115, 0.0
  %v3142 = vmax.f32 %v3120, 0.0
  %v3143 = vmax.f32 %v3125, 0.0
  %v3144 = vmax.f32 %v3130, 0.0
  %v3145 = vmax.f32 %v3135, 0.0
  %s3146 = scalar_lea.vmem %s2, 16
  %v3147 = vld [vmem:[%s3146] sm:$0xff]
  %v3148 = vlaneseq
  %v3149 = vshrl.u32 %v3148, 7
  %v3150 = vsub.s32 0, %v3149
  %v3151 = vrot.slane %v3147, %v3150
  %3153 = vbcast.lane.b32.xlu0 %v3151, 256
  %v3154 = vpop.permute.xlu0 %3153
  %v3155 = vlaneseq
  %v3156 = vshrl.u32 %v3155, 7
  %v3157 = vsub.s32 1, %v3156
  %v3158 = vrot.slane %v3147, %v3157
  %3160 = vbcast.lane.b32.xlu0 %v3158, 256
  %v3161 = vpop.permute.xlu0 %3160
  %v3162 = vlaneseq
  %v3163 = vshrl.u32 %v3162, 7
  %v3164 = vsub.s32 2, %v3163
  %v3165 = vrot.slane %v3147, %v3164
  %3167 = vbcast.lane.b32.xlu0 %v3165, 256
  %v3168 = vpop.permute.xlu0 %3167
  %v3169 = vlaneseq
  %v3170 = vshrl.u32 %v3169, 7
  %v3171 = vsub.s32 3, %v3170
  %v3172 = vrot.slane %v3147, %v3171
  %3174 = vbcast.lane.b32.xlu0 %v3172, 256
  %v3175 = vpop.permute.xlu0 %3174
  %v3176 = vlaneseq
  %v3177 = vshrl.u32 %v3176, 7
  %v3178 = vsub.s32 4, %v3177
  %v3179 = vrot.slane %v3147, %v3178
  %3181 = vbcast.lane.b32.xlu0 %v3179, 256
  %v3182 = vpop.permute.xlu0 %3181
  %v3183 = vlaneseq
  %v3184 = vshrl.u32 %v3183, 7
  %v3185 = vsub.s32 5, %v3184
  %v3186 = vrot.slane %v3147, %v3185
  %3188 = vbcast.lane.b32.xlu0 %v3186, 256
  %v3189 = vpop.permute.xlu0 %3188
  %v3190 = vlaneseq
  %v3191 = vshrl.u32 %v3190, 7
  %v3192 = vsub.s32 6, %v3191
  %v3193 = vrot.slane %v3147, %v3192
  %3195 = vbcast.lane.b32.xlu0 %v3193, 256
  %v3196 = vpop.permute.xlu0 %3195
  %v3197 = vlaneseq
  %v3198 = vshrl.u32 %v3197, 7
  %v3199 = vsub.s32 7, %v3198
  %v3200 = vrot.slane %v3147, %v3199
  %3202 = vbcast.lane.b32.xlu0 %v3200, 256
  %v3203 = vpop.permute.xlu0 %3202
  %v3204 = vmul.f32 %v3138, %v3154
  %v3205 = vmul.f32 %v3139, %v3161
  %v3206 = vmul.f32 %v3140, %v3168
  %v3207 = vmul.f32 %v3141, %v3175
  %v3208 = vmul.f32 %v3142, %v3182
  %v3209 = vmul.f32 %v3143, %v3189
  %v3210 = vmul.f32 %v3144, %v3196
  %v3211 = vmul.f32 %v3145, %v3203
  %v3212 = vsel %vm364, %v3204, -inf
  %v3213 = vrot.slane %v3212, 4
  %v3214 = vmax.f32 %v3212, %v3213
  %v3215 = vrot.slane %v3214, 2
  %v3216 = vmax.f32 %v3214, %v3215
  %v3217 = vrot.slane %v3216, 1
  %v3218 = vmax.f32 %v3216, %v3217
  %v3219 = vsel %vm364, %v3205, -inf
  %v3220 = vrot.slane %v3219, 4
  %v3221 = vmax.f32 %v3219, %v3220
  %v3222 = vrot.slane %v3221, 2
  %v3223 = vmax.f32 %v3221, %v3222
  %v3224 = vrot.slane %v3223, 1
  %v3225 = vmax.f32 %v3223, %v3224
  %v3226 = vsel %vm364, %v3206, -inf
  %v3227 = vrot.slane %v3226, 4
  %v3228 = vmax.f32 %v3226, %v3227
  %v3229 = vrot.slane %v3228, 2
  %v3230 = vmax.f32 %v3228, %v3229
  %v3231 = vrot.slane %v3230, 1
  %v3232 = vmax.f32 %v3230, %v3231
  %v3233 = vsel %vm364, %v3207, -inf
  %v3234 = vrot.slane %v3233, 4
  %v3235 = vmax.f32 %v3233, %v3234
  %v3236 = vrot.slane %v3235, 2
  %v3237 = vmax.f32 %v3235, %v3236
  %v3238 = vrot.slane %v3237, 1
  %v3239 = vmax.f32 %v3237, %v3238
  %v3240 = vsel %vm364, %v3208, -inf
  %v3241 = vrot.slane %v3240, 4
  %v3242 = vmax.f32 %v3240, %v3241
  %v3243 = vrot.slane %v3242, 2
  %v3244 = vmax.f32 %v3242, %v3243
  %v3245 = vrot.slane %v3244, 1
  %v3246 = vmax.f32 %v3244, %v3245
  %v3247 = vsel %vm364, %v3209, -inf
  %v3248 = vrot.slane %v3247, 4
  %v3249 = vmax.f32 %v3247, %v3248
  %v3250 = vrot.slane %v3249, 2
  %v3251 = vmax.f32 %v3249, %v3250
  %v3252 = vrot.slane %v3251, 1
  %v3253 = vmax.f32 %v3251, %v3252
  %v3254 = vsel %vm364, %v3210, -inf
  %v3255 = vrot.slane %v3254, 4
  %v3256 = vmax.f32 %v3254, %v3255
  %v3257 = vrot.slane %v3256, 2
  %v3258 = vmax.f32 %v3256, %v3257
  %v3259 = vrot.slane %v3258, 1
  %v3260 = vmax.f32 %v3258, %v3259
  %v3261 = vsel %vm364, %v3211, -inf
  %v3262 = vrot.slane %v3261, 4
  %v3263 = vmax.f32 %v3261, %v3262
  %v3264 = vrot.slane %v3263, 2
  %v3265 = vmax.f32 %v3263, %v3264
  %v3266 = vrot.slane %v3265, 1
  %v3267 = vmax.f32 %v3265, %v3266
  %v3277 = vsel %vm1794, %v3225, %v3218
  %v3278 = vsel %vm1796, %v3232, %v3277
  %v3279 = vsel %vm1798, %v3239, %v3278
  %v3280 = vsel %vm1800, %v3246, %v3279
  %v3281 = vsel %vm1802, %v3253, %v3280
  %v3282 = vsel %vm1804, %v3260, %v3281
  %v3283 = vsel %vm1806, %v3267, %v3282
  %3284 = vrot.lane.b32.xlu0 %v3283, 8
  %v3285 = vpop.permute.xlu0 %3284
  %v3287 = vsel %vm364, %v2824, %v3285
  %v3289 = vsel %vm232, %v3287, 0
  %3291 = vmatprep.subr.mxu0 0.0
  %3292 = vmatpush1.msra.mxu0 %v56
  %3293 = vmatprep.subr.mxu0 0.0
  %3294 = vmatpush1.msra.mxu0 %v57
  %3295 = vmatprep.subr.mxu0 0.0
  %3296 = vmatpush1.msra.mxu0 0.0
  %3297 = vmatprep.subr.mxu0 0.0
  %3298 = vmatpush1.msra.mxu0 0.0
  %3299 = vmatprep.subr.mxu0 0.0
  %3300 = vmatpush1.msra.mxu0 0.0
  %3301 = vmatprep.subr.mxu0 0.0
  %3302 = vmatpush1.msra.mxu0 0.0
  %3303 = vmatprep.subr.mxu0 0.0
  %3304 = vmatpush1.msra.mxu0 0.0
  %3305 = vmatprep.subr.mxu0 0.0
  %3306 = vmatpush1.msra.mxu0 0.0
  %3307 = vmatprep.subr.mxu0 0.0
  %3308 = vmatpush1.msra.mxu0 0.0
  %3309 = vmatprep.subr.mxu0 0.0
  %3310 = vmatpush1.msra.mxu0 0.0
  %3311 = vmatprep.subr.mxu0 0.0
  %3312 = vmatpush1.msra.mxu0 0.0
  %3313 = vmatprep.subr.mxu0 0.0
  %3314 = vmatpush1.msra.mxu0 0.0
  %3315 = vmatprep.subr.mxu0 0.0
  %3316 = vmatpush1.msra.mxu0 0.0
  %3317 = vmatprep.subr.mxu0 0.0
  %3318 = vmatpush1.msra.mxu0 0.0
  %3319 = vmatprep.subr.mxu0 0.0
  %3320 = vmatpush1.msra.mxu0 0.0
  %3321 = vmatprep.subr.mxu0 0.0
  %3322 = vmatpush1.msra.mxu0 0.0
  %3323 = vmatprep.subr.mxu0 0.0
  %3324 = vmatpush1.msra.mxu0 0.0
  %3325 = vmatprep.subr.mxu0 0.0
  %3326 = vmatpush1.msra.mxu0 0.0
  %3327 = vmatprep.subr.mxu0 0.0
  %3328 = vmatpush1.msra.mxu0 0.0
  %3329 = vmatprep.subr.mxu0 0.0
  %3330 = vmatpush1.msra.mxu0 0.0
  %3331 = vmatprep.subr.mxu0 0.0
  %3332 = vmatpush1.msra.mxu0 0.0
  %3333 = vmatprep.subr.mxu0 0.0
  %3334 = vmatpush1.msra.mxu0 0.0
  %3335 = vmatprep.subr.mxu0 0.0
  %3336 = vmatpush1.msra.mxu0 0.0
  %3337 = vmatprep.subr.mxu0 0.0
  %3338 = vmatpush1.msra.mxu0 0.0
  %3339 = vmatprep.subr.mxu0 0.0
  %3340 = vmatpush1.msra.mxu0 0.0
  %3341 = vmatprep.subr.mxu0 0.0
  %3342 = vmatpush1.msra.mxu0 0.0
  %3343 = vmatprep.subr.mxu0 0.0
  %3344 = vmatpush1.msra.mxu0 0.0
  %3345 = vmatprep.subr.mxu0 0.0
  %3346 = vmatpush1.msra.mxu0 0.0
  %3347 = vmatprep.subr.mxu0 0.0
  %3348 = vmatpush1.msra.mxu0 0.0
  %3349 = vmatprep.subr.mxu0 0.0
  %3350 = vmatpush1.msra.mxu0 0.0
  %3351 = vmatprep.subr.mxu0 0.0
  %3352 = vmatpush1.msra.mxu0 0.0
  %3353 = vmatprep.subr.mxu0 0.0
  %3354 = vmatpush1.msra.mxu0 0.0
  %3355 = vmatprep.mubr.f32.mxu0 0.0
  %3356 = vmatmul.mubr.f32.gmra.mrb[0].mxu0 %v3289
  %v3357 = vpop.f32.mrb[0].mxu0
  %v3358 = vadd.f32 0.0, %v3357
  %v3359 = vpop.f32.mrb[0].mxu0
  %3360 = vdwg.mxu0
  %v3361 = vadd.f32 %v3358, %v62
  %s3362 = scalar_lea.vmem %s7, 16
  %3363 = vst.msk [vmem:[%s3362] sm:$0xff] %vm1886, %v3361
  %s3364 = scalar_lea.vmem %s5, 16
  %v3365 = vld [vmem:[%s3364] sm:$0xff]
  %v3366 = vmul.f32 %v3361, 0.5
  %v3367 = vmul.f32 %v3366, 1.442695
  %v3368 = vpow.pop %v3367
  %3370 = vrot.lane.b32.xlu0 %v3368, 126
  %v3371 = vpop.permute.xlu0 %3370
  %v3373 = vmul.f32 %v3365, %v3371
  %v3374 = vadd.f32 %v3358, %v1899
  %v3376 = vsel %vm86, %v3373, 0
  %3378 = vmatprep.subr.mxu0 0.0
  %3379 = vmatpush1.msra.mxu0 %v1906
  %3380 = vmatprep.subr.mxu0 0.0
  %3381 = vmatpush1.msra.mxu0 0.0
  %3382 = vmatprep.subr.mxu0 0.0
  %3383 = vmatpush1.msra.mxu0 0.0
  %3384 = vmatprep.subr.mxu0 0.0
  %3385 = vmatpush1.msra.mxu0 0.0
  %3386 = vmatprep.subr.mxu0 0.0
  %3387 = vmatpush1.msra.mxu0 0.0
  %3388 = vmatprep.subr.mxu0 0.0
  %3389 = vmatpush1.msra.mxu0 0.0
  %3390 = vmatprep.subr.mxu0 0.0
  %3391 = vmatpush1.msra.mxu0 0.0
  %3392 = vmatprep.subr.mxu0 0.0
  %3393 = vmatpush1.msra.mxu0 0.0
  %3394 = vmatprep.subr.mxu0 0.0
  %3395 = vmatpush1.msra.mxu0 0.0
  %3396 = vmatprep.subr.mxu0 0.0
  %3397 = vmatpush1.msra.mxu0 0.0
  %3398 = vmatprep.subr.mxu0 0.0
  %3399 = vmatpush1.msra.mxu0 0.0
  %3400 = vmatprep.subr.mxu0 0.0
  %3401 = vmatpush1.msra.mxu0 0.0
  %3402 = vmatprep.subr.mxu0 0.0
  %3403 = vmatpush1.msra.mxu0 0.0
  %3404 = vmatprep.subr.mxu0 0.0
  %3405 = vmatpush1.msra.mxu0 0.0
  %3406 = vmatprep.subr.mxu0 0.0
  %3407 = vmatpush1.msra.mxu0 0.0
  %3408 = vmatprep.subr.mxu0 0.0
  %3409 = vmatpush1.msra.mxu0 0.0
  %3410 = vmatprep.subr.mxu0 0.0
  %3411 = vmatpush1.msra.mxu0 0.0
  %3412 = vmatprep.subr.mxu0 0.0
  %3413 = vmatpush1.msra.mxu0 0.0
  %3414 = vmatprep.subr.mxu0 0.0
  %3415 = vmatpush1.msra.mxu0 0.0
  %3416 = vmatprep.subr.mxu0 0.0
  %3417 = vmatpush1.msra.mxu0 0.0
  %3418 = vmatprep.subr.mxu0 0.0
  %3419 = vmatpush1.msra.mxu0 0.0
  %3420 = vmatprep.subr.mxu0 0.0
  %3421 = vmatpush1.msra.mxu0 0.0
  %3422 = vmatprep.subr.mxu0 0.0
  %3423 = vmatpush1.msra.mxu0 0.0
  %3424 = vmatprep.subr.mxu0 0.0
  %3425 = vmatpush1.msra.mxu0 0.0
  %3426 = vmatprep.subr.mxu0 0.0
  %3427 = vmatpush1.msra.mxu0 0.0
  %3428 = vmatprep.subr.mxu0 0.0
  %3429 = vmatpush1.msra.mxu0 0.0
  %3430 = vmatprep.subr.mxu0 0.0
  %3431 = vmatpush1.msra.mxu0 0.0
  %3432 = vmatprep.subr.mxu0 0.0
  %3433 = vmatpush1.msra.mxu0 0.0
  %3434 = vmatprep.subr.mxu0 0.0
  %3435 = vmatpush1.msra.mxu0 0.0
  %3436 = vmatprep.subr.mxu0 0.0
  %3437 = vmatpush1.msra.mxu0 0.0
  %3438 = vmatprep.subr.mxu0 0.0
  %3439 = vmatpush1.msra.mxu0 0.0
  %3440 = vmatprep.subr.mxu0 0.0
  %3441 = vmatpush1.msra.mxu0 0.0
  %3442 = vmatprep.mubr.f32.mxu0 0.0
  %3443 = vmatmul.mubr.f32.gmra.mrb[0].mxu0 %v3376
  %v3444 = vpop.f32.mrb[0].mxu0
  %v3445 = vadd.f32 0.0, %v3444
  %v3446 = vpop.f32.mrb[0].mxu0
  %3447 = vdwg.mxu0
  %3449 = vrot.lane.b32.xlu0 %v3445, 4
  %v3450 = vpop.permute.xlu0 %3449
  %v3452 = vadd.f32 %v3374, %v3450
  %v3453 = vmax.f32 %v3452, 0.0
  %3455 = vrot.lane.b32.xlu0 %v3453, 124
  %v3456 = vpop.permute.xlu0 %3455
  %3458 = vrot.lane.b32.xlu0 %v2821, 120
  %v3459 = vpop.permute.xlu0 %3458
  %v3461 = vsel %vm232, %v3456, %v3459
  %v3463 = vsel %vm1239, %v3461, 0
  %3465 = vmatprep.subr.mxu0 0.0
  %3466 = vmatpush1.msra.mxu0 %v32
  %3467 = vmatprep.subr.mxu0 0.0
  %3468 = vmatpush1.msra.mxu0 %v33
  %3469 = vmatprep.subr.mxu0 0.0
  %3470 = vmatpush1.msra.mxu0 %v34
  %3471 = vmatprep.subr.mxu0 0.0
  %3472 = vmatpush1.msra.mxu0 0.0
  %3473 = vmatprep.subr.mxu0 0.0
  %3474 = vmatpush1.msra.mxu0 0.0
  %3475 = vmatprep.subr.mxu0 0.0
  %3476 = vmatpush1.msra.mxu0 0.0
  %3477 = vmatprep.subr.mxu0 0.0
  %3478 = vmatpush1.msra.mxu0 0.0
  %3479 = vmatprep.subr.mxu0 0.0
  %3480 = vmatpush1.msra.mxu0 0.0
  %3481 = vmatprep.subr.mxu0 0.0
  %3482 = vmatpush1.msra.mxu0 0.0
  %3483 = vmatprep.subr.mxu0 0.0
  %3484 = vmatpush1.msra.mxu0 0.0
  %3485 = vmatprep.subr.mxu0 0.0
  %3486 = vmatpush1.msra.mxu0 0.0
  %3487 = vmatprep.subr.mxu0 0.0
  %3488 = vmatpush1.msra.mxu0 0.0
  %3489 = vmatprep.subr.mxu0 0.0
  %3490 = vmatpush1.msra.mxu0 0.0
  %3491 = vmatprep.subr.mxu0 0.0
  %3492 = vmatpush1.msra.mxu0 0.0
  %3493 = vmatprep.subr.mxu0 0.0
  %3494 = vmatpush1.msra.mxu0 0.0
  %3495 = vmatprep.subr.mxu0 0.0
  %3496 = vmatpush1.msra.mxu0 0.0
  %3497 = vmatprep.subr.mxu0 0.0
  %3498 = vmatpush1.msra.mxu0 0.0
  %3499 = vmatprep.subr.mxu0 0.0
  %3500 = vmatpush1.msra.mxu0 0.0
  %3501 = vmatprep.subr.mxu0 0.0
  %3502 = vmatpush1.msra.mxu0 0.0
  %3503 = vmatprep.subr.mxu0 0.0
  %3504 = vmatpush1.msra.mxu0 0.0
  %3505 = vmatprep.subr.mxu0 0.0
  %3506 = vmatpush1.msra.mxu0 0.0
  %3507 = vmatprep.subr.mxu0 0.0
  %3508 = vmatpush1.msra.mxu0 0.0
  %3509 = vmatprep.subr.mxu0 0.0
  %3510 = vmatpush1.msra.mxu0 0.0
  %3511 = vmatprep.subr.mxu0 0.0
  %3512 = vmatpush1.msra.mxu0 0.0
  %3513 = vmatprep.subr.mxu0 0.0
  %3514 = vmatpush1.msra.mxu0 0.0
  %3515 = vmatprep.subr.mxu0 0.0
  %3516 = vmatpush1.msra.mxu0 0.0
  %3517 = vmatprep.subr.mxu0 0.0
  %3518 = vmatpush1.msra.mxu0 0.0
  %3519 = vmatprep.subr.mxu0 0.0
  %3520 = vmatpush1.msra.mxu0 0.0
  %3521 = vmatprep.subr.mxu0 0.0
  %3522 = vmatpush1.msra.mxu0 0.0
  %3523 = vmatprep.subr.mxu0 0.0
  %3524 = vmatpush1.msra.mxu0 0.0
  %3525 = vmatprep.subr.mxu0 0.0
  %3526 = vmatpush1.msra.mxu0 0.0
  %3527 = vmatprep.subr.mxu0 0.0
  %3528 = vmatpush1.msra.mxu0 0.0
  %3529 = vmatprep.mubr.f32.mxu0 0.0
  %3530 = vmatmul.mubr.f32.gmra.mrb[0].mxu0 %v3463
  %v3531 = vpop.f32.mrb[0].mxu0
  %v3532 = vadd.f32 %v39, %v3531
  %v3533 = vpop.f32.mrb[0].mxu0
  %3534 = vdwg.mxu0
  %v3535 = vmul.f32 %v3532, 0.5
  %v3536 = vtanh.pop %v3535
  %v3537 = vmul.f32 %v3536, 0.5
  %v3538 = vadd.f32 %v3537, 0.5
  %v3539 = vtanh.pop %v3532
  %v3540 = vmul.f32 %v3538, %v2815
  %3542 = vrot.lane.b32.xlu0 %v3539, 112
  %v3543 = vpop.permute.xlu0 %3542
  %v3545 = vmul.f32 %v3538, %v3543
  %3547 = vrot.lane.b32.xlu0 %v3545, 8
  %v3548 = vpop.permute.xlu0 %3547
  %v3550 = vadd.f32 %v3540, %v3548
  %v3551 = vtanh.pop %v3550
  %3553 = vrot.lane.b32.xlu0 %v3551, 16
  %v3554 = vpop.permute.xlu0 %3553
  %v3556 = vmul.f32 %v3538, %v3554
  %3558 = vrot.lane.b32.xlu0 %v3556, 104
  %v3559 = vpop.permute.xlu0 %3558
  %v3560 = vsel %vm364, %v3559, 0
  %3562 = vmatprep.subr.mxu0 0.0
  %3563 = vmatpush1.msra.mxu0 %v42
  %3564 = vmatprep.subr.mxu0 0.0
  %3565 = vmatpush1.msra.mxu0 0.0
  %3566 = vmatprep.subr.mxu0 0.0
  %3567 = vmatpush1.msra.mxu0 0.0
  %3568 = vmatprep.subr.mxu0 0.0
  %3569 = vmatpush1.msra.mxu0 0.0
  %3570 = vmatprep.subr.mxu0 0.0
  %3571 = vmatpush1.msra.mxu0 0.0
  %3572 = vmatprep.subr.mxu0 0.0
  %3573 = vmatpush1.msra.mxu0 0.0
  %3574 = vmatprep.subr.mxu0 0.0
  %3575 = vmatpush1.msra.mxu0 0.0
  %3576 = vmatprep.subr.mxu0 0.0
  %3577 = vmatpush1.msra.mxu0 0.0
  %3578 = vmatprep.subr.mxu0 0.0
  %3579 = vmatpush1.msra.mxu0 0.0
  %3580 = vmatprep.subr.mxu0 0.0
  %3581 = vmatpush1.msra.mxu0 0.0
  %3582 = vmatprep.subr.mxu0 0.0
  %3583 = vmatpush1.msra.mxu0 0.0
  %3584 = vmatprep.subr.mxu0 0.0
  %3585 = vmatpush1.msra.mxu0 0.0
  %3586 = vmatprep.subr.mxu0 0.0
  %3587 = vmatpush1.msra.mxu0 0.0
  %3588 = vmatprep.subr.mxu0 0.0
  %3589 = vmatpush1.msra.mxu0 0.0
  %3590 = vmatprep.subr.mxu0 0.0
  %3591 = vmatpush1.msra.mxu0 0.0
  %3592 = vmatprep.subr.mxu0 0.0
  %3593 = vmatpush1.msra.mxu0 0.0
  %3594 = vmatprep.subr.mxu0 0.0
  %3595 = vmatpush1.msra.mxu0 0.0
  %3596 = vmatprep.subr.mxu0 0.0
  %3597 = vmatpush1.msra.mxu0 0.0
  %3598 = vmatprep.subr.mxu0 0.0
  %3599 = vmatpush1.msra.mxu0 0.0
  %3600 = vmatprep.subr.mxu0 0.0
  %3601 = vmatpush1.msra.mxu0 0.0
  %3602 = vmatprep.subr.mxu0 0.0
  %3603 = vmatpush1.msra.mxu0 0.0
  %3604 = vmatprep.subr.mxu0 0.0
  %3605 = vmatpush1.msra.mxu0 0.0
  %3606 = vmatprep.subr.mxu0 0.0
  %3607 = vmatpush1.msra.mxu0 0.0
  %3608 = vmatprep.subr.mxu0 0.0
  %3609 = vmatpush1.msra.mxu0 0.0
  %3610 = vmatprep.subr.mxu0 0.0
  %3611 = vmatpush1.msra.mxu0 0.0
  %3612 = vmatprep.subr.mxu0 0.0
  %3613 = vmatpush1.msra.mxu0 0.0
  %3614 = vmatprep.subr.mxu0 0.0
  %3615 = vmatpush1.msra.mxu0 0.0
  %3616 = vmatprep.subr.mxu0 0.0
  %3617 = vmatpush1.msra.mxu0 0.0
  %3618 = vmatprep.subr.mxu0 0.0
  %3619 = vmatpush1.msra.mxu0 0.0
  %3620 = vmatprep.subr.mxu0 0.0
  %3621 = vmatpush1.msra.mxu0 0.0
  %3622 = vmatprep.subr.mxu0 0.0
  %3623 = vmatpush1.msra.mxu0 0.0
  %3624 = vmatprep.subr.mxu0 0.0
  %3625 = vmatpush1.msra.mxu0 0.0
  %3626 = vmatprep.mubr.f32.mxu0 0.0
  %3627 = vmatmul.mubr.f32.gmra.mrb[0].mxu0 %v3560
  %v3628 = vpop.f32.mrb[0].mxu0
  %v3629 = vadd.f32 0.0, %v3628
  %v3630 = vpop.f32.mrb[0].mxu0
  %3631 = vdwg.mxu0
  %v3632 = vadd.f32 %v1232, %v3629
  %v3633 = vsub.f32 %v3629, %v1413
  %v3635 = vcombine.high %v3632, %v3632
  %v3637 = vunpack.c.l.s4 1966171168
  %v3638 = vunpack.c.0.s8 %v3637
  %v3639 = vlaneseq
  %v3640 = vshrl.u32 %v3639, 7
  %v3641 = vsub.s32 %v3638, %v3640
  %v3642 = vrot.slane %v3632, %v3641
  %v3644 = vunpack.c.l.s4 1966171168
  %v3645 = vunpack.c.0.s8 %v3644
  %v3646 = vlaneseq
  %v3647 = vshrl.u32 %v3646, 7
  %v3648 = vsub.s32 %v3645, %v3647
  %v3649 = vrot.slane %v3635, %v3648
  %v3650 = vcombine.high %v3642, %v3642
  %v3651 = vcombine.high %v3649, %v3649
  %v3653 = vunpack.c.l.s4 1966171168
  %v3654 = vunpack.c.0.s8 %v3653
  %v3655 = vlaneseq
  %v3656 = vshrl.u32 %v3655, 7
  %v3657 = vsub.s32 %v3654, %v3656
  %v3658 = vrot.slane %v3642, %v3657
  %v3660 = vunpack.c.l.s4 1966171168
  %v3661 = vunpack.c.0.s8 %v3660
  %v3662 = vlaneseq
  %v3663 = vshrl.u32 %v3662, 7
  %v3664 = vsub.s32 %v3661, %v3663
  %v3665 = vrot.slane %v3649, %v3664
  %v3667 = vunpack.c.l.s4 1966171168
  %v3668 = vunpack.c.0.s8 %v3667
  %v3669 = vlaneseq
  %v3670 = vshrl.u32 %v3669, 7
  %v3671 = vsub.s32 %v3668, %v3670
  %v3672 = vrot.slane %v3650, %v3671
  %v3674 = vunpack.c.l.s4 1966171168
  %v3675 = vunpack.c.0.s8 %v3674
  %v3676 = vlaneseq
  %v3677 = vshrl.u32 %v3676, 7
  %v3678 = vsub.s32 %v3675, %v3677
  %v3679 = vrot.slane %v3651, %v3678
  %v3680 = vcombine.high %v3658, %v3658
  %v3681 = vcombine.high %v3665, %v3665
  %v3682 = vcombine.high %v3672, %v3672
  %v3683 = vcombine.high %v3679, %v3679
  %v3684 = vlaneseq
  %v3685 = vshrl.u32 %v3684, 7
  %v3686 = vsub.s32 0, %v3685
  %v3687 = vrot.slane %v3658, %v3686
  %v3688 = vlaneseq
  %v3689 = vshrl.u32 %v3688, 7
  %v3690 = vsub.s32 0, %v3689
  %v3691 = vrot.slane %v3672, %v3690
  %v3692 = vlaneseq
  %v3693 = vshrl.u32 %v3692, 7
  %v3694 = vsub.s32 0, %v3693
  %v3695 = vrot.slane %v3680, %v3694
  %v3696 = vlaneseq
  %v3697 = vshrl.u32 %v3696, 7
  %v3698 = vsub.s32 0, %v3697
  %v3699 = vrot.slane %v3682, %v3698
  %v3700 = vlaneseq
  %v3701 = vshrl.u32 %v3700, 7
  %v3702 = vsub.s32 0, %v3701
  %v3703 = vrot.slane %v3665, %v3702
  %v3704 = vlaneseq
  %v3705 = vshrl.u32 %v3704, 7
  %v3706 = vsub.s32 0, %v3705
  %v3707 = vrot.slane %v3679, %v3706
  %v3708 = vlaneseq
  %v3709 = vshrl.u32 %v3708, 7
  %v3710 = vsub.s32 0, %v3709
  %v3711 = vrot.slane %v3681, %v3710
  %v3712 = vlaneseq
  %v3713 = vshrl.u32 %v3712, 7
  %v3714 = vsub.s32 0, %v3713
  %v3715 = vrot.slane %v3683, %v3714
  %3725 = vrot.lane.b32.xlu0 %v3633, 64
  %v3726 = vpop.permute.xlu0 %3725
  %v3728 = vadd.f32 %v3687, %v3726
  %v3729 = vadd.f32 %v3691, %v3726
  %v3730 = vadd.f32 %v3695, %v3726
  %v3731 = vadd.f32 %v3699, %v3726
  %v3732 = vadd.f32 %v3703, %v3726
  %v3733 = vadd.f32 %v3707, %v3726
  %v3734 = vadd.f32 %v3711, %v3726
  %v3735 = vadd.f32 %v3715, %v3726
  %v3736 = vmax.f32 %v3728, 0.0
  %v3737 = vmax.f32 %v3729, 0.0
  %v3738 = vmax.f32 %v3730, 0.0
  %v3739 = vmax.f32 %v3731, 0.0
  %v3740 = vmax.f32 %v3732, 0.0
  %v3741 = vmax.f32 %v3733, 0.0
  %v3742 = vmax.f32 %v3734, 0.0
  %v3743 = vmax.f32 %v3735, 0.0
  %v3745 = vsel %vm1526, %v3736, 0
  %v3748 = vsel %vm1526, %v3737, 0
  %v3751 = vsel %vm1526, %v3738, 0
  %v3754 = vsel %vm1526, %v3739, 0
  %v3757 = vsel %vm1526, %v3740, 0
  %v3760 = vsel %vm1526, %v3741, 0
  %v3763 = vsel %vm1526, %v3742, 0
  %v3766 = vsel %vm1526, %v3743, 0
  %3768 = vmatprep.subr.mxu0 0.0
  %3769 = vmatpush1.msra.mxu0 %v43
  %3770 = vmatprep.subr.mxu0 0.0
  %3771 = vmatpush1.msra.mxu0 %v44
  %3772 = vmatprep.subr.mxu0 0.0
  %3773 = vmatpush1.msra.mxu0 %v45
  %3774 = vmatprep.subr.mxu0 0.0
  %3775 = vmatpush1.msra.mxu0 %v46
  %3776 = vmatprep.subr.mxu0 0.0
  %3777 = vmatpush1.msra.mxu0 %v47
  %3778 = vmatprep.subr.mxu0 0.0
  %3779 = vmatpush1.msra.mxu0 %v48
  %3780 = vmatprep.subr.mxu0 0.0
  %3781 = vmatpush1.msra.mxu0 %v49
  %3782 = vmatprep.subr.mxu0 0.0
  %3783 = vmatpush1.msra.mxu0 %v50
  %3784 = vmatprep.subr.mxu0 0.0
  %3785 = vmatpush1.msra.mxu0 0.0
  %3786 = vmatprep.subr.mxu0 0.0
  %3787 = vmatpush1.msra.mxu0 0.0
  %3788 = vmatprep.subr.mxu0 0.0
  %3789 = vmatpush1.msra.mxu0 0.0
  %3790 = vmatprep.subr.mxu0 0.0
  %3791 = vmatpush1.msra.mxu0 0.0
  %3792 = vmatprep.subr.mxu0 0.0
  %3793 = vmatpush1.msra.mxu0 0.0
  %3794 = vmatprep.subr.mxu0 0.0
  %3795 = vmatpush1.msra.mxu0 0.0
  %3796 = vmatprep.subr.mxu0 0.0
  %3797 = vmatpush1.msra.mxu0 0.0
  %3798 = vmatprep.subr.mxu0 0.0
  %3799 = vmatpush1.msra.mxu0 0.0
  %3800 = vmatprep.subr.mxu0 0.0
  %3801 = vmatpush1.msra.mxu0 0.0
  %3802 = vmatprep.subr.mxu0 0.0
  %3803 = vmatpush1.msra.mxu0 0.0
  %3804 = vmatprep.subr.mxu0 0.0
  %3805 = vmatpush1.msra.mxu0 0.0
  %3806 = vmatprep.subr.mxu0 0.0
  %3807 = vmatpush1.msra.mxu0 0.0
  %3808 = vmatprep.subr.mxu0 0.0
  %3809 = vmatpush1.msra.mxu0 0.0
  %3810 = vmatprep.subr.mxu0 0.0
  %3811 = vmatpush1.msra.mxu0 0.0
  %3812 = vmatprep.subr.mxu0 0.0
  %3813 = vmatpush1.msra.mxu0 0.0
  %3814 = vmatprep.subr.mxu0 0.0
  %3815 = vmatpush1.msra.mxu0 0.0
  %3816 = vmatprep.subr.mxu0 0.0
  %3817 = vmatpush1.msra.mxu0 0.0
  %3818 = vmatprep.subr.mxu0 0.0
  %3819 = vmatpush1.msra.mxu0 0.0
  %3820 = vmatprep.subr.mxu0 0.0
  %3821 = vmatpush1.msra.mxu0 0.0
  %3822 = vmatprep.subr.mxu0 0.0
  %3823 = vmatpush1.msra.mxu0 0.0
  %3824 = vmatprep.subr.mxu0 0.0
  %3825 = vmatpush1.msra.mxu0 0.0
  %3826 = vmatprep.subr.mxu0 0.0
  %3827 = vmatpush1.msra.mxu0 0.0
  %3828 = vmatprep.subr.mxu0 0.0
  %3829 = vmatpush1.msra.mxu0 0.0
  %3830 = vmatprep.subr.mxu0 0.0
  %3831 = vmatpush1.msra.mxu0 0.0
  %3832 = vmatprep.mubr.f32.mxu0 0.0
  %3833 = vmatmul.mubr.f32.gmra.mrb[0].mxu0 %v3745
  %v3834 = vpop.f32.mrb[0].mxu0
  %v3835 = vadd.f32 %v55, %v3834
  %v3836 = vpop.f32.mrb[0].mxu0
  %3837 = vmatprep.mubr.f32.mxu0 0.0
  %3838 = vmatmul.mubr.f32.gmra.mrb[0].mxu0 %v3748
  %v3839 = vpop.f32.mrb[0].mxu0
  %v3840 = vadd.f32 %v55, %v3839
  %v3841 = vpop.f32.mrb[0].mxu0
  %3842 = vmatprep.mubr.f32.mxu0 0.0
  %3843 = vmatmul.mubr.f32.gmra.mrb[0].mxu0 %v3751
  %v3844 = vpop.f32.mrb[0].mxu0
  %v3845 = vadd.f32 %v55, %v3844
  %v3846 = vpop.f32.mrb[0].mxu0
  %3847 = vmatprep.mubr.f32.mxu0 0.0
  %3848 = vmatmul.mubr.f32.gmra.mrb[0].mxu0 %v3754
  %v3849 = vpop.f32.mrb[0].mxu0
  %v3850 = vadd.f32 %v55, %v3849
  %v3851 = vpop.f32.mrb[0].mxu0
  %3852 = vmatprep.mubr.f32.mxu0 0.0
  %3853 = vmatmul.mubr.f32.gmra.mrb[0].mxu0 %v3757
  %v3854 = vpop.f32.mrb[0].mxu0
  %v3855 = vadd.f32 %v55, %v3854
  %v3856 = vpop.f32.mrb[0].mxu0
  %3857 = vmatprep.mubr.f32.mxu0 0.0
  %3858 = vmatmul.mubr.f32.gmra.mrb[0].mxu0 %v3760
  %v3859 = vpop.f32.mrb[0].mxu0
  %v3860 = vadd.f32 %v55, %v3859
  %v3861 = vpop.f32.mrb[0].mxu0
  %3862 = vmatprep.mubr.f32.mxu0 0.0
  %3863 = vmatmul.mubr.f32.gmra.mrb[0].mxu0 %v3763
  %v3864 = vpop.f32.mrb[0].mxu0
  %v3865 = vadd.f32 %v55, %v3864
  %v3866 = vpop.f32.mrb[0].mxu0
  %3867 = vmatprep.mubr.f32.mxu0 0.0
  %3868 = vmatmul.mubr.f32.gmra.mrb[0].mxu0 %v3766
  %v3869 = vpop.f32.mrb[0].mxu0
  %v3870 = vadd.f32 %v55, %v3869
  %v3871 = vpop.f32.mrb[0].mxu0
  %3872 = vdwg.mxu0
  %v3873 = vmax.f32 %v3835, 0.0
  %v3874 = vmax.f32 %v3840, 0.0
  %v3875 = vmax.f32 %v3845, 0.0
  %v3876 = vmax.f32 %v3850, 0.0
  %v3877 = vmax.f32 %v3855, 0.0
  %v3878 = vmax.f32 %v3860, 0.0
  %v3879 = vmax.f32 %v3865, 0.0
  %v3880 = vmax.f32 %v3870, 0.0
  %s3881 = scalar_lea.vmem %s2, 24
  %v3882 = vld [vmem:[%s3881] sm:$0xff]
  %v3883 = vlaneseq
  %v3884 = vshrl.u32 %v3883, 7
  %v3885 = vsub.s32 0, %v3884
  %v3886 = vrot.slane %v3882, %v3885
  %3888 = vbcast.lane.b32.xlu0 %v3886, 256
  %v3889 = vpop.permute.xlu0 %3888
  %v3890 = vlaneseq
  %v3891 = vshrl.u32 %v3890, 7
  %v3892 = vsub.s32 1, %v3891
  %v3893 = vrot.slane %v3882, %v3892
  %3895 = vbcast.lane.b32.xlu0 %v3893, 256
  %v3896 = vpop.permute.xlu0 %3895
  %v3897 = vlaneseq
  %v3898 = vshrl.u32 %v3897, 7
  %v3899 = vsub.s32 2, %v3898
  %v3900 = vrot.slane %v3882, %v3899
  %3902 = vbcast.lane.b32.xlu0 %v3900, 256
  %v3903 = vpop.permute.xlu0 %3902
  %v3904 = vlaneseq
  %v3905 = vshrl.u32 %v3904, 7
  %v3906 = vsub.s32 3, %v3905
  %v3907 = vrot.slane %v3882, %v3906
  %3909 = vbcast.lane.b32.xlu0 %v3907, 256
  %v3910 = vpop.permute.xlu0 %3909
  %v3911 = vlaneseq
  %v3912 = vshrl.u32 %v3911, 7
  %v3913 = vsub.s32 4, %v3912
  %v3914 = vrot.slane %v3882, %v3913
  %3916 = vbcast.lane.b32.xlu0 %v3914, 256
  %v3917 = vpop.permute.xlu0 %3916
  %v3918 = vlaneseq
  %v3919 = vshrl.u32 %v3918, 7
  %v3920 = vsub.s32 5, %v3919
  %v3921 = vrot.slane %v3882, %v3920
  %3923 = vbcast.lane.b32.xlu0 %v3921, 256
  %v3924 = vpop.permute.xlu0 %3923
  %v3925 = vlaneseq
  %v3926 = vshrl.u32 %v3925, 7
  %v3927 = vsub.s32 6, %v3926
  %v3928 = vrot.slane %v3882, %v3927
  %3930 = vbcast.lane.b32.xlu0 %v3928, 256
  %v3931 = vpop.permute.xlu0 %3930
  %v3932 = vlaneseq
  %v3933 = vshrl.u32 %v3932, 7
  %v3934 = vsub.s32 7, %v3933
  %v3935 = vrot.slane %v3882, %v3934
  %3937 = vbcast.lane.b32.xlu0 %v3935, 256
  %v3938 = vpop.permute.xlu0 %3937
  %v3939 = vmul.f32 %v3873, %v3889
  %v3940 = vmul.f32 %v3874, %v3896
  %v3941 = vmul.f32 %v3875, %v3903
  %v3942 = vmul.f32 %v3876, %v3910
  %v3943 = vmul.f32 %v3877, %v3917
  %v3944 = vmul.f32 %v3878, %v3924
  %v3945 = vmul.f32 %v3879, %v3931
  %v3946 = vmul.f32 %v3880, %v3938
  %v3947 = vsel %vm364, %v3939, -inf
  %v3948 = vrot.slane %v3947, 4
  %v3949 = vmax.f32 %v3947, %v3948
  %v3950 = vrot.slane %v3949, 2
  %v3951 = vmax.f32 %v3949, %v3950
  %v3952 = vrot.slane %v3951, 1
  %v3953 = vmax.f32 %v3951, %v3952
  %v3954 = vsel %vm364, %v3940, -inf
  %v3955 = vrot.slane %v3954, 4
  %v3956 = vmax.f32 %v3954, %v3955
  %v3957 = vrot.slane %v3956, 2
  %v3958 = vmax.f32 %v3956, %v3957
  %v3959 = vrot.slane %v3958, 1
  %v3960 = vmax.f32 %v3958, %v3959
  %v3961 = vsel %vm364, %v3941, -inf
  %v3962 = vrot.slane %v3961, 4
  %v3963 = vmax.f32 %v3961, %v3962
  %v3964 = vrot.slane %v3963, 2
  %v3965 = vmax.f32 %v3963, %v3964
  %v3966 = vrot.slane %v3965, 1
  %v3967 = vmax.f32 %v3965, %v3966
  %v3968 = vsel %vm364, %v3942, -inf
  %v3969 = vrot.slane %v3968, 4
  %v3970 = vmax.f32 %v3968, %v3969
  %v3971 = vrot.slane %v3970, 2
  %v3972 = vmax.f32 %v3970, %v3971
  %v3973 = vrot.slane %v3972, 1
  %v3974 = vmax.f32 %v3972, %v3973
  %v3975 = vsel %vm364, %v3943, -inf
  %v3976 = vrot.slane %v3975, 4
  %v3977 = vmax.f32 %v3975, %v3976
  %v3978 = vrot.slane %v3977, 2
  %v3979 = vmax.f32 %v3977, %v3978
  %v3980 = vrot.slane %v3979, 1
  %v3981 = vmax.f32 %v3979, %v3980
  %v3982 = vsel %vm364, %v3944, -inf
  %v3983 = vrot.slane %v3982, 4
  %v3984 = vmax.f32 %v3982, %v3983
  %v3985 = vrot.slane %v3984, 2
  %v3986 = vmax.f32 %v3984, %v3985
  %v3987 = vrot.slane %v3986, 1
  %v3988 = vmax.f32 %v3986, %v3987
  %v3989 = vsel %vm364, %v3945, -inf
  %v3990 = vrot.slane %v3989, 4
  %v3991 = vmax.f32 %v3989, %v3990
  %v3992 = vrot.slane %v3991, 2
  %v3993 = vmax.f32 %v3991, %v3992
  %v3994 = vrot.slane %v3993, 1
  %v3995 = vmax.f32 %v3993, %v3994
  %v3996 = vsel %vm364, %v3946, -inf
  %v3997 = vrot.slane %v3996, 4
  %v3998 = vmax.f32 %v3996, %v3997
  %v3999 = vrot.slane %v3998, 2
  %v4000 = vmax.f32 %v3998, %v3999
  %v4001 = vrot.slane %v4000, 1
  %v4002 = vmax.f32 %v4000, %v4001
  %v4012 = vsel %vm1794, %v3960, %v3953
  %v4013 = vsel %vm1796, %v3967, %v4012
  %v4014 = vsel %vm1798, %v3974, %v4013
  %v4015 = vsel %vm1800, %v3981, %v4014
  %v4016 = vsel %vm1802, %v3988, %v4015
  %v4017 = vsel %vm1804, %v3995, %v4016
  %v4018 = vsel %vm1806, %v4002, %v4017
  %4019 = vrot.lane.b32.xlu0 %v4018, 8
  %v4020 = vpop.permute.xlu0 %4019
  %v4022 = vsel %vm364, %v3559, %v4020
  %v4024 = vsel %vm232, %v4022, 0
  %4026 = vmatprep.subr.mxu0 0.0
  %4027 = vmatpush1.msra.mxu0 %v56
  %4028 = vmatprep.subr.mxu0 0.0
  %4029 = vmatpush1.msra.mxu0 %v57
  %4030 = vmatprep.subr.mxu0 0.0
  %4031 = vmatpush1.msra.mxu0 0.0
  %4032 = vmatprep.subr.mxu0 0.0
  %4033 = vmatpush1.msra.mxu0 0.0
  %4034 = vmatprep.subr.mxu0 0.0
  %4035 = vmatpush1.msra.mxu0 0.0
  %4036 = vmatprep.subr.mxu0 0.0
  %4037 = vmatpush1.msra.mxu0 0.0
  %4038 = vmatprep.subr.mxu0 0.0
  %4039 = vmatpush1.msra.mxu0 0.0
  %4040 = vmatprep.subr.mxu0 0.0
  %4041 = vmatpush1.msra.mxu0 0.0
  %4042 = vmatprep.subr.mxu0 0.0
  %4043 = vmatpush1.msra.mxu0 0.0
  %4044 = vmatprep.subr.mxu0 0.0
  %4045 = vmatpush1.msra.mxu0 0.0
  %4046 = vmatprep.subr.mxu0 0.0
  %4047 = vmatpush1.msra.mxu0 0.0
  %4048 = vmatprep.subr.mxu0 0.0
  %4049 = vmatpush1.msra.mxu0 0.0
  %4050 = vmatprep.subr.mxu0 0.0
  %4051 = vmatpush1.msra.mxu0 0.0
  %4052 = vmatprep.subr.mxu0 0.0
  %4053 = vmatpush1.msra.mxu0 0.0
  %4054 = vmatprep.subr.mxu0 0.0
  %4055 = vmatpush1.msra.mxu0 0.0
  %4056 = vmatprep.subr.mxu0 0.0
  %4057 = vmatpush1.msra.mxu0 0.0
  %4058 = vmatprep.subr.mxu0 0.0
  %4059 = vmatpush1.msra.mxu0 0.0
  %4060 = vmatprep.subr.mxu0 0.0
  %4061 = vmatpush1.msra.mxu0 0.0
  %4062 = vmatprep.subr.mxu0 0.0
  %4063 = vmatpush1.msra.mxu0 0.0
  %4064 = vmatprep.subr.mxu0 0.0
  %4065 = vmatpush1.msra.mxu0 0.0
  %4066 = vmatprep.subr.mxu0 0.0
  %4067 = vmatpush1.msra.mxu0 0.0
  %4068 = vmatprep.subr.mxu0 0.0
  %4069 = vmatpush1.msra.mxu0 0.0
  %4070 = vmatprep.subr.mxu0 0.0
  %4071 = vmatpush1.msra.mxu0 0.0
  %4072 = vmatprep.subr.mxu0 0.0
  %4073 = vmatpush1.msra.mxu0 0.0
  %4074 = vmatprep.subr.mxu0 0.0
  %4075 = vmatpush1.msra.mxu0 0.0
  %4076 = vmatprep.subr.mxu0 0.0
  %4077 = vmatpush1.msra.mxu0 0.0
  %4078 = vmatprep.subr.mxu0 0.0
  %4079 = vmatpush1.msra.mxu0 0.0
  %4080 = vmatprep.subr.mxu0 0.0
  %4081 = vmatpush1.msra.mxu0 0.0
  %4082 = vmatprep.subr.mxu0 0.0
  %4083 = vmatpush1.msra.mxu0 0.0
  %4084 = vmatprep.subr.mxu0 0.0
  %4085 = vmatpush1.msra.mxu0 0.0
  %4086 = vmatprep.subr.mxu0 0.0
  %4087 = vmatpush1.msra.mxu0 0.0
  %4088 = vmatprep.subr.mxu0 0.0
  %4089 = vmatpush1.msra.mxu0 0.0
  %4090 = vmatprep.mubr.f32.mxu0 0.0
  %4091 = vmatmul.mubr.f32.gmra.mrb[0].mxu0 %v4024
  %v4092 = vpop.f32.mrb[0].mxu0
  %v4093 = vadd.f32 0.0, %v4092
  %v4094 = vpop.f32.mrb[0].mxu0
  %4095 = vdwg.mxu0
  %v4096 = vadd.f32 %v4093, %v62
  %s4097 = scalar_lea.vmem %s7, 24
  %4098 = vst.msk [vmem:[%s4097] sm:$0xff] %vm1886, %v4096
  %s4099 = scalar_lea.vmem %s5, 24
  %v4100 = vld [vmem:[%s4099] sm:$0xff]
  %v4101 = vmul.f32 %v4096, 0.5
  %v4102 = vmul.f32 %v4101, 1.442695
  %v4103 = vpow.pop %v4102
  %4105 = vrot.lane.b32.xlu0 %v4103, 126
  %v4106 = vpop.permute.xlu0 %4105
  %v4108 = vmul.f32 %v4100, %v4106
  %v4109 = vadd.f32 %v4093, %v1899
  %v4111 = vsel %vm86, %v4108, 0
  %4113 = vmatprep.subr.mxu0 0.0
  %4114 = vmatpush1.msra.mxu0 %v1906
  %4115 = vmatprep.subr.mxu0 0.0
  %4116 = vmatpush1.msra.mxu0 0.0
  %4117 = vmatprep.subr.mxu0 0.0
  %4118 = vmatpush1.msra.mxu0 0.0
  %4119 = vmatprep.subr.mxu0 0.0
  %4120 = vmatpush1.msra.mxu0 0.0
  %4121 = vmatprep.subr.mxu0 0.0
  %4122 = vmatpush1.msra.mxu0 0.0
  %4123 = vmatprep.subr.mxu0 0.0
  %4124 = vmatpush1.msra.mxu0 0.0
  %4125 = vmatprep.subr.mxu0 0.0
  %4126 = vmatpush1.msra.mxu0 0.0
  %4127 = vmatprep.subr.mxu0 0.0
  %4128 = vmatpush1.msra.mxu0 0.0
  %4129 = vmatprep.subr.mxu0 0.0
  %4130 = vmatpush1.msra.mxu0 0.0
  %4131 = vmatprep.subr.mxu0 0.0
  %4132 = vmatpush1.msra.mxu0 0.0
  %4133 = vmatprep.subr.mxu0 0.0
  %4134 = vmatpush1.msra.mxu0 0.0
  %4135 = vmatprep.subr.mxu0 0.0
  %4136 = vmatpush1.msra.mxu0 0.0
  %4137 = vmatprep.subr.mxu0 0.0
  %4138 = vmatpush1.msra.mxu0 0.0
  %4139 = vmatprep.subr.mxu0 0.0
  %4140 = vmatpush1.msra.mxu0 0.0
  %4141 = vmatprep.subr.mxu0 0.0
  %4142 = vmatpush1.msra.mxu0 0.0
  %4143 = vmatprep.subr.mxu0 0.0
  %4144 = vmatpush1.msra.mxu0 0.0
  %4145 = vmatprep.subr.mxu0 0.0
  %4146 = vmatpush1.msra.mxu0 0.0
  %4147 = vmatprep.subr.mxu0 0.0
  %4148 = vmatpush1.msra.mxu0 0.0
  %4149 = vmatprep.subr.mxu0 0.0
  %4150 = vmatpush1.msra.mxu0 0.0
  %4151 = vmatprep.subr.mxu0 0.0
  %4152 = vmatpush1.msra.mxu0 0.0
  %4153 = vmatprep.subr.mxu0 0.0
  %4154 = vmatpush1.msra.mxu0 0.0
  %4155 = vmatprep.subr.mxu0 0.0
  %4156 = vmatpush1.msra.mxu0 0.0
  %4157 = vmatprep.subr.mxu0 0.0
  %4158 = vmatpush1.msra.mxu0 0.0
  %4159 = vmatprep.subr.mxu0 0.0
  %4160 = vmatpush1.msra.mxu0 0.0
  %4161 = vmatprep.subr.mxu0 0.0
  %4162 = vmatpush1.msra.mxu0 0.0
  %4163 = vmatprep.subr.mxu0 0.0
  %4164 = vmatpush1.msra.mxu0 0.0
  %4165 = vmatprep.subr.mxu0 0.0
  %4166 = vmatpush1.msra.mxu0 0.0
  %4167 = vmatprep.subr.mxu0 0.0
  %4168 = vmatpush1.msra.mxu0 0.0
  %4169 = vmatprep.subr.mxu0 0.0
  %4170 = vmatpush1.msra.mxu0 0.0
  %4171 = vmatprep.subr.mxu0 0.0
  %4172 = vmatpush1.msra.mxu0 0.0
  %4173 = vmatprep.subr.mxu0 0.0
  %4174 = vmatpush1.msra.mxu0 0.0
  %4175 = vmatprep.subr.mxu0 0.0
  %4176 = vmatpush1.msra.mxu0 0.0
  %4177 = vmatprep.mubr.f32.mxu0 0.0
  %4178 = vmatmul.mubr.f32.gmra.mrb[0].mxu0 %v4111
  %v4179 = vpop.f32.mrb[0].mxu0
  %v4180 = vadd.f32 0.0, %v4179
  %v4181 = vpop.f32.mrb[0].mxu0
  %4182 = vdwg.mxu0
  %4184 = vrot.lane.b32.xlu0 %v4180, 4
  %v4185 = vpop.permute.xlu0 %4184
  %v4187 = vadd.f32 %v4109, %v4185
  %v4188 = vmax.f32 %v4187, 0.0
  %4190 = vrot.lane.b32.xlu0 %v4188, 124
  %v4191 = vpop.permute.xlu0 %4190
  %4193 = vrot.lane.b32.xlu0 %v3556, 120
  %v4194 = vpop.permute.xlu0 %4193
  %v4196 = vsel %vm232, %v4191, %v4194
  %v4198 = vsel %vm1239, %v4196, 0
  %4200 = vmatprep.subr.mxu0 0.0
  %4201 = vmatpush1.msra.mxu0 %v32
  %4202 = vmatprep.subr.mxu0 0.0
  %4203 = vmatpush1.msra.mxu0 %v33
  %4204 = vmatprep.subr.mxu0 0.0
  %4205 = vmatpush1.msra.mxu0 %v34
  %4206 = vmatprep.subr.mxu0 0.0
  %4207 = vmatpush1.msra.mxu0 0.0
  %4208 = vmatprep.subr.mxu0 0.0
  %4209 = vmatpush1.msra.mxu0 0.0
  %4210 = vmatprep.subr.mxu0 0.0
  %4211 = vmatpush1.msra.mxu0 0.0
  %4212 = vmatprep.subr.mxu0 0.0
  %4213 = vmatpush1.msra.mxu0 0.0
  %4214 = vmatprep.subr.mxu0 0.0
  %4215 = vmatpush1.msra.mxu0 0.0
  %4216 = vmatprep.subr.mxu0 0.0
  %4217 = vmatpush1.msra.mxu0 0.0
  %4218 = vmatprep.subr.mxu0 0.0
  %4219 = vmatpush1.msra.mxu0 0.0
  %4220 = vmatprep.subr.mxu0 0.0
  %4221 = vmatpush1.msra.mxu0 0.0
  %4222 = vmatprep.subr.mxu0 0.0
  %4223 = vmatpush1.msra.mxu0 0.0
  %4224 = vmatprep.subr.mxu0 0.0
  %4225 = vmatpush1.msra.mxu0 0.0
  %4226 = vmatprep.subr.mxu0 0.0
  %4227 = vmatpush1.msra.mxu0 0.0
  %4228 = vmatprep.subr.mxu0 0.0
  %4229 = vmatpush1.msra.mxu0 0.0
  %4230 = vmatprep.subr.mxu0 0.0
  %4231 = vmatpush1.msra.mxu0 0.0
  %4232 = vmatprep.subr.mxu0 0.0
  %4233 = vmatpush1.msra.mxu0 0.0
  %4234 = vmatprep.subr.mxu0 0.0
  %4235 = vmatpush1.msra.mxu0 0.0
  %4236 = vmatprep.subr.mxu0 0.0
  %4237 = vmatpush1.msra.mxu0 0.0
  %4238 = vmatprep.subr.mxu0 0.0
  %4239 = vmatpush1.msra.mxu0 0.0
  %4240 = vmatprep.subr.mxu0 0.0
  %4241 = vmatpush1.msra.mxu0 0.0
  %4242 = vmatprep.subr.mxu0 0.0
  %4243 = vmatpush1.msra.mxu0 0.0
  %4244 = vmatprep.subr.mxu0 0.0
  %4245 = vmatpush1.msra.mxu0 0.0
  %4246 = vmatprep.subr.mxu0 0.0
  %4247 = vmatpush1.msra.mxu0 0.0
  %4248 = vmatprep.subr.mxu0 0.0
  %4249 = vmatpush1.msra.mxu0 0.0
  %4250 = vmatprep.subr.mxu0 0.0
  %4251 = vmatpush1.msra.mxu0 0.0
  %4252 = vmatprep.subr.mxu0 0.0
  %4253 = vmatpush1.msra.mxu0 0.0
  %4254 = vmatprep.subr.mxu0 0.0
  %4255 = vmatpush1.msra.mxu0 0.0
  %4256 = vmatprep.subr.mxu0 0.0
  %4257 = vmatpush1.msra.mxu0 0.0
  %4258 = vmatprep.subr.mxu0 0.0
  %4259 = vmatpush1.msra.mxu0 0.0
  %4260 = vmatprep.subr.mxu0 0.0
  %4261 = vmatpush1.msra.mxu0 0.0
  %4262 = vmatprep.subr.mxu0 0.0
  %4263 = vmatpush1.msra.mxu0 0.0
  %4264 = vmatprep.mubr.f32.mxu0 0.0
  %4265 = vmatmul.mubr.f32.gmra.mrb[0].mxu0 %v4198
  %v4266 = vpop.f32.mrb[0].mxu0
  %v4267 = vadd.f32 %v39, %v4266
  %v4268 = vpop.f32.mrb[0].mxu0
  %4269 = vdwg.mxu0
  %v4270 = vmul.f32 %v4267, 0.5
  %v4271 = vtanh.pop %v4270
  %v4272 = vmul.f32 %v4271, 0.5
  %v4273 = vadd.f32 %v4272, 0.5
  %v4274 = vtanh.pop %v4267
  %v4275 = vmul.f32 %v4273, %v3550
  %4277 = vrot.lane.b32.xlu0 %v4274, 112
  %v4278 = vpop.permute.xlu0 %4277
  %v4280 = vmul.f32 %v4273, %v4278
  %4282 = vrot.lane.b32.xlu0 %v4280, 8
  %v4283 = vpop.permute.xlu0 %4282
  %v4285 = vadd.f32 %v4275, %v4283
  %v4286 = vtanh.pop %v4285
  %4288 = vrot.lane.b32.xlu0 %v4286, 16
  %v4289 = vpop.permute.xlu0 %4288
  %v4291 = vmul.f32 %v4273, %v4289
  %4293 = vrot.lane.b32.xlu0 %v4291, 104
  %v4294 = vpop.permute.xlu0 %4293
  %v4295 = vsel %vm364, %v4294, 0
  %4297 = vmatprep.subr.mxu0 0.0
  %4298 = vmatpush1.msra.mxu0 %v42
  %4299 = vmatprep.subr.mxu0 0.0
  %4300 = vmatpush1.msra.mxu0 0.0
  %4301 = vmatprep.subr.mxu0 0.0
  %4302 = vmatpush1.msra.mxu0 0.0
  %4303 = vmatprep.subr.mxu0 0.0
  %4304 = vmatpush1.msra.mxu0 0.0
  %4305 = vmatprep.subr.mxu0 0.0
  %4306 = vmatpush1.msra.mxu0 0.0
  %4307 = vmatprep.subr.mxu0 0.0
  %4308 = vmatpush1.msra.mxu0 0.0
  %4309 = vmatprep.subr.mxu0 0.0
  %4310 = vmatpush1.msra.mxu0 0.0
  %4311 = vmatprep.subr.mxu0 0.0
  %4312 = vmatpush1.msra.mxu0 0.0
  %4313 = vmatprep.subr.mxu0 0.0
  %4314 = vmatpush1.msra.mxu0 0.0
  %4315 = vmatprep.subr.mxu0 0.0
  %4316 = vmatpush1.msra.mxu0 0.0
  %4317 = vmatprep.subr.mxu0 0.0
  %4318 = vmatpush1.msra.mxu0 0.0
  %4319 = vmatprep.subr.mxu0 0.0
  %4320 = vmatpush1.msra.mxu0 0.0
  %4321 = vmatprep.subr.mxu0 0.0
  %4322 = vmatpush1.msra.mxu0 0.0
  %4323 = vmatprep.subr.mxu0 0.0
  %4324 = vmatpush1.msra.mxu0 0.0
  %4325 = vmatprep.subr.mxu0 0.0
  %4326 = vmatpush1.msra.mxu0 0.0
  %4327 = vmatprep.subr.mxu0 0.0
  %4328 = vmatpush1.msra.mxu0 0.0
  %4329 = vmatprep.subr.mxu0 0.0
  %4330 = vmatpush1.msra.mxu0 0.0
  %4331 = vmatprep.subr.mxu0 0.0
  %4332 = vmatpush1.msra.mxu0 0.0
  %4333 = vmatprep.subr.mxu0 0.0
  %4334 = vmatpush1.msra.mxu0 0.0
  %4335 = vmatprep.subr.mxu0 0.0
  %4336 = vmatpush1.msra.mxu0 0.0
  %4337 = vmatprep.subr.mxu0 0.0
  %4338 = vmatpush1.msra.mxu0 0.0
  %4339 = vmatprep.subr.mxu0 0.0
  %4340 = vmatpush1.msra.mxu0 0.0
  %4341 = vmatprep.subr.mxu0 0.0
  %4342 = vmatpush1.msra.mxu0 0.0
  %4343 = vmatprep.subr.mxu0 0.0
  %4344 = vmatpush1.msra.mxu0 0.0
  %4345 = vmatprep.subr.mxu0 0.0
  %4346 = vmatpush1.msra.mxu0 0.0
  %4347 = vmatprep.subr.mxu0 0.0
  %4348 = vmatpush1.msra.mxu0 0.0
  %4349 = vmatprep.subr.mxu0 0.0
  %4350 = vmatpush1.msra.mxu0 0.0
  %4351 = vmatprep.subr.mxu0 0.0
  %4352 = vmatpush1.msra.mxu0 0.0
  %4353 = vmatprep.subr.mxu0 0.0
  %4354 = vmatpush1.msra.mxu0 0.0
  %4355 = vmatprep.subr.mxu0 0.0
  %4356 = vmatpush1.msra.mxu0 0.0
  %4357 = vmatprep.subr.mxu0 0.0
  %4358 = vmatpush1.msra.mxu0 0.0
  %4359 = vmatprep.subr.mxu0 0.0
  %4360 = vmatpush1.msra.mxu0 0.0
  %4361 = vmatprep.mubr.f32.mxu0 0.0
  %4362 = vmatmul.mubr.f32.gmra.mrb[0].mxu0 %v4295
  %v4363 = vpop.f32.mrb[0].mxu0
  %v4364 = vadd.f32 0.0, %v4363
  %v4365 = vpop.f32.mrb[0].mxu0
  %4366 = vdwg.mxu0
  %v4367 = vadd.f32 %v1232, %v4364
  %v4368 = vsub.f32 %v4364, %v1413
  %v4370 = vcombine.high %v4367, %v4367
  %v4372 = vunpack.c.l.s4 1966171168
  %v4373 = vunpack.c.0.s8 %v4372
  %v4374 = vlaneseq
  %v4375 = vshrl.u32 %v4374, 7
  %v4376 = vsub.s32 %v4373, %v4375
  %v4377 = vrot.slane %v4367, %v4376
  %v4379 = vunpack.c.l.s4 1966171168
  %v4380 = vunpack.c.0.s8 %v4379
  %v4381 = vlaneseq
  %v4382 = vshrl.u32 %v4381, 7
  %v4383 = vsub.s32 %v4380, %v4382
  %v4384 = vrot.slane %v4370, %v4383
  %v4385 = vcombine.high %v4377, %v4377
  %v4386 = vcombine.high %v4384, %v4384
  %v4388 = vunpack.c.l.s4 1966171168
  %v4389 = vunpack.c.0.s8 %v4388
  %v4390 = vlaneseq
  %v4391 = vshrl.u32 %v4390, 7
  %v4392 = vsub.s32 %v4389, %v4391
  %v4393 = vrot.slane %v4377, %v4392
  %v4395 = vunpack.c.l.s4 1966171168
  %v4396 = vunpack.c.0.s8 %v4395
  %v4397 = vlaneseq
  %v4398 = vshrl.u32 %v4397, 7
  %v4399 = vsub.s32 %v4396, %v4398
  %v4400 = vrot.slane %v4384, %v4399
  %v4402 = vunpack.c.l.s4 1966171168
  %v4403 = vunpack.c.0.s8 %v4402
  %v4404 = vlaneseq
  %v4405 = vshrl.u32 %v4404, 7
  %v4406 = vsub.s32 %v4403, %v4405
  %v4407 = vrot.slane %v4385, %v4406
  %v4409 = vunpack.c.l.s4 1966171168
  %v4410 = vunpack.c.0.s8 %v4409
  %v4411 = vlaneseq
  %v4412 = vshrl.u32 %v4411, 7
  %v4413 = vsub.s32 %v4410, %v4412
  %v4414 = vrot.slane %v4386, %v4413
  %v4415 = vcombine.high %v4393, %v4393
  %v4416 = vcombine.high %v4400, %v4400
  %v4417 = vcombine.high %v4407, %v4407
  %v4418 = vcombine.high %v4414, %v4414
  %v4419 = vlaneseq
  %v4420 = vshrl.u32 %v4419, 7
  %v4421 = vsub.s32 0, %v4420
  %v4422 = vrot.slane %v4393, %v4421
  %v4423 = vlaneseq
  %v4424 = vshrl.u32 %v4423, 7
  %v4425 = vsub.s32 0, %v4424
  %v4426 = vrot.slane %v4407, %v4425
  %v4427 = vlaneseq
  %v4428 = vshrl.u32 %v4427, 7
  %v4429 = vsub.s32 0, %v4428
  %v4430 = vrot.slane %v4415, %v4429
  %v4431 = vlaneseq
  %v4432 = vshrl.u32 %v4431, 7
  %v4433 = vsub.s32 0, %v4432
  %v4434 = vrot.slane %v4417, %v4433
  %v4435 = vlaneseq
  %v4436 = vshrl.u32 %v4435, 7
  %v4437 = vsub.s32 0, %v4436
  %v4438 = vrot.slane %v4400, %v4437
  %v4439 = vlaneseq
  %v4440 = vshrl.u32 %v4439, 7
  %v4441 = vsub.s32 0, %v4440
  %v4442 = vrot.slane %v4414, %v4441
  %v4443 = vlaneseq
  %v4444 = vshrl.u32 %v4443, 7
  %v4445 = vsub.s32 0, %v4444
  %v4446 = vrot.slane %v4416, %v4445
  %v4447 = vlaneseq
  %v4448 = vshrl.u32 %v4447, 7
  %v4449 = vsub.s32 0, %v4448
  %v4450 = vrot.slane %v4418, %v4449
  %4460 = vrot.lane.b32.xlu0 %v4368, 64
  %v4461 = vpop.permute.xlu0 %4460
  %v4463 = vadd.f32 %v4422, %v4461
  %v4464 = vadd.f32 %v4426, %v4461
  %v4465 = vadd.f32 %v4430, %v4461
  %v4466 = vadd.f32 %v4434, %v4461
  %v4467 = vadd.f32 %v4438, %v4461
  %v4468 = vadd.f32 %v4442, %v4461
  %v4469 = vadd.f32 %v4446, %v4461
  %v4470 = vadd.f32 %v4450, %v4461
  %v4471 = vmax.f32 %v4463, 0.0
  %v4472 = vmax.f32 %v4464, 0.0
  %v4473 = vmax.f32 %v4465, 0.0
  %v4474 = vmax.f32 %v4466, 0.0
  %v4475 = vmax.f32 %v4467, 0.0
  %v4476 = vmax.f32 %v4468, 0.0
  %v4477 = vmax.f32 %v4469, 0.0
  %v4478 = vmax.f32 %v4470, 0.0
  %v4480 = vsel %vm1526, %v4471, 0
  %v4483 = vsel %vm1526, %v4472, 0
  %v4486 = vsel %vm1526, %v4473, 0
  %v4489 = vsel %vm1526, %v4474, 0
  %v4492 = vsel %vm1526, %v4475, 0
  %v4495 = vsel %vm1526, %v4476, 0
  %v4498 = vsel %vm1526, %v4477, 0
  %v4501 = vsel %vm1526, %v4478, 0
  %4503 = vmatprep.subr.mxu0 0.0
  %4504 = vmatpush1.msra.mxu0 %v43
  %4505 = vmatprep.subr.mxu0 0.0
  %4506 = vmatpush1.msra.mxu0 %v44
  %4507 = vmatprep.subr.mxu0 0.0
  %4508 = vmatpush1.msra.mxu0 %v45
  %4509 = vmatprep.subr.mxu0 0.0
  %4510 = vmatpush1.msra.mxu0 %v46
  %4511 = vmatprep.subr.mxu0 0.0
  %4512 = vmatpush1.msra.mxu0 %v47
  %4513 = vmatprep.subr.mxu0 0.0
  %4514 = vmatpush1.msra.mxu0 %v48
  %4515 = vmatprep.subr.mxu0 0.0
  %4516 = vmatpush1.msra.mxu0 %v49
  %4517 = vmatprep.subr.mxu0 0.0
  %4518 = vmatpush1.msra.mxu0 %v50
  %4519 = vmatprep.subr.mxu0 0.0
  %4520 = vmatpush1.msra.mxu0 0.0
  %4521 = vmatprep.subr.mxu0 0.0
  %4522 = vmatpush1.msra.mxu0 0.0
  %4523 = vmatprep.subr.mxu0 0.0
  %4524 = vmatpush1.msra.mxu0 0.0
  %4525 = vmatprep.subr.mxu0 0.0
  %4526 = vmatpush1.msra.mxu0 0.0
  %4527 = vmatprep.subr.mxu0 0.0
  %4528 = vmatpush1.msra.mxu0 0.0
  %4529 = vmatprep.subr.mxu0 0.0
  %4530 = vmatpush1.msra.mxu0 0.0
  %4531 = vmatprep.subr.mxu0 0.0
  %4532 = vmatpush1.msra.mxu0 0.0
  %4533 = vmatprep.subr.mxu0 0.0
  %4534 = vmatpush1.msra.mxu0 0.0
  %4535 = vmatprep.subr.mxu0 0.0
  %4536 = vmatpush1.msra.mxu0 0.0
  %4537 = vmatprep.subr.mxu0 0.0
  %4538 = vmatpush1.msra.mxu0 0.0
  %4539 = vmatprep.subr.mxu0 0.0
  %4540 = vmatpush1.msra.mxu0 0.0
  %4541 = vmatprep.subr.mxu0 0.0
  %4542 = vmatpush1.msra.mxu0 0.0
  %4543 = vmatprep.subr.mxu0 0.0
  %4544 = vmatpush1.msra.mxu0 0.0
  %4545 = vmatprep.subr.mxu0 0.0
  %4546 = vmatpush1.msra.mxu0 0.0
  %4547 = vmatprep.subr.mxu0 0.0
  %4548 = vmatpush1.msra.mxu0 0.0
  %4549 = vmatprep.subr.mxu0 0.0
  %4550 = vmatpush1.msra.mxu0 0.0
  %4551 = vmatprep.subr.mxu0 0.0
  %4552 = vmatpush1.msra.mxu0 0.0
  %4553 = vmatprep.subr.mxu0 0.0
  %4554 = vmatpush1.msra.mxu0 0.0
  %4555 = vmatprep.subr.mxu0 0.0
  %4556 = vmatpush1.msra.mxu0 0.0
  %4557 = vmatprep.subr.mxu0 0.0
  %4558 = vmatpush1.msra.mxu0 0.0
  %4559 = vmatprep.subr.mxu0 0.0
  %4560 = vmatpush1.msra.mxu0 0.0
  %4561 = vmatprep.subr.mxu0 0.0
  %4562 = vmatpush1.msra.mxu0 0.0
  %4563 = vmatprep.subr.mxu0 0.0
  %4564 = vmatpush1.msra.mxu0 0.0
  %4565 = vmatprep.subr.mxu0 0.0
  %4566 = vmatpush1.msra.mxu0 0.0
  %4567 = vmatprep.mubr.f32.mxu0 0.0
  %4568 = vmatmul.mubr.f32.gmra.mrb[0].mxu0 %v4480
  %v4569 = vpop.f32.mrb[0].mxu0
  %v4570 = vadd.f32 %v55, %v4569
  %v4571 = vpop.f32.mrb[0].mxu0
  %4572 = vmatprep.mubr.f32.mxu0 0.0
  %4573 = vmatmul.mubr.f32.gmra.mrb[0].mxu0 %v4483
  %v4574 = vpop.f32.mrb[0].mxu0
  %v4575 = vadd.f32 %v55, %v4574
  %v4576 = vpop.f32.mrb[0].mxu0
  %4577 = vmatprep.mubr.f32.mxu0 0.0
  %4578 = vmatmul.mubr.f32.gmra.mrb[0].mxu0 %v4486
  %v4579 = vpop.f32.mrb[0].mxu0
  %v4580 = vadd.f32 %v55, %v4579
  %v4581 = vpop.f32.mrb[0].mxu0
  %4582 = vmatprep.mubr.f32.mxu0 0.0
  %4583 = vmatmul.mubr.f32.gmra.mrb[0].mxu0 %v4489
  %v4584 = vpop.f32.mrb[0].mxu0
  %v4585 = vadd.f32 %v55, %v4584
  %v4586 = vpop.f32.mrb[0].mxu0
  %4587 = vmatprep.mubr.f32.mxu0 0.0
  %4588 = vmatmul.mubr.f32.gmra.mrb[0].mxu0 %v4492
  %v4589 = vpop.f32.mrb[0].mxu0
  %v4590 = vadd.f32 %v55, %v4589
  %v4591 = vpop.f32.mrb[0].mxu0
  %4592 = vmatprep.mubr.f32.mxu0 0.0
  %4593 = vmatmul.mubr.f32.gmra.mrb[0].mxu0 %v4495
  %v4594 = vpop.f32.mrb[0].mxu0
  %v4595 = vadd.f32 %v55, %v4594
  %v4596 = vpop.f32.mrb[0].mxu0
  %4597 = vmatprep.mubr.f32.mxu0 0.0
  %4598 = vmatmul.mubr.f32.gmra.mrb[0].mxu0 %v4498
  %v4599 = vpop.f32.mrb[0].mxu0
  %v4600 = vadd.f32 %v55, %v4599
  %v4601 = vpop.f32.mrb[0].mxu0
  %4602 = vmatprep.mubr.f32.mxu0 0.0
  %4603 = vmatmul.mubr.f32.gmra.mrb[0].mxu0 %v4501
  %v4604 = vpop.f32.mrb[0].mxu0
  %v4605 = vadd.f32 %v55, %v4604
  %v4606 = vpop.f32.mrb[0].mxu0
  %4607 = vdwg.mxu0
  %v4608 = vmax.f32 %v4570, 0.0
  %v4609 = vmax.f32 %v4575, 0.0
  %v4610 = vmax.f32 %v4580, 0.0
  %v4611 = vmax.f32 %v4585, 0.0
  %v4612 = vmax.f32 %v4590, 0.0
  %v4613 = vmax.f32 %v4595, 0.0
  %v4614 = vmax.f32 %v4600, 0.0
  %v4615 = vmax.f32 %v4605, 0.0
  %s4616 = scalar_lea.vmem %s2, 32
  %v4617 = vld [vmem:[%s4616] sm:$0xff]
  %v4618 = vlaneseq
  %v4619 = vshrl.u32 %v4618, 7
  %v4620 = vsub.s32 0, %v4619
  %v4621 = vrot.slane %v4617, %v4620
  %4623 = vbcast.lane.b32.xlu0 %v4621, 256
  %v4624 = vpop.permute.xlu0 %4623
  %v4625 = vlaneseq
  %v4626 = vshrl.u32 %v4625, 7
  %v4627 = vsub.s32 1, %v4626
  %v4628 = vrot.slane %v4617, %v4627
  %4630 = vbcast.lane.b32.xlu0 %v4628, 256
  %v4631 = vpop.permute.xlu0 %4630
  %v4632 = vlaneseq
  %v4633 = vshrl.u32 %v4632, 7
  %v4634 = vsub.s32 2, %v4633
  %v4635 = vrot.slane %v4617, %v4634
  %4637 = vbcast.lane.b32.xlu0 %v4635, 256
  %v4638 = vpop.permute.xlu0 %4637
  %v4639 = vlaneseq
  %v4640 = vshrl.u32 %v4639, 7
  %v4641 = vsub.s32 3, %v4640
  %v4642 = vrot.slane %v4617, %v4641
  %4644 = vbcast.lane.b32.xlu0 %v4642, 256
  %v4645 = vpop.permute.xlu0 %4644
  %v4646 = vlaneseq
  %v4647 = vshrl.u32 %v4646, 7
  %v4648 = vsub.s32 4, %v4647
  %v4649 = vrot.slane %v4617, %v4648
  %4651 = vbcast.lane.b32.xlu0 %v4649, 256
  %v4652 = vpop.permute.xlu0 %4651
  %v4653 = vlaneseq
  %v4654 = vshrl.u32 %v4653, 7
  %v4655 = vsub.s32 5, %v4654
  %v4656 = vrot.slane %v4617, %v4655
  %4658 = vbcast.lane.b32.xlu0 %v4656, 256
  %v4659 = vpop.permute.xlu0 %4658
  %v4660 = vlaneseq
  %v4661 = vshrl.u32 %v4660, 7
  %v4662 = vsub.s32 6, %v4661
  %v4663 = vrot.slane %v4617, %v4662
  %4665 = vbcast.lane.b32.xlu0 %v4663, 256
  %v4666 = vpop.permute.xlu0 %4665
  %v4667 = vlaneseq
  %v4668 = vshrl.u32 %v4667, 7
  %v4669 = vsub.s32 7, %v4668
  %v4670 = vrot.slane %v4617, %v4669
  %4672 = vbcast.lane.b32.xlu0 %v4670, 256
  %v4673 = vpop.permute.xlu0 %4672
  %v4674 = vmul.f32 %v4608, %v4624
  %v4675 = vmul.f32 %v4609, %v4631
  %v4676 = vmul.f32 %v4610, %v4638
  %v4677 = vmul.f32 %v4611, %v4645
  %v4678 = vmul.f32 %v4612, %v4652
  %v4679 = vmul.f32 %v4613, %v4659
  %v4680 = vmul.f32 %v4614, %v4666
  %v4681 = vmul.f32 %v4615, %v4673
  %v4682 = vsel %vm364, %v4674, -inf
  %v4683 = vrot.slane %v4682, 4
  %v4684 = vmax.f32 %v4682, %v4683
  %v4685 = vrot.slane %v4684, 2
  %v4686 = vmax.f32 %v4684, %v4685
  %v4687 = vrot.slane %v4686, 1
  %v4688 = vmax.f32 %v4686, %v4687
  %v4689 = vsel %vm364, %v4675, -inf
  %v4690 = vrot.slane %v4689, 4
  %v4691 = vmax.f32 %v4689, %v4690
  %v4692 = vrot.slane %v4691, 2
  %v4693 = vmax.f32 %v4691, %v4692
  %v4694 = vrot.slane %v4693, 1
  %v4695 = vmax.f32 %v4693, %v4694
  %v4696 = vsel %vm364, %v4676, -inf
  %v4697 = vrot.slane %v4696, 4
  %v4698 = vmax.f32 %v4696, %v4697
  %v4699 = vrot.slane %v4698, 2
  %v4700 = vmax.f32 %v4698, %v4699
  %v4701 = vrot.slane %v4700, 1
  %v4702 = vmax.f32 %v4700, %v4701
  %v4703 = vsel %vm364, %v4677, -inf
  %v4704 = vrot.slane %v4703, 4
  %v4705 = vmax.f32 %v4703, %v4704
  %v4706 = vrot.slane %v4705, 2
  %v4707 = vmax.f32 %v4705, %v4706
  %v4708 = vrot.slane %v4707, 1
  %v4709 = vmax.f32 %v4707, %v4708
  %v4710 = vsel %vm364, %v4678, -inf
  %v4711 = vrot.slane %v4710, 4
  %v4712 = vmax.f32 %v4710, %v4711
  %v4713 = vrot.slane %v4712, 2
  %v4714 = vmax.f32 %v4712, %v4713
  %v4715 = vrot.slane %v4714, 1
  %v4716 = vmax.f32 %v4714, %v4715
  %v4717 = vsel %vm364, %v4679, -inf
  %v4718 = vrot.slane %v4717, 4
  %v4719 = vmax.f32 %v4717, %v4718
  %v4720 = vrot.slane %v4719, 2
  %v4721 = vmax.f32 %v4719, %v4720
  %v4722 = vrot.slane %v4721, 1
  %v4723 = vmax.f32 %v4721, %v4722
  %v4724 = vsel %vm364, %v4680, -inf
  %v4725 = vrot.slane %v4724, 4
  %v4726 = vmax.f32 %v4724, %v4725
  %v4727 = vrot.slane %v4726, 2
  %v4728 = vmax.f32 %v4726, %v4727
  %v4729 = vrot.slane %v4728, 1
  %v4730 = vmax.f32 %v4728, %v4729
  %v4731 = vsel %vm364, %v4681, -inf
  %v4732 = vrot.slane %v4731, 4
  %v4733 = vmax.f32 %v4731, %v4732
  %v4734 = vrot.slane %v4733, 2
  %v4735 = vmax.f32 %v4733, %v4734
  %v4736 = vrot.slane %v4735, 1
  %v4737 = vmax.f32 %v4735, %v4736
  %v4747 = vsel %vm1794, %v4695, %v4688
  %v4748 = vsel %vm1796, %v4702, %v4747
  %v4749 = vsel %vm1798, %v4709, %v4748
  %v4750 = vsel %vm1800, %v4716, %v4749
  %v4751 = vsel %vm1802, %v4723, %v4750
  %v4752 = vsel %vm1804, %v4730, %v4751
  %v4753 = vsel %vm1806, %v4737, %v4752
  %4754 = vrot.lane.b32.xlu0 %v4753, 8
  %v4755 = vpop.permute.xlu0 %4754
  %v4757 = vsel %vm364, %v4294, %v4755
  %v4759 = vsel %vm232, %v4757, 0
  %4761 = vmatprep.subr.mxu0 0.0
  %4762 = vmatpush1.msra.mxu0 %v56
  %4763 = vmatprep.subr.mxu0 0.0
  %4764 = vmatpush1.msra.mxu0 %v57
  %4765 = vmatprep.subr.mxu0 0.0
  %4766 = vmatpush1.msra.mxu0 0.0
  %4767 = vmatprep.subr.mxu0 0.0
  %4768 = vmatpush1.msra.mxu0 0.0
  %4769 = vmatprep.subr.mxu0 0.0
  %4770 = vmatpush1.msra.mxu0 0.0
  %4771 = vmatprep.subr.mxu0 0.0
  %4772 = vmatpush1.msra.mxu0 0.0
  %4773 = vmatprep.subr.mxu0 0.0
  %4774 = vmatpush1.msra.mxu0 0.0
  %4775 = vmatprep.subr.mxu0 0.0
  %4776 = vmatpush1.msra.mxu0 0.0
  %4777 = vmatprep.subr.mxu0 0.0
  %4778 = vmatpush1.msra.mxu0 0.0
  %4779 = vmatprep.subr.mxu0 0.0
  %4780 = vmatpush1.msra.mxu0 0.0
  %4781 = vmatprep.subr.mxu0 0.0
  %4782 = vmatpush1.msra.mxu0 0.0
  %4783 = vmatprep.subr.mxu0 0.0
  %4784 = vmatpush1.msra.mxu0 0.0
  %4785 = vmatprep.subr.mxu0 0.0
  %4786 = vmatpush1.msra.mxu0 0.0
  %4787 = vmatprep.subr.mxu0 0.0
  %4788 = vmatpush1.msra.mxu0 0.0
  %4789 = vmatprep.subr.mxu0 0.0
  %4790 = vmatpush1.msra.mxu0 0.0
  %4791 = vmatprep.subr.mxu0 0.0
  %4792 = vmatpush1.msra.mxu0 0.0
  %4793 = vmatprep.subr.mxu0 0.0
  %4794 = vmatpush1.msra.mxu0 0.0
  %4795 = vmatprep.subr.mxu0 0.0
  %4796 = vmatpush1.msra.mxu0 0.0
  %4797 = vmatprep.subr.mxu0 0.0
  %4798 = vmatpush1.msra.mxu0 0.0
  %4799 = vmatprep.subr.mxu0 0.0
  %4800 = vmatpush1.msra.mxu0 0.0
  %4801 = vmatprep.subr.mxu0 0.0
  %4802 = vmatpush1.msra.mxu0 0.0
  %4803 = vmatprep.subr.mxu0 0.0
  %4804 = vmatpush1.msra.mxu0 0.0
  %4805 = vmatprep.subr.mxu0 0.0
  %4806 = vmatpush1.msra.mxu0 0.0
  %4807 = vmatprep.subr.mxu0 0.0
  %4808 = vmatpush1.msra.mxu0 0.0
  %4809 = vmatprep.subr.mxu0 0.0
  %4810 = vmatpush1.msra.mxu0 0.0
  %4811 = vmatprep.subr.mxu0 0.0
  %4812 = vmatpush1.msra.mxu0 0.0
  %4813 = vmatprep.subr.mxu0 0.0
  %4814 = vmatpush1.msra.mxu0 0.0
  %4815 = vmatprep.subr.mxu0 0.0
  %4816 = vmatpush1.msra.mxu0 0.0
  %4817 = vmatprep.subr.mxu0 0.0
  %4818 = vmatpush1.msra.mxu0 0.0
  %4819 = vmatprep.subr.mxu0 0.0
  %4820 = vmatpush1.msra.mxu0 0.0
  %4821 = vmatprep.subr.mxu0 0.0
  %4822 = vmatpush1.msra.mxu0 0.0
  %4823 = vmatprep.subr.mxu0 0.0
  %4824 = vmatpush1.msra.mxu0 0.0
  %4825 = vmatprep.mubr.f32.mxu0 0.0
  %4826 = vmatmul.mubr.f32.gmra.mrb[0].mxu0 %v4759
  %v4827 = vpop.f32.mrb[0].mxu0
  %v4828 = vadd.f32 0.0, %v4827
  %v4829 = vpop.f32.mrb[0].mxu0
  %4830 = vdwg.mxu0
  %v4831 = vadd.f32 %v4828, %v62
  %s4832 = scalar_lea.vmem %s7, 32
  %4833 = vst.msk [vmem:[%s4832] sm:$0xff] %vm1886, %v4831
  %s4834 = scalar_lea.vmem %s5, 32
  %v4835 = vld [vmem:[%s4834] sm:$0xff]
  %v4836 = vmul.f32 %v4831, 0.5
  %v4837 = vmul.f32 %v4836, 1.442695
  %v4838 = vpow.pop %v4837
  %4840 = vrot.lane.b32.xlu0 %v4838, 126
  %v4841 = vpop.permute.xlu0 %4840
  %v4843 = vmul.f32 %v4835, %v4841
  %v4844 = vadd.f32 %v4828, %v1899
  %v4846 = vsel %vm86, %v4843, 0
  %4848 = vmatprep.subr.mxu0 0.0
  %4849 = vmatpush1.msra.mxu0 %v1906
  %4850 = vmatprep.subr.mxu0 0.0
  %4851 = vmatpush1.msra.mxu0 0.0
  %4852 = vmatprep.subr.mxu0 0.0
  %4853 = vmatpush1.msra.mxu0 0.0
  %4854 = vmatprep.subr.mxu0 0.0
  %4855 = vmatpush1.msra.mxu0 0.0
  %4856 = vmatprep.subr.mxu0 0.0
  %4857 = vmatpush1.msra.mxu0 0.0
  %4858 = vmatprep.subr.mxu0 0.0
  %4859 = vmatpush1.msra.mxu0 0.0
  %4860 = vmatprep.subr.mxu0 0.0
  %4861 = vmatpush1.msra.mxu0 0.0
  %4862 = vmatprep.subr.mxu0 0.0
  %4863 = vmatpush1.msra.mxu0 0.0
  %4864 = vmatprep.subr.mxu0 0.0
  %4865 = vmatpush1.msra.mxu0 0.0
  %4866 = vmatprep.subr.mxu0 0.0
  %4867 = vmatpush1.msra.mxu0 0.0
  %4868 = vmatprep.subr.mxu0 0.0
  %4869 = vmatpush1.msra.mxu0 0.0
  %4870 = vmatprep.subr.mxu0 0.0
  %4871 = vmatpush1.msra.mxu0 0.0
  %4872 = vmatprep.subr.mxu0 0.0
  %4873 = vmatpush1.msra.mxu0 0.0
  %4874 = vmatprep.subr.mxu0 0.0
  %4875 = vmatpush1.msra.mxu0 0.0
  %4876 = vmatprep.subr.mxu0 0.0
  %4877 = vmatpush1.msra.mxu0 0.0
  %4878 = vmatprep.subr.mxu0 0.0
  %4879 = vmatpush1.msra.mxu0 0.0
  %4880 = vmatprep.subr.mxu0 0.0
  %4881 = vmatpush1.msra.mxu0 0.0
  %4882 = vmatprep.subr.mxu0 0.0
  %4883 = vmatpush1.msra.mxu0 0.0
  %4884 = vmatprep.subr.mxu0 0.0
  %4885 = vmatpush1.msra.mxu0 0.0
  %4886 = vmatprep.subr.mxu0 0.0
  %4887 = vmatpush1.msra.mxu0 0.0
  %4888 = vmatprep.subr.mxu0 0.0
  %4889 = vmatpush1.msra.mxu0 0.0
  %4890 = vmatprep.subr.mxu0 0.0
  %4891 = vmatpush1.msra.mxu0 0.0
  %4892 = vmatprep.subr.mxu0 0.0
  %4893 = vmatpush1.msra.mxu0 0.0
  %4894 = vmatprep.subr.mxu0 0.0
  %4895 = vmatpush1.msra.mxu0 0.0
  %4896 = vmatprep.subr.mxu0 0.0
  %4897 = vmatpush1.msra.mxu0 0.0
  %4898 = vmatprep.subr.mxu0 0.0
  %4899 = vmatpush1.msra.mxu0 0.0
  %4900 = vmatprep.subr.mxu0 0.0
  %4901 = vmatpush1.msra.mxu0 0.0
  %4902 = vmatprep.subr.mxu0 0.0
  %4903 = vmatpush1.msra.mxu0 0.0
  %4904 = vmatprep.subr.mxu0 0.0
  %4905 = vmatpush1.msra.mxu0 0.0
  %4906 = vmatprep.subr.mxu0 0.0
  %4907 = vmatpush1.msra.mxu0 0.0
  %4908 = vmatprep.subr.mxu0 0.0
  %4909 = vmatpush1.msra.mxu0 0.0
  %4910 = vmatprep.subr.mxu0 0.0
  %4911 = vmatpush1.msra.mxu0 0.0
  %4912 = vmatprep.mubr.f32.mxu0 0.0
  %4913 = vmatmul.mubr.f32.gmra.mrb[0].mxu0 %v4846
  %v4914 = vpop.f32.mrb[0].mxu0
  %v4915 = vadd.f32 0.0, %v4914
  %v4916 = vpop.f32.mrb[0].mxu0
  %4917 = vdwg.mxu0
  %4919 = vrot.lane.b32.xlu0 %v4915, 4
  %v4920 = vpop.permute.xlu0 %4919
  %v4922 = vadd.f32 %v4844, %v4920
  %v4923 = vmax.f32 %v4922, 0.0
  %4925 = vrot.lane.b32.xlu0 %v4923, 124
  %v4926 = vpop.permute.xlu0 %4925
  %4928 = vrot.lane.b32.xlu0 %v4291, 120
  %v4929 = vpop.permute.xlu0 %4928
  %v4931 = vsel %vm232, %v4926, %v4929
  %v4933 = vsel %vm1239, %v4931, 0
  %4935 = vmatprep.subr.mxu0 0.0
  %4936 = vmatpush1.msra.mxu0 %v32
  %4937 = vmatprep.subr.mxu0 0.0
  %4938 = vmatpush1.msra.mxu0 %v33
  %4939 = vmatprep.subr.mxu0 0.0
  %4940 = vmatpush1.msra.mxu0 %v34
  %4941 = vmatprep.subr.mxu0 0.0
  %4942 = vmatpush1.msra.mxu0 0.0
  %4943 = vmatprep.subr.mxu0 0.0
  %4944 = vmatpush1.msra.mxu0 0.0
  %4945 = vmatprep.subr.mxu0 0.0
  %4946 = vmatpush1.msra.mxu0 0.0
  %4947 = vmatprep.subr.mxu0 0.0
  %4948 = vmatpush1.msra.mxu0 0.0
  %4949 = vmatprep.subr.mxu0 0.0
  %4950 = vmatpush1.msra.mxu0 0.0
  %4951 = vmatprep.subr.mxu0 0.0
  %4952 = vmatpush1.msra.mxu0 0.0
  %4953 = vmatprep.subr.mxu0 0.0
  %4954 = vmatpush1.msra.mxu0 0.0
  %4955 = vmatprep.subr.mxu0 0.0
  %4956 = vmatpush1.msra.mxu0 0.0
  %4957 = vmatprep.subr.mxu0 0.0
  %4958 = vmatpush1.msra.mxu0 0.0
  %4959 = vmatprep.subr.mxu0 0.0
  %4960 = vmatpush1.msra.mxu0 0.0
  %4961 = vmatprep.subr.mxu0 0.0
  %4962 = vmatpush1.msra.mxu0 0.0
  %4963 = vmatprep.subr.mxu0 0.0
  %4964 = vmatpush1.msra.mxu0 0.0
  %4965 = vmatprep.subr.mxu0 0.0
  %4966 = vmatpush1.msra.mxu0 0.0
  %4967 = vmatprep.subr.mxu0 0.0
  %4968 = vmatpush1.msra.mxu0 0.0
  %4969 = vmatprep.subr.mxu0 0.0
  %4970 = vmatpush1.msra.mxu0 0.0
  %4971 = vmatprep.subr.mxu0 0.0
  %4972 = vmatpush1.msra.mxu0 0.0
  %4973 = vmatprep.subr.mxu0 0.0
  %4974 = vmatpush1.msra.mxu0 0.0
  %4975 = vmatprep.subr.mxu0 0.0
  %4976 = vmatpush1.msra.mxu0 0.0
  %4977 = vmatprep.subr.mxu0 0.0
  %4978 = vmatpush1.msra.mxu0 0.0
  %4979 = vmatprep.subr.mxu0 0.0
  %4980 = vmatpush1.msra.mxu0 0.0
  %4981 = vmatprep.subr.mxu0 0.0
  %4982 = vmatpush1.msra.mxu0 0.0
  %4983 = vmatprep.subr.mxu0 0.0
  %4984 = vmatpush1.msra.mxu0 0.0
  %4985 = vmatprep.subr.mxu0 0.0
  %4986 = vmatpush1.msra.mxu0 0.0
  %4987 = vmatprep.subr.mxu0 0.0
  %4988 = vmatpush1.msra.mxu0 0.0
  %4989 = vmatprep.subr.mxu0 0.0
  %4990 = vmatpush1.msra.mxu0 0.0
  %4991 = vmatprep.subr.mxu0 0.0
  %4992 = vmatpush1.msra.mxu0 0.0
  %4993 = vmatprep.subr.mxu0 0.0
  %4994 = vmatpush1.msra.mxu0 0.0
  %4995 = vmatprep.subr.mxu0 0.0
  %4996 = vmatpush1.msra.mxu0 0.0
  %4997 = vmatprep.subr.mxu0 0.0
  %4998 = vmatpush1.msra.mxu0 0.0
  %4999 = vmatprep.mubr.f32.mxu0 0.0
  %5000 = vmatmul.mubr.f32.gmra.mrb[0].mxu0 %v4933
  %v5001 = vpop.f32.mrb[0].mxu0
  %v5002 = vadd.f32 %v39, %v5001
  %v5003 = vpop.f32.mrb[0].mxu0
  %5004 = vdwg.mxu0
  %v5005 = vmul.f32 %v5002, 0.5
  %v5006 = vtanh.pop %v5005
  %v5007 = vmul.f32 %v5006, 0.5
  %v5008 = vadd.f32 %v5007, 0.5
  %v5009 = vtanh.pop %v5002
  %v5010 = vmul.f32 %v5008, %v4285
  %5012 = vrot.lane.b32.xlu0 %v5009, 112
  %v5013 = vpop.permute.xlu0 %5012
  %v5015 = vmul.f32 %v5008, %v5013
  %5017 = vrot.lane.b32.xlu0 %v5015, 8
  %v5018 = vpop.permute.xlu0 %5017
  %v5020 = vadd.f32 %v5010, %v5018
  %v5021 = vtanh.pop %v5020
  %5023 = vrot.lane.b32.xlu0 %v5021, 16
  %v5024 = vpop.permute.xlu0 %5023
  %v5026 = vmul.f32 %v5008, %v5024
  %5028 = vrot.lane.b32.xlu0 %v5026, 104
  %v5029 = vpop.permute.xlu0 %5028
  %v5030 = vsel %vm364, %v5029, 0
  %5032 = vmatprep.subr.mxu0 0.0
  %5033 = vmatpush1.msra.mxu0 %v42
  %5034 = vmatprep.subr.mxu0 0.0
  %5035 = vmatpush1.msra.mxu0 0.0
  %5036 = vmatprep.subr.mxu0 0.0
  %5037 = vmatpush1.msra.mxu0 0.0
  %5038 = vmatprep.subr.mxu0 0.0
  %5039 = vmatpush1.msra.mxu0 0.0
  %5040 = vmatprep.subr.mxu0 0.0
  %5041 = vmatpush1.msra.mxu0 0.0
  %5042 = vmatprep.subr.mxu0 0.0
  %5043 = vmatpush1.msra.mxu0 0.0
  %5044 = vmatprep.subr.mxu0 0.0
  %5045 = vmatpush1.msra.mxu0 0.0
  %5046 = vmatprep.subr.mxu0 0.0
  %5047 = vmatpush1.msra.mxu0 0.0
  %5048 = vmatprep.subr.mxu0 0.0
  %5049 = vmatpush1.msra.mxu0 0.0
  %5050 = vmatprep.subr.mxu0 0.0
  %5051 = vmatpush1.msra.mxu0 0.0
  %5052 = vmatprep.subr.mxu0 0.0
  %5053 = vmatpush1.msra.mxu0 0.0
  %5054 = vmatprep.subr.mxu0 0.0
  %5055 = vmatpush1.msra.mxu0 0.0
  %5056 = vmatprep.subr.mxu0 0.0
  %5057 = vmatpush1.msra.mxu0 0.0
  %5058 = vmatprep.subr.mxu0 0.0
  %5059 = vmatpush1.msra.mxu0 0.0
  %5060 = vmatprep.subr.mxu0 0.0
  %5061 = vmatpush1.msra.mxu0 0.0
  %5062 = vmatprep.subr.mxu0 0.0
  %5063 = vmatpush1.msra.mxu0 0.0
  %5064 = vmatprep.subr.mxu0 0.0
  %5065 = vmatpush1.msra.mxu0 0.0
  %5066 = vmatprep.subr.mxu0 0.0
  %5067 = vmatpush1.msra.mxu0 0.0
  %5068 = vmatprep.subr.mxu0 0.0
  %5069 = vmatpush1.msra.mxu0 0.0
  %5070 = vmatprep.subr.mxu0 0.0
  %5071 = vmatpush1.msra.mxu0 0.0
  %5072 = vmatprep.subr.mxu0 0.0
  %5073 = vmatpush1.msra.mxu0 0.0
  %5074 = vmatprep.subr.mxu0 0.0
  %5075 = vmatpush1.msra.mxu0 0.0
  %5076 = vmatprep.subr.mxu0 0.0
  %5077 = vmatpush1.msra.mxu0 0.0
  %5078 = vmatprep.subr.mxu0 0.0
  %5079 = vmatpush1.msra.mxu0 0.0
  %5080 = vmatprep.subr.mxu0 0.0
  %5081 = vmatpush1.msra.mxu0 0.0
  %5082 = vmatprep.subr.mxu0 0.0
  %5083 = vmatpush1.msra.mxu0 0.0
  %5084 = vmatprep.subr.mxu0 0.0
  %5085 = vmatpush1.msra.mxu0 0.0
  %5086 = vmatprep.subr.mxu0 0.0
  %5087 = vmatpush1.msra.mxu0 0.0
  %5088 = vmatprep.subr.mxu0 0.0
  %5089 = vmatpush1.msra.mxu0 0.0
  %5090 = vmatprep.subr.mxu0 0.0
  %5091 = vmatpush1.msra.mxu0 0.0
  %5092 = vmatprep.subr.mxu0 0.0
  %5093 = vmatpush1.msra.mxu0 0.0
  %5094 = vmatprep.subr.mxu0 0.0
  %5095 = vmatpush1.msra.mxu0 0.0
  %5096 = vmatprep.mubr.f32.mxu0 0.0
  %5097 = vmatmul.mubr.f32.gmra.mrb[0].mxu0 %v5030
  %v5098 = vpop.f32.mrb[0].mxu0
  %v5099 = vadd.f32 0.0, %v5098
  %v5100 = vpop.f32.mrb[0].mxu0
  %5101 = vdwg.mxu0
  %v5102 = vadd.f32 %v1232, %v5099
  %v5103 = vsub.f32 %v5099, %v1413
  %v5105 = vcombine.high %v5102, %v5102
  %v5107 = vunpack.c.l.s4 1966171168
  %v5108 = vunpack.c.0.s8 %v5107
  %v5109 = vlaneseq
  %v5110 = vshrl.u32 %v5109, 7
  %v5111 = vsub.s32 %v5108, %v5110
  %v5112 = vrot.slane %v5102, %v5111
  %v5114 = vunpack.c.l.s4 1966171168
  %v5115 = vunpack.c.0.s8 %v5114
  %v5116 = vlaneseq
  %v5117 = vshrl.u32 %v5116, 7
  %v5118 = vsub.s32 %v5115, %v5117
  %v5119 = vrot.slane %v5105, %v5118
  %v5120 = vcombine.high %v5112, %v5112
  %v5121 = vcombine.high %v5119, %v5119
  %v5123 = vunpack.c.l.s4 1966171168
  %v5124 = vunpack.c.0.s8 %v5123
  %v5125 = vlaneseq
  %v5126 = vshrl.u32 %v5125, 7
  %v5127 = vsub.s32 %v5124, %v5126
  %v5128 = vrot.slane %v5112, %v5127
  %v5130 = vunpack.c.l.s4 1966171168
  %v5131 = vunpack.c.0.s8 %v5130
  %v5132 = vlaneseq
  %v5133 = vshrl.u32 %v5132, 7
  %v5134 = vsub.s32 %v5131, %v5133
  %v5135 = vrot.slane %v5119, %v5134
  %v5137 = vunpack.c.l.s4 1966171168
  %v5138 = vunpack.c.0.s8 %v5137
  %v5139 = vlaneseq
  %v5140 = vshrl.u32 %v5139, 7
  %v5141 = vsub.s32 %v5138, %v5140
  %v5142 = vrot.slane %v5120, %v5141
  %v5144 = vunpack.c.l.s4 1966171168
  %v5145 = vunpack.c.0.s8 %v5144
  %v5146 = vlaneseq
  %v5147 = vshrl.u32 %v5146, 7
  %v5148 = vsub.s32 %v5145, %v5147
  %v5149 = vrot.slane %v5121, %v5148
  %v5150 = vcombine.high %v5128, %v5128
  %v5151 = vcombine.high %v5135, %v5135
  %v5152 = vcombine.high %v5142, %v5142
  %v5153 = vcombine.high %v5149, %v5149
  %v5154 = vlaneseq
  %v5155 = vshrl.u32 %v5154, 7
  %v5156 = vsub.s32 0, %v5155
  %v5157 = vrot.slane %v5128, %v5156
  %v5158 = vlaneseq
  %v5159 = vshrl.u32 %v5158, 7
  %v5160 = vsub.s32 0, %v5159
  %v5161 = vrot.slane %v5142, %v5160
  %v5162 = vlaneseq
  %v5163 = vshrl.u32 %v5162, 7
  %v5164 = vsub.s32 0, %v5163
  %v5165 = vrot.slane %v5150, %v5164
  %v5166 = vlaneseq
  %v5167 = vshrl.u32 %v5166, 7
  %v5168 = vsub.s32 0, %v5167
  %v5169 = vrot.slane %v5152, %v5168
  %v5170 = vlaneseq
  %v5171 = vshrl.u32 %v5170, 7
  %v5172 = vsub.s32 0, %v5171
  %v5173 = vrot.slane %v5135, %v5172
  %v5174 = vlaneseq
  %v5175 = vshrl.u32 %v5174, 7
  %v5176 = vsub.s32 0, %v5175
  %v5177 = vrot.slane %v5149, %v5176
  %v5178 = vlaneseq
  %v5179 = vshrl.u32 %v5178, 7
  %v5180 = vsub.s32 0, %v5179
  %v5181 = vrot.slane %v5151, %v5180
  %v5182 = vlaneseq
  %v5183 = vshrl.u32 %v5182, 7
  %v5184 = vsub.s32 0, %v5183
  %v5185 = vrot.slane %v5153, %v5184
  %5195 = vrot.lane.b32.xlu0 %v5103, 64
  %v5196 = vpop.permute.xlu0 %5195
  %v5198 = vadd.f32 %v5157, %v5196
  %v5199 = vadd.f32 %v5161, %v5196
  %v5200 = vadd.f32 %v5165, %v5196
  %v5201 = vadd.f32 %v5169, %v5196
  %v5202 = vadd.f32 %v5173, %v5196
  %v5203 = vadd.f32 %v5177, %v5196
  %v5204 = vadd.f32 %v5181, %v5196
  %v5205 = vadd.f32 %v5185, %v5196
  %v5206 = vmax.f32 %v5198, 0.0
  %v5207 = vmax.f32 %v5199, 0.0
  %v5208 = vmax.f32 %v5200, 0.0
  %v5209 = vmax.f32 %v5201, 0.0
  %v5210 = vmax.f32 %v5202, 0.0
  %v5211 = vmax.f32 %v5203, 0.0
  %v5212 = vmax.f32 %v5204, 0.0
  %v5213 = vmax.f32 %v5205, 0.0
  %v5215 = vsel %vm1526, %v5206, 0
  %v5218 = vsel %vm1526, %v5207, 0
  %v5221 = vsel %vm1526, %v5208, 0
  %v5224 = vsel %vm1526, %v5209, 0
  %v5227 = vsel %vm1526, %v5210, 0
  %v5230 = vsel %vm1526, %v5211, 0
  %v5233 = vsel %vm1526, %v5212, 0
  %v5236 = vsel %vm1526, %v5213, 0
  %5238 = vmatprep.subr.mxu0 0.0
  %5239 = vmatpush1.msra.mxu0 %v43
  %5240 = vmatprep.subr.mxu0 0.0
  %5241 = vmatpush1.msra.mxu0 %v44
  %5242 = vmatprep.subr.mxu0 0.0
  %5243 = vmatpush1.msra.mxu0 %v45
  %5244 = vmatprep.subr.mxu0 0.0
  %5245 = vmatpush1.msra.mxu0 %v46
  %5246 = vmatprep.subr.mxu0 0.0
  %5247 = vmatpush1.msra.mxu0 %v47
  %5248 = vmatprep.subr.mxu0 0.0
  %5249 = vmatpush1.msra.mxu0 %v48
  %5250 = vmatprep.subr.mxu0 0.0
  %5251 = vmatpush1.msra.mxu0 %v49
  %5252 = vmatprep.subr.mxu0 0.0
  %5253 = vmatpush1.msra.mxu0 %v50
  %5254 = vmatprep.subr.mxu0 0.0
  %5255 = vmatpush1.msra.mxu0 0.0
  %5256 = vmatprep.subr.mxu0 0.0
  %5257 = vmatpush1.msra.mxu0 0.0
  %5258 = vmatprep.subr.mxu0 0.0
  %5259 = vmatpush1.msra.mxu0 0.0
  %5260 = vmatprep.subr.mxu0 0.0
  %5261 = vmatpush1.msra.mxu0 0.0
  %5262 = vmatprep.subr.mxu0 0.0
  %5263 = vmatpush1.msra.mxu0 0.0
  %5264 = vmatprep.subr.mxu0 0.0
  %5265 = vmatpush1.msra.mxu0 0.0
  %5266 = vmatprep.subr.mxu0 0.0
  %5267 = vmatpush1.msra.mxu0 0.0
  %5268 = vmatprep.subr.mxu0 0.0
  %5269 = vmatpush1.msra.mxu0 0.0
  %5270 = vmatprep.subr.mxu0 0.0
  %5271 = vmatpush1.msra.mxu0 0.0
  %5272 = vmatprep.subr.mxu0 0.0
  %5273 = vmatpush1.msra.mxu0 0.0
  %5274 = vmatprep.subr.mxu0 0.0
  %5275 = vmatpush1.msra.mxu0 0.0
  %5276 = vmatprep.subr.mxu0 0.0
  %5277 = vmatpush1.msra.mxu0 0.0
  %5278 = vmatprep.subr.mxu0 0.0
  %5279 = vmatpush1.msra.mxu0 0.0
  %5280 = vmatprep.subr.mxu0 0.0
  %5281 = vmatpush1.msra.mxu0 0.0
  %5282 = vmatprep.subr.mxu0 0.0
  %5283 = vmatpush1.msra.mxu0 0.0
  %5284 = vmatprep.subr.mxu0 0.0
  %5285 = vmatpush1.msra.mxu0 0.0
  %5286 = vmatprep.subr.mxu0 0.0
  %5287 = vmatpush1.msra.mxu0 0.0
  %5288 = vmatprep.subr.mxu0 0.0
  %5289 = vmatpush1.msra.mxu0 0.0
  %5290 = vmatprep.subr.mxu0 0.0
  %5291 = vmatpush1.msra.mxu0 0.0
  %5292 = vmatprep.subr.mxu0 0.0
  %5293 = vmatpush1.msra.mxu0 0.0
  %5294 = vmatprep.subr.mxu0 0.0
  %5295 = vmatpush1.msra.mxu0 0.0
  %5296 = vmatprep.subr.mxu0 0.0
  %5297 = vmatpush1.msra.mxu0 0.0
  %5298 = vmatprep.subr.mxu0 0.0
  %5299 = vmatpush1.msra.mxu0 0.0
  %5300 = vmatprep.subr.mxu0 0.0
  %5301 = vmatpush1.msra.mxu0 0.0
  %5302 = vmatprep.mubr.f32.mxu0 0.0
  %5303 = vmatmul.mubr.f32.gmra.mrb[0].mxu0 %v5215
  %v5304 = vpop.f32.mrb[0].mxu0
  %v5305 = vadd.f32 %v55, %v5304
  %v5306 = vpop.f32.mrb[0].mxu0
  %5307 = vmatprep.mubr.f32.mxu0 0.0
  %5308 = vmatmul.mubr.f32.gmra.mrb[0].mxu0 %v5218
  %v5309 = vpop.f32.mrb[0].mxu0
  %v5310 = vadd.f32 %v55, %v5309
  %v5311 = vpop.f32.mrb[0].mxu0
  %5312 = vmatprep.mubr.f32.mxu0 0.0
  %5313 = vmatmul.mubr.f32.gmra.mrb[0].mxu0 %v5221
  %v5314 = vpop.f32.mrb[0].mxu0
  %v5315 = vadd.f32 %v55, %v5314
  %v5316 = vpop.f32.mrb[0].mxu0
  %5317 = vmatprep.mubr.f32.mxu0 0.0
  %5318 = vmatmul.mubr.f32.gmra.mrb[0].mxu0 %v5224
  %v5319 = vpop.f32.mrb[0].mxu0
  %v5320 = vadd.f32 %v55, %v5319
  %v5321 = vpop.f32.mrb[0].mxu0
  %5322 = vmatprep.mubr.f32.mxu0 0.0
  %5323 = vmatmul.mubr.f32.gmra.mrb[0].mxu0 %v5227
  %v5324 = vpop.f32.mrb[0].mxu0
  %v5325 = vadd.f32 %v55, %v5324
  %v5326 = vpop.f32.mrb[0].mxu0
  %5327 = vmatprep.mubr.f32.mxu0 0.0
  %5328 = vmatmul.mubr.f32.gmra.mrb[0].mxu0 %v5230
  %v5329 = vpop.f32.mrb[0].mxu0
  %v5330 = vadd.f32 %v55, %v5329
  %v5331 = vpop.f32.mrb[0].mxu0
  %5332 = vmatprep.mubr.f32.mxu0 0.0
  %5333 = vmatmul.mubr.f32.gmra.mrb[0].mxu0 %v5233
  %v5334 = vpop.f32.mrb[0].mxu0
  %v5335 = vadd.f32 %v55, %v5334
  %v5336 = vpop.f32.mrb[0].mxu0
  %5337 = vmatprep.mubr.f32.mxu0 0.0
  %5338 = vmatmul.mubr.f32.gmra.mrb[0].mxu0 %v5236
  %v5339 = vpop.f32.mrb[0].mxu0
  %v5340 = vadd.f32 %v55, %v5339
  %v5341 = vpop.f32.mrb[0].mxu0
  %5342 = vdwg.mxu0
  %v5343 = vmax.f32 %v5305, 0.0
  %v5344 = vmax.f32 %v5310, 0.0
  %v5345 = vmax.f32 %v5315, 0.0
  %v5346 = vmax.f32 %v5320, 0.0
  %v5347 = vmax.f32 %v5325, 0.0
  %v5348 = vmax.f32 %v5330, 0.0
  %v5349 = vmax.f32 %v5335, 0.0
  %v5350 = vmax.f32 %v5340, 0.0
  %s5351 = scalar_lea.vmem %s2, 40
  %v5352 = vld [vmem:[%s5351] sm:$0xff]
  %v5353 = vlaneseq
  %v5354 = vshrl.u32 %v5353, 7
  %v5355 = vsub.s32 0, %v5354
  %v5356 = vrot.slane %v5352, %v5355
  %5358 = vbcast.lane.b32.xlu0 %v5356, 256
  %v5359 = vpop.permute.xlu0 %5358
  %v5360 = vlaneseq
  %v5361 = vshrl.u32 %v5360, 7
  %v5362 = vsub.s32 1, %v5361
  %v5363 = vrot.slane %v5352, %v5362
  %5365 = vbcast.lane.b32.xlu0 %v5363, 256
  %v5366 = vpop.permute.xlu0 %5365
  %v5367 = vlaneseq
  %v5368 = vshrl.u32 %v5367, 7
  %v5369 = vsub.s32 2, %v5368
  %v5370 = vrot.slane %v5352, %v5369
  %5372 = vbcast.lane.b32.xlu0 %v5370, 256
  %v5373 = vpop.permute.xlu0 %5372
  %v5374 = vlaneseq
  %v5375 = vshrl.u32 %v5374, 7
  %v5376 = vsub.s32 3, %v5375
  %v5377 = vrot.slane %v5352, %v5376
  %5379 = vbcast.lane.b32.xlu0 %v5377, 256
  %v5380 = vpop.permute.xlu0 %5379
  %v5381 = vlaneseq
  %v5382 = vshrl.u32 %v5381, 7
  %v5383 = vsub.s32 4, %v5382
  %v5384 = vrot.slane %v5352, %v5383
  %5386 = vbcast.lane.b32.xlu0 %v5384, 256
  %v5387 = vpop.permute.xlu0 %5386
  %v5388 = vlaneseq
  %v5389 = vshrl.u32 %v5388, 7
  %v5390 = vsub.s32 5, %v5389
  %v5391 = vrot.slane %v5352, %v5390
  %5393 = vbcast.lane.b32.xlu0 %v5391, 256
  %v5394 = vpop.permute.xlu0 %5393
  %v5395 = vlaneseq
  %v5396 = vshrl.u32 %v5395, 7
  %v5397 = vsub.s32 6, %v5396
  %v5398 = vrot.slane %v5352, %v5397
  %5400 = vbcast.lane.b32.xlu0 %v5398, 256
  %v5401 = vpop.permute.xlu0 %5400
  %v5402 = vlaneseq
  %v5403 = vshrl.u32 %v5402, 7
  %v5404 = vsub.s32 7, %v5403
  %v5405 = vrot.slane %v5352, %v5404
  %5407 = vbcast.lane.b32.xlu0 %v5405, 256
  %v5408 = vpop.permute.xlu0 %5407
  %v5409 = vmul.f32 %v5343, %v5359
  %v5410 = vmul.f32 %v5344, %v5366
  %v5411 = vmul.f32 %v5345, %v5373
  %v5412 = vmul.f32 %v5346, %v5380
  %v5413 = vmul.f32 %v5347, %v5387
  %v5414 = vmul.f32 %v5348, %v5394
  %v5415 = vmul.f32 %v5349, %v5401
  %v5416 = vmul.f32 %v5350, %v5408
  %v5417 = vsel %vm364, %v5409, -inf
  %v5418 = vrot.slane %v5417, 4
  %v5419 = vmax.f32 %v5417, %v5418
  %v5420 = vrot.slane %v5419, 2
  %v5421 = vmax.f32 %v5419, %v5420
  %v5422 = vrot.slane %v5421, 1
  %v5423 = vmax.f32 %v5421, %v5422
  %v5424 = vsel %vm364, %v5410, -inf
  %v5425 = vrot.slane %v5424, 4
  %v5426 = vmax.f32 %v5424, %v5425
  %v5427 = vrot.slane %v5426, 2
  %v5428 = vmax.f32 %v5426, %v5427
  %v5429 = vrot.slane %v5428, 1
  %v5430 = vmax.f32 %v5428, %v5429
  %v5431 = vsel %vm364, %v5411, -inf
  %v5432 = vrot.slane %v5431, 4
  %v5433 = vmax.f32 %v5431, %v5432
  %v5434 = vrot.slane %v5433, 2
  %v5435 = vmax.f32 %v5433, %v5434
  %v5436 = vrot.slane %v5435, 1
  %v5437 = vmax.f32 %v5435, %v5436
  %v5438 = vsel %vm364, %v5412, -inf
  %v5439 = vrot.slane %v5438, 4
  %v5440 = vmax.f32 %v5438, %v5439
  %v5441 = vrot.slane %v5440, 2
  %v5442 = vmax.f32 %v5440, %v5441
  %v5443 = vrot.slane %v5442, 1
  %v5444 = vmax.f32 %v5442, %v5443
  %v5445 = vsel %vm364, %v5413, -inf
  %v5446 = vrot.slane %v5445, 4
  %v5447 = vmax.f32 %v5445, %v5446
  %v5448 = vrot.slane %v5447, 2
  %v5449 = vmax.f32 %v5447, %v5448
  %v5450 = vrot.slane %v5449, 1
  %v5451 = vmax.f32 %v5449, %v5450
  %v5452 = vsel %vm364, %v5414, -inf
  %v5453 = vrot.slane %v5452, 4
  %v5454 = vmax.f32 %v5452, %v5453
  %v5455 = vrot.slane %v5454, 2
  %v5456 = vmax.f32 %v5454, %v5455
  %v5457 = vrot.slane %v5456, 1
  %v5458 = vmax.f32 %v5456, %v5457
  %v5459 = vsel %vm364, %v5415, -inf
  %v5460 = vrot.slane %v5459, 4
  %v5461 = vmax.f32 %v5459, %v5460
  %v5462 = vrot.slane %v5461, 2
  %v5463 = vmax.f32 %v5461, %v5462
  %v5464 = vrot.slane %v5463, 1
  %v5465 = vmax.f32 %v5463, %v5464
  %v5466 = vsel %vm364, %v5416, -inf
  %v5467 = vrot.slane %v5466, 4
  %v5468 = vmax.f32 %v5466, %v5467
  %v5469 = vrot.slane %v5468, 2
  %v5470 = vmax.f32 %v5468, %v5469
  %v5471 = vrot.slane %v5470, 1
  %v5472 = vmax.f32 %v5470, %v5471
  %v5482 = vsel %vm1794, %v5430, %v5423
  %v5483 = vsel %vm1796, %v5437, %v5482
  %v5484 = vsel %vm1798, %v5444, %v5483
  %v5485 = vsel %vm1800, %v5451, %v5484
  %v5486 = vsel %vm1802, %v5458, %v5485
  %v5487 = vsel %vm1804, %v5465, %v5486
  %v5488 = vsel %vm1806, %v5472, %v5487
  %5489 = vrot.lane.b32.xlu0 %v5488, 8
  %v5490 = vpop.permute.xlu0 %5489
  %v5492 = vsel %vm364, %v5029, %v5490
  %v5494 = vsel %vm232, %v5492, 0
  %5496 = vmatprep.subr.mxu0 0.0
  %5497 = vmatpush1.msra.mxu0 %v56
  %5498 = vmatprep.subr.mxu0 0.0
  %5499 = vmatpush1.msra.mxu0 %v57
  %5500 = vmatprep.subr.mxu0 0.0
  %5501 = vmatpush1.msra.mxu0 0.0
  %5502 = vmatprep.subr.mxu0 0.0
  %5503 = vmatpush1.msra.mxu0 0.0
  %5504 = vmatprep.subr.mxu0 0.0
  %5505 = vmatpush1.msra.mxu0 0.0
  %5506 = vmatprep.subr.mxu0 0.0
  %5507 = vmatpush1.msra.mxu0 0.0
  %5508 = vmatprep.subr.mxu0 0.0
  %5509 = vmatpush1.msra.mxu0 0.0
  %5510 = vmatprep.subr.mxu0 0.0
  %5511 = vmatpush1.msra.mxu0 0.0
  %5512 = vmatprep.subr.mxu0 0.0
  %5513 = vmatpush1.msra.mxu0 0.0
  %5514 = vmatprep.subr.mxu0 0.0
  %5515 = vmatpush1.msra.mxu0 0.0
  %5516 = vmatprep.subr.mxu0 0.0
  %5517 = vmatpush1.msra.mxu0 0.0
  %5518 = vmatprep.subr.mxu0 0.0
  %5519 = vmatpush1.msra.mxu0 0.0
  %5520 = vmatprep.subr.mxu0 0.0
  %5521 = vmatpush1.msra.mxu0 0.0
  %5522 = vmatprep.subr.mxu0 0.0
  %5523 = vmatpush1.msra.mxu0 0.0
  %5524 = vmatprep.subr.mxu0 0.0
  %5525 = vmatpush1.msra.mxu0 0.0
  %5526 = vmatprep.subr.mxu0 0.0
  %5527 = vmatpush1.msra.mxu0 0.0
  %5528 = vmatprep.subr.mxu0 0.0
  %5529 = vmatpush1.msra.mxu0 0.0
  %5530 = vmatprep.subr.mxu0 0.0
  %5531 = vmatpush1.msra.mxu0 0.0
  %5532 = vmatprep.subr.mxu0 0.0
  %5533 = vmatpush1.msra.mxu0 0.0
  %5534 = vmatprep.subr.mxu0 0.0
  %5535 = vmatpush1.msra.mxu0 0.0
  %5536 = vmatprep.subr.mxu0 0.0
  %5537 = vmatpush1.msra.mxu0 0.0
  %5538 = vmatprep.subr.mxu0 0.0
  %5539 = vmatpush1.msra.mxu0 0.0
  %5540 = vmatprep.subr.mxu0 0.0
  %5541 = vmatpush1.msra.mxu0 0.0
  %5542 = vmatprep.subr.mxu0 0.0
  %5543 = vmatpush1.msra.mxu0 0.0
  %5544 = vmatprep.subr.mxu0 0.0
  %5545 = vmatpush1.msra.mxu0 0.0
  %5546 = vmatprep.subr.mxu0 0.0
  %5547 = vmatpush1.msra.mxu0 0.0
  %5548 = vmatprep.subr.mxu0 0.0
  %5549 = vmatpush1.msra.mxu0 0.0
  %5550 = vmatprep.subr.mxu0 0.0
  %5551 = vmatpush1.msra.mxu0 0.0
  %5552 = vmatprep.subr.mxu0 0.0
  %5553 = vmatpush1.msra.mxu0 0.0
  %5554 = vmatprep.subr.mxu0 0.0
  %5555 = vmatpush1.msra.mxu0 0.0
  %5556 = vmatprep.subr.mxu0 0.0
  %5557 = vmatpush1.msra.mxu0 0.0
  %5558 = vmatprep.subr.mxu0 0.0
  %5559 = vmatpush1.msra.mxu0 0.0
  %5560 = vmatprep.mubr.f32.mxu0 0.0
  %5561 = vmatmul.mubr.f32.gmra.mrb[0].mxu0 %v5494
  %v5562 = vpop.f32.mrb[0].mxu0
  %v5563 = vadd.f32 0.0, %v5562
  %v5564 = vpop.f32.mrb[0].mxu0
  %5565 = vdwg.mxu0
  %v5566 = vadd.f32 %v5563, %v62
  %s5567 = scalar_lea.vmem %s7, 40
  %5568 = vst.msk [vmem:[%s5567] sm:$0xff] %vm1886, %v5566
  %s5569 = scalar_lea.vmem %s5, 40
  %v5570 = vld [vmem:[%s5569] sm:$0xff]
  %v5571 = vmul.f32 %v5566, 0.5
  %v5572 = vmul.f32 %v5571, 1.442695
  %v5573 = vpow.pop %v5572
  %5575 = vrot.lane.b32.xlu0 %v5573, 126
  %v5576 = vpop.permute.xlu0 %5575
  %v5578 = vmul.f32 %v5570, %v5576
  %v5579 = vadd.f32 %v5563, %v1899
  %v5581 = vsel %vm86, %v5578, 0
  %5583 = vmatprep.subr.mxu0 0.0
  %5584 = vmatpush1.msra.mxu0 %v1906
  %5585 = vmatprep.subr.mxu0 0.0
  %5586 = vmatpush1.msra.mxu0 0.0
  %5587 = vmatprep.subr.mxu0 0.0
  %5588 = vmatpush1.msra.mxu0 0.0
  %5589 = vmatprep.subr.mxu0 0.0
  %5590 = vmatpush1.msra.mxu0 0.0
  %5591 = vmatprep.subr.mxu0 0.0
  %5592 = vmatpush1.msra.mxu0 0.0
  %5593 = vmatprep.subr.mxu0 0.0
  %5594 = vmatpush1.msra.mxu0 0.0
  %5595 = vmatprep.subr.mxu0 0.0
  %5596 = vmatpush1.msra.mxu0 0.0
  %5597 = vmatprep.subr.mxu0 0.0
  %5598 = vmatpush1.msra.mxu0 0.0
  %5599 = vmatprep.subr.mxu0 0.0
  %5600 = vmatpush1.msra.mxu0 0.0
  %5601 = vmatprep.subr.mxu0 0.0
  %5602 = vmatpush1.msra.mxu0 0.0
  %5603 = vmatprep.subr.mxu0 0.0
  %5604 = vmatpush1.msra.mxu0 0.0
  %5605 = vmatprep.subr.mxu0 0.0
  %5606 = vmatpush1.msra.mxu0 0.0
  %5607 = vmatprep.subr.mxu0 0.0
  %5608 = vmatpush1.msra.mxu0 0.0
  %5609 = vmatprep.subr.mxu0 0.0
  %5610 = vmatpush1.msra.mxu0 0.0
  %5611 = vmatprep.subr.mxu0 0.0
  %5612 = vmatpush1.msra.mxu0 0.0
  %5613 = vmatprep.subr.mxu0 0.0
  %5614 = vmatpush1.msra.mxu0 0.0
  %5615 = vmatprep.subr.mxu0 0.0
  %5616 = vmatpush1.msra.mxu0 0.0
  %5617 = vmatprep.subr.mxu0 0.0
  %5618 = vmatpush1.msra.mxu0 0.0
  %5619 = vmatprep.subr.mxu0 0.0
  %5620 = vmatpush1.msra.mxu0 0.0
  %5621 = vmatprep.subr.mxu0 0.0
  %5622 = vmatpush1.msra.mxu0 0.0
  %5623 = vmatprep.subr.mxu0 0.0
  %5624 = vmatpush1.msra.mxu0 0.0
  %5625 = vmatprep.subr.mxu0 0.0
  %5626 = vmatpush1.msra.mxu0 0.0
  %5627 = vmatprep.subr.mxu0 0.0
  %5628 = vmatpush1.msra.mxu0 0.0
  %5629 = vmatprep.subr.mxu0 0.0
  %5630 = vmatpush1.msra.mxu0 0.0
  %5631 = vmatprep.subr.mxu0 0.0
  %5632 = vmatpush1.msra.mxu0 0.0
  %5633 = vmatprep.subr.mxu0 0.0
  %5634 = vmatpush1.msra.mxu0 0.0
  %5635 = vmatprep.subr.mxu0 0.0
  %5636 = vmatpush1.msra.mxu0 0.0
  %5637 = vmatprep.subr.mxu0 0.0
  %5638 = vmatpush1.msra.mxu0 0.0
  %5639 = vmatprep.subr.mxu0 0.0
  %5640 = vmatpush1.msra.mxu0 0.0
  %5641 = vmatprep.subr.mxu0 0.0
  %5642 = vmatpush1.msra.mxu0 0.0
  %5643 = vmatprep.subr.mxu0 0.0
  %5644 = vmatpush1.msra.mxu0 0.0
  %5645 = vmatprep.subr.mxu0 0.0
  %5646 = vmatpush1.msra.mxu0 0.0
  %5647 = vmatprep.mubr.f32.mxu0 0.0
  %5648 = vmatmul.mubr.f32.gmra.mrb[0].mxu0 %v5581
  %v5649 = vpop.f32.mrb[0].mxu0
  %v5650 = vadd.f32 0.0, %v5649
  %v5651 = vpop.f32.mrb[0].mxu0
  %5652 = vdwg.mxu0
  %5654 = vrot.lane.b32.xlu0 %v5650, 4
  %v5655 = vpop.permute.xlu0 %5654
  %v5657 = vadd.f32 %v5579, %v5655
  %v5658 = vmax.f32 %v5657, 0.0
  %5660 = vrot.lane.b32.xlu0 %v5658, 124
  %v5661 = vpop.permute.xlu0 %5660
  %5663 = vrot.lane.b32.xlu0 %v5026, 120
  %v5664 = vpop.permute.xlu0 %5663
  %v5666 = vsel %vm232, %v5661, %v5664
  %v5668 = vsel %vm1239, %v5666, 0
  %5670 = vmatprep.subr.mxu0 0.0
  %5671 = vmatpush1.msra.mxu0 %v32
  %5672 = vmatprep.subr.mxu0 0.0
  %5673 = vmatpush1.msra.mxu0 %v33
  %5674 = vmatprep.subr.mxu0 0.0
  %5675 = vmatpush1.msra.mxu0 %v34
  %5676 = vmatprep.subr.mxu0 0.0
  %5677 = vmatpush1.msra.mxu0 0.0
  %5678 = vmatprep.subr.mxu0 0.0
  %5679 = vmatpush1.msra.mxu0 0.0
  %5680 = vmatprep.subr.mxu0 0.0
  %5681 = vmatpush1.msra.mxu0 0.0
  %5682 = vmatprep.subr.mxu0 0.0
  %5683 = vmatpush1.msra.mxu0 0.0
  %5684 = vmatprep.subr.mxu0 0.0
  %5685 = vmatpush1.msra.mxu0 0.0
  %5686 = vmatprep.subr.mxu0 0.0
  %5687 = vmatpush1.msra.mxu0 0.0
  %5688 = vmatprep.subr.mxu0 0.0
  %5689 = vmatpush1.msra.mxu0 0.0
  %5690 = vmatprep.subr.mxu0 0.0
  %5691 = vmatpush1.msra.mxu0 0.0
  %5692 = vmatprep.subr.mxu0 0.0
  %5693 = vmatpush1.msra.mxu0 0.0
  %5694 = vmatprep.subr.mxu0 0.0
  %5695 = vmatpush1.msra.mxu0 0.0
  %5696 = vmatprep.subr.mxu0 0.0
  %5697 = vmatpush1.msra.mxu0 0.0
  %5698 = vmatprep.subr.mxu0 0.0
  %5699 = vmatpush1.msra.mxu0 0.0
  %5700 = vmatprep.subr.mxu0 0.0
  %5701 = vmatpush1.msra.mxu0 0.0
  %5702 = vmatprep.subr.mxu0 0.0
  %5703 = vmatpush1.msra.mxu0 0.0
  %5704 = vmatprep.subr.mxu0 0.0
  %5705 = vmatpush1.msra.mxu0 0.0
  %5706 = vmatprep.subr.mxu0 0.0
  %5707 = vmatpush1.msra.mxu0 0.0
  %5708 = vmatprep.subr.mxu0 0.0
  %5709 = vmatpush1.msra.mxu0 0.0
  %5710 = vmatprep.subr.mxu0 0.0
  %5711 = vmatpush1.msra.mxu0 0.0
  %5712 = vmatprep.subr.mxu0 0.0
  %5713 = vmatpush1.msra.mxu0 0.0
  %5714 = vmatprep.subr.mxu0 0.0
  %5715 = vmatpush1.msra.mxu0 0.0
  %5716 = vmatprep.subr.mxu0 0.0
  %5717 = vmatpush1.msra.mxu0 0.0
  %5718 = vmatprep.subr.mxu0 0.0
  %5719 = vmatpush1.msra.mxu0 0.0
  %5720 = vmatprep.subr.mxu0 0.0
  %5721 = vmatpush1.msra.mxu0 0.0
  %5722 = vmatprep.subr.mxu0 0.0
  %5723 = vmatpush1.msra.mxu0 0.0
  %5724 = vmatprep.subr.mxu0 0.0
  %5725 = vmatpush1.msra.mxu0 0.0
  %5726 = vmatprep.subr.mxu0 0.0
  %5727 = vmatpush1.msra.mxu0 0.0
  %5728 = vmatprep.subr.mxu0 0.0
  %5729 = vmatpush1.msra.mxu0 0.0
  %5730 = vmatprep.subr.mxu0 0.0
  %5731 = vmatpush1.msra.mxu0 0.0
  %5732 = vmatprep.subr.mxu0 0.0
  %5733 = vmatpush1.msra.mxu0 0.0
  %5734 = vmatprep.mubr.f32.mxu0 0.0
  %5735 = vmatmul.mubr.f32.gmra.mrb[0].mxu0 %v5668
  %v5736 = vpop.f32.mrb[0].mxu0
  %v5737 = vadd.f32 %v39, %v5736
  %v5738 = vpop.f32.mrb[0].mxu0
  %5739 = vdwg.mxu0
  %v5740 = vmul.f32 %v5737, 0.5
  %v5741 = vtanh.pop %v5740
  %v5742 = vmul.f32 %v5741, 0.5
  %v5743 = vadd.f32 %v5742, 0.5
  %v5744 = vtanh.pop %v5737
  %v5745 = vmul.f32 %v5743, %v5020
  %5747 = vrot.lane.b32.xlu0 %v5744, 112
  %v5748 = vpop.permute.xlu0 %5747
  %v5750 = vmul.f32 %v5743, %v5748
  %5752 = vrot.lane.b32.xlu0 %v5750, 8
  %v5753 = vpop.permute.xlu0 %5752
  %v5755 = vadd.f32 %v5745, %v5753
  %v5756 = vtanh.pop %v5755
  %5758 = vrot.lane.b32.xlu0 %v5756, 16
  %v5759 = vpop.permute.xlu0 %5758
  %v5761 = vmul.f32 %v5743, %v5759
  %5763 = vrot.lane.b32.xlu0 %v5761, 104
  %v5764 = vpop.permute.xlu0 %5763
  %v5765 = vsel %vm364, %v5764, 0
  %5767 = vmatprep.subr.mxu0 0.0
  %5768 = vmatpush1.msra.mxu0 %v42
  %5769 = vmatprep.subr.mxu0 0.0
  %5770 = vmatpush1.msra.mxu0 0.0
  %5771 = vmatprep.subr.mxu0 0.0
  %5772 = vmatpush1.msra.mxu0 0.0
  %5773 = vmatprep.subr.mxu0 0.0
  %5774 = vmatpush1.msra.mxu0 0.0
  %5775 = vmatprep.subr.mxu0 0.0
  %5776 = vmatpush1.msra.mxu0 0.0
  %5777 = vmatprep.subr.mxu0 0.0
  %5778 = vmatpush1.msra.mxu0 0.0
  %5779 = vmatprep.subr.mxu0 0.0
  %5780 = vmatpush1.msra.mxu0 0.0
  %5781 = vmatprep.subr.mxu0 0.0
  %5782 = vmatpush1.msra.mxu0 0.0
  %5783 = vmatprep.subr.mxu0 0.0
  %5784 = vmatpush1.msra.mxu0 0.0
  %5785 = vmatprep.subr.mxu0 0.0
  %5786 = vmatpush1.msra.mxu0 0.0
  %5787 = vmatprep.subr.mxu0 0.0
  %5788 = vmatpush1.msra.mxu0 0.0
  %5789 = vmatprep.subr.mxu0 0.0
  %5790 = vmatpush1.msra.mxu0 0.0
  %5791 = vmatprep.subr.mxu0 0.0
  %5792 = vmatpush1.msra.mxu0 0.0
  %5793 = vmatprep.subr.mxu0 0.0
  %5794 = vmatpush1.msra.mxu0 0.0
  %5795 = vmatprep.subr.mxu0 0.0
  %5796 = vmatpush1.msra.mxu0 0.0
  %5797 = vmatprep.subr.mxu0 0.0
  %5798 = vmatpush1.msra.mxu0 0.0
  %5799 = vmatprep.subr.mxu0 0.0
  %5800 = vmatpush1.msra.mxu0 0.0
  %5801 = vmatprep.subr.mxu0 0.0
  %5802 = vmatpush1.msra.mxu0 0.0
  %5803 = vmatprep.subr.mxu0 0.0
  %5804 = vmatpush1.msra.mxu0 0.0
  %5805 = vmatprep.subr.mxu0 0.0
  %5806 = vmatpush1.msra.mxu0 0.0
  %5807 = vmatprep.subr.mxu0 0.0
  %5808 = vmatpush1.msra.mxu0 0.0
  %5809 = vmatprep.subr.mxu0 0.0
  %5810 = vmatpush1.msra.mxu0 0.0
  %5811 = vmatprep.subr.mxu0 0.0
  %5812 = vmatpush1.msra.mxu0 0.0
  %5813 = vmatprep.subr.mxu0 0.0
  %5814 = vmatpush1.msra.mxu0 0.0
  %5815 = vmatprep.subr.mxu0 0.0
  %5816 = vmatpush1.msra.mxu0 0.0
  %5817 = vmatprep.subr.mxu0 0.0
  %5818 = vmatpush1.msra.mxu0 0.0
  %5819 = vmatprep.subr.mxu0 0.0
  %5820 = vmatpush1.msra.mxu0 0.0
  %5821 = vmatprep.subr.mxu0 0.0
  %5822 = vmatpush1.msra.mxu0 0.0
  %5823 = vmatprep.subr.mxu0 0.0
  %5824 = vmatpush1.msra.mxu0 0.0
  %5825 = vmatprep.subr.mxu0 0.0
  %5826 = vmatpush1.msra.mxu0 0.0
  %5827 = vmatprep.subr.mxu0 0.0
  %5828 = vmatpush1.msra.mxu0 0.0
  %5829 = vmatprep.subr.mxu0 0.0
  %5830 = vmatpush1.msra.mxu0 0.0
  %5831 = vmatprep.mubr.f32.mxu0 0.0
  %5832 = vmatmul.mubr.f32.gmra.mrb[0].mxu0 %v5765
  %v5833 = vpop.f32.mrb[0].mxu0
  %v5834 = vadd.f32 0.0, %v5833
  %v5835 = vpop.f32.mrb[0].mxu0
  %5836 = vdwg.mxu0
  %v5837 = vadd.f32 %v1232, %v5834
  %v5838 = vsub.f32 %v5834, %v1413
  %v5840 = vcombine.high %v5837, %v5837
  %v5842 = vunpack.c.l.s4 1966171168
  %v5843 = vunpack.c.0.s8 %v5842
  %v5844 = vlaneseq
  %v5845 = vshrl.u32 %v5844, 7
  %v5846 = vsub.s32 %v5843, %v5845
  %v5847 = vrot.slane %v5837, %v5846
  %v5849 = vunpack.c.l.s4 1966171168
  %v5850 = vunpack.c.0.s8 %v5849
  %v5851 = vlaneseq
  %v5852 = vshrl.u32 %v5851, 7
  %v5853 = vsub.s32 %v5850, %v5852
  %v5854 = vrot.slane %v5840, %v5853
  %v5855 = vcombine.high %v5847, %v5847
  %v5856 = vcombine.high %v5854, %v5854
  %v5858 = vunpack.c.l.s4 1966171168
  %v5859 = vunpack.c.0.s8 %v5858
  %v5860 = vlaneseq
  %v5861 = vshrl.u32 %v5860, 7
  %v5862 = vsub.s32 %v5859, %v5861
  %v5863 = vrot.slane %v5847, %v5862
  %v5865 = vunpack.c.l.s4 1966171168
  %v5866 = vunpack.c.0.s8 %v5865
  %v5867 = vlaneseq
  %v5868 = vshrl.u32 %v5867, 7
  %v5869 = vsub.s32 %v5866, %v5868
  %v5870 = vrot.slane %v5854, %v5869
  %v5872 = vunpack.c.l.s4 1966171168
  %v5873 = vunpack.c.0.s8 %v5872
  %v5874 = vlaneseq
  %v5875 = vshrl.u32 %v5874, 7
  %v5876 = vsub.s32 %v5873, %v5875
  %v5877 = vrot.slane %v5855, %v5876
  %v5879 = vunpack.c.l.s4 1966171168
  %v5880 = vunpack.c.0.s8 %v5879
  %v5881 = vlaneseq
  %v5882 = vshrl.u32 %v5881, 7
  %v5883 = vsub.s32 %v5880, %v5882
  %v5884 = vrot.slane %v5856, %v5883
  %v5885 = vcombine.high %v5863, %v5863
  %v5886 = vcombine.high %v5870, %v5870
  %v5887 = vcombine.high %v5877, %v5877
  %v5888 = vcombine.high %v5884, %v5884
  %v5889 = vlaneseq
  %v5890 = vshrl.u32 %v5889, 7
  %v5891 = vsub.s32 0, %v5890
  %v5892 = vrot.slane %v5863, %v5891
  %v5893 = vlaneseq
  %v5894 = vshrl.u32 %v5893, 7
  %v5895 = vsub.s32 0, %v5894
  %v5896 = vrot.slane %v5877, %v5895
  %v5897 = vlaneseq
  %v5898 = vshrl.u32 %v5897, 7
  %v5899 = vsub.s32 0, %v5898
  %v5900 = vrot.slane %v5885, %v5899
  %v5901 = vlaneseq
  %v5902 = vshrl.u32 %v5901, 7
  %v5903 = vsub.s32 0, %v5902
  %v5904 = vrot.slane %v5887, %v5903
  %v5905 = vlaneseq
  %v5906 = vshrl.u32 %v5905, 7
  %v5907 = vsub.s32 0, %v5906
  %v5908 = vrot.slane %v5870, %v5907
  %v5909 = vlaneseq
  %v5910 = vshrl.u32 %v5909, 7
  %v5911 = vsub.s32 0, %v5910
  %v5912 = vrot.slane %v5884, %v5911
  %v5913 = vlaneseq
  %v5914 = vshrl.u32 %v5913, 7
  %v5915 = vsub.s32 0, %v5914
  %v5916 = vrot.slane %v5886, %v5915
  %v5917 = vlaneseq
  %v5918 = vshrl.u32 %v5917, 7
  %v5919 = vsub.s32 0, %v5918
  %v5920 = vrot.slane %v5888, %v5919
  %5930 = vrot.lane.b32.xlu0 %v5838, 64
  %v5931 = vpop.permute.xlu0 %5930
  %v5933 = vadd.f32 %v5892, %v5931
  %v5934 = vadd.f32 %v5896, %v5931
  %v5935 = vadd.f32 %v5900, %v5931
  %v5936 = vadd.f32 %v5904, %v5931
  %v5937 = vadd.f32 %v5908, %v5931
  %v5938 = vadd.f32 %v5912, %v5931
  %v5939 = vadd.f32 %v5916, %v5931
  %v5940 = vadd.f32 %v5920, %v5931
  %v5941 = vmax.f32 %v5933, 0.0
  %v5942 = vmax.f32 %v5934, 0.0
  %v5943 = vmax.f32 %v5935, 0.0
  %v5944 = vmax.f32 %v5936, 0.0
  %v5945 = vmax.f32 %v5937, 0.0
  %v5946 = vmax.f32 %v5938, 0.0
  %v5947 = vmax.f32 %v5939, 0.0
  %v5948 = vmax.f32 %v5940, 0.0
  %v5950 = vsel %vm1526, %v5941, 0
  %v5953 = vsel %vm1526, %v5942, 0
  %v5956 = vsel %vm1526, %v5943, 0
  %v5959 = vsel %vm1526, %v5944, 0
  %v5962 = vsel %vm1526, %v5945, 0
  %v5965 = vsel %vm1526, %v5946, 0
  %v5968 = vsel %vm1526, %v5947, 0
  %v5971 = vsel %vm1526, %v5948, 0
  %5973 = vmatprep.subr.mxu0 0.0
  %5974 = vmatpush1.msra.mxu0 %v43
  %5975 = vmatprep.subr.mxu0 0.0
  %5976 = vmatpush1.msra.mxu0 %v44
  %5977 = vmatprep.subr.mxu0 0.0
  %5978 = vmatpush1.msra.mxu0 %v45
  %5979 = vmatprep.subr.mxu0 0.0
  %5980 = vmatpush1.msra.mxu0 %v46
  %5981 = vmatprep.subr.mxu0 0.0
  %5982 = vmatpush1.msra.mxu0 %v47
  %5983 = vmatprep.subr.mxu0 0.0
  %5984 = vmatpush1.msra.mxu0 %v48
  %5985 = vmatprep.subr.mxu0 0.0
  %5986 = vmatpush1.msra.mxu0 %v49
  %5987 = vmatprep.subr.mxu0 0.0
  %5988 = vmatpush1.msra.mxu0 %v50
  %5989 = vmatprep.subr.mxu0 0.0
  %5990 = vmatpush1.msra.mxu0 0.0
  %5991 = vmatprep.subr.mxu0 0.0
  %5992 = vmatpush1.msra.mxu0 0.0
  %5993 = vmatprep.subr.mxu0 0.0
  %5994 = vmatpush1.msra.mxu0 0.0
  %5995 = vmatprep.subr.mxu0 0.0
  %5996 = vmatpush1.msra.mxu0 0.0
  %5997 = vmatprep.subr.mxu0 0.0
  %5998 = vmatpush1.msra.mxu0 0.0
  %5999 = vmatprep.subr.mxu0 0.0
  %6000 = vmatpush1.msra.mxu0 0.0
  %6001 = vmatprep.subr.mxu0 0.0
  %6002 = vmatpush1.msra.mxu0 0.0
  %6003 = vmatprep.subr.mxu0 0.0
  %6004 = vmatpush1.msra.mxu0 0.0
  %6005 = vmatprep.subr.mxu0 0.0
  %6006 = vmatpush1.msra.mxu0 0.0
  %6007 = vmatprep.subr.mxu0 0.0
  %6008 = vmatpush1.msra.mxu0 0.0
  %6009 = vmatprep.subr.mxu0 0.0
  %6010 = vmatpush1.msra.mxu0 0.0
  %6011 = vmatprep.subr.mxu0 0.0
  %6012 = vmatpush1.msra.mxu0 0.0
  %6013 = vmatprep.subr.mxu0 0.0
  %6014 = vmatpush1.msra.mxu0 0.0
  %6015 = vmatprep.subr.mxu0 0.0
  %6016 = vmatpush1.msra.mxu0 0.0
  %6017 = vmatprep.subr.mxu0 0.0
  %6018 = vmatpush1.msra.mxu0 0.0
  %6019 = vmatprep.subr.mxu0 0.0
  %6020 = vmatpush1.msra.mxu0 0.0
  %6021 = vmatprep.subr.mxu0 0.0
  %6022 = vmatpush1.msra.mxu0 0.0
  %6023 = vmatprep.subr.mxu0 0.0
  %6024 = vmatpush1.msra.mxu0 0.0
  %6025 = vmatprep.subr.mxu0 0.0
  %6026 = vmatpush1.msra.mxu0 0.0
  %6027 = vmatprep.subr.mxu0 0.0
  %6028 = vmatpush1.msra.mxu0 0.0
  %6029 = vmatprep.subr.mxu0 0.0
  %6030 = vmatpush1.msra.mxu0 0.0
  %6031 = vmatprep.subr.mxu0 0.0
  %6032 = vmatpush1.msra.mxu0 0.0
  %6033 = vmatprep.subr.mxu0 0.0
  %6034 = vmatpush1.msra.mxu0 0.0
  %6035 = vmatprep.subr.mxu0 0.0
  %6036 = vmatpush1.msra.mxu0 0.0
  %6037 = vmatprep.mubr.f32.mxu0 0.0
  %6038 = vmatmul.mubr.f32.gmra.mrb[0].mxu0 %v5950
  %v6039 = vpop.f32.mrb[0].mxu0
  %v6040 = vadd.f32 %v55, %v6039
  %v6041 = vpop.f32.mrb[0].mxu0
  %6042 = vmatprep.mubr.f32.mxu0 0.0
  %6043 = vmatmul.mubr.f32.gmra.mrb[0].mxu0 %v5953
  %v6044 = vpop.f32.mrb[0].mxu0
  %v6045 = vadd.f32 %v55, %v6044
  %v6046 = vpop.f32.mrb[0].mxu0
  %6047 = vmatprep.mubr.f32.mxu0 0.0
  %6048 = vmatmul.mubr.f32.gmra.mrb[0].mxu0 %v5956
  %v6049 = vpop.f32.mrb[0].mxu0
  %v6050 = vadd.f32 %v55, %v6049
  %v6051 = vpop.f32.mrb[0].mxu0
  %6052 = vmatprep.mubr.f32.mxu0 0.0
  %6053 = vmatmul.mubr.f32.gmra.mrb[0].mxu0 %v5959
  %v6054 = vpop.f32.mrb[0].mxu0
  %v6055 = vadd.f32 %v55, %v6054
  %v6056 = vpop.f32.mrb[0].mxu0
  %6057 = vmatprep.mubr.f32.mxu0 0.0
  %6058 = vmatmul.mubr.f32.gmra.mrb[0].mxu0 %v5962
  %v6059 = vpop.f32.mrb[0].mxu0
  %v6060 = vadd.f32 %v55, %v6059
  %v6061 = vpop.f32.mrb[0].mxu0
  %6062 = vmatprep.mubr.f32.mxu0 0.0
  %6063 = vmatmul.mubr.f32.gmra.mrb[0].mxu0 %v5965
  %v6064 = vpop.f32.mrb[0].mxu0
  %v6065 = vadd.f32 %v55, %v6064
  %v6066 = vpop.f32.mrb[0].mxu0
  %6067 = vmatprep.mubr.f32.mxu0 0.0
  %6068 = vmatmul.mubr.f32.gmra.mrb[0].mxu0 %v5968
  %v6069 = vpop.f32.mrb[0].mxu0
  %v6070 = vadd.f32 %v55, %v6069
  %v6071 = vpop.f32.mrb[0].mxu0
  %6072 = vmatprep.mubr.f32.mxu0 0.0
  %6073 = vmatmul.mubr.f32.gmra.mrb[0].mxu0 %v5971
  %v6074 = vpop.f32.mrb[0].mxu0
  %v6075 = vadd.f32 %v55, %v6074
  %v6076 = vpop.f32.mrb[0].mxu0
  %6077 = vdwg.mxu0
  %v6078 = vmax.f32 %v6040, 0.0
  %v6079 = vmax.f32 %v6045, 0.0
  %v6080 = vmax.f32 %v6050, 0.0
  %v6081 = vmax.f32 %v6055, 0.0
  %v6082 = vmax.f32 %v6060, 0.0
  %v6083 = vmax.f32 %v6065, 0.0
  %v6084 = vmax.f32 %v6070, 0.0
  %v6085 = vmax.f32 %v6075, 0.0
  %s6086 = scalar_lea.vmem %s2, 48
  %v6087 = vld [vmem:[%s6086] sm:$0xff]
  %v6088 = vlaneseq
  %v6089 = vshrl.u32 %v6088, 7
  %v6090 = vsub.s32 0, %v6089
  %v6091 = vrot.slane %v6087, %v6090
  %6093 = vbcast.lane.b32.xlu0 %v6091, 256
  %v6094 = vpop.permute.xlu0 %6093
  %v6095 = vlaneseq
  %v6096 = vshrl.u32 %v6095, 7
  %v6097 = vsub.s32 1, %v6096
  %v6098 = vrot.slane %v6087, %v6097
  %6100 = vbcast.lane.b32.xlu0 %v6098, 256
  %v6101 = vpop.permute.xlu0 %6100
  %v6102 = vlaneseq
  %v6103 = vshrl.u32 %v6102, 7
  %v6104 = vsub.s32 2, %v6103
  %v6105 = vrot.slane %v6087, %v6104
  %6107 = vbcast.lane.b32.xlu0 %v6105, 256
  %v6108 = vpop.permute.xlu0 %6107
  %v6109 = vlaneseq
  %v6110 = vshrl.u32 %v6109, 7
  %v6111 = vsub.s32 3, %v6110
  %v6112 = vrot.slane %v6087, %v6111
  %6114 = vbcast.lane.b32.xlu0 %v6112, 256
  %v6115 = vpop.permute.xlu0 %6114
  %v6116 = vlaneseq
  %v6117 = vshrl.u32 %v6116, 7
  %v6118 = vsub.s32 4, %v6117
  %v6119 = vrot.slane %v6087, %v6118
  %6121 = vbcast.lane.b32.xlu0 %v6119, 256
  %v6122 = vpop.permute.xlu0 %6121
  %v6123 = vlaneseq
  %v6124 = vshrl.u32 %v6123, 7
  %v6125 = vsub.s32 5, %v6124
  %v6126 = vrot.slane %v6087, %v6125
  %6128 = vbcast.lane.b32.xlu0 %v6126, 256
  %v6129 = vpop.permute.xlu0 %6128
  %v6130 = vlaneseq
  %v6131 = vshrl.u32 %v6130, 7
  %v6132 = vsub.s32 6, %v6131
  %v6133 = vrot.slane %v6087, %v6132
  %6135 = vbcast.lane.b32.xlu0 %v6133, 256
  %v6136 = vpop.permute.xlu0 %6135
  %v6137 = vlaneseq
  %v6138 = vshrl.u32 %v6137, 7
  %v6139 = vsub.s32 7, %v6138
  %v6140 = vrot.slane %v6087, %v6139
  %6142 = vbcast.lane.b32.xlu0 %v6140, 256
  %v6143 = vpop.permute.xlu0 %6142
  %v6144 = vmul.f32 %v6078, %v6094
  %v6145 = vmul.f32 %v6079, %v6101
  %v6146 = vmul.f32 %v6080, %v6108
  %v6147 = vmul.f32 %v6081, %v6115
  %v6148 = vmul.f32 %v6082, %v6122
  %v6149 = vmul.f32 %v6083, %v6129
  %v6150 = vmul.f32 %v6084, %v6136
  %v6151 = vmul.f32 %v6085, %v6143
  %v6152 = vsel %vm364, %v6144, -inf
  %v6153 = vrot.slane %v6152, 4
  %v6154 = vmax.f32 %v6152, %v6153
  %v6155 = vrot.slane %v6154, 2
  %v6156 = vmax.f32 %v6154, %v6155
  %v6157 = vrot.slane %v6156, 1
  %v6158 = vmax.f32 %v6156, %v6157
  %v6159 = vsel %vm364, %v6145, -inf
  %v6160 = vrot.slane %v6159, 4
  %v6161 = vmax.f32 %v6159, %v6160
  %v6162 = vrot.slane %v6161, 2
  %v6163 = vmax.f32 %v6161, %v6162
  %v6164 = vrot.slane %v6163, 1
  %v6165 = vmax.f32 %v6163, %v6164
  %v6166 = vsel %vm364, %v6146, -inf
  %v6167 = vrot.slane %v6166, 4
  %v6168 = vmax.f32 %v6166, %v6167
  %v6169 = vrot.slane %v6168, 2
  %v6170 = vmax.f32 %v6168, %v6169
  %v6171 = vrot.slane %v6170, 1
  %v6172 = vmax.f32 %v6170, %v6171
  %v6173 = vsel %vm364, %v6147, -inf
  %v6174 = vrot.slane %v6173, 4
  %v6175 = vmax.f32 %v6173, %v6174
  %v6176 = vrot.slane %v6175, 2
  %v6177 = vmax.f32 %v6175, %v6176
  %v6178 = vrot.slane %v6177, 1
  %v6179 = vmax.f32 %v6177, %v6178
  %v6180 = vsel %vm364, %v6148, -inf
  %v6181 = vrot.slane %v6180, 4
  %v6182 = vmax.f32 %v6180, %v6181
  %v6183 = vrot.slane %v6182, 2
  %v6184 = vmax.f32 %v6182, %v6183
  %v6185 = vrot.slane %v6184, 1
  %v6186 = vmax.f32 %v6184, %v6185
  %v6187 = vsel %vm364, %v6149, -inf
  %v6188 = vrot.slane %v6187, 4
  %v6189 = vmax.f32 %v6187, %v6188
  %v6190 = vrot.slane %v6189, 2
  %v6191 = vmax.f32 %v6189, %v6190
  %v6192 = vrot.slane %v6191, 1
  %v6193 = vmax.f32 %v6191, %v6192
  %v6194 = vsel %vm364, %v6150, -inf
  %v6195 = vrot.slane %v6194, 4
  %v6196 = vmax.f32 %v6194, %v6195
  %v6197 = vrot.slane %v6196, 2
  %v6198 = vmax.f32 %v6196, %v6197
  %v6199 = vrot.slane %v6198, 1
  %v6200 = vmax.f32 %v6198, %v6199
  %v6201 = vsel %vm364, %v6151, -inf
  %v6202 = vrot.slane %v6201, 4
  %v6203 = vmax.f32 %v6201, %v6202
  %v6204 = vrot.slane %v6203, 2
  %v6205 = vmax.f32 %v6203, %v6204
  %v6206 = vrot.slane %v6205, 1
  %v6207 = vmax.f32 %v6205, %v6206
  %v6217 = vsel %vm1794, %v6165, %v6158
  %v6218 = vsel %vm1796, %v6172, %v6217
  %v6219 = vsel %vm1798, %v6179, %v6218
  %v6220 = vsel %vm1800, %v6186, %v6219
  %v6221 = vsel %vm1802, %v6193, %v6220
  %v6222 = vsel %vm1804, %v6200, %v6221
  %v6223 = vsel %vm1806, %v6207, %v6222
  %6224 = vrot.lane.b32.xlu0 %v6223, 8
  %v6225 = vpop.permute.xlu0 %6224
  %v6227 = vsel %vm364, %v5764, %v6225
  %v6229 = vsel %vm232, %v6227, 0
  %6231 = vmatprep.subr.mxu0 0.0
  %6232 = vmatpush1.msra.mxu0 %v56
  %6233 = vmatprep.subr.mxu0 0.0
  %6234 = vmatpush1.msra.mxu0 %v57
  %6235 = vmatprep.subr.mxu0 0.0
  %6236 = vmatpush1.msra.mxu0 0.0
  %6237 = vmatprep.subr.mxu0 0.0
  %6238 = vmatpush1.msra.mxu0 0.0
  %6239 = vmatprep.subr.mxu0 0.0
  %6240 = vmatpush1.msra.mxu0 0.0
  %6241 = vmatprep.subr.mxu0 0.0
  %6242 = vmatpush1.msra.mxu0 0.0
  %6243 = vmatprep.subr.mxu0 0.0
  %6244 = vmatpush1.msra.mxu0 0.0
  %6245 = vmatprep.subr.mxu0 0.0
  %6246 = vmatpush1.msra.mxu0 0.0
  %6247 = vmatprep.subr.mxu0 0.0
  %6248 = vmatpush1.msra.mxu0 0.0
  %6249 = vmatprep.subr.mxu0 0.0
  %6250 = vmatpush1.msra.mxu0 0.0
  %6251 = vmatprep.subr.mxu0 0.0
  %6252 = vmatpush1.msra.mxu0 0.0
  %6253 = vmatprep.subr.mxu0 0.0
  %6254 = vmatpush1.msra.mxu0 0.0
  %6255 = vmatprep.subr.mxu0 0.0
  %6256 = vmatpush1.msra.mxu0 0.0
  %6257 = vmatprep.subr.mxu0 0.0
  %6258 = vmatpush1.msra.mxu0 0.0
  %6259 = vmatprep.subr.mxu0 0.0
  %6260 = vmatpush1.msra.mxu0 0.0
  %6261 = vmatprep.subr.mxu0 0.0
  %6262 = vmatpush1.msra.mxu0 0.0
  %6263 = vmatprep.subr.mxu0 0.0
  %6264 = vmatpush1.msra.mxu0 0.0
  %6265 = vmatprep.subr.mxu0 0.0
  %6266 = vmatpush1.msra.mxu0 0.0
  %6267 = vmatprep.subr.mxu0 0.0
  %6268 = vmatpush1.msra.mxu0 0.0
  %6269 = vmatprep.subr.mxu0 0.0
  %6270 = vmatpush1.msra.mxu0 0.0
  %6271 = vmatprep.subr.mxu0 0.0
  %6272 = vmatpush1.msra.mxu0 0.0
  %6273 = vmatprep.subr.mxu0 0.0
  %6274 = vmatpush1.msra.mxu0 0.0
  %6275 = vmatprep.subr.mxu0 0.0
  %6276 = vmatpush1.msra.mxu0 0.0
  %6277 = vmatprep.subr.mxu0 0.0
  %6278 = vmatpush1.msra.mxu0 0.0
  %6279 = vmatprep.subr.mxu0 0.0
  %6280 = vmatpush1.msra.mxu0 0.0
  %6281 = vmatprep.subr.mxu0 0.0
  %6282 = vmatpush1.msra.mxu0 0.0
  %6283 = vmatprep.subr.mxu0 0.0
  %6284 = vmatpush1.msra.mxu0 0.0
  %6285 = vmatprep.subr.mxu0 0.0
  %6286 = vmatpush1.msra.mxu0 0.0
  %6287 = vmatprep.subr.mxu0 0.0
  %6288 = vmatpush1.msra.mxu0 0.0
  %6289 = vmatprep.subr.mxu0 0.0
  %6290 = vmatpush1.msra.mxu0 0.0
  %6291 = vmatprep.subr.mxu0 0.0
  %6292 = vmatpush1.msra.mxu0 0.0
  %6293 = vmatprep.subr.mxu0 0.0
  %6294 = vmatpush1.msra.mxu0 0.0
  %6295 = vmatprep.mubr.f32.mxu0 0.0
  %6296 = vmatmul.mubr.f32.gmra.mrb[0].mxu0 %v6229
  %v6297 = vpop.f32.mrb[0].mxu0
  %v6298 = vadd.f32 0.0, %v6297
  %v6299 = vpop.f32.mrb[0].mxu0
  %6300 = vdwg.mxu0
  %v6301 = vadd.f32 %v6298, %v62
  %s6302 = scalar_lea.vmem %s7, 48
  %6303 = vst.msk [vmem:[%s6302] sm:$0xff] %vm1886, %v6301
  %s6304 = scalar_lea.vmem %s5, 48
  %v6305 = vld [vmem:[%s6304] sm:$0xff]
  %v6306 = vmul.f32 %v6301, 0.5
  %v6307 = vmul.f32 %v6306, 1.442695
  %v6308 = vpow.pop %v6307
  %6310 = vrot.lane.b32.xlu0 %v6308, 126
  %v6311 = vpop.permute.xlu0 %6310
  %v6313 = vmul.f32 %v6305, %v6311
  %v6314 = vadd.f32 %v6298, %v1899
  %v6316 = vsel %vm86, %v6313, 0
  %6318 = vmatprep.subr.mxu0 0.0
  %6319 = vmatpush1.msra.mxu0 %v1906
  %6320 = vmatprep.subr.mxu0 0.0
  %6321 = vmatpush1.msra.mxu0 0.0
  %6322 = vmatprep.subr.mxu0 0.0
  %6323 = vmatpush1.msra.mxu0 0.0
  %6324 = vmatprep.subr.mxu0 0.0
  %6325 = vmatpush1.msra.mxu0 0.0
  %6326 = vmatprep.subr.mxu0 0.0
  %6327 = vmatpush1.msra.mxu0 0.0
  %6328 = vmatprep.subr.mxu0 0.0
  %6329 = vmatpush1.msra.mxu0 0.0
  %6330 = vmatprep.subr.mxu0 0.0
  %6331 = vmatpush1.msra.mxu0 0.0
  %6332 = vmatprep.subr.mxu0 0.0
  %6333 = vmatpush1.msra.mxu0 0.0
  %6334 = vmatprep.subr.mxu0 0.0
  %6335 = vmatpush1.msra.mxu0 0.0
  %6336 = vmatprep.subr.mxu0 0.0
  %6337 = vmatpush1.msra.mxu0 0.0
  %6338 = vmatprep.subr.mxu0 0.0
  %6339 = vmatpush1.msra.mxu0 0.0
  %6340 = vmatprep.subr.mxu0 0.0
  %6341 = vmatpush1.msra.mxu0 0.0
  %6342 = vmatprep.subr.mxu0 0.0
  %6343 = vmatpush1.msra.mxu0 0.0
  %6344 = vmatprep.subr.mxu0 0.0
  %6345 = vmatpush1.msra.mxu0 0.0
  %6346 = vmatprep.subr.mxu0 0.0
  %6347 = vmatpush1.msra.mxu0 0.0
  %6348 = vmatprep.subr.mxu0 0.0
  %6349 = vmatpush1.msra.mxu0 0.0
  %6350 = vmatprep.subr.mxu0 0.0
  %6351 = vmatpush1.msra.mxu0 0.0
  %6352 = vmatprep.subr.mxu0 0.0
  %6353 = vmatpush1.msra.mxu0 0.0
  %6354 = vmatprep.subr.mxu0 0.0
  %6355 = vmatpush1.msra.mxu0 0.0
  %6356 = vmatprep.subr.mxu0 0.0
  %6357 = vmatpush1.msra.mxu0 0.0
  %6358 = vmatprep.subr.mxu0 0.0
  %6359 = vmatpush1.msra.mxu0 0.0
  %6360 = vmatprep.subr.mxu0 0.0
  %6361 = vmatpush1.msra.mxu0 0.0
  %6362 = vmatprep.subr.mxu0 0.0
  %6363 = vmatpush1.msra.mxu0 0.0
  %6364 = vmatprep.subr.mxu0 0.0
  %6365 = vmatpush1.msra.mxu0 0.0
  %6366 = vmatprep.subr.mxu0 0.0
  %6367 = vmatpush1.msra.mxu0 0.0
  %6368 = vmatprep.subr.mxu0 0.0
  %6369 = vmatpush1.msra.mxu0 0.0
  %6370 = vmatprep.subr.mxu0 0.0
  %6371 = vmatpush1.msra.mxu0 0.0
  %6372 = vmatprep.subr.mxu0 0.0
  %6373 = vmatpush1.msra.mxu0 0.0
  %6374 = vmatprep.subr.mxu0 0.0
  %6375 = vmatpush1.msra.mxu0 0.0
  %6376 = vmatprep.subr.mxu0 0.0
  %6377 = vmatpush1.msra.mxu0 0.0
  %6378 = vmatprep.subr.mxu0 0.0
  %6379 = vmatpush1.msra.mxu0 0.0
  %6380 = vmatprep.subr.mxu0 0.0
  %6381 = vmatpush1.msra.mxu0 0.0
  %6382 = vmatprep.mubr.f32.mxu0 0.0
  %6383 = vmatmul.mubr.f32.gmra.mrb[0].mxu0 %v6316
  %v6384 = vpop.f32.mrb[0].mxu0
  %v6385 = vadd.f32 0.0, %v6384
  %v6386 = vpop.f32.mrb[0].mxu0
  %6387 = vdwg.mxu0
  %6389 = vrot.lane.b32.xlu0 %v6385, 4
  %v6390 = vpop.permute.xlu0 %6389
  %v6392 = vadd.f32 %v6314, %v6390
  %v6393 = vmax.f32 %v6392, 0.0
  %6395 = vrot.lane.b32.xlu0 %v6393, 124
  %v6396 = vpop.permute.xlu0 %6395
  %6398 = vrot.lane.b32.xlu0 %v5761, 120
  %v6399 = vpop.permute.xlu0 %6398
  %v6401 = vsel %vm232, %v6396, %v6399
  %v6403 = vsel %vm1239, %v6401, 0
  %6405 = vmatprep.subr.mxu0 0.0
  %6406 = vmatpush1.msra.mxu0 %v32
  %6407 = vmatprep.subr.mxu0 0.0
  %6408 = vmatpush1.msra.mxu0 %v33
  %6409 = vmatprep.subr.mxu0 0.0
  %6410 = vmatpush1.msra.mxu0 %v34
  %6411 = vmatprep.subr.mxu0 0.0
  %6412 = vmatpush1.msra.mxu0 0.0
  %6413 = vmatprep.subr.mxu0 0.0
  %6414 = vmatpush1.msra.mxu0 0.0
  %6415 = vmatprep.subr.mxu0 0.0
  %6416 = vmatpush1.msra.mxu0 0.0
  %6417 = vmatprep.subr.mxu0 0.0
  %6418 = vmatpush1.msra.mxu0 0.0
  %6419 = vmatprep.subr.mxu0 0.0
  %6420 = vmatpush1.msra.mxu0 0.0
  %6421 = vmatprep.subr.mxu0 0.0
  %6422 = vmatpush1.msra.mxu0 0.0
  %6423 = vmatprep.subr.mxu0 0.0
  %6424 = vmatpush1.msra.mxu0 0.0
  %6425 = vmatprep.subr.mxu0 0.0
  %6426 = vmatpush1.msra.mxu0 0.0
  %6427 = vmatprep.subr.mxu0 0.0
  %6428 = vmatpush1.msra.mxu0 0.0
  %6429 = vmatprep.subr.mxu0 0.0
  %6430 = vmatpush1.msra.mxu0 0.0
  %6431 = vmatprep.subr.mxu0 0.0
  %6432 = vmatpush1.msra.mxu0 0.0
  %6433 = vmatprep.subr.mxu0 0.0
  %6434 = vmatpush1.msra.mxu0 0.0
  %6435 = vmatprep.subr.mxu0 0.0
  %6436 = vmatpush1.msra.mxu0 0.0
  %6437 = vmatprep.subr.mxu0 0.0
  %6438 = vmatpush1.msra.mxu0 0.0
  %6439 = vmatprep.subr.mxu0 0.0
  %6440 = vmatpush1.msra.mxu0 0.0
  %6441 = vmatprep.subr.mxu0 0.0
  %6442 = vmatpush1.msra.mxu0 0.0
  %6443 = vmatprep.subr.mxu0 0.0
  %6444 = vmatpush1.msra.mxu0 0.0
  %6445 = vmatprep.subr.mxu0 0.0
  %6446 = vmatpush1.msra.mxu0 0.0
  %6447 = vmatprep.subr.mxu0 0.0
  %6448 = vmatpush1.msra.mxu0 0.0
  %6449 = vmatprep.subr.mxu0 0.0
  %6450 = vmatpush1.msra.mxu0 0.0
  %6451 = vmatprep.subr.mxu0 0.0
  %6452 = vmatpush1.msra.mxu0 0.0
  %6453 = vmatprep.subr.mxu0 0.0
  %6454 = vmatpush1.msra.mxu0 0.0
  %6455 = vmatprep.subr.mxu0 0.0
  %6456 = vmatpush1.msra.mxu0 0.0
  %6457 = vmatprep.subr.mxu0 0.0
  %6458 = vmatpush1.msra.mxu0 0.0
  %6459 = vmatprep.subr.mxu0 0.0
  %6460 = vmatpush1.msra.mxu0 0.0
  %6461 = vmatprep.subr.mxu0 0.0
  %6462 = vmatpush1.msra.mxu0 0.0
  %6463 = vmatprep.subr.mxu0 0.0
  %6464 = vmatpush1.msra.mxu0 0.0
  %6465 = vmatprep.subr.mxu0 0.0
  %6466 = vmatpush1.msra.mxu0 0.0
  %6467 = vmatprep.subr.mxu0 0.0
  %6468 = vmatpush1.msra.mxu0 0.0
  %6469 = vmatprep.mubr.f32.mxu0 0.0
  %6470 = vmatmul.mubr.f32.gmra.mrb[0].mxu0 %v6403
  %v6471 = vpop.f32.mrb[0].mxu0
  %v6472 = vadd.f32 %v39, %v6471
  %v6473 = vpop.f32.mrb[0].mxu0
  %6474 = vdwg.mxu0
  %v6475 = vmul.f32 %v6472, 0.5
  %v6476 = vtanh.pop %v6475
  %v6477 = vmul.f32 %v6476, 0.5
  %v6478 = vadd.f32 %v6477, 0.5
  %v6479 = vtanh.pop %v6472
  %v6480 = vmul.f32 %v6478, %v5755
  %6482 = vrot.lane.b32.xlu0 %v6479, 112
  %v6483 = vpop.permute.xlu0 %6482
  %v6485 = vmul.f32 %v6478, %v6483
  %6487 = vrot.lane.b32.xlu0 %v6485, 8
  %v6488 = vpop.permute.xlu0 %6487
  %v6490 = vadd.f32 %v6480, %v6488
  %v6491 = vtanh.pop %v6490
  %6493 = vrot.lane.b32.xlu0 %v6491, 16
  %v6494 = vpop.permute.xlu0 %6493
  %v6496 = vmul.f32 %v6478, %v6494
  %6498 = vrot.lane.b32.xlu0 %v6496, 104
  %v6499 = vpop.permute.xlu0 %6498
  %v6500 = vsel %vm364, %v6499, 0
  %6502 = vmatprep.subr.mxu0 0.0
  %6503 = vmatpush1.msra.mxu0 %v42
  %6504 = vmatprep.subr.mxu0 0.0
  %6505 = vmatpush1.msra.mxu0 0.0
  %6506 = vmatprep.subr.mxu0 0.0
  %6507 = vmatpush1.msra.mxu0 0.0
  %6508 = vmatprep.subr.mxu0 0.0
  %6509 = vmatpush1.msra.mxu0 0.0
  %6510 = vmatprep.subr.mxu0 0.0
  %6511 = vmatpush1.msra.mxu0 0.0
  %6512 = vmatprep.subr.mxu0 0.0
  %6513 = vmatpush1.msra.mxu0 0.0
  %6514 = vmatprep.subr.mxu0 0.0
  %6515 = vmatpush1.msra.mxu0 0.0
  %6516 = vmatprep.subr.mxu0 0.0
  %6517 = vmatpush1.msra.mxu0 0.0
  %6518 = vmatprep.subr.mxu0 0.0
  %6519 = vmatpush1.msra.mxu0 0.0
  %6520 = vmatprep.subr.mxu0 0.0
  %6521 = vmatpush1.msra.mxu0 0.0
  %6522 = vmatprep.subr.mxu0 0.0
  %6523 = vmatpush1.msra.mxu0 0.0
  %6524 = vmatprep.subr.mxu0 0.0
  %6525 = vmatpush1.msra.mxu0 0.0
  %6526 = vmatprep.subr.mxu0 0.0
  %6527 = vmatpush1.msra.mxu0 0.0
  %6528 = vmatprep.subr.mxu0 0.0
  %6529 = vmatpush1.msra.mxu0 0.0
  %6530 = vmatprep.subr.mxu0 0.0
  %6531 = vmatpush1.msra.mxu0 0.0
  %6532 = vmatprep.subr.mxu0 0.0
  %6533 = vmatpush1.msra.mxu0 0.0
  %6534 = vmatprep.subr.mxu0 0.0
  %6535 = vmatpush1.msra.mxu0 0.0
  %6536 = vmatprep.subr.mxu0 0.0
  %6537 = vmatpush1.msra.mxu0 0.0
  %6538 = vmatprep.subr.mxu0 0.0
  %6539 = vmatpush1.msra.mxu0 0.0
  %6540 = vmatprep.subr.mxu0 0.0
  %6541 = vmatpush1.msra.mxu0 0.0
  %6542 = vmatprep.subr.mxu0 0.0
  %6543 = vmatpush1.msra.mxu0 0.0
  %6544 = vmatprep.subr.mxu0 0.0
  %6545 = vmatpush1.msra.mxu0 0.0
  %6546 = vmatprep.subr.mxu0 0.0
  %6547 = vmatpush1.msra.mxu0 0.0
  %6548 = vmatprep.subr.mxu0 0.0
  %6549 = vmatpush1.msra.mxu0 0.0
  %6550 = vmatprep.subr.mxu0 0.0
  %6551 = vmatpush1.msra.mxu0 0.0
  %6552 = vmatprep.subr.mxu0 0.0
  %6553 = vmatpush1.msra.mxu0 0.0
  %6554 = vmatprep.subr.mxu0 0.0
  %6555 = vmatpush1.msra.mxu0 0.0
  %6556 = vmatprep.subr.mxu0 0.0
  %6557 = vmatpush1.msra.mxu0 0.0
  %6558 = vmatprep.subr.mxu0 0.0
  %6559 = vmatpush1.msra.mxu0 0.0
  %6560 = vmatprep.subr.mxu0 0.0
  %6561 = vmatpush1.msra.mxu0 0.0
  %6562 = vmatprep.subr.mxu0 0.0
  %6563 = vmatpush1.msra.mxu0 0.0
  %6564 = vmatprep.subr.mxu0 0.0
  %6565 = vmatpush1.msra.mxu0 0.0
  %6566 = vmatprep.mubr.f32.mxu0 0.0
  %6567 = vmatmul.mubr.f32.gmra.mrb[0].mxu0 %v6500
  %v6568 = vpop.f32.mrb[0].mxu0
  %v6569 = vadd.f32 0.0, %v6568
  %v6570 = vpop.f32.mrb[0].mxu0
  %6571 = vdwg.mxu0
  %v6572 = vadd.f32 %v1232, %v6569
  %v6573 = vsub.f32 %v6569, %v1413
  %v6575 = vcombine.high %v6572, %v6572
  %v6577 = vunpack.c.l.s4 1966171168
  %v6578 = vunpack.c.0.s8 %v6577
  %v6579 = vlaneseq
  %v6580 = vshrl.u32 %v6579, 7
  %v6581 = vsub.s32 %v6578, %v6580
  %v6582 = vrot.slane %v6572, %v6581
  %v6584 = vunpack.c.l.s4 1966171168
  %v6585 = vunpack.c.0.s8 %v6584
  %v6586 = vlaneseq
  %v6587 = vshrl.u32 %v6586, 7
  %v6588 = vsub.s32 %v6585, %v6587
  %v6589 = vrot.slane %v6575, %v6588
  %v6590 = vcombine.high %v6582, %v6582
  %v6591 = vcombine.high %v6589, %v6589
  %v6593 = vunpack.c.l.s4 1966171168
  %v6594 = vunpack.c.0.s8 %v6593
  %v6595 = vlaneseq
  %v6596 = vshrl.u32 %v6595, 7
  %v6597 = vsub.s32 %v6594, %v6596
  %v6598 = vrot.slane %v6582, %v6597
  %v6600 = vunpack.c.l.s4 1966171168
  %v6601 = vunpack.c.0.s8 %v6600
  %v6602 = vlaneseq
  %v6603 = vshrl.u32 %v6602, 7
  %v6604 = vsub.s32 %v6601, %v6603
  %v6605 = vrot.slane %v6589, %v6604
  %v6607 = vunpack.c.l.s4 1966171168
  %v6608 = vunpack.c.0.s8 %v6607
  %v6609 = vlaneseq
  %v6610 = vshrl.u32 %v6609, 7
  %v6611 = vsub.s32 %v6608, %v6610
  %v6612 = vrot.slane %v6590, %v6611
  %v6614 = vunpack.c.l.s4 1966171168
  %v6615 = vunpack.c.0.s8 %v6614
  %v6616 = vlaneseq
  %v6617 = vshrl.u32 %v6616, 7
  %v6618 = vsub.s32 %v6615, %v6617
  %v6619 = vrot.slane %v6591, %v6618
  %v6620 = vcombine.high %v6598, %v6598
  %v6621 = vcombine.high %v6605, %v6605
  %v6622 = vcombine.high %v6612, %v6612
  %v6623 = vcombine.high %v6619, %v6619
  %v6624 = vlaneseq
  %v6625 = vshrl.u32 %v6624, 7
  %v6626 = vsub.s32 0, %v6625
  %v6627 = vrot.slane %v6598, %v6626
  %v6628 = vlaneseq
  %v6629 = vshrl.u32 %v6628, 7
  %v6630 = vsub.s32 0, %v6629
  %v6631 = vrot.slane %v6612, %v6630
  %v6632 = vlaneseq
  %v6633 = vshrl.u32 %v6632, 7
  %v6634 = vsub.s32 0, %v6633
  %v6635 = vrot.slane %v6620, %v6634
  %v6636 = vlaneseq
  %v6637 = vshrl.u32 %v6636, 7
  %v6638 = vsub.s32 0, %v6637
  %v6639 = vrot.slane %v6622, %v6638
  %v6640 = vlaneseq
  %v6641 = vshrl.u32 %v6640, 7
  %v6642 = vsub.s32 0, %v6641
  %v6643 = vrot.slane %v6605, %v6642
  %v6644 = vlaneseq
  %v6645 = vshrl.u32 %v6644, 7
  %v6646 = vsub.s32 0, %v6645
  %v6647 = vrot.slane %v6619, %v6646
  %v6648 = vlaneseq
  %v6649 = vshrl.u32 %v6648, 7
  %v6650 = vsub.s32 0, %v6649
  %v6651 = vrot.slane %v6621, %v6650
  %v6652 = vlaneseq
  %v6653 = vshrl.u32 %v6652, 7
  %v6654 = vsub.s32 0, %v6653
  %v6655 = vrot.slane %v6623, %v6654
  %6665 = vrot.lane.b32.xlu0 %v6573, 64
  %v6666 = vpop.permute.xlu0 %6665
  %v6668 = vadd.f32 %v6627, %v6666
  %v6669 = vadd.f32 %v6631, %v6666
  %v6670 = vadd.f32 %v6635, %v6666
  %v6671 = vadd.f32 %v6639, %v6666
  %v6672 = vadd.f32 %v6643, %v6666
  %v6673 = vadd.f32 %v6647, %v6666
  %v6674 = vadd.f32 %v6651, %v6666
  %v6675 = vadd.f32 %v6655, %v6666
  %v6676 = vmax.f32 %v6668, 0.0
  %v6677 = vmax.f32 %v6669, 0.0
  %v6678 = vmax.f32 %v6670, 0.0
  %v6679 = vmax.f32 %v6671, 0.0
  %v6680 = vmax.f32 %v6672, 0.0
  %v6681 = vmax.f32 %v6673, 0.0
  %v6682 = vmax.f32 %v6674, 0.0
  %v6683 = vmax.f32 %v6675, 0.0
  %v6685 = vsel %vm1526, %v6676, 0
  %v6688 = vsel %vm1526, %v6677, 0
  %v6691 = vsel %vm1526, %v6678, 0
  %v6694 = vsel %vm1526, %v6679, 0
  %v6697 = vsel %vm1526, %v6680, 0
  %v6700 = vsel %vm1526, %v6681, 0
  %v6703 = vsel %vm1526, %v6682, 0
  %v6706 = vsel %vm1526, %v6683, 0
  %6708 = vmatprep.subr.mxu0 0.0
  %6709 = vmatpush1.msra.mxu0 %v43
  %6710 = vmatprep.subr.mxu0 0.0
  %6711 = vmatpush1.msra.mxu0 %v44
  %6712 = vmatprep.subr.mxu0 0.0
  %6713 = vmatpush1.msra.mxu0 %v45
  %6714 = vmatprep.subr.mxu0 0.0
  %6715 = vmatpush1.msra.mxu0 %v46
  %6716 = vmatprep.subr.mxu0 0.0
  %6717 = vmatpush1.msra.mxu0 %v47
  %6718 = vmatprep.subr.mxu0 0.0
  %6719 = vmatpush1.msra.mxu0 %v48
  %6720 = vmatprep.subr.mxu0 0.0
  %6721 = vmatpush1.msra.mxu0 %v49
  %6722 = vmatprep.subr.mxu0 0.0
  %6723 = vmatpush1.msra.mxu0 %v50
  %6724 = vmatprep.subr.mxu0 0.0
  %6725 = vmatpush1.msra.mxu0 0.0
  %6726 = vmatprep.subr.mxu0 0.0
  %6727 = vmatpush1.msra.mxu0 0.0
  %6728 = vmatprep.subr.mxu0 0.0
  %6729 = vmatpush1.msra.mxu0 0.0
  %6730 = vmatprep.subr.mxu0 0.0
  %6731 = vmatpush1.msra.mxu0 0.0
  %6732 = vmatprep.subr.mxu0 0.0
  %6733 = vmatpush1.msra.mxu0 0.0
  %6734 = vmatprep.subr.mxu0 0.0
  %6735 = vmatpush1.msra.mxu0 0.0
  %6736 = vmatprep.subr.mxu0 0.0
  %6737 = vmatpush1.msra.mxu0 0.0
  %6738 = vmatprep.subr.mxu0 0.0
  %6739 = vmatpush1.msra.mxu0 0.0
  %6740 = vmatprep.subr.mxu0 0.0
  %6741 = vmatpush1.msra.mxu0 0.0
  %6742 = vmatprep.subr.mxu0 0.0
  %6743 = vmatpush1.msra.mxu0 0.0
  %6744 = vmatprep.subr.mxu0 0.0
  %6745 = vmatpush1.msra.mxu0 0.0
  %6746 = vmatprep.subr.mxu0 0.0
  %6747 = vmatpush1.msra.mxu0 0.0
  %6748 = vmatprep.subr.mxu0 0.0
  %6749 = vmatpush1.msra.mxu0 0.0
  %6750 = vmatprep.subr.mxu0 0.0
  %6751 = vmatpush1.msra.mxu0 0.0
  %6752 = vmatprep.subr.mxu0 0.0
  %6753 = vmatpush1.msra.mxu0 0.0
  %6754 = vmatprep.subr.mxu0 0.0
  %6755 = vmatpush1.msra.mxu0 0.0
  %6756 = vmatprep.subr.mxu0 0.0
  %6757 = vmatpush1.msra.mxu0 0.0
  %6758 = vmatprep.subr.mxu0 0.0
  %6759 = vmatpush1.msra.mxu0 0.0
  %6760 = vmatprep.subr.mxu0 0.0
  %6761 = vmatpush1.msra.mxu0 0.0
  %6762 = vmatprep.subr.mxu0 0.0
  %6763 = vmatpush1.msra.mxu0 0.0
  %6764 = vmatprep.subr.mxu0 0.0
  %6765 = vmatpush1.msra.mxu0 0.0
  %6766 = vmatprep.subr.mxu0 0.0
  %6767 = vmatpush1.msra.mxu0 0.0
  %6768 = vmatprep.subr.mxu0 0.0
  %6769 = vmatpush1.msra.mxu0 0.0
  %6770 = vmatprep.subr.mxu0 0.0
  %6771 = vmatpush1.msra.mxu0 0.0
  %6772 = vmatprep.mubr.f32.mxu0 0.0
  %6773 = vmatmul.mubr.f32.gmra.mrb[0].mxu0 %v6685
  %v6774 = vpop.f32.mrb[0].mxu0
  %v6775 = vadd.f32 %v55, %v6774
  %v6776 = vpop.f32.mrb[0].mxu0
  %6777 = vmatprep.mubr.f32.mxu0 0.0
  %6778 = vmatmul.mubr.f32.gmra.mrb[0].mxu0 %v6688
  %v6779 = vpop.f32.mrb[0].mxu0
  %v6780 = vadd.f32 %v55, %v6779
  %v6781 = vpop.f32.mrb[0].mxu0
  %6782 = vmatprep.mubr.f32.mxu0 0.0
  %6783 = vmatmul.mubr.f32.gmra.mrb[0].mxu0 %v6691
  %v6784 = vpop.f32.mrb[0].mxu0
  %v6785 = vadd.f32 %v55, %v6784
  %v6786 = vpop.f32.mrb[0].mxu0
  %6787 = vmatprep.mubr.f32.mxu0 0.0
  %6788 = vmatmul.mubr.f32.gmra.mrb[0].mxu0 %v6694
  %v6789 = vpop.f32.mrb[0].mxu0
  %v6790 = vadd.f32 %v55, %v6789
  %v6791 = vpop.f32.mrb[0].mxu0
  %6792 = vmatprep.mubr.f32.mxu0 0.0
  %6793 = vmatmul.mubr.f32.gmra.mrb[0].mxu0 %v6697
  %v6794 = vpop.f32.mrb[0].mxu0
  %v6795 = vadd.f32 %v55, %v6794
  %v6796 = vpop.f32.mrb[0].mxu0
  %6797 = vmatprep.mubr.f32.mxu0 0.0
  %6798 = vmatmul.mubr.f32.gmra.mrb[0].mxu0 %v6700
  %v6799 = vpop.f32.mrb[0].mxu0
  %v6800 = vadd.f32 %v55, %v6799
  %v6801 = vpop.f32.mrb[0].mxu0
  %6802 = vmatprep.mubr.f32.mxu0 0.0
  %6803 = vmatmul.mubr.f32.gmra.mrb[0].mxu0 %v6703
  %v6804 = vpop.f32.mrb[0].mxu0
  %v6805 = vadd.f32 %v55, %v6804
  %v6806 = vpop.f32.mrb[0].mxu0
  %6807 = vmatprep.mubr.f32.mxu0 0.0
  %6808 = vmatmul.mubr.f32.gmra.mrb[0].mxu0 %v6706
  %v6809 = vpop.f32.mrb[0].mxu0
  %v6810 = vadd.f32 %v55, %v6809
  %v6811 = vpop.f32.mrb[0].mxu0
  %6812 = vdwg.mxu0
  %v6813 = vmax.f32 %v6775, 0.0
  %v6814 = vmax.f32 %v6780, 0.0
  %v6815 = vmax.f32 %v6785, 0.0
  %v6816 = vmax.f32 %v6790, 0.0
  %v6817 = vmax.f32 %v6795, 0.0
  %v6818 = vmax.f32 %v6800, 0.0
  %v6819 = vmax.f32 %v6805, 0.0
  %v6820 = vmax.f32 %v6810, 0.0
  %s6821 = scalar_lea.vmem %s2, 56
  %v6822 = vld [vmem:[%s6821] sm:$0xff]
  %v6823 = vlaneseq
  %v6824 = vshrl.u32 %v6823, 7
  %v6825 = vsub.s32 0, %v6824
  %v6826 = vrot.slane %v6822, %v6825
  %6828 = vbcast.lane.b32.xlu0 %v6826, 256
  %v6829 = vpop.permute.xlu0 %6828
  %v6830 = vlaneseq
  %v6831 = vshrl.u32 %v6830, 7
  %v6832 = vsub.s32 1, %v6831
  %v6833 = vrot.slane %v6822, %v6832
  %6835 = vbcast.lane.b32.xlu0 %v6833, 256
  %v6836 = vpop.permute.xlu0 %6835
  %v6837 = vlaneseq
  %v6838 = vshrl.u32 %v6837, 7
  %v6839 = vsub.s32 2, %v6838
  %v6840 = vrot.slane %v6822, %v6839
  %6842 = vbcast.lane.b32.xlu0 %v6840, 256
  %v6843 = vpop.permute.xlu0 %6842
  %v6844 = vlaneseq
  %v6845 = vshrl.u32 %v6844, 7
  %v6846 = vsub.s32 3, %v6845
  %v6847 = vrot.slane %v6822, %v6846
  %6849 = vbcast.lane.b32.xlu0 %v6847, 256
  %v6850 = vpop.permute.xlu0 %6849
  %v6851 = vlaneseq
  %v6852 = vshrl.u32 %v6851, 7
  %v6853 = vsub.s32 4, %v6852
  %v6854 = vrot.slane %v6822, %v6853
  %6856 = vbcast.lane.b32.xlu0 %v6854, 256
  %v6857 = vpop.permute.xlu0 %6856
  %v6858 = vlaneseq
  %v6859 = vshrl.u32 %v6858, 7
  %v6860 = vsub.s32 5, %v6859
  %v6861 = vrot.slane %v6822, %v6860
  %6863 = vbcast.lane.b32.xlu0 %v6861, 256
  %v6864 = vpop.permute.xlu0 %6863
  %v6865 = vlaneseq
  %v6866 = vshrl.u32 %v6865, 7
  %v6867 = vsub.s32 6, %v6866
  %v6868 = vrot.slane %v6822, %v6867
  %6870 = vbcast.lane.b32.xlu0 %v6868, 256
  %v6871 = vpop.permute.xlu0 %6870
  %v6872 = vlaneseq
  %v6873 = vshrl.u32 %v6872, 7
  %v6874 = vsub.s32 7, %v6873
  %v6875 = vrot.slane %v6822, %v6874
  %6877 = vbcast.lane.b32.xlu0 %v6875, 256
  %v6878 = vpop.permute.xlu0 %6877
  %v6879 = vmul.f32 %v6813, %v6829
  %v6880 = vmul.f32 %v6814, %v6836
  %v6881 = vmul.f32 %v6815, %v6843
  %v6882 = vmul.f32 %v6816, %v6850
  %v6883 = vmul.f32 %v6817, %v6857
  %v6884 = vmul.f32 %v6818, %v6864
  %v6885 = vmul.f32 %v6819, %v6871
  %v6886 = vmul.f32 %v6820, %v6878
  %v6887 = vsel %vm364, %v6879, -inf
  %v6888 = vrot.slane %v6887, 4
  %v6889 = vmax.f32 %v6887, %v6888
  %v6890 = vrot.slane %v6889, 2
  %v6891 = vmax.f32 %v6889, %v6890
  %v6892 = vrot.slane %v6891, 1
  %v6893 = vmax.f32 %v6891, %v6892
  %v6894 = vsel %vm364, %v6880, -inf
  %v6895 = vrot.slane %v6894, 4
  %v6896 = vmax.f32 %v6894, %v6895
  %v6897 = vrot.slane %v6896, 2
  %v6898 = vmax.f32 %v6896, %v6897
  %v6899 = vrot.slane %v6898, 1
  %v6900 = vmax.f32 %v6898, %v6899
  %v6901 = vsel %vm364, %v6881, -inf
  %v6902 = vrot.slane %v6901, 4
  %v6903 = vmax.f32 %v6901, %v6902
  %v6904 = vrot.slane %v6903, 2
  %v6905 = vmax.f32 %v6903, %v6904
  %v6906 = vrot.slane %v6905, 1
  %v6907 = vmax.f32 %v6905, %v6906
  %v6908 = vsel %vm364, %v6882, -inf
  %v6909 = vrot.slane %v6908, 4
  %v6910 = vmax.f32 %v6908, %v6909
  %v6911 = vrot.slane %v6910, 2
  %v6912 = vmax.f32 %v6910, %v6911
  %v6913 = vrot.slane %v6912, 1
  %v6914 = vmax.f32 %v6912, %v6913
  %v6915 = vsel %vm364, %v6883, -inf
  %v6916 = vrot.slane %v6915, 4
  %v6917 = vmax.f32 %v6915, %v6916
  %v6918 = vrot.slane %v6917, 2
  %v6919 = vmax.f32 %v6917, %v6918
  %v6920 = vrot.slane %v6919, 1
  %v6921 = vmax.f32 %v6919, %v6920
  %v6922 = vsel %vm364, %v6884, -inf
  %v6923 = vrot.slane %v6922, 4
  %v6924 = vmax.f32 %v6922, %v6923
  %v6925 = vrot.slane %v6924, 2
  %v6926 = vmax.f32 %v6924, %v6925
  %v6927 = vrot.slane %v6926, 1
  %v6928 = vmax.f32 %v6926, %v6927
  %v6929 = vsel %vm364, %v6885, -inf
  %v6930 = vrot.slane %v6929, 4
  %v6931 = vmax.f32 %v6929, %v6930
  %v6932 = vrot.slane %v6931, 2
  %v6933 = vmax.f32 %v6931, %v6932
  %v6934 = vrot.slane %v6933, 1
  %v6935 = vmax.f32 %v6933, %v6934
  %v6936 = vsel %vm364, %v6886, -inf
  %v6937 = vrot.slane %v6936, 4
  %v6938 = vmax.f32 %v6936, %v6937
  %v6939 = vrot.slane %v6938, 2
  %v6940 = vmax.f32 %v6938, %v6939
  %v6941 = vrot.slane %v6940, 1
  %v6942 = vmax.f32 %v6940, %v6941
  %v6952 = vsel %vm1794, %v6900, %v6893
  %v6953 = vsel %vm1796, %v6907, %v6952
  %v6954 = vsel %vm1798, %v6914, %v6953
  %v6955 = vsel %vm1800, %v6921, %v6954
  %v6956 = vsel %vm1802, %v6928, %v6955
  %v6957 = vsel %vm1804, %v6935, %v6956
  %v6958 = vsel %vm1806, %v6942, %v6957
  %6959 = vrot.lane.b32.xlu0 %v6958, 8
  %v6960 = vpop.permute.xlu0 %6959
  %v6962 = vsel %vm364, %v6499, %v6960
  %v6964 = vsel %vm232, %v6962, 0
  %6966 = vmatprep.subr.mxu0 0.0
  %6967 = vmatpush1.msra.mxu0 %v56
  %6968 = vmatprep.subr.mxu0 0.0
  %6969 = vmatpush1.msra.mxu0 %v57
  %6970 = vmatprep.subr.mxu0 0.0
  %6971 = vmatpush1.msra.mxu0 0.0
  %6972 = vmatprep.subr.mxu0 0.0
  %6973 = vmatpush1.msra.mxu0 0.0
  %6974 = vmatprep.subr.mxu0 0.0
  %6975 = vmatpush1.msra.mxu0 0.0
  %6976 = vmatprep.subr.mxu0 0.0
  %6977 = vmatpush1.msra.mxu0 0.0
  %6978 = vmatprep.subr.mxu0 0.0
  %6979 = vmatpush1.msra.mxu0 0.0
  %6980 = vmatprep.subr.mxu0 0.0
  %6981 = vmatpush1.msra.mxu0 0.0
  %6982 = vmatprep.subr.mxu0 0.0
  %6983 = vmatpush1.msra.mxu0 0.0
  %6984 = vmatprep.subr.mxu0 0.0
  %6985 = vmatpush1.msra.mxu0 0.0
  %6986 = vmatprep.subr.mxu0 0.0
  %6987 = vmatpush1.msra.mxu0 0.0
  %6988 = vmatprep.subr.mxu0 0.0
  %6989 = vmatpush1.msra.mxu0 0.0
  %6990 = vmatprep.subr.mxu0 0.0
  %6991 = vmatpush1.msra.mxu0 0.0
  %6992 = vmatprep.subr.mxu0 0.0
  %6993 = vmatpush1.msra.mxu0 0.0
  %6994 = vmatprep.subr.mxu0 0.0
  %6995 = vmatpush1.msra.mxu0 0.0
  %6996 = vmatprep.subr.mxu0 0.0
  %6997 = vmatpush1.msra.mxu0 0.0
  %6998 = vmatprep.subr.mxu0 0.0
  %6999 = vmatpush1.msra.mxu0 0.0
  %7000 = vmatprep.subr.mxu0 0.0
  %7001 = vmatpush1.msra.mxu0 0.0
  %7002 = vmatprep.subr.mxu0 0.0
  %7003 = vmatpush1.msra.mxu0 0.0
  %7004 = vmatprep.subr.mxu0 0.0
  %7005 = vmatpush1.msra.mxu0 0.0
  %7006 = vmatprep.subr.mxu0 0.0
  %7007 = vmatpush1.msra.mxu0 0.0
  %7008 = vmatprep.subr.mxu0 0.0
  %7009 = vmatpush1.msra.mxu0 0.0
  %7010 = vmatprep.subr.mxu0 0.0
  %7011 = vmatpush1.msra.mxu0 0.0
  %7012 = vmatprep.subr.mxu0 0.0
  %7013 = vmatpush1.msra.mxu0 0.0
  %7014 = vmatprep.subr.mxu0 0.0
  %7015 = vmatpush1.msra.mxu0 0.0
  %7016 = vmatprep.subr.mxu0 0.0
  %7017 = vmatpush1.msra.mxu0 0.0
  %7018 = vmatprep.subr.mxu0 0.0
  %7019 = vmatpush1.msra.mxu0 0.0
  %7020 = vmatprep.subr.mxu0 0.0
  %7021 = vmatpush1.msra.mxu0 0.0
  %7022 = vmatprep.subr.mxu0 0.0
  %7023 = vmatpush1.msra.mxu0 0.0
  %7024 = vmatprep.subr.mxu0 0.0
  %7025 = vmatpush1.msra.mxu0 0.0
  %7026 = vmatprep.subr.mxu0 0.0
  %7027 = vmatpush1.msra.mxu0 0.0
  %7028 = vmatprep.subr.mxu0 0.0
  %7029 = vmatpush1.msra.mxu0 0.0
  %7030 = vmatprep.mubr.f32.mxu0 0.0
  %7031 = vmatmul.mubr.f32.gmra.mrb[0].mxu0 %v6964
  %v7032 = vpop.f32.mrb[0].mxu0
  %v7033 = vadd.f32 0.0, %v7032
  %v7034 = vpop.f32.mrb[0].mxu0
  %7035 = vdwg.mxu0
  %v7036 = vadd.f32 %v7033, %v62
  %s7037 = scalar_lea.vmem %s7, 56
  %7038 = vst.msk [vmem:[%s7037] sm:$0xff] %vm1886, %v7036
  %s7039 = scalar_lea.vmem %s5, 56
  %v7040 = vld [vmem:[%s7039] sm:$0xff]
  %v7041 = vmul.f32 %v7036, 0.5
  %v7042 = vmul.f32 %v7041, 1.442695
  %v7043 = vpow.pop %v7042
  %7045 = vrot.lane.b32.xlu0 %v7043, 126
  %v7046 = vpop.permute.xlu0 %7045
  %v7048 = vmul.f32 %v7040, %v7046
  %v7049 = vadd.f32 %v7033, %v1899
  %v7051 = vsel %vm86, %v7048, 0
  %7053 = vmatprep.subr.mxu0 0.0
  %7054 = vmatpush1.msra.mxu0 %v1906
  %7055 = vmatprep.subr.mxu0 0.0
  %7056 = vmatpush1.msra.mxu0 0.0
  %7057 = vmatprep.subr.mxu0 0.0
  %7058 = vmatpush1.msra.mxu0 0.0
  %7059 = vmatprep.subr.mxu0 0.0
  %7060 = vmatpush1.msra.mxu0 0.0
  %7061 = vmatprep.subr.mxu0 0.0
  %7062 = vmatpush1.msra.mxu0 0.0
  %7063 = vmatprep.subr.mxu0 0.0
  %7064 = vmatpush1.msra.mxu0 0.0
  %7065 = vmatprep.subr.mxu0 0.0
  %7066 = vmatpush1.msra.mxu0 0.0
  %7067 = vmatprep.subr.mxu0 0.0
  %7068 = vmatpush1.msra.mxu0 0.0
  %7069 = vmatprep.subr.mxu0 0.0
  %7070 = vmatpush1.msra.mxu0 0.0
  %7071 = vmatprep.subr.mxu0 0.0
  %7072 = vmatpush1.msra.mxu0 0.0
  %7073 = vmatprep.subr.mxu0 0.0
  %7074 = vmatpush1.msra.mxu0 0.0
  %7075 = vmatprep.subr.mxu0 0.0
  %7076 = vmatpush1.msra.mxu0 0.0
  %7077 = vmatprep.subr.mxu0 0.0
  %7078 = vmatpush1.msra.mxu0 0.0
  %7079 = vmatprep.subr.mxu0 0.0
  %7080 = vmatpush1.msra.mxu0 0.0
  %7081 = vmatprep.subr.mxu0 0.0
  %7082 = vmatpush1.msra.mxu0 0.0
  %7083 = vmatprep.subr.mxu0 0.0
  %7084 = vmatpush1.msra.mxu0 0.0
  %7085 = vmatprep.subr.mxu0 0.0
  %7086 = vmatpush1.msra.mxu0 0.0
  %7087 = vmatprep.subr.mxu0 0.0
  %7088 = vmatpush1.msra.mxu0 0.0
  %7089 = vmatprep.subr.mxu0 0.0
  %7090 = vmatpush1.msra.mxu0 0.0
  %7091 = vmatprep.subr.mxu0 0.0
  %7092 = vmatpush1.msra.mxu0 0.0
  %7093 = vmatprep.subr.mxu0 0.0
  %7094 = vmatpush1.msra.mxu0 0.0
  %7095 = vmatprep.subr.mxu0 0.0
  %7096 = vmatpush1.msra.mxu0 0.0
  %7097 = vmatprep.subr.mxu0 0.0
  %7098 = vmatpush1.msra.mxu0 0.0
  %7099 = vmatprep.subr.mxu0 0.0
  %7100 = vmatpush1.msra.mxu0 0.0
  %7101 = vmatprep.subr.mxu0 0.0
  %7102 = vmatpush1.msra.mxu0 0.0
  %7103 = vmatprep.subr.mxu0 0.0
  %7104 = vmatpush1.msra.mxu0 0.0
  %7105 = vmatprep.subr.mxu0 0.0
  %7106 = vmatpush1.msra.mxu0 0.0
  %7107 = vmatprep.subr.mxu0 0.0
  %7108 = vmatpush1.msra.mxu0 0.0
  %7109 = vmatprep.subr.mxu0 0.0
  %7110 = vmatpush1.msra.mxu0 0.0
  %7111 = vmatprep.subr.mxu0 0.0
  %7112 = vmatpush1.msra.mxu0 0.0
  %7113 = vmatprep.subr.mxu0 0.0
  %7114 = vmatpush1.msra.mxu0 0.0
  %7115 = vmatprep.subr.mxu0 0.0
  %7116 = vmatpush1.msra.mxu0 0.0
  %7117 = vmatprep.mubr.f32.mxu0 0.0
  %7118 = vmatmul.mubr.f32.gmra.mrb[0].mxu0 %v7051
  %v7119 = vpop.f32.mrb[0].mxu0
  %v7120 = vadd.f32 0.0, %v7119
  %v7121 = vpop.f32.mrb[0].mxu0
  %7122 = vdwg.mxu0
  %7124 = vrot.lane.b32.xlu0 %v7120, 4
  %v7125 = vpop.permute.xlu0 %7124
  %v7127 = vadd.f32 %v7049, %v7125
  %v7128 = vmax.f32 %v7127, 0.0
  %7130 = vrot.lane.b32.xlu0 %v7128, 124
  %v7131 = vpop.permute.xlu0 %7130
  %7133 = vrot.lane.b32.xlu0 %v6496, 120
  %v7134 = vpop.permute.xlu0 %7133
  %v7136 = vsel %vm232, %v7131, %v7134
  %v7138 = vsel %vm1239, %v7136, 0
  %7140 = vmatprep.subr.mxu0 0.0
  %7141 = vmatpush1.msra.mxu0 %v32
  %7142 = vmatprep.subr.mxu0 0.0
  %7143 = vmatpush1.msra.mxu0 %v33
  %7144 = vmatprep.subr.mxu0 0.0
  %7145 = vmatpush1.msra.mxu0 %v34
  %7146 = vmatprep.subr.mxu0 0.0
  %7147 = vmatpush1.msra.mxu0 0.0
  %7148 = vmatprep.subr.mxu0 0.0
  %7149 = vmatpush1.msra.mxu0 0.0
  %7150 = vmatprep.subr.mxu0 0.0
  %7151 = vmatpush1.msra.mxu0 0.0
  %7152 = vmatprep.subr.mxu0 0.0
  %7153 = vmatpush1.msra.mxu0 0.0
  %7154 = vmatprep.subr.mxu0 0.0
  %7155 = vmatpush1.msra.mxu0 0.0
  %7156 = vmatprep.subr.mxu0 0.0
  %7157 = vmatpush1.msra.mxu0 0.0
  %7158 = vmatprep.subr.mxu0 0.0
  %7159 = vmatpush1.msra.mxu0 0.0
  %7160 = vmatprep.subr.mxu0 0.0
  %7161 = vmatpush1.msra.mxu0 0.0
  %7162 = vmatprep.subr.mxu0 0.0
  %7163 = vmatpush1.msra.mxu0 0.0
  %7164 = vmatprep.subr.mxu0 0.0
  %7165 = vmatpush1.msra.mxu0 0.0
  %7166 = vmatprep.subr.mxu0 0.0
  %7167 = vmatpush1.msra.mxu0 0.0
  %7168 = vmatprep.subr.mxu0 0.0
  %7169 = vmatpush1.msra.mxu0 0.0
  %7170 = vmatprep.subr.mxu0 0.0
  %7171 = vmatpush1.msra.mxu0 0.0
  %7172 = vmatprep.subr.mxu0 0.0
  %7173 = vmatpush1.msra.mxu0 0.0
  %7174 = vmatprep.subr.mxu0 0.0
  %7175 = vmatpush1.msra.mxu0 0.0
  %7176 = vmatprep.subr.mxu0 0.0
  %7177 = vmatpush1.msra.mxu0 0.0
  %7178 = vmatprep.subr.mxu0 0.0
  %7179 = vmatpush1.msra.mxu0 0.0
  %7180 = vmatprep.subr.mxu0 0.0
  %7181 = vmatpush1.msra.mxu0 0.0
  %7182 = vmatprep.subr.mxu0 0.0
  %7183 = vmatpush1.msra.mxu0 0.0
  %7184 = vmatprep.subr.mxu0 0.0
  %7185 = vmatpush1.msra.mxu0 0.0
  %7186 = vmatprep.subr.mxu0 0.0
  %7187 = vmatpush1.msra.mxu0 0.0
  %7188 = vmatprep.subr.mxu0 0.0
  %7189 = vmatpush1.msra.mxu0 0.0
  %7190 = vmatprep.subr.mxu0 0.0
  %7191 = vmatpush1.msra.mxu0 0.0
  %7192 = vmatprep.subr.mxu0 0.0
  %7193 = vmatpush1.msra.mxu0 0.0
  %7194 = vmatprep.subr.mxu0 0.0
  %7195 = vmatpush1.msra.mxu0 0.0
  %7196 = vmatprep.subr.mxu0 0.0
  %7197 = vmatpush1.msra.mxu0 0.0
  %7198 = vmatprep.subr.mxu0 0.0
  %7199 = vmatpush1.msra.mxu0 0.0
  %7200 = vmatprep.subr.mxu0 0.0
  %7201 = vmatpush1.msra.mxu0 0.0
  %7202 = vmatprep.subr.mxu0 0.0
  %7203 = vmatpush1.msra.mxu0 0.0
  %7204 = vmatprep.mubr.f32.mxu0 0.0
  %7205 = vmatmul.mubr.f32.gmra.mrb[0].mxu0 %v7138
  %v7206 = vpop.f32.mrb[0].mxu0
  %v7207 = vadd.f32 %v39, %v7206
  %v7208 = vpop.f32.mrb[0].mxu0
  %7209 = vdwg.mxu0
  %v7210 = vmul.f32 %v7207, 0.5
  %v7211 = vtanh.pop %v7210
  %v7212 = vmul.f32 %v7211, 0.5
  %v7213 = vadd.f32 %v7212, 0.5
  %v7214 = vtanh.pop %v7207
  %v7215 = vmul.f32 %v7213, %v6490
  %7217 = vrot.lane.b32.xlu0 %v7214, 112
  %v7218 = vpop.permute.xlu0 %7217
  %v7220 = vmul.f32 %v7213, %v7218
  %7222 = vrot.lane.b32.xlu0 %v7220, 8
  %v7223 = vpop.permute.xlu0 %7222
  %v7225 = vadd.f32 %v7215, %v7223
  %v7226 = vtanh.pop %v7225
  %7228 = vrot.lane.b32.xlu0 %v7226, 16
  %v7229 = vpop.permute.xlu0 %7228
  %v7231 = vmul.f32 %v7213, %v7229
  %7233 = vrot.lane.b32.xlu0 %v7231, 104
  %v7234 = vpop.permute.xlu0 %7233
  %v7235 = vsel %vm364, %v7234, 0
  %7237 = vmatprep.subr.mxu0 0.0
  %7238 = vmatpush1.msra.mxu0 %v42
  %7239 = vmatprep.subr.mxu0 0.0
  %7240 = vmatpush1.msra.mxu0 0.0
  %7241 = vmatprep.subr.mxu0 0.0
  %7242 = vmatpush1.msra.mxu0 0.0
  %7243 = vmatprep.subr.mxu0 0.0
  %7244 = vmatpush1.msra.mxu0 0.0
  %7245 = vmatprep.subr.mxu0 0.0
  %7246 = vmatpush1.msra.mxu0 0.0
  %7247 = vmatprep.subr.mxu0 0.0
  %7248 = vmatpush1.msra.mxu0 0.0
  %7249 = vmatprep.subr.mxu0 0.0
  %7250 = vmatpush1.msra.mxu0 0.0
  %7251 = vmatprep.subr.mxu0 0.0
  %7252 = vmatpush1.msra.mxu0 0.0
  %7253 = vmatprep.subr.mxu0 0.0
  %7254 = vmatpush1.msra.mxu0 0.0
  %7255 = vmatprep.subr.mxu0 0.0
  %7256 = vmatpush1.msra.mxu0 0.0
  %7257 = vmatprep.subr.mxu0 0.0
  %7258 = vmatpush1.msra.mxu0 0.0
  %7259 = vmatprep.subr.mxu0 0.0
  %7260 = vmatpush1.msra.mxu0 0.0
  %7261 = vmatprep.subr.mxu0 0.0
  %7262 = vmatpush1.msra.mxu0 0.0
  %7263 = vmatprep.subr.mxu0 0.0
  %7264 = vmatpush1.msra.mxu0 0.0
  %7265 = vmatprep.subr.mxu0 0.0
  %7266 = vmatpush1.msra.mxu0 0.0
  %7267 = vmatprep.subr.mxu0 0.0
  %7268 = vmatpush1.msra.mxu0 0.0
  %7269 = vmatprep.subr.mxu0 0.0
  %7270 = vmatpush1.msra.mxu0 0.0
  %7271 = vmatprep.subr.mxu0 0.0
  %7272 = vmatpush1.msra.mxu0 0.0
  %7273 = vmatprep.subr.mxu0 0.0
  %7274 = vmatpush1.msra.mxu0 0.0
  %7275 = vmatprep.subr.mxu0 0.0
  %7276 = vmatpush1.msra.mxu0 0.0
  %7277 = vmatprep.subr.mxu0 0.0
  %7278 = vmatpush1.msra.mxu0 0.0
  %7279 = vmatprep.subr.mxu0 0.0
  %7280 = vmatpush1.msra.mxu0 0.0
  %7281 = vmatprep.subr.mxu0 0.0
  %7282 = vmatpush1.msra.mxu0 0.0
  %7283 = vmatprep.subr.mxu0 0.0
  %7284 = vmatpush1.msra.mxu0 0.0
  %7285 = vmatprep.subr.mxu0 0.0
  %7286 = vmatpush1.msra.mxu0 0.0
  %7287 = vmatprep.subr.mxu0 0.0
  %7288 = vmatpush1.msra.mxu0 0.0
  %7289 = vmatprep.subr.mxu0 0.0
  %7290 = vmatpush1.msra.mxu0 0.0
  %7291 = vmatprep.subr.mxu0 0.0
  %7292 = vmatpush1.msra.mxu0 0.0
  %7293 = vmatprep.subr.mxu0 0.0
  %7294 = vmatpush1.msra.mxu0 0.0
  %7295 = vmatprep.subr.mxu0 0.0
  %7296 = vmatpush1.msra.mxu0 0.0
  %7297 = vmatprep.subr.mxu0 0.0
  %7298 = vmatpush1.msra.mxu0 0.0
  %7299 = vmatprep.subr.mxu0 0.0
  %7300 = vmatpush1.msra.mxu0 0.0
  %7301 = vmatprep.mubr.f32.mxu0 0.0
  %7302 = vmatmul.mubr.f32.gmra.mrb[0].mxu0 %v7235
  %v7303 = vpop.f32.mrb[0].mxu0
  %v7304 = vadd.f32 0.0, %v7303
  %v7305 = vpop.f32.mrb[0].mxu0
  %7306 = vdwg.mxu0
  %v7307 = vadd.f32 %v1232, %v7304
  %v7308 = vsub.f32 %v7304, %v1413
  %v7310 = vcombine.high %v7307, %v7307
  %v7312 = vunpack.c.l.s4 1966171168
  %v7313 = vunpack.c.0.s8 %v7312
  %v7314 = vlaneseq
  %v7315 = vshrl.u32 %v7314, 7
  %v7316 = vsub.s32 %v7313, %v7315
  %v7317 = vrot.slane %v7307, %v7316
  %v7319 = vunpack.c.l.s4 1966171168
  %v7320 = vunpack.c.0.s8 %v7319
  %v7321 = vlaneseq
  %v7322 = vshrl.u32 %v7321, 7
  %v7323 = vsub.s32 %v7320, %v7322
  %v7324 = vrot.slane %v7310, %v7323
  %v7325 = vcombine.high %v7317, %v7317
  %v7326 = vcombine.high %v7324, %v7324
  %v7328 = vunpack.c.l.s4 1966171168
  %v7329 = vunpack.c.0.s8 %v7328
  %v7330 = vlaneseq
  %v7331 = vshrl.u32 %v7330, 7
  %v7332 = vsub.s32 %v7329, %v7331
  %v7333 = vrot.slane %v7317, %v7332
  %v7335 = vunpack.c.l.s4 1966171168
  %v7336 = vunpack.c.0.s8 %v7335
  %v7337 = vlaneseq
  %v7338 = vshrl.u32 %v7337, 7
  %v7339 = vsub.s32 %v7336, %v7338
  %v7340 = vrot.slane %v7324, %v7339
  %v7342 = vunpack.c.l.s4 1966171168
  %v7343 = vunpack.c.0.s8 %v7342
  %v7344 = vlaneseq
  %v7345 = vshrl.u32 %v7344, 7
  %v7346 = vsub.s32 %v7343, %v7345
  %v7347 = vrot.slane %v7325, %v7346
  %v7349 = vunpack.c.l.s4 1966171168
  %v7350 = vunpack.c.0.s8 %v7349
  %v7351 = vlaneseq
  %v7352 = vshrl.u32 %v7351, 7
  %v7353 = vsub.s32 %v7350, %v7352
  %v7354 = vrot.slane %v7326, %v7353
  %v7355 = vcombine.high %v7333, %v7333
  %v7356 = vcombine.high %v7340, %v7340
  %v7357 = vcombine.high %v7347, %v7347
  %v7358 = vcombine.high %v7354, %v7354
  %v7359 = vlaneseq
  %v7360 = vshrl.u32 %v7359, 7
  %v7361 = vsub.s32 0, %v7360
  %v7362 = vrot.slane %v7333, %v7361
  %v7363 = vlaneseq
  %v7364 = vshrl.u32 %v7363, 7
  %v7365 = vsub.s32 0, %v7364
  %v7366 = vrot.slane %v7347, %v7365
  %v7367 = vlaneseq
  %v7368 = vshrl.u32 %v7367, 7
  %v7369 = vsub.s32 0, %v7368
  %v7370 = vrot.slane %v7355, %v7369
  %v7371 = vlaneseq
  %v7372 = vshrl.u32 %v7371, 7
  %v7373 = vsub.s32 0, %v7372
  %v7374 = vrot.slane %v7357, %v7373
  %v7375 = vlaneseq
  %v7376 = vshrl.u32 %v7375, 7
  %v7377 = vsub.s32 0, %v7376
  %v7378 = vrot.slane %v7340, %v7377
  %v7379 = vlaneseq
  %v7380 = vshrl.u32 %v7379, 7
  %v7381 = vsub.s32 0, %v7380
  %v7382 = vrot.slane %v7354, %v7381
  %v7383 = vlaneseq
  %v7384 = vshrl.u32 %v7383, 7
  %v7385 = vsub.s32 0, %v7384
  %v7386 = vrot.slane %v7356, %v7385
  %v7387 = vlaneseq
  %v7388 = vshrl.u32 %v7387, 7
  %v7389 = vsub.s32 0, %v7388
  %v7390 = vrot.slane %v7358, %v7389
  %7400 = vrot.lane.b32.xlu0 %v7308, 64
  %v7401 = vpop.permute.xlu0 %7400
  %v7403 = vadd.f32 %v7362, %v7401
  %v7404 = vadd.f32 %v7366, %v7401
  %v7405 = vadd.f32 %v7370, %v7401
  %v7406 = vadd.f32 %v7374, %v7401
  %v7407 = vadd.f32 %v7378, %v7401
  %v7408 = vadd.f32 %v7382, %v7401
  %v7409 = vadd.f32 %v7386, %v7401
  %v7410 = vadd.f32 %v7390, %v7401
  %v7411 = vmax.f32 %v7403, 0.0
  %v7412 = vmax.f32 %v7404, 0.0
  %v7413 = vmax.f32 %v7405, 0.0
  %v7414 = vmax.f32 %v7406, 0.0
  %v7415 = vmax.f32 %v7407, 0.0
  %v7416 = vmax.f32 %v7408, 0.0
  %v7417 = vmax.f32 %v7409, 0.0
  %v7418 = vmax.f32 %v7410, 0.0
  %v7420 = vsel %vm1526, %v7411, 0
  %v7423 = vsel %vm1526, %v7412, 0
  %v7426 = vsel %vm1526, %v7413, 0
  %v7429 = vsel %vm1526, %v7414, 0
  %v7432 = vsel %vm1526, %v7415, 0
  %v7435 = vsel %vm1526, %v7416, 0
  %v7438 = vsel %vm1526, %v7417, 0
  %v7441 = vsel %vm1526, %v7418, 0
  %7443 = vmatprep.subr.mxu0 0.0
  %7444 = vmatpush1.msra.mxu0 %v43
  %7445 = vmatprep.subr.mxu0 0.0
  %7446 = vmatpush1.msra.mxu0 %v44
  %7447 = vmatprep.subr.mxu0 0.0
  %7448 = vmatpush1.msra.mxu0 %v45
  %7449 = vmatprep.subr.mxu0 0.0
  %7450 = vmatpush1.msra.mxu0 %v46
  %7451 = vmatprep.subr.mxu0 0.0
  %7452 = vmatpush1.msra.mxu0 %v47
  %7453 = vmatprep.subr.mxu0 0.0
  %7454 = vmatpush1.msra.mxu0 %v48
  %7455 = vmatprep.subr.mxu0 0.0
  %7456 = vmatpush1.msra.mxu0 %v49
  %7457 = vmatprep.subr.mxu0 0.0
  %7458 = vmatpush1.msra.mxu0 %v50
  %7459 = vmatprep.subr.mxu0 0.0
  %7460 = vmatpush1.msra.mxu0 0.0
  %7461 = vmatprep.subr.mxu0 0.0
  %7462 = vmatpush1.msra.mxu0 0.0
  %7463 = vmatprep.subr.mxu0 0.0
  %7464 = vmatpush1.msra.mxu0 0.0
  %7465 = vmatprep.subr.mxu0 0.0
  %7466 = vmatpush1.msra.mxu0 0.0
  %7467 = vmatprep.subr.mxu0 0.0
  %7468 = vmatpush1.msra.mxu0 0.0
  %7469 = vmatprep.subr.mxu0 0.0
  %7470 = vmatpush1.msra.mxu0 0.0
  %7471 = vmatprep.subr.mxu0 0.0
  %7472 = vmatpush1.msra.mxu0 0.0
  %7473 = vmatprep.subr.mxu0 0.0
  %7474 = vmatpush1.msra.mxu0 0.0
  %7475 = vmatprep.subr.mxu0 0.0
  %7476 = vmatpush1.msra.mxu0 0.0
  %7477 = vmatprep.subr.mxu0 0.0
  %7478 = vmatpush1.msra.mxu0 0.0
  %7479 = vmatprep.subr.mxu0 0.0
  %7480 = vmatpush1.msra.mxu0 0.0
  %7481 = vmatprep.subr.mxu0 0.0
  %7482 = vmatpush1.msra.mxu0 0.0
  %7483 = vmatprep.subr.mxu0 0.0
  %7484 = vmatpush1.msra.mxu0 0.0
  %7485 = vmatprep.subr.mxu0 0.0
  %7486 = vmatpush1.msra.mxu0 0.0
  %7487 = vmatprep.subr.mxu0 0.0
  %7488 = vmatpush1.msra.mxu0 0.0
  %7489 = vmatprep.subr.mxu0 0.0
  %7490 = vmatpush1.msra.mxu0 0.0
  %7491 = vmatprep.subr.mxu0 0.0
  %7492 = vmatpush1.msra.mxu0 0.0
  %7493 = vmatprep.subr.mxu0 0.0
  %7494 = vmatpush1.msra.mxu0 0.0
  %7495 = vmatprep.subr.mxu0 0.0
  %7496 = vmatpush1.msra.mxu0 0.0
  %7497 = vmatprep.subr.mxu0 0.0
  %7498 = vmatpush1.msra.mxu0 0.0
  %7499 = vmatprep.subr.mxu0 0.0
  %7500 = vmatpush1.msra.mxu0 0.0
  %7501 = vmatprep.subr.mxu0 0.0
  %7502 = vmatpush1.msra.mxu0 0.0
  %7503 = vmatprep.subr.mxu0 0.0
  %7504 = vmatpush1.msra.mxu0 0.0
  %7505 = vmatprep.subr.mxu0 0.0
  %7506 = vmatpush1.msra.mxu0 0.0
  %7507 = vmatprep.mubr.f32.mxu0 0.0
  %7508 = vmatmul.mubr.f32.gmra.mrb[0].mxu0 %v7420
  %v7509 = vpop.f32.mrb[0].mxu0
  %v7510 = vadd.f32 %v55, %v7509
  %v7511 = vpop.f32.mrb[0].mxu0
  %7512 = vmatprep.mubr.f32.mxu0 0.0
  %7513 = vmatmul.mubr.f32.gmra.mrb[0].mxu0 %v7423
  %v7514 = vpop.f32.mrb[0].mxu0
  %v7515 = vadd.f32 %v55, %v7514
  %v7516 = vpop.f32.mrb[0].mxu0
  %7517 = vmatprep.mubr.f32.mxu0 0.0
  %7518 = vmatmul.mubr.f32.gmra.mrb[0].mxu0 %v7426
  %v7519 = vpop.f32.mrb[0].mxu0
  %v7520 = vadd.f32 %v55, %v7519
  %v7521 = vpop.f32.mrb[0].mxu0
  %7522 = vmatprep.mubr.f32.mxu0 0.0
  %7523 = vmatmul.mubr.f32.gmra.mrb[0].mxu0 %v7429
  %v7524 = vpop.f32.mrb[0].mxu0
  %v7525 = vadd.f32 %v55, %v7524
  %v7526 = vpop.f32.mrb[0].mxu0
  %7527 = vmatprep.mubr.f32.mxu0 0.0
  %7528 = vmatmul.mubr.f32.gmra.mrb[0].mxu0 %v7432
  %v7529 = vpop.f32.mrb[0].mxu0
  %v7530 = vadd.f32 %v55, %v7529
  %v7531 = vpop.f32.mrb[0].mxu0
  %7532 = vmatprep.mubr.f32.mxu0 0.0
  %7533 = vmatmul.mubr.f32.gmra.mrb[0].mxu0 %v7435
  %v7534 = vpop.f32.mrb[0].mxu0
  %v7535 = vadd.f32 %v55, %v7534
  %v7536 = vpop.f32.mrb[0].mxu0
  %7537 = vmatprep.mubr.f32.mxu0 0.0
  %7538 = vmatmul.mubr.f32.gmra.mrb[0].mxu0 %v7438
  %v7539 = vpop.f32.mrb[0].mxu0
  %v7540 = vadd.f32 %v55, %v7539
  %v7541 = vpop.f32.mrb[0].mxu0
  %7542 = vmatprep.mubr.f32.mxu0 0.0
  %7543 = vmatmul.mubr.f32.gmra.mrb[0].mxu0 %v7441
  %v7544 = vpop.f32.mrb[0].mxu0
  %v7545 = vadd.f32 %v55, %v7544
  %v7546 = vpop.f32.mrb[0].mxu0
  %7547 = vdwg.mxu0
  %v7548 = vmax.f32 %v7510, 0.0
  %v7549 = vmax.f32 %v7515, 0.0
  %v7550 = vmax.f32 %v7520, 0.0
  %v7551 = vmax.f32 %v7525, 0.0
  %v7552 = vmax.f32 %v7530, 0.0
  %v7553 = vmax.f32 %v7535, 0.0
  %v7554 = vmax.f32 %v7540, 0.0
  %v7555 = vmax.f32 %v7545, 0.0
  %s7556 = scalar_lea.vmem %s2, 64
  %v7557 = vld [vmem:[%s7556] sm:$0xff]
  %v7558 = vlaneseq
  %v7559 = vshrl.u32 %v7558, 7
  %v7560 = vsub.s32 0, %v7559
  %v7561 = vrot.slane %v7557, %v7560
  %7563 = vbcast.lane.b32.xlu0 %v7561, 256
  %v7564 = vpop.permute.xlu0 %7563
  %v7565 = vlaneseq
  %v7566 = vshrl.u32 %v7565, 7
  %v7567 = vsub.s32 1, %v7566
  %v7568 = vrot.slane %v7557, %v7567
  %7570 = vbcast.lane.b32.xlu0 %v7568, 256
  %v7571 = vpop.permute.xlu0 %7570
  %v7572 = vlaneseq
  %v7573 = vshrl.u32 %v7572, 7
  %v7574 = vsub.s32 2, %v7573
  %v7575 = vrot.slane %v7557, %v7574
  %7577 = vbcast.lane.b32.xlu0 %v7575, 256
  %v7578 = vpop.permute.xlu0 %7577
  %v7579 = vlaneseq
  %v7580 = vshrl.u32 %v7579, 7
  %v7581 = vsub.s32 3, %v7580
  %v7582 = vrot.slane %v7557, %v7581
  %7584 = vbcast.lane.b32.xlu0 %v7582, 256
  %v7585 = vpop.permute.xlu0 %7584
  %v7586 = vlaneseq
  %v7587 = vshrl.u32 %v7586, 7
  %v7588 = vsub.s32 4, %v7587
  %v7589 = vrot.slane %v7557, %v7588
  %7591 = vbcast.lane.b32.xlu0 %v7589, 256
  %v7592 = vpop.permute.xlu0 %7591
  %v7593 = vlaneseq
  %v7594 = vshrl.u32 %v7593, 7
  %v7595 = vsub.s32 5, %v7594
  %v7596 = vrot.slane %v7557, %v7595
  %7598 = vbcast.lane.b32.xlu0 %v7596, 256
  %v7599 = vpop.permute.xlu0 %7598
  %v7600 = vlaneseq
  %v7601 = vshrl.u32 %v7600, 7
  %v7602 = vsub.s32 6, %v7601
  %v7603 = vrot.slane %v7557, %v7602
  %7605 = vbcast.lane.b32.xlu0 %v7603, 256
  %v7606 = vpop.permute.xlu0 %7605
  %v7607 = vlaneseq
  %v7608 = vshrl.u32 %v7607, 7
  %v7609 = vsub.s32 7, %v7608
  %v7610 = vrot.slane %v7557, %v7609
  %7612 = vbcast.lane.b32.xlu0 %v7610, 256
  %v7613 = vpop.permute.xlu0 %7612
  %v7614 = vmul.f32 %v7548, %v7564
  %v7615 = vmul.f32 %v7549, %v7571
  %v7616 = vmul.f32 %v7550, %v7578
  %v7617 = vmul.f32 %v7551, %v7585
  %v7618 = vmul.f32 %v7552, %v7592
  %v7619 = vmul.f32 %v7553, %v7599
  %v7620 = vmul.f32 %v7554, %v7606
  %v7621 = vmul.f32 %v7555, %v7613
  %v7622 = vsel %vm364, %v7614, -inf
  %v7623 = vrot.slane %v7622, 4
  %v7624 = vmax.f32 %v7622, %v7623
  %v7625 = vrot.slane %v7624, 2
  %v7626 = vmax.f32 %v7624, %v7625
  %v7627 = vrot.slane %v7626, 1
  %v7628 = vmax.f32 %v7626, %v7627
  %v7629 = vsel %vm364, %v7615, -inf
  %v7630 = vrot.slane %v7629, 4
  %v7631 = vmax.f32 %v7629, %v7630
  %v7632 = vrot.slane %v7631, 2
  %v7633 = vmax.f32 %v7631, %v7632
  %v7634 = vrot.slane %v7633, 1
  %v7635 = vmax.f32 %v7633, %v7634
  %v7636 = vsel %vm364, %v7616, -inf
  %v7637 = vrot.slane %v7636, 4
  %v7638 = vmax.f32 %v7636, %v7637
  %v7639 = vrot.slane %v7638, 2
  %v7640 = vmax.f32 %v7638, %v7639
  %v7641 = vrot.slane %v7640, 1
  %v7642 = vmax.f32 %v7640, %v7641
  %v7643 = vsel %vm364, %v7617, -inf
  %v7644 = vrot.slane %v7643, 4
  %v7645 = vmax.f32 %v7643, %v7644
  %v7646 = vrot.slane %v7645, 2
  %v7647 = vmax.f32 %v7645, %v7646
  %v7648 = vrot.slane %v7647, 1
  %v7649 = vmax.f32 %v7647, %v7648
  %v7650 = vsel %vm364, %v7618, -inf
  %v7651 = vrot.slane %v7650, 4
  %v7652 = vmax.f32 %v7650, %v7651
  %v7653 = vrot.slane %v7652, 2
  %v7654 = vmax.f32 %v7652, %v7653
  %v7655 = vrot.slane %v7654, 1
  %v7656 = vmax.f32 %v7654, %v7655
  %v7657 = vsel %vm364, %v7619, -inf
  %v7658 = vrot.slane %v7657, 4
  %v7659 = vmax.f32 %v7657, %v7658
  %v7660 = vrot.slane %v7659, 2
  %v7661 = vmax.f32 %v7659, %v7660
  %v7662 = vrot.slane %v7661, 1
  %v7663 = vmax.f32 %v7661, %v7662
  %v7664 = vsel %vm364, %v7620, -inf
  %v7665 = vrot.slane %v7664, 4
  %v7666 = vmax.f32 %v7664, %v7665
  %v7667 = vrot.slane %v7666, 2
  %v7668 = vmax.f32 %v7666, %v7667
  %v7669 = vrot.slane %v7668, 1
  %v7670 = vmax.f32 %v7668, %v7669
  %v7671 = vsel %vm364, %v7621, -inf
  %v7672 = vrot.slane %v7671, 4
  %v7673 = vmax.f32 %v7671, %v7672
  %v7674 = vrot.slane %v7673, 2
  %v7675 = vmax.f32 %v7673, %v7674
  %v7676 = vrot.slane %v7675, 1
  %v7677 = vmax.f32 %v7675, %v7676
  %v7687 = vsel %vm1794, %v7635, %v7628
  %v7688 = vsel %vm1796, %v7642, %v7687
  %v7689 = vsel %vm1798, %v7649, %v7688
  %v7690 = vsel %vm1800, %v7656, %v7689
  %v7691 = vsel %vm1802, %v7663, %v7690
  %v7692 = vsel %vm1804, %v7670, %v7691
  %v7693 = vsel %vm1806, %v7677, %v7692
  %7694 = vrot.lane.b32.xlu0 %v7693, 8
  %v7695 = vpop.permute.xlu0 %7694
  %v7697 = vsel %vm364, %v7234, %v7695
  %v7699 = vsel %vm232, %v7697, 0
  %7701 = vmatprep.subr.mxu0 0.0
  %7702 = vmatpush1.msra.mxu0 %v56
  %7703 = vmatprep.subr.mxu0 0.0
  %7704 = vmatpush1.msra.mxu0 %v57
  %7705 = vmatprep.subr.mxu0 0.0
  %7706 = vmatpush1.msra.mxu0 0.0
  %7707 = vmatprep.subr.mxu0 0.0
  %7708 = vmatpush1.msra.mxu0 0.0
  %7709 = vmatprep.subr.mxu0 0.0
  %7710 = vmatpush1.msra.mxu0 0.0
  %7711 = vmatprep.subr.mxu0 0.0
  %7712 = vmatpush1.msra.mxu0 0.0
  %7713 = vmatprep.subr.mxu0 0.0
  %7714 = vmatpush1.msra.mxu0 0.0
  %7715 = vmatprep.subr.mxu0 0.0
  %7716 = vmatpush1.msra.mxu0 0.0
  %7717 = vmatprep.subr.mxu0 0.0
  %7718 = vmatpush1.msra.mxu0 0.0
  %7719 = vmatprep.subr.mxu0 0.0
  %7720 = vmatpush1.msra.mxu0 0.0
  %7721 = vmatprep.subr.mxu0 0.0
  %7722 = vmatpush1.msra.mxu0 0.0
  %7723 = vmatprep.subr.mxu0 0.0
  %7724 = vmatpush1.msra.mxu0 0.0
  %7725 = vmatprep.subr.mxu0 0.0
  %7726 = vmatpush1.msra.mxu0 0.0
  %7727 = vmatprep.subr.mxu0 0.0
  %7728 = vmatpush1.msra.mxu0 0.0
  %7729 = vmatprep.subr.mxu0 0.0
  %7730 = vmatpush1.msra.mxu0 0.0
  %7731 = vmatprep.subr.mxu0 0.0
  %7732 = vmatpush1.msra.mxu0 0.0
  %7733 = vmatprep.subr.mxu0 0.0
  %7734 = vmatpush1.msra.mxu0 0.0
  %7735 = vmatprep.subr.mxu0 0.0
  %7736 = vmatpush1.msra.mxu0 0.0
  %7737 = vmatprep.subr.mxu0 0.0
  %7738 = vmatpush1.msra.mxu0 0.0
  %7739 = vmatprep.subr.mxu0 0.0
  %7740 = vmatpush1.msra.mxu0 0.0
  %7741 = vmatprep.subr.mxu0 0.0
  %7742 = vmatpush1.msra.mxu0 0.0
  %7743 = vmatprep.subr.mxu0 0.0
  %7744 = vmatpush1.msra.mxu0 0.0
  %7745 = vmatprep.subr.mxu0 0.0
  %7746 = vmatpush1.msra.mxu0 0.0
  %7747 = vmatprep.subr.mxu0 0.0
  %7748 = vmatpush1.msra.mxu0 0.0
  %7749 = vmatprep.subr.mxu0 0.0
  %7750 = vmatpush1.msra.mxu0 0.0
  %7751 = vmatprep.subr.mxu0 0.0
  %7752 = vmatpush1.msra.mxu0 0.0
  %7753 = vmatprep.subr.mxu0 0.0
  %7754 = vmatpush1.msra.mxu0 0.0
  %7755 = vmatprep.subr.mxu0 0.0
  %7756 = vmatpush1.msra.mxu0 0.0
  %7757 = vmatprep.subr.mxu0 0.0
  %7758 = vmatpush1.msra.mxu0 0.0
  %7759 = vmatprep.subr.mxu0 0.0
  %7760 = vmatpush1.msra.mxu0 0.0
  %7761 = vmatprep.subr.mxu0 0.0
  %7762 = vmatpush1.msra.mxu0 0.0
  %7763 = vmatprep.subr.mxu0 0.0
  %7764 = vmatpush1.msra.mxu0 0.0
  %7765 = vmatprep.mubr.f32.mxu0 0.0
  %7766 = vmatmul.mubr.f32.gmra.mrb[0].mxu0 %v7699
  %v7767 = vpop.f32.mrb[0].mxu0
  %v7768 = vadd.f32 0.0, %v7767
  %v7769 = vpop.f32.mrb[0].mxu0
  %7770 = vdwg.mxu0
  %v7771 = vadd.f32 %v7768, %v62
  %s7772 = scalar_lea.vmem %s7, 64
  %7773 = vst.msk [vmem:[%s7772] sm:$0xff] %vm1886, %v7771
  %s7774 = scalar_lea.vmem %s5, 64
  %v7775 = vld [vmem:[%s7774] sm:$0xff]
  %v7776 = vmul.f32 %v7771, 0.5
  %v7777 = vmul.f32 %v7776, 1.442695
  %v7778 = vpow.pop %v7777
  %7780 = vrot.lane.b32.xlu0 %v7778, 126
  %v7781 = vpop.permute.xlu0 %7780
  %v7783 = vmul.f32 %v7775, %v7781
  %v7784 = vadd.f32 %v7768, %v1899
  %v7786 = vsel %vm86, %v7783, 0
  %7788 = vmatprep.subr.mxu0 0.0
  %7789 = vmatpush1.msra.mxu0 %v1906
  %7790 = vmatprep.subr.mxu0 0.0
  %7791 = vmatpush1.msra.mxu0 0.0
  %7792 = vmatprep.subr.mxu0 0.0
  %7793 = vmatpush1.msra.mxu0 0.0
  %7794 = vmatprep.subr.mxu0 0.0
  %7795 = vmatpush1.msra.mxu0 0.0
  %7796 = vmatprep.subr.mxu0 0.0
  %7797 = vmatpush1.msra.mxu0 0.0
  %7798 = vmatprep.subr.mxu0 0.0
  %7799 = vmatpush1.msra.mxu0 0.0
  %7800 = vmatprep.subr.mxu0 0.0
  %7801 = vmatpush1.msra.mxu0 0.0
  %7802 = vmatprep.subr.mxu0 0.0
  %7803 = vmatpush1.msra.mxu0 0.0
  %7804 = vmatprep.subr.mxu0 0.0
  %7805 = vmatpush1.msra.mxu0 0.0
  %7806 = vmatprep.subr.mxu0 0.0
  %7807 = vmatpush1.msra.mxu0 0.0
  %7808 = vmatprep.subr.mxu0 0.0
  %7809 = vmatpush1.msra.mxu0 0.0
  %7810 = vmatprep.subr.mxu0 0.0
  %7811 = vmatpush1.msra.mxu0 0.0
  %7812 = vmatprep.subr.mxu0 0.0
  %7813 = vmatpush1.msra.mxu0 0.0
  %7814 = vmatprep.subr.mxu0 0.0
  %7815 = vmatpush1.msra.mxu0 0.0
  %7816 = vmatprep.subr.mxu0 0.0
  %7817 = vmatpush1.msra.mxu0 0.0
  %7818 = vmatprep.subr.mxu0 0.0
  %7819 = vmatpush1.msra.mxu0 0.0
  %7820 = vmatprep.subr.mxu0 0.0
  %7821 = vmatpush1.msra.mxu0 0.0
  %7822 = vmatprep.subr.mxu0 0.0
  %7823 = vmatpush1.msra.mxu0 0.0
  %7824 = vmatprep.subr.mxu0 0.0
  %7825 = vmatpush1.msra.mxu0 0.0
  %7826 = vmatprep.subr.mxu0 0.0
  %7827 = vmatpush1.msra.mxu0 0.0
  %7828 = vmatprep.subr.mxu0 0.0
  %7829 = vmatpush1.msra.mxu0 0.0
  %7830 = vmatprep.subr.mxu0 0.0
  %7831 = vmatpush1.msra.mxu0 0.0
  %7832 = vmatprep.subr.mxu0 0.0
  %7833 = vmatpush1.msra.mxu0 0.0
  %7834 = vmatprep.subr.mxu0 0.0
  %7835 = vmatpush1.msra.mxu0 0.0
  %7836 = vmatprep.subr.mxu0 0.0
  %7837 = vmatpush1.msra.mxu0 0.0
  %7838 = vmatprep.subr.mxu0 0.0
  %7839 = vmatpush1.msra.mxu0 0.0
  %7840 = vmatprep.subr.mxu0 0.0
  %7841 = vmatpush1.msra.mxu0 0.0
  %7842 = vmatprep.subr.mxu0 0.0
  %7843 = vmatpush1.msra.mxu0 0.0
  %7844 = vmatprep.subr.mxu0 0.0
  %7845 = vmatpush1.msra.mxu0 0.0
  %7846 = vmatprep.subr.mxu0 0.0
  %7847 = vmatpush1.msra.mxu0 0.0
  %7848 = vmatprep.subr.mxu0 0.0
  %7849 = vmatpush1.msra.mxu0 0.0
  %7850 = vmatprep.subr.mxu0 0.0
  %7851 = vmatpush1.msra.mxu0 0.0
  %7852 = vmatprep.mubr.f32.mxu0 0.0
  %7853 = vmatmul.mubr.f32.gmra.mrb[0].mxu0 %v7786
  %v7854 = vpop.f32.mrb[0].mxu0
  %v7855 = vadd.f32 0.0, %v7854
  %v7856 = vpop.f32.mrb[0].mxu0
  %7857 = vdwg.mxu0
  %7859 = vrot.lane.b32.xlu0 %v7855, 4
  %v7860 = vpop.permute.xlu0 %7859
  %v7862 = vadd.f32 %v7784, %v7860
  %v7863 = vmax.f32 %v7862, 0.0
  %7865 = vrot.lane.b32.xlu0 %v7863, 124
  %v7866 = vpop.permute.xlu0 %7865
  %7868 = vrot.lane.b32.xlu0 %v7231, 120
  %v7869 = vpop.permute.xlu0 %7868
  %v7871 = vsel %vm232, %v7866, %v7869
  %v7873 = vsel %vm1239, %v7871, 0
  %7875 = vmatprep.subr.mxu0 0.0
  %7876 = vmatpush1.msra.mxu0 %v32
  %7877 = vmatprep.subr.mxu0 0.0
  %7878 = vmatpush1.msra.mxu0 %v33
  %7879 = vmatprep.subr.mxu0 0.0
  %7880 = vmatpush1.msra.mxu0 %v34
  %7881 = vmatprep.subr.mxu0 0.0
  %7882 = vmatpush1.msra.mxu0 0.0
  %7883 = vmatprep.subr.mxu0 0.0
  %7884 = vmatpush1.msra.mxu0 0.0
  %7885 = vmatprep.subr.mxu0 0.0
  %7886 = vmatpush1.msra.mxu0 0.0
  %7887 = vmatprep.subr.mxu0 0.0
  %7888 = vmatpush1.msra.mxu0 0.0
  %7889 = vmatprep.subr.mxu0 0.0
  %7890 = vmatpush1.msra.mxu0 0.0
  %7891 = vmatprep.subr.mxu0 0.0
  %7892 = vmatpush1.msra.mxu0 0.0
  %7893 = vmatprep.subr.mxu0 0.0
  %7894 = vmatpush1.msra.mxu0 0.0
  %7895 = vmatprep.subr.mxu0 0.0
  %7896 = vmatpush1.msra.mxu0 0.0
  %7897 = vmatprep.subr.mxu0 0.0
  %7898 = vmatpush1.msra.mxu0 0.0
  %7899 = vmatprep.subr.mxu0 0.0
  %7900 = vmatpush1.msra.mxu0 0.0
  %7901 = vmatprep.subr.mxu0 0.0
  %7902 = vmatpush1.msra.mxu0 0.0
  %7903 = vmatprep.subr.mxu0 0.0
  %7904 = vmatpush1.msra.mxu0 0.0
  %7905 = vmatprep.subr.mxu0 0.0
  %7906 = vmatpush1.msra.mxu0 0.0
  %7907 = vmatprep.subr.mxu0 0.0
  %7908 = vmatpush1.msra.mxu0 0.0
  %7909 = vmatprep.subr.mxu0 0.0
  %7910 = vmatpush1.msra.mxu0 0.0
  %7911 = vmatprep.subr.mxu0 0.0
  %7912 = vmatpush1.msra.mxu0 0.0
  %7913 = vmatprep.subr.mxu0 0.0
  %7914 = vmatpush1.msra.mxu0 0.0
  %7915 = vmatprep.subr.mxu0 0.0
  %7916 = vmatpush1.msra.mxu0 0.0
  %7917 = vmatprep.subr.mxu0 0.0
  %7918 = vmatpush1.msra.mxu0 0.0
  %7919 = vmatprep.subr.mxu0 0.0
  %7920 = vmatpush1.msra.mxu0 0.0
  %7921 = vmatprep.subr.mxu0 0.0
  %7922 = vmatpush1.msra.mxu0 0.0
  %7923 = vmatprep.subr.mxu0 0.0
  %7924 = vmatpush1.msra.mxu0 0.0
  %7925 = vmatprep.subr.mxu0 0.0
  %7926 = vmatpush1.msra.mxu0 0.0
  %7927 = vmatprep.subr.mxu0 0.0
  %7928 = vmatpush1.msra.mxu0 0.0
  %7929 = vmatprep.subr.mxu0 0.0
  %7930 = vmatpush1.msra.mxu0 0.0
  %7931 = vmatprep.subr.mxu0 0.0
  %7932 = vmatpush1.msra.mxu0 0.0
  %7933 = vmatprep.subr.mxu0 0.0
  %7934 = vmatpush1.msra.mxu0 0.0
  %7935 = vmatprep.subr.mxu0 0.0
  %7936 = vmatpush1.msra.mxu0 0.0
  %7937 = vmatprep.subr.mxu0 0.0
  %7938 = vmatpush1.msra.mxu0 0.0
  %7939 = vmatprep.mubr.f32.mxu0 0.0
  %7940 = vmatmul.mubr.f32.gmra.mrb[0].mxu0 %v7873
  %v7941 = vpop.f32.mrb[0].mxu0
  %v7942 = vadd.f32 %v39, %v7941
  %v7943 = vpop.f32.mrb[0].mxu0
  %7944 = vdwg.mxu0
  %v7945 = vmul.f32 %v7942, 0.5
  %v7946 = vtanh.pop %v7945
  %v7947 = vmul.f32 %v7946, 0.5
  %v7948 = vadd.f32 %v7947, 0.5
  %v7949 = vtanh.pop %v7942
  %v7950 = vmul.f32 %v7948, %v7225
  %7952 = vrot.lane.b32.xlu0 %v7949, 112
  %v7953 = vpop.permute.xlu0 %7952
  %v7955 = vmul.f32 %v7948, %v7953
  %7957 = vrot.lane.b32.xlu0 %v7955, 8
  %v7958 = vpop.permute.xlu0 %7957
  %v7960 = vadd.f32 %v7950, %v7958
  %v7961 = vtanh.pop %v7960
  %7963 = vrot.lane.b32.xlu0 %v7961, 16
  %v7964 = vpop.permute.xlu0 %7963
  %v7966 = vmul.f32 %v7948, %v7964
  %7968 = vrot.lane.b32.xlu0 %v7966, 104
  %v7969 = vpop.permute.xlu0 %7968
  %v7970 = vsel %vm364, %v7969, 0
  %7972 = vmatprep.subr.mxu0 0.0
  %7973 = vmatpush1.msra.mxu0 %v42
  %7974 = vmatprep.subr.mxu0 0.0
  %7975 = vmatpush1.msra.mxu0 0.0
  %7976 = vmatprep.subr.mxu0 0.0
  %7977 = vmatpush1.msra.mxu0 0.0
  %7978 = vmatprep.subr.mxu0 0.0
  %7979 = vmatpush1.msra.mxu0 0.0
  %7980 = vmatprep.subr.mxu0 0.0
  %7981 = vmatpush1.msra.mxu0 0.0
  %7982 = vmatprep.subr.mxu0 0.0
  %7983 = vmatpush1.msra.mxu0 0.0
  %7984 = vmatprep.subr.mxu0 0.0
  %7985 = vmatpush1.msra.mxu0 0.0
  %7986 = vmatprep.subr.mxu0 0.0
  %7987 = vmatpush1.msra.mxu0 0.0
  %7988 = vmatprep.subr.mxu0 0.0
  %7989 = vmatpush1.msra.mxu0 0.0
  %7990 = vmatprep.subr.mxu0 0.0
  %7991 = vmatpush1.msra.mxu0 0.0
  %7992 = vmatprep.subr.mxu0 0.0
  %7993 = vmatpush1.msra.mxu0 0.0
  %7994 = vmatprep.subr.mxu0 0.0
  %7995 = vmatpush1.msra.mxu0 0.0
  %7996 = vmatprep.subr.mxu0 0.0
  %7997 = vmatpush1.msra.mxu0 0.0
  %7998 = vmatprep.subr.mxu0 0.0
  %7999 = vmatpush1.msra.mxu0 0.0
  %8000 = vmatprep.subr.mxu0 0.0
  %8001 = vmatpush1.msra.mxu0 0.0
  %8002 = vmatprep.subr.mxu0 0.0
  %8003 = vmatpush1.msra.mxu0 0.0
  %8004 = vmatprep.subr.mxu0 0.0
  %8005 = vmatpush1.msra.mxu0 0.0
  %8006 = vmatprep.subr.mxu0 0.0
  %8007 = vmatpush1.msra.mxu0 0.0
  %8008 = vmatprep.subr.mxu0 0.0
  %8009 = vmatpush1.msra.mxu0 0.0
  %8010 = vmatprep.subr.mxu0 0.0
  %8011 = vmatpush1.msra.mxu0 0.0
  %8012 = vmatprep.subr.mxu0 0.0
  %8013 = vmatpush1.msra.mxu0 0.0
  %8014 = vmatprep.subr.mxu0 0.0
  %8015 = vmatpush1.msra.mxu0 0.0
  %8016 = vmatprep.subr.mxu0 0.0
  %8017 = vmatpush1.msra.mxu0 0.0
  %8018 = vmatprep.subr.mxu0 0.0
  %8019 = vmatpush1.msra.mxu0 0.0
  %8020 = vmatprep.subr.mxu0 0.0
  %8021 = vmatpush1.msra.mxu0 0.0
  %8022 = vmatprep.subr.mxu0 0.0
  %8023 = vmatpush1.msra.mxu0 0.0
  %8024 = vmatprep.subr.mxu0 0.0
  %8025 = vmatpush1.msra.mxu0 0.0
  %8026 = vmatprep.subr.mxu0 0.0
  %8027 = vmatpush1.msra.mxu0 0.0
  %8028 = vmatprep.subr.mxu0 0.0
  %8029 = vmatpush1.msra.mxu0 0.0
  %8030 = vmatprep.subr.mxu0 0.0
  %8031 = vmatpush1.msra.mxu0 0.0
  %8032 = vmatprep.subr.mxu0 0.0
  %8033 = vmatpush1.msra.mxu0 0.0
  %8034 = vmatprep.subr.mxu0 0.0
  %8035 = vmatpush1.msra.mxu0 0.0
  %8036 = vmatprep.mubr.f32.mxu0 0.0
  %8037 = vmatmul.mubr.f32.gmra.mrb[0].mxu0 %v7970
  %v8038 = vpop.f32.mrb[0].mxu0
  %v8039 = vadd.f32 0.0, %v8038
  %v8040 = vpop.f32.mrb[0].mxu0
  %8041 = vdwg.mxu0
  %v8042 = vadd.f32 %v1232, %v8039
  %v8043 = vsub.f32 %v8039, %v1413
  %v8045 = vcombine.high %v8042, %v8042
  %v8047 = vunpack.c.l.s4 1966171168
  %v8048 = vunpack.c.0.s8 %v8047
  %v8049 = vlaneseq
  %v8050 = vshrl.u32 %v8049, 7
  %v8051 = vsub.s32 %v8048, %v8050
  %v8052 = vrot.slane %v8042, %v8051
  %v8054 = vunpack.c.l.s4 1966171168
  %v8055 = vunpack.c.0.s8 %v8054
  %v8056 = vlaneseq
  %v8057 = vshrl.u32 %v8056, 7
  %v8058 = vsub.s32 %v8055, %v8057
  %v8059 = vrot.slane %v8045, %v8058
  %v8060 = vcombine.high %v8052, %v8052
  %v8061 = vcombine.high %v8059, %v8059
  %v8063 = vunpack.c.l.s4 1966171168
  %v8064 = vunpack.c.0.s8 %v8063
  %v8065 = vlaneseq
  %v8066 = vshrl.u32 %v8065, 7
  %v8067 = vsub.s32 %v8064, %v8066
  %v8068 = vrot.slane %v8052, %v8067
  %v8070 = vunpack.c.l.s4 1966171168
  %v8071 = vunpack.c.0.s8 %v8070
  %v8072 = vlaneseq
  %v8073 = vshrl.u32 %v8072, 7
  %v8074 = vsub.s32 %v8071, %v8073
  %v8075 = vrot.slane %v8059, %v8074
  %v8077 = vunpack.c.l.s4 1966171168
  %v8078 = vunpack.c.0.s8 %v8077
  %v8079 = vlaneseq
  %v8080 = vshrl.u32 %v8079, 7
  %v8081 = vsub.s32 %v8078, %v8080
  %v8082 = vrot.slane %v8060, %v8081
  %v8084 = vunpack.c.l.s4 1966171168
  %v8085 = vunpack.c.0.s8 %v8084
  %v8086 = vlaneseq
  %v8087 = vshrl.u32 %v8086, 7
  %v8088 = vsub.s32 %v8085, %v8087
  %v8089 = vrot.slane %v8061, %v8088
  %v8090 = vcombine.high %v8068, %v8068
  %v8091 = vcombine.high %v8075, %v8075
  %v8092 = vcombine.high %v8082, %v8082
  %v8093 = vcombine.high %v8089, %v8089
  %v8094 = vlaneseq
  %v8095 = vshrl.u32 %v8094, 7
  %v8096 = vsub.s32 0, %v8095
  %v8097 = vrot.slane %v8068, %v8096
  %v8098 = vlaneseq
  %v8099 = vshrl.u32 %v8098, 7
  %v8100 = vsub.s32 0, %v8099
  %v8101 = vrot.slane %v8082, %v8100
  %v8102 = vlaneseq
  %v8103 = vshrl.u32 %v8102, 7
  %v8104 = vsub.s32 0, %v8103
  %v8105 = vrot.slane %v8090, %v8104
  %v8106 = vlaneseq
  %v8107 = vshrl.u32 %v8106, 7
  %v8108 = vsub.s32 0, %v8107
  %v8109 = vrot.slane %v8092, %v8108
  %v8110 = vlaneseq
  %v8111 = vshrl.u32 %v8110, 7
  %v8112 = vsub.s32 0, %v8111
  %v8113 = vrot.slane %v8075, %v8112
  %v8114 = vlaneseq
  %v8115 = vshrl.u32 %v8114, 7
  %v8116 = vsub.s32 0, %v8115
  %v8117 = vrot.slane %v8089, %v8116
  %v8118 = vlaneseq
  %v8119 = vshrl.u32 %v8118, 7
  %v8120 = vsub.s32 0, %v8119
  %v8121 = vrot.slane %v8091, %v8120
  %v8122 = vlaneseq
  %v8123 = vshrl.u32 %v8122, 7
  %v8124 = vsub.s32 0, %v8123
  %v8125 = vrot.slane %v8093, %v8124
  %8135 = vrot.lane.b32.xlu0 %v8043, 64
  %v8136 = vpop.permute.xlu0 %8135
  %v8138 = vadd.f32 %v8097, %v8136
  %v8139 = vadd.f32 %v8101, %v8136
  %v8140 = vadd.f32 %v8105, %v8136
  %v8141 = vadd.f32 %v8109, %v8136
  %v8142 = vadd.f32 %v8113, %v8136
  %v8143 = vadd.f32 %v8117, %v8136
  %v8144 = vadd.f32 %v8121, %v8136
  %v8145 = vadd.f32 %v8125, %v8136
  %v8146 = vmax.f32 %v8138, 0.0
  %v8147 = vmax.f32 %v8139, 0.0
  %v8148 = vmax.f32 %v8140, 0.0
  %v8149 = vmax.f32 %v8141, 0.0
  %v8150 = vmax.f32 %v8142, 0.0
  %v8151 = vmax.f32 %v8143, 0.0
  %v8152 = vmax.f32 %v8144, 0.0
  %v8153 = vmax.f32 %v8145, 0.0
  %v8155 = vsel %vm1526, %v8146, 0
  %v8158 = vsel %vm1526, %v8147, 0
  %v8161 = vsel %vm1526, %v8148, 0
  %v8164 = vsel %vm1526, %v8149, 0
  %v8167 = vsel %vm1526, %v8150, 0
  %v8170 = vsel %vm1526, %v8151, 0
  %v8173 = vsel %vm1526, %v8152, 0
  %v8176 = vsel %vm1526, %v8153, 0
  %8178 = vmatprep.subr.mxu0 0.0
  %8179 = vmatpush1.msra.mxu0 %v43
  %8180 = vmatprep.subr.mxu0 0.0
  %8181 = vmatpush1.msra.mxu0 %v44
  %8182 = vmatprep.subr.mxu0 0.0
  %8183 = vmatpush1.msra.mxu0 %v45
  %8184 = vmatprep.subr.mxu0 0.0
  %8185 = vmatpush1.msra.mxu0 %v46
  %8186 = vmatprep.subr.mxu0 0.0
  %8187 = vmatpush1.msra.mxu0 %v47
  %8188 = vmatprep.subr.mxu0 0.0
  %8189 = vmatpush1.msra.mxu0 %v48
  %8190 = vmatprep.subr.mxu0 0.0
  %8191 = vmatpush1.msra.mxu0 %v49
  %8192 = vmatprep.subr.mxu0 0.0
  %8193 = vmatpush1.msra.mxu0 %v50
  %8194 = vmatprep.subr.mxu0 0.0
  %8195 = vmatpush1.msra.mxu0 0.0
  %8196 = vmatprep.subr.mxu0 0.0
  %8197 = vmatpush1.msra.mxu0 0.0
  %8198 = vmatprep.subr.mxu0 0.0
  %8199 = vmatpush1.msra.mxu0 0.0
  %8200 = vmatprep.subr.mxu0 0.0
  %8201 = vmatpush1.msra.mxu0 0.0
  %8202 = vmatprep.subr.mxu0 0.0
  %8203 = vmatpush1.msra.mxu0 0.0
  %8204 = vmatprep.subr.mxu0 0.0
  %8205 = vmatpush1.msra.mxu0 0.0
  %8206 = vmatprep.subr.mxu0 0.0
  %8207 = vmatpush1.msra.mxu0 0.0
  %8208 = vmatprep.subr.mxu0 0.0
  %8209 = vmatpush1.msra.mxu0 0.0
  %8210 = vmatprep.subr.mxu0 0.0
  %8211 = vmatpush1.msra.mxu0 0.0
  %8212 = vmatprep.subr.mxu0 0.0
  %8213 = vmatpush1.msra.mxu0 0.0
  %8214 = vmatprep.subr.mxu0 0.0
  %8215 = vmatpush1.msra.mxu0 0.0
  %8216 = vmatprep.subr.mxu0 0.0
  %8217 = vmatpush1.msra.mxu0 0.0
  %8218 = vmatprep.subr.mxu0 0.0
  %8219 = vmatpush1.msra.mxu0 0.0
  %8220 = vmatprep.subr.mxu0 0.0
  %8221 = vmatpush1.msra.mxu0 0.0
  %8222 = vmatprep.subr.mxu0 0.0
  %8223 = vmatpush1.msra.mxu0 0.0
  %8224 = vmatprep.subr.mxu0 0.0
  %8225 = vmatpush1.msra.mxu0 0.0
  %8226 = vmatprep.subr.mxu0 0.0
  %8227 = vmatpush1.msra.mxu0 0.0
  %8228 = vmatprep.subr.mxu0 0.0
  %8229 = vmatpush1.msra.mxu0 0.0
  %8230 = vmatprep.subr.mxu0 0.0
  %8231 = vmatpush1.msra.mxu0 0.0
  %8232 = vmatprep.subr.mxu0 0.0
  %8233 = vmatpush1.msra.mxu0 0.0
  %8234 = vmatprep.subr.mxu0 0.0
  %8235 = vmatpush1.msra.mxu0 0.0
  %8236 = vmatprep.subr.mxu0 0.0
  %8237 = vmatpush1.msra.mxu0 0.0
  %8238 = vmatprep.subr.mxu0 0.0
  %8239 = vmatpush1.msra.mxu0 0.0
  %8240 = vmatprep.subr.mxu0 0.0
  %8241 = vmatpush1.msra.mxu0 0.0
  %8242 = vmatprep.mubr.f32.mxu0 0.0
  %8243 = vmatmul.mubr.f32.gmra.mrb[0].mxu0 %v8155
  %v8244 = vpop.f32.mrb[0].mxu0
  %v8245 = vadd.f32 %v55, %v8244
  %v8246 = vpop.f32.mrb[0].mxu0
  %8247 = vmatprep.mubr.f32.mxu0 0.0
  %8248 = vmatmul.mubr.f32.gmra.mrb[0].mxu0 %v8158
  %v8249 = vpop.f32.mrb[0].mxu0
  %v8250 = vadd.f32 %v55, %v8249
  %v8251 = vpop.f32.mrb[0].mxu0
  %8252 = vmatprep.mubr.f32.mxu0 0.0
  %8253 = vmatmul.mubr.f32.gmra.mrb[0].mxu0 %v8161
  %v8254 = vpop.f32.mrb[0].mxu0
  %v8255 = vadd.f32 %v55, %v8254
  %v8256 = vpop.f32.mrb[0].mxu0
  %8257 = vmatprep.mubr.f32.mxu0 0.0
  %8258 = vmatmul.mubr.f32.gmra.mrb[0].mxu0 %v8164
  %v8259 = vpop.f32.mrb[0].mxu0
  %v8260 = vadd.f32 %v55, %v8259
  %v8261 = vpop.f32.mrb[0].mxu0
  %8262 = vmatprep.mubr.f32.mxu0 0.0
  %8263 = vmatmul.mubr.f32.gmra.mrb[0].mxu0 %v8167
  %v8264 = vpop.f32.mrb[0].mxu0
  %v8265 = vadd.f32 %v55, %v8264
  %v8266 = vpop.f32.mrb[0].mxu0
  %8267 = vmatprep.mubr.f32.mxu0 0.0
  %8268 = vmatmul.mubr.f32.gmra.mrb[0].mxu0 %v8170
  %v8269 = vpop.f32.mrb[0].mxu0
  %v8270 = vadd.f32 %v55, %v8269
  %v8271 = vpop.f32.mrb[0].mxu0
  %8272 = vmatprep.mubr.f32.mxu0 0.0
  %8273 = vmatmul.mubr.f32.gmra.mrb[0].mxu0 %v8173
  %v8274 = vpop.f32.mrb[0].mxu0
  %v8275 = vadd.f32 %v55, %v8274
  %v8276 = vpop.f32.mrb[0].mxu0
  %8277 = vmatprep.mubr.f32.mxu0 0.0
  %8278 = vmatmul.mubr.f32.gmra.mrb[0].mxu0 %v8176
  %v8279 = vpop.f32.mrb[0].mxu0
  %v8280 = vadd.f32 %v55, %v8279
  %v8281 = vpop.f32.mrb[0].mxu0
  %8282 = vdwg.mxu0
  %v8283 = vmax.f32 %v8245, 0.0
  %v8284 = vmax.f32 %v8250, 0.0
  %v8285 = vmax.f32 %v8255, 0.0
  %v8286 = vmax.f32 %v8260, 0.0
  %v8287 = vmax.f32 %v8265, 0.0
  %v8288 = vmax.f32 %v8270, 0.0
  %v8289 = vmax.f32 %v8275, 0.0
  %v8290 = vmax.f32 %v8280, 0.0
  %s8291 = scalar_lea.vmem %s2, 72
  %v8292 = vld [vmem:[%s8291] sm:$0xff]
  %v8293 = vlaneseq
  %v8294 = vshrl.u32 %v8293, 7
  %v8295 = vsub.s32 0, %v8294
  %v8296 = vrot.slane %v8292, %v8295
  %8298 = vbcast.lane.b32.xlu0 %v8296, 256
  %v8299 = vpop.permute.xlu0 %8298
  %v8300 = vlaneseq
  %v8301 = vshrl.u32 %v8300, 7
  %v8302 = vsub.s32 1, %v8301
  %v8303 = vrot.slane %v8292, %v8302
  %8305 = vbcast.lane.b32.xlu0 %v8303, 256
  %v8306 = vpop.permute.xlu0 %8305
  %v8307 = vlaneseq
  %v8308 = vshrl.u32 %v8307, 7
  %v8309 = vsub.s32 2, %v8308
  %v8310 = vrot.slane %v8292, %v8309
  %8312 = vbcast.lane.b32.xlu0 %v8310, 256
  %v8313 = vpop.permute.xlu0 %8312
  %v8314 = vlaneseq
  %v8315 = vshrl.u32 %v8314, 7
  %v8316 = vsub.s32 3, %v8315
  %v8317 = vrot.slane %v8292, %v8316
  %8319 = vbcast.lane.b32.xlu0 %v8317, 256
  %v8320 = vpop.permute.xlu0 %8319
  %v8321 = vlaneseq
  %v8322 = vshrl.u32 %v8321, 7
  %v8323 = vsub.s32 4, %v8322
  %v8324 = vrot.slane %v8292, %v8323
  %8326 = vbcast.lane.b32.xlu0 %v8324, 256
  %v8327 = vpop.permute.xlu0 %8326
  %v8328 = vlaneseq
  %v8329 = vshrl.u32 %v8328, 7
  %v8330 = vsub.s32 5, %v8329
  %v8331 = vrot.slane %v8292, %v8330
  %8333 = vbcast.lane.b32.xlu0 %v8331, 256
  %v8334 = vpop.permute.xlu0 %8333
  %v8335 = vlaneseq
  %v8336 = vshrl.u32 %v8335, 7
  %v8337 = vsub.s32 6, %v8336
  %v8338 = vrot.slane %v8292, %v8337
  %8340 = vbcast.lane.b32.xlu0 %v8338, 256
  %v8341 = vpop.permute.xlu0 %8340
  %v8342 = vlaneseq
  %v8343 = vshrl.u32 %v8342, 7
  %v8344 = vsub.s32 7, %v8343
  %v8345 = vrot.slane %v8292, %v8344
  %8347 = vbcast.lane.b32.xlu0 %v8345, 256
  %v8348 = vpop.permute.xlu0 %8347
  %v8349 = vmul.f32 %v8283, %v8299
  %v8350 = vmul.f32 %v8284, %v8306
  %v8351 = vmul.f32 %v8285, %v8313
  %v8352 = vmul.f32 %v8286, %v8320
  %v8353 = vmul.f32 %v8287, %v8327
  %v8354 = vmul.f32 %v8288, %v8334
  %v8355 = vmul.f32 %v8289, %v8341
  %v8356 = vmul.f32 %v8290, %v8348
  %v8357 = vsel %vm364, %v8349, -inf
  %v8358 = vrot.slane %v8357, 4
  %v8359 = vmax.f32 %v8357, %v8358
  %v8360 = vrot.slane %v8359, 2
  %v8361 = vmax.f32 %v8359, %v8360
  %v8362 = vrot.slane %v8361, 1
  %v8363 = vmax.f32 %v8361, %v8362
  %v8364 = vsel %vm364, %v8350, -inf
  %v8365 = vrot.slane %v8364, 4
  %v8366 = vmax.f32 %v8364, %v8365
  %v8367 = vrot.slane %v8366, 2
  %v8368 = vmax.f32 %v8366, %v8367
  %v8369 = vrot.slane %v8368, 1
  %v8370 = vmax.f32 %v8368, %v8369
  %v8371 = vsel %vm364, %v8351, -inf
  %v8372 = vrot.slane %v8371, 4
  %v8373 = vmax.f32 %v8371, %v8372
  %v8374 = vrot.slane %v8373, 2
  %v8375 = vmax.f32 %v8373, %v8374
  %v8376 = vrot.slane %v8375, 1
  %v8377 = vmax.f32 %v8375, %v8376
  %v8378 = vsel %vm364, %v8352, -inf
  %v8379 = vrot.slane %v8378, 4
  %v8380 = vmax.f32 %v8378, %v8379
  %v8381 = vrot.slane %v8380, 2
  %v8382 = vmax.f32 %v8380, %v8381
  %v8383 = vrot.slane %v8382, 1
  %v8384 = vmax.f32 %v8382, %v8383
  %v8385 = vsel %vm364, %v8353, -inf
  %v8386 = vrot.slane %v8385, 4
  %v8387 = vmax.f32 %v8385, %v8386
  %v8388 = vrot.slane %v8387, 2
  %v8389 = vmax.f32 %v8387, %v8388
  %v8390 = vrot.slane %v8389, 1
  %v8391 = vmax.f32 %v8389, %v8390
  %v8392 = vsel %vm364, %v8354, -inf
  %v8393 = vrot.slane %v8392, 4
  %v8394 = vmax.f32 %v8392, %v8393
  %v8395 = vrot.slane %v8394, 2
  %v8396 = vmax.f32 %v8394, %v8395
  %v8397 = vrot.slane %v8396, 1
  %v8398 = vmax.f32 %v8396, %v8397
  %v8399 = vsel %vm364, %v8355, -inf
  %v8400 = vrot.slane %v8399, 4
  %v8401 = vmax.f32 %v8399, %v8400
  %v8402 = vrot.slane %v8401, 2
  %v8403 = vmax.f32 %v8401, %v8402
  %v8404 = vrot.slane %v8403, 1
  %v8405 = vmax.f32 %v8403, %v8404
  %v8406 = vsel %vm364, %v8356, -inf
  %v8407 = vrot.slane %v8406, 4
  %v8408 = vmax.f32 %v8406, %v8407
  %v8409 = vrot.slane %v8408, 2
  %v8410 = vmax.f32 %v8408, %v8409
  %v8411 = vrot.slane %v8410, 1
  %v8412 = vmax.f32 %v8410, %v8411
  %v8422 = vsel %vm1794, %v8370, %v8363
  %v8423 = vsel %vm1796, %v8377, %v8422
  %v8424 = vsel %vm1798, %v8384, %v8423
  %v8425 = vsel %vm1800, %v8391, %v8424
  %v8426 = vsel %vm1802, %v8398, %v8425
  %v8427 = vsel %vm1804, %v8405, %v8426
  %v8428 = vsel %vm1806, %v8412, %v8427
  %8429 = vrot.lane.b32.xlu0 %v8428, 8
  %v8430 = vpop.permute.xlu0 %8429
  %v8432 = vsel %vm364, %v7969, %v8430
  %v8434 = vsel %vm232, %v8432, 0
  %8436 = vmatprep.subr.mxu0 0.0
  %8437 = vmatpush1.msra.mxu0 %v56
  %8438 = vmatprep.subr.mxu0 0.0
  %8439 = vmatpush1.msra.mxu0 %v57
  %8440 = vmatprep.subr.mxu0 0.0
  %8441 = vmatpush1.msra.mxu0 0.0
  %8442 = vmatprep.subr.mxu0 0.0
  %8443 = vmatpush1.msra.mxu0 0.0
  %8444 = vmatprep.subr.mxu0 0.0
  %8445 = vmatpush1.msra.mxu0 0.0
  %8446 = vmatprep.subr.mxu0 0.0
  %8447 = vmatpush1.msra.mxu0 0.0
  %8448 = vmatprep.subr.mxu0 0.0
  %8449 = vmatpush1.msra.mxu0 0.0
  %8450 = vmatprep.subr.mxu0 0.0
  %8451 = vmatpush1.msra.mxu0 0.0
  %8452 = vmatprep.subr.mxu0 0.0
  %8453 = vmatpush1.msra.mxu0 0.0
  %8454 = vmatprep.subr.mxu0 0.0
  %8455 = vmatpush1.msra.mxu0 0.0
  %8456 = vmatprep.subr.mxu0 0.0
  %8457 = vmatpush1.msra.mxu0 0.0
  %8458 = vmatprep.subr.mxu0 0.0
  %8459 = vmatpush1.msra.mxu0 0.0
  %8460 = vmatprep.subr.mxu0 0.0
  %8461 = vmatpush1.msra.mxu0 0.0
  %8462 = vmatprep.subr.mxu0 0.0
  %8463 = vmatpush1.msra.mxu0 0.0
  %8464 = vmatprep.subr.mxu0 0.0
  %8465 = vmatpush1.msra.mxu0 0.0
  %8466 = vmatprep.subr.mxu0 0.0
  %8467 = vmatpush1.msra.mxu0 0.0
  %8468 = vmatprep.subr.mxu0 0.0
  %8469 = vmatpush1.msra.mxu0 0.0
  %8470 = vmatprep.subr.mxu0 0.0
  %8471 = vmatpush1.msra.mxu0 0.0
  %8472 = vmatprep.subr.mxu0 0.0
  %8473 = vmatpush1.msra.mxu0 0.0
  %8474 = vmatprep.subr.mxu0 0.0
  %8475 = vmatpush1.msra.mxu0 0.0
  %8476 = vmatprep.subr.mxu0 0.0
  %8477 = vmatpush1.msra.mxu0 0.0
  %8478 = vmatprep.subr.mxu0 0.0
  %8479 = vmatpush1.msra.mxu0 0.0
  %8480 = vmatprep.subr.mxu0 0.0
  %8481 = vmatpush1.msra.mxu0 0.0
  %8482 = vmatprep.subr.mxu0 0.0
  %8483 = vmatpush1.msra.mxu0 0.0
  %8484 = vmatprep.subr.mxu0 0.0
  %8485 = vmatpush1.msra.mxu0 0.0
  %8486 = vmatprep.subr.mxu0 0.0
  %8487 = vmatpush1.msra.mxu0 0.0
  %8488 = vmatprep.subr.mxu0 0.0
  %8489 = vmatpush1.msra.mxu0 0.0
  %8490 = vmatprep.subr.mxu0 0.0
  %8491 = vmatpush1.msra.mxu0 0.0
  %8492 = vmatprep.subr.mxu0 0.0
  %8493 = vmatpush1.msra.mxu0 0.0
  %8494 = vmatprep.subr.mxu0 0.0
  %8495 = vmatpush1.msra.mxu0 0.0
  %8496 = vmatprep.subr.mxu0 0.0
  %8497 = vmatpush1.msra.mxu0 0.0
  %8498 = vmatprep.subr.mxu0 0.0
  %8499 = vmatpush1.msra.mxu0 0.0
  %8500 = vmatprep.mubr.f32.mxu0 0.0
  %8501 = vmatmul.mubr.f32.gmra.mrb[0].mxu0 %v8434
  %v8502 = vpop.f32.mrb[0].mxu0
  %v8503 = vadd.f32 0.0, %v8502
  %v8504 = vpop.f32.mrb[0].mxu0
  %8505 = vdwg.mxu0
  %v8506 = vadd.f32 %v8503, %v62
  %s8507 = scalar_lea.vmem %s7, 72
  %8508 = vst.msk [vmem:[%s8507] sm:$0xff] %vm1886, %v8506
  %s8509 = scalar_lea.vmem %s5, 72
  %v8510 = vld [vmem:[%s8509] sm:$0xff]
  %v8511 = vmul.f32 %v8506, 0.5
  %v8512 = vmul.f32 %v8511, 1.442695
  %v8513 = vpow.pop %v8512
  %8515 = vrot.lane.b32.xlu0 %v8513, 126
  %v8516 = vpop.permute.xlu0 %8515
  %v8518 = vmul.f32 %v8510, %v8516
  %v8519 = vadd.f32 %v8503, %v1899
  %v8521 = vsel %vm86, %v8518, 0
  %8523 = vmatprep.subr.mxu0 0.0
  %8524 = vmatpush1.msra.mxu0 %v1906
  %8525 = vmatprep.subr.mxu0 0.0
  %8526 = vmatpush1.msra.mxu0 0.0
  %8527 = vmatprep.subr.mxu0 0.0
  %8528 = vmatpush1.msra.mxu0 0.0
  %8529 = vmatprep.subr.mxu0 0.0
  %8530 = vmatpush1.msra.mxu0 0.0
  %8531 = vmatprep.subr.mxu0 0.0
  %8532 = vmatpush1.msra.mxu0 0.0
  %8533 = vmatprep.subr.mxu0 0.0
  %8534 = vmatpush1.msra.mxu0 0.0
  %8535 = vmatprep.subr.mxu0 0.0
  %8536 = vmatpush1.msra.mxu0 0.0
  %8537 = vmatprep.subr.mxu0 0.0
  %8538 = vmatpush1.msra.mxu0 0.0
  %8539 = vmatprep.subr.mxu0 0.0
  %8540 = vmatpush1.msra.mxu0 0.0
  %8541 = vmatprep.subr.mxu0 0.0
  %8542 = vmatpush1.msra.mxu0 0.0
  %8543 = vmatprep.subr.mxu0 0.0
  %8544 = vmatpush1.msra.mxu0 0.0
  %8545 = vmatprep.subr.mxu0 0.0
  %8546 = vmatpush1.msra.mxu0 0.0
  %8547 = vmatprep.subr.mxu0 0.0
  %8548 = vmatpush1.msra.mxu0 0.0
  %8549 = vmatprep.subr.mxu0 0.0
  %8550 = vmatpush1.msra.mxu0 0.0
  %8551 = vmatprep.subr.mxu0 0.0
  %8552 = vmatpush1.msra.mxu0 0.0
  %8553 = vmatprep.subr.mxu0 0.0
  %8554 = vmatpush1.msra.mxu0 0.0
  %8555 = vmatprep.subr.mxu0 0.0
  %8556 = vmatpush1.msra.mxu0 0.0
  %8557 = vmatprep.subr.mxu0 0.0
  %8558 = vmatpush1.msra.mxu0 0.0
  %8559 = vmatprep.subr.mxu0 0.0
  %8560 = vmatpush1.msra.mxu0 0.0
  %8561 = vmatprep.subr.mxu0 0.0
  %8562 = vmatpush1.msra.mxu0 0.0
  %8563 = vmatprep.subr.mxu0 0.0
  %8564 = vmatpush1.msra.mxu0 0.0
  %8565 = vmatprep.subr.mxu0 0.0
  %8566 = vmatpush1.msra.mxu0 0.0
  %8567 = vmatprep.subr.mxu0 0.0
  %8568 = vmatpush1.msra.mxu0 0.0
  %8569 = vmatprep.subr.mxu0 0.0
  %8570 = vmatpush1.msra.mxu0 0.0
  %8571 = vmatprep.subr.mxu0 0.0
  %8572 = vmatpush1.msra.mxu0 0.0
  %8573 = vmatprep.subr.mxu0 0.0
  %8574 = vmatpush1.msra.mxu0 0.0
  %8575 = vmatprep.subr.mxu0 0.0
  %8576 = vmatpush1.msra.mxu0 0.0
  %8577 = vmatprep.subr.mxu0 0.0
  %8578 = vmatpush1.msra.mxu0 0.0
  %8579 = vmatprep.subr.mxu0 0.0
  %8580 = vmatpush1.msra.mxu0 0.0
  %8581 = vmatprep.subr.mxu0 0.0
  %8582 = vmatpush1.msra.mxu0 0.0
  %8583 = vmatprep.subr.mxu0 0.0
  %8584 = vmatpush1.msra.mxu0 0.0
  %8585 = vmatprep.subr.mxu0 0.0
  %8586 = vmatpush1.msra.mxu0 0.0
  %8587 = vmatprep.mubr.f32.mxu0 0.0
  %8588 = vmatmul.mubr.f32.gmra.mrb[0].mxu0 %v8521
  %v8589 = vpop.f32.mrb[0].mxu0
  %v8590 = vadd.f32 0.0, %v8589
  %v8591 = vpop.f32.mrb[0].mxu0
  %8592 = vdwg.mxu0
  %8594 = vrot.lane.b32.xlu0 %v8590, 4
  %v8595 = vpop.permute.xlu0 %8594
  %v8597 = vadd.f32 %v8519, %v8595
  %v8598 = vmax.f32 %v8597, 0.0
  %8600 = vrot.lane.b32.xlu0 %v8598, 124
  %v8601 = vpop.permute.xlu0 %8600
  %8603 = vrot.lane.b32.xlu0 %v7966, 120
  %v8604 = vpop.permute.xlu0 %8603
  %v8606 = vsel %vm232, %v8601, %v8604
  %v8608 = vsel %vm1239, %v8606, 0
  %8610 = vmatprep.subr.mxu0 0.0
  %8611 = vmatpush1.msra.mxu0 %v32
  %8612 = vmatprep.subr.mxu0 0.0
  %8613 = vmatpush1.msra.mxu0 %v33
  %8614 = vmatprep.subr.mxu0 0.0
  %8615 = vmatpush1.msra.mxu0 %v34
  %8616 = vmatprep.subr.mxu0 0.0
  %8617 = vmatpush1.msra.mxu0 0.0
  %8618 = vmatprep.subr.mxu0 0.0
  %8619 = vmatpush1.msra.mxu0 0.0
  %8620 = vmatprep.subr.mxu0 0.0
  %8621 = vmatpush1.msra.mxu0 0.0
  %8622 = vmatprep.subr.mxu0 0.0
  %8623 = vmatpush1.msra.mxu0 0.0
  %8624 = vmatprep.subr.mxu0 0.0
  %8625 = vmatpush1.msra.mxu0 0.0
  %8626 = vmatprep.subr.mxu0 0.0
  %8627 = vmatpush1.msra.mxu0 0.0
  %8628 = vmatprep.subr.mxu0 0.0
  %8629 = vmatpush1.msra.mxu0 0.0
  %8630 = vmatprep.subr.mxu0 0.0
  %8631 = vmatpush1.msra.mxu0 0.0
  %8632 = vmatprep.subr.mxu0 0.0
  %8633 = vmatpush1.msra.mxu0 0.0
  %8634 = vmatprep.subr.mxu0 0.0
  %8635 = vmatpush1.msra.mxu0 0.0
  %8636 = vmatprep.subr.mxu0 0.0
  %8637 = vmatpush1.msra.mxu0 0.0
  %8638 = vmatprep.subr.mxu0 0.0
  %8639 = vmatpush1.msra.mxu0 0.0
  %8640 = vmatprep.subr.mxu0 0.0
  %8641 = vmatpush1.msra.mxu0 0.0
  %8642 = vmatprep.subr.mxu0 0.0
  %8643 = vmatpush1.msra.mxu0 0.0
  %8644 = vmatprep.subr.mxu0 0.0
  %8645 = vmatpush1.msra.mxu0 0.0
  %8646 = vmatprep.subr.mxu0 0.0
  %8647 = vmatpush1.msra.mxu0 0.0
  %8648 = vmatprep.subr.mxu0 0.0
  %8649 = vmatpush1.msra.mxu0 0.0
  %8650 = vmatprep.subr.mxu0 0.0
  %8651 = vmatpush1.msra.mxu0 0.0
  %8652 = vmatprep.subr.mxu0 0.0
  %8653 = vmatpush1.msra.mxu0 0.0
  %8654 = vmatprep.subr.mxu0 0.0
  %8655 = vmatpush1.msra.mxu0 0.0
  %8656 = vmatprep.subr.mxu0 0.0
  %8657 = vmatpush1.msra.mxu0 0.0
  %8658 = vmatprep.subr.mxu0 0.0
  %8659 = vmatpush1.msra.mxu0 0.0
  %8660 = vmatprep.subr.mxu0 0.0
  %8661 = vmatpush1.msra.mxu0 0.0
  %8662 = vmatprep.subr.mxu0 0.0
  %8663 = vmatpush1.msra.mxu0 0.0
  %8664 = vmatprep.subr.mxu0 0.0
  %8665 = vmatpush1.msra.mxu0 0.0
  %8666 = vmatprep.subr.mxu0 0.0
  %8667 = vmatpush1.msra.mxu0 0.0
  %8668 = vmatprep.subr.mxu0 0.0
  %8669 = vmatpush1.msra.mxu0 0.0
  %8670 = vmatprep.subr.mxu0 0.0
  %8671 = vmatpush1.msra.mxu0 0.0
  %8672 = vmatprep.subr.mxu0 0.0
  %8673 = vmatpush1.msra.mxu0 0.0
  %8674 = vmatprep.mubr.f32.mxu0 0.0
  %8675 = vmatmul.mubr.f32.gmra.mrb[0].mxu0 %v8608
  %v8676 = vpop.f32.mrb[0].mxu0
  %v8677 = vadd.f32 %v39, %v8676
  %v8678 = vpop.f32.mrb[0].mxu0
  %8679 = vdwg.mxu0
  %v8680 = vmul.f32 %v8677, 0.5
  %v8681 = vtanh.pop %v8680
  %v8682 = vmul.f32 %v8681, 0.5
  %v8683 = vadd.f32 %v8682, 0.5
  %v8684 = vtanh.pop %v8677
  %v8685 = vmul.f32 %v8683, %v7960
  %8687 = vrot.lane.b32.xlu0 %v8684, 112
  %v8688 = vpop.permute.xlu0 %8687
  %v8690 = vmul.f32 %v8683, %v8688
  %8692 = vrot.lane.b32.xlu0 %v8690, 8
  %v8693 = vpop.permute.xlu0 %8692
  %v8695 = vadd.f32 %v8685, %v8693
  %v8696 = vtanh.pop %v8695
  %8698 = vrot.lane.b32.xlu0 %v8696, 16
  %v8699 = vpop.permute.xlu0 %8698
  %v8701 = vmul.f32 %v8683, %v8699
  %8703 = vrot.lane.b32.xlu0 %v8701, 104
  %v8704 = vpop.permute.xlu0 %8703
  %v8705 = vsel %vm364, %v8704, 0
  %8707 = vmatprep.subr.mxu0 0.0
  %8708 = vmatpush1.msra.mxu0 %v42
  %8709 = vmatprep.subr.mxu0 0.0
  %8710 = vmatpush1.msra.mxu0 0.0
  %8711 = vmatprep.subr.mxu0 0.0
  %8712 = vmatpush1.msra.mxu0 0.0
  %8713 = vmatprep.subr.mxu0 0.0
  %8714 = vmatpush1.msra.mxu0 0.0
  %8715 = vmatprep.subr.mxu0 0.0
  %8716 = vmatpush1.msra.mxu0 0.0
  %8717 = vmatprep.subr.mxu0 0.0
  %8718 = vmatpush1.msra.mxu0 0.0
  %8719 = vmatprep.subr.mxu0 0.0
  %8720 = vmatpush1.msra.mxu0 0.0
  %8721 = vmatprep.subr.mxu0 0.0
  %8722 = vmatpush1.msra.mxu0 0.0
  %8723 = vmatprep.subr.mxu0 0.0
  %8724 = vmatpush1.msra.mxu0 0.0
  %8725 = vmatprep.subr.mxu0 0.0
  %8726 = vmatpush1.msra.mxu0 0.0
  %8727 = vmatprep.subr.mxu0 0.0
  %8728 = vmatpush1.msra.mxu0 0.0
  %8729 = vmatprep.subr.mxu0 0.0
  %8730 = vmatpush1.msra.mxu0 0.0
  %8731 = vmatprep.subr.mxu0 0.0
  %8732 = vmatpush1.msra.mxu0 0.0
  %8733 = vmatprep.subr.mxu0 0.0
  %8734 = vmatpush1.msra.mxu0 0.0
  %8735 = vmatprep.subr.mxu0 0.0
  %8736 = vmatpush1.msra.mxu0 0.0
  %8737 = vmatprep.subr.mxu0 0.0
  %8738 = vmatpush1.msra.mxu0 0.0
  %8739 = vmatprep.subr.mxu0 0.0
  %8740 = vmatpush1.msra.mxu0 0.0
  %8741 = vmatprep.subr.mxu0 0.0
  %8742 = vmatpush1.msra.mxu0 0.0
  %8743 = vmatprep.subr.mxu0 0.0
  %8744 = vmatpush1.msra.mxu0 0.0
  %8745 = vmatprep.subr.mxu0 0.0
  %8746 = vmatpush1.msra.mxu0 0.0
  %8747 = vmatprep.subr.mxu0 0.0
  %8748 = vmatpush1.msra.mxu0 0.0
  %8749 = vmatprep.subr.mxu0 0.0
  %8750 = vmatpush1.msra.mxu0 0.0
  %8751 = vmatprep.subr.mxu0 0.0
  %8752 = vmatpush1.msra.mxu0 0.0
  %8753 = vmatprep.subr.mxu0 0.0
  %8754 = vmatpush1.msra.mxu0 0.0
  %8755 = vmatprep.subr.mxu0 0.0
  %8756 = vmatpush1.msra.mxu0 0.0
  %8757 = vmatprep.subr.mxu0 0.0
  %8758 = vmatpush1.msra.mxu0 0.0
  %8759 = vmatprep.subr.mxu0 0.0
  %8760 = vmatpush1.msra.mxu0 0.0
  %8761 = vmatprep.subr.mxu0 0.0
  %8762 = vmatpush1.msra.mxu0 0.0
  %8763 = vmatprep.subr.mxu0 0.0
  %8764 = vmatpush1.msra.mxu0 0.0
  %8765 = vmatprep.subr.mxu0 0.0
  %8766 = vmatpush1.msra.mxu0 0.0
  %8767 = vmatprep.subr.mxu0 0.0
  %8768 = vmatpush1.msra.mxu0 0.0
  %8769 = vmatprep.subr.mxu0 0.0
  %8770 = vmatpush1.msra.mxu0 0.0
  %8771 = vmatprep.mubr.f32.mxu0 0.0
  %8772 = vmatmul.mubr.f32.gmra.mrb[0].mxu0 %v8705
  %v8773 = vpop.f32.mrb[0].mxu0
  %v8774 = vadd.f32 0.0, %v8773
  %v8775 = vpop.f32.mrb[0].mxu0
  %8776 = vdwg.mxu0
  %v8777 = vadd.f32 %v1232, %v8774
  %v8778 = vsub.f32 %v8774, %v1413
  %v8780 = vcombine.high %v8777, %v8777
  %v8782 = vunpack.c.l.s4 1966171168
  %v8783 = vunpack.c.0.s8 %v8782
  %v8784 = vlaneseq
  %v8785 = vshrl.u32 %v8784, 7
  %v8786 = vsub.s32 %v8783, %v8785
  %v8787 = vrot.slane %v8777, %v8786
  %v8789 = vunpack.c.l.s4 1966171168
  %v8790 = vunpack.c.0.s8 %v8789
  %v8791 = vlaneseq
  %v8792 = vshrl.u32 %v8791, 7
  %v8793 = vsub.s32 %v8790, %v8792
  %v8794 = vrot.slane %v8780, %v8793
  %v8795 = vcombine.high %v8787, %v8787
  %v8796 = vcombine.high %v8794, %v8794
  %v8798 = vunpack.c.l.s4 1966171168
  %v8799 = vunpack.c.0.s8 %v8798
  %v8800 = vlaneseq
  %v8801 = vshrl.u32 %v8800, 7
  %v8802 = vsub.s32 %v8799, %v8801
  %v8803 = vrot.slane %v8787, %v8802
  %v8805 = vunpack.c.l.s4 1966171168
  %v8806 = vunpack.c.0.s8 %v8805
  %v8807 = vlaneseq
  %v8808 = vshrl.u32 %v8807, 7
  %v8809 = vsub.s32 %v8806, %v8808
  %v8810 = vrot.slane %v8794, %v8809
  %v8812 = vunpack.c.l.s4 1966171168
  %v8813 = vunpack.c.0.s8 %v8812
  %v8814 = vlaneseq
  %v8815 = vshrl.u32 %v8814, 7
  %v8816 = vsub.s32 %v8813, %v8815
  %v8817 = vrot.slane %v8795, %v8816
  %v8819 = vunpack.c.l.s4 1966171168
  %v8820 = vunpack.c.0.s8 %v8819
  %v8821 = vlaneseq
  %v8822 = vshrl.u32 %v8821, 7
  %v8823 = vsub.s32 %v8820, %v8822
  %v8824 = vrot.slane %v8796, %v8823
  %v8825 = vcombine.high %v8803, %v8803
  %v8826 = vcombine.high %v8810, %v8810
  %v8827 = vcombine.high %v8817, %v8817
  %v8828 = vcombine.high %v8824, %v8824
  %v8829 = vlaneseq
  %v8830 = vshrl.u32 %v8829, 7
  %v8831 = vsub.s32 0, %v8830
  %v8832 = vrot.slane %v8803, %v8831
  %v8833 = vlaneseq
  %v8834 = vshrl.u32 %v8833, 7
  %v8835 = vsub.s32 0, %v8834
  %v8836 = vrot.slane %v8817, %v8835
  %v8837 = vlaneseq
  %v8838 = vshrl.u32 %v8837, 7
  %v8839 = vsub.s32 0, %v8838
  %v8840 = vrot.slane %v8825, %v8839
  %v8841 = vlaneseq
  %v8842 = vshrl.u32 %v8841, 7
  %v8843 = vsub.s32 0, %v8842
  %v8844 = vrot.slane %v8827, %v8843
  %v8845 = vlaneseq
  %v8846 = vshrl.u32 %v8845, 7
  %v8847 = vsub.s32 0, %v8846
  %v8848 = vrot.slane %v8810, %v8847
  %v8849 = vlaneseq
  %v8850 = vshrl.u32 %v8849, 7
  %v8851 = vsub.s32 0, %v8850
  %v8852 = vrot.slane %v8824, %v8851
  %v8853 = vlaneseq
  %v8854 = vshrl.u32 %v8853, 7
  %v8855 = vsub.s32 0, %v8854
  %v8856 = vrot.slane %v8826, %v8855
  %v8857 = vlaneseq
  %v8858 = vshrl.u32 %v8857, 7
  %v8859 = vsub.s32 0, %v8858
  %v8860 = vrot.slane %v8828, %v8859
  %8870 = vrot.lane.b32.xlu0 %v8778, 64
  %v8871 = vpop.permute.xlu0 %8870
  %v8873 = vadd.f32 %v8832, %v8871
  %v8874 = vadd.f32 %v8836, %v8871
  %v8875 = vadd.f32 %v8840, %v8871
  %v8876 = vadd.f32 %v8844, %v8871
  %v8877 = vadd.f32 %v8848, %v8871
  %v8878 = vadd.f32 %v8852, %v8871
  %v8879 = vadd.f32 %v8856, %v8871
  %v8880 = vadd.f32 %v8860, %v8871
  %v8881 = vmax.f32 %v8873, 0.0
  %v8882 = vmax.f32 %v8874, 0.0
  %v8883 = vmax.f32 %v8875, 0.0
  %v8884 = vmax.f32 %v8876, 0.0
  %v8885 = vmax.f32 %v8877, 0.0
  %v8886 = vmax.f32 %v8878, 0.0
  %v8887 = vmax.f32 %v8879, 0.0
  %v8888 = vmax.f32 %v8880, 0.0
  %v8890 = vsel %vm1526, %v8881, 0
  %v8893 = vsel %vm1526, %v8882, 0
  %v8896 = vsel %vm1526, %v8883, 0
  %v8899 = vsel %vm1526, %v8884, 0
  %v8902 = vsel %vm1526, %v8885, 0
  %v8905 = vsel %vm1526, %v8886, 0
  %v8908 = vsel %vm1526, %v8887, 0
  %v8911 = vsel %vm1526, %v8888, 0
  %8913 = vmatprep.subr.mxu0 0.0
  %8914 = vmatpush1.msra.mxu0 %v43
  %8915 = vmatprep.subr.mxu0 0.0
  %8916 = vmatpush1.msra.mxu0 %v44
  %8917 = vmatprep.subr.mxu0 0.0
  %8918 = vmatpush1.msra.mxu0 %v45
  %8919 = vmatprep.subr.mxu0 0.0
  %8920 = vmatpush1.msra.mxu0 %v46
  %8921 = vmatprep.subr.mxu0 0.0
  %8922 = vmatpush1.msra.mxu0 %v47
  %8923 = vmatprep.subr.mxu0 0.0
  %8924 = vmatpush1.msra.mxu0 %v48
  %8925 = vmatprep.subr.mxu0 0.0
  %8926 = vmatpush1.msra.mxu0 %v49
  %8927 = vmatprep.subr.mxu0 0.0
  %8928 = vmatpush1.msra.mxu0 %v50
  %8929 = vmatprep.subr.mxu0 0.0
  %8930 = vmatpush1.msra.mxu0 0.0
  %8931 = vmatprep.subr.mxu0 0.0
  %8932 = vmatpush1.msra.mxu0 0.0
  %8933 = vmatprep.subr.mxu0 0.0
  %8934 = vmatpush1.msra.mxu0 0.0
  %8935 = vmatprep.subr.mxu0 0.0
  %8936 = vmatpush1.msra.mxu0 0.0
  %8937 = vmatprep.subr.mxu0 0.0
  %8938 = vmatpush1.msra.mxu0 0.0
  %8939 = vmatprep.subr.mxu0 0.0
  %8940 = vmatpush1.msra.mxu0 0.0
  %8941 = vmatprep.subr.mxu0 0.0
  %8942 = vmatpush1.msra.mxu0 0.0
  %8943 = vmatprep.subr.mxu0 0.0
  %8944 = vmatpush1.msra.mxu0 0.0
  %8945 = vmatprep.subr.mxu0 0.0
  %8946 = vmatpush1.msra.mxu0 0.0
  %8947 = vmatprep.subr.mxu0 0.0
  %8948 = vmatpush1.msra.mxu0 0.0
  %8949 = vmatprep.subr.mxu0 0.0
  %8950 = vmatpush1.msra.mxu0 0.0
  %8951 = vmatprep.subr.mxu0 0.0
  %8952 = vmatpush1.msra.mxu0 0.0
  %8953 = vmatprep.subr.mxu0 0.0
  %8954 = vmatpush1.msra.mxu0 0.0
  %8955 = vmatprep.subr.mxu0 0.0
  %8956 = vmatpush1.msra.mxu0 0.0
  %8957 = vmatprep.subr.mxu0 0.0
  %8958 = vmatpush1.msra.mxu0 0.0
  %8959 = vmatprep.subr.mxu0 0.0
  %8960 = vmatpush1.msra.mxu0 0.0
  %8961 = vmatprep.subr.mxu0 0.0
  %8962 = vmatpush1.msra.mxu0 0.0
  %8963 = vmatprep.subr.mxu0 0.0
  %8964 = vmatpush1.msra.mxu0 0.0
  %8965 = vmatprep.subr.mxu0 0.0
  %8966 = vmatpush1.msra.mxu0 0.0
  %8967 = vmatprep.subr.mxu0 0.0
  %8968 = vmatpush1.msra.mxu0 0.0
  %8969 = vmatprep.subr.mxu0 0.0
  %8970 = vmatpush1.msra.mxu0 0.0
  %8971 = vmatprep.subr.mxu0 0.0
  %8972 = vmatpush1.msra.mxu0 0.0
  %8973 = vmatprep.subr.mxu0 0.0
  %8974 = vmatpush1.msra.mxu0 0.0
  %8975 = vmatprep.subr.mxu0 0.0
  %8976 = vmatpush1.msra.mxu0 0.0
  %8977 = vmatprep.mubr.f32.mxu0 0.0
  %8978 = vmatmul.mubr.f32.gmra.mrb[0].mxu0 %v8890
  %v8979 = vpop.f32.mrb[0].mxu0
  %v8980 = vadd.f32 %v55, %v8979
  %v8981 = vpop.f32.mrb[0].mxu0
  %8982 = vmatprep.mubr.f32.mxu0 0.0
  %8983 = vmatmul.mubr.f32.gmra.mrb[0].mxu0 %v8893
  %v8984 = vpop.f32.mrb[0].mxu0
  %v8985 = vadd.f32 %v55, %v8984
  %v8986 = vpop.f32.mrb[0].mxu0
  %8987 = vmatprep.mubr.f32.mxu0 0.0
  %8988 = vmatmul.mubr.f32.gmra.mrb[0].mxu0 %v8896
  %v8989 = vpop.f32.mrb[0].mxu0
  %v8990 = vadd.f32 %v55, %v8989
  %v8991 = vpop.f32.mrb[0].mxu0
  %8992 = vmatprep.mubr.f32.mxu0 0.0
  %8993 = vmatmul.mubr.f32.gmra.mrb[0].mxu0 %v8899
  %v8994 = vpop.f32.mrb[0].mxu0
  %v8995 = vadd.f32 %v55, %v8994
  %v8996 = vpop.f32.mrb[0].mxu0
  %8997 = vmatprep.mubr.f32.mxu0 0.0
  %8998 = vmatmul.mubr.f32.gmra.mrb[0].mxu0 %v8902
  %v8999 = vpop.f32.mrb[0].mxu0
  %v9000 = vadd.f32 %v55, %v8999
  %v9001 = vpop.f32.mrb[0].mxu0
  %9002 = vmatprep.mubr.f32.mxu0 0.0
  %9003 = vmatmul.mubr.f32.gmra.mrb[0].mxu0 %v8905
  %v9004 = vpop.f32.mrb[0].mxu0
  %v9005 = vadd.f32 %v55, %v9004
  %v9006 = vpop.f32.mrb[0].mxu0
  %9007 = vmatprep.mubr.f32.mxu0 0.0
  %9008 = vmatmul.mubr.f32.gmra.mrb[0].mxu0 %v8908
  %v9009 = vpop.f32.mrb[0].mxu0
  %v9010 = vadd.f32 %v55, %v9009
  %v9011 = vpop.f32.mrb[0].mxu0
  %9012 = vmatprep.mubr.f32.mxu0 0.0
  %9013 = vmatmul.mubr.f32.gmra.mrb[0].mxu0 %v8911
  %v9014 = vpop.f32.mrb[0].mxu0
  %v9015 = vadd.f32 %v55, %v9014
  %v9016 = vpop.f32.mrb[0].mxu0
  %9017 = vdwg.mxu0
  %v9018 = vmax.f32 %v8980, 0.0
  %v9019 = vmax.f32 %v8985, 0.0
  %v9020 = vmax.f32 %v8990, 0.0
  %v9021 = vmax.f32 %v8995, 0.0
  %v9022 = vmax.f32 %v9000, 0.0
  %v9023 = vmax.f32 %v9005, 0.0
  %v9024 = vmax.f32 %v9010, 0.0
  %v9025 = vmax.f32 %v9015, 0.0
  %s9026 = scalar_lea.vmem %s2, 80
  %v9027 = vld [vmem:[%s9026] sm:$0xff]
  %v9028 = vlaneseq
  %v9029 = vshrl.u32 %v9028, 7
  %v9030 = vsub.s32 0, %v9029
  %v9031 = vrot.slane %v9027, %v9030
  %9033 = vbcast.lane.b32.xlu0 %v9031, 256
  %v9034 = vpop.permute.xlu0 %9033
  %v9035 = vlaneseq
  %v9036 = vshrl.u32 %v9035, 7
  %v9037 = vsub.s32 1, %v9036
  %v9038 = vrot.slane %v9027, %v9037
  %9040 = vbcast.lane.b32.xlu0 %v9038, 256
  %v9041 = vpop.permute.xlu0 %9040
  %v9042 = vlaneseq
  %v9043 = vshrl.u32 %v9042, 7
  %v9044 = vsub.s32 2, %v9043
  %v9045 = vrot.slane %v9027, %v9044
  %9047 = vbcast.lane.b32.xlu0 %v9045, 256
  %v9048 = vpop.permute.xlu0 %9047
  %v9049 = vlaneseq
  %v9050 = vshrl.u32 %v9049, 7
  %v9051 = vsub.s32 3, %v9050
  %v9052 = vrot.slane %v9027, %v9051
  %9054 = vbcast.lane.b32.xlu0 %v9052, 256
  %v9055 = vpop.permute.xlu0 %9054
  %v9056 = vlaneseq
  %v9057 = vshrl.u32 %v9056, 7
  %v9058 = vsub.s32 4, %v9057
  %v9059 = vrot.slane %v9027, %v9058
  %9061 = vbcast.lane.b32.xlu0 %v9059, 256
  %v9062 = vpop.permute.xlu0 %9061
  %v9063 = vlaneseq
  %v9064 = vshrl.u32 %v9063, 7
  %v9065 = vsub.s32 5, %v9064
  %v9066 = vrot.slane %v9027, %v9065
  %9068 = vbcast.lane.b32.xlu0 %v9066, 256
  %v9069 = vpop.permute.xlu0 %9068
  %v9070 = vlaneseq
  %v9071 = vshrl.u32 %v9070, 7
  %v9072 = vsub.s32 6, %v9071
  %v9073 = vrot.slane %v9027, %v9072
  %9075 = vbcast.lane.b32.xlu0 %v9073, 256
  %v9076 = vpop.permute.xlu0 %9075
  %v9077 = vlaneseq
  %v9078 = vshrl.u32 %v9077, 7
  %v9079 = vsub.s32 7, %v9078
  %v9080 = vrot.slane %v9027, %v9079
  %9082 = vbcast.lane.b32.xlu0 %v9080, 256
  %v9083 = vpop.permute.xlu0 %9082
  %v9084 = vmul.f32 %v9018, %v9034
  %v9085 = vmul.f32 %v9019, %v9041
  %v9086 = vmul.f32 %v9020, %v9048
  %v9087 = vmul.f32 %v9021, %v9055
  %v9088 = vmul.f32 %v9022, %v9062
  %v9089 = vmul.f32 %v9023, %v9069
  %v9090 = vmul.f32 %v9024, %v9076
  %v9091 = vmul.f32 %v9025, %v9083
  %v9092 = vsel %vm364, %v9084, -inf
  %v9093 = vrot.slane %v9092, 4
  %v9094 = vmax.f32 %v9092, %v9093
  %v9095 = vrot.slane %v9094, 2
  %v9096 = vmax.f32 %v9094, %v9095
  %v9097 = vrot.slane %v9096, 1
  %v9098 = vmax.f32 %v9096, %v9097
  %v9099 = vsel %vm364, %v9085, -inf
  %v9100 = vrot.slane %v9099, 4
  %v9101 = vmax.f32 %v9099, %v9100
  %v9102 = vrot.slane %v9101, 2
  %v9103 = vmax.f32 %v9101, %v9102
  %v9104 = vrot.slane %v9103, 1
  %v9105 = vmax.f32 %v9103, %v9104
  %v9106 = vsel %vm364, %v9086, -inf
  %v9107 = vrot.slane %v9106, 4
  %v9108 = vmax.f32 %v9106, %v9107
  %v9109 = vrot.slane %v9108, 2
  %v9110 = vmax.f32 %v9108, %v9109
  %v9111 = vrot.slane %v9110, 1
  %v9112 = vmax.f32 %v9110, %v9111
  %v9113 = vsel %vm364, %v9087, -inf
  %v9114 = vrot.slane %v9113, 4
  %v9115 = vmax.f32 %v9113, %v9114
  %v9116 = vrot.slane %v9115, 2
  %v9117 = vmax.f32 %v9115, %v9116
  %v9118 = vrot.slane %v9117, 1
  %v9119 = vmax.f32 %v9117, %v9118
  %v9120 = vsel %vm364, %v9088, -inf
  %v9121 = vrot.slane %v9120, 4
  %v9122 = vmax.f32 %v9120, %v9121
  %v9123 = vrot.slane %v9122, 2
  %v9124 = vmax.f32 %v9122, %v9123
  %v9125 = vrot.slane %v9124, 1
  %v9126 = vmax.f32 %v9124, %v9125
  %v9127 = vsel %vm364, %v9089, -inf
  %v9128 = vrot.slane %v9127, 4
  %v9129 = vmax.f32 %v9127, %v9128
  %v9130 = vrot.slane %v9129, 2
  %v9131 = vmax.f32 %v9129, %v9130
  %v9132 = vrot.slane %v9131, 1
  %v9133 = vmax.f32 %v9131, %v9132
  %v9134 = vsel %vm364, %v9090, -inf
  %v9135 = vrot.slane %v9134, 4
  %v9136 = vmax.f32 %v9134, %v9135
  %v9137 = vrot.slane %v9136, 2
  %v9138 = vmax.f32 %v9136, %v9137
  %v9139 = vrot.slane %v9138, 1
  %v9140 = vmax.f32 %v9138, %v9139
  %v9141 = vsel %vm364, %v9091, -inf
  %v9142 = vrot.slane %v9141, 4
  %v9143 = vmax.f32 %v9141, %v9142
  %v9144 = vrot.slane %v9143, 2
  %v9145 = vmax.f32 %v9143, %v9144
  %v9146 = vrot.slane %v9145, 1
  %v9147 = vmax.f32 %v9145, %v9146
  %v9157 = vsel %vm1794, %v9105, %v9098
  %v9158 = vsel %vm1796, %v9112, %v9157
  %v9159 = vsel %vm1798, %v9119, %v9158
  %v9160 = vsel %vm1800, %v9126, %v9159
  %v9161 = vsel %vm1802, %v9133, %v9160
  %v9162 = vsel %vm1804, %v9140, %v9161
  %v9163 = vsel %vm1806, %v9147, %v9162
  %9164 = vrot.lane.b32.xlu0 %v9163, 8
  %v9165 = vpop.permute.xlu0 %9164
  %v9167 = vsel %vm364, %v8704, %v9165
  %v9169 = vsel %vm232, %v9167, 0
  %9171 = vmatprep.subr.mxu0 0.0
  %9172 = vmatpush1.msra.mxu0 %v56
  %9173 = vmatprep.subr.mxu0 0.0
  %9174 = vmatpush1.msra.mxu0 %v57
  %9175 = vmatprep.subr.mxu0 0.0
  %9176 = vmatpush1.msra.mxu0 0.0
  %9177 = vmatprep.subr.mxu0 0.0
  %9178 = vmatpush1.msra.mxu0 0.0
  %9179 = vmatprep.subr.mxu0 0.0
  %9180 = vmatpush1.msra.mxu0 0.0
  %9181 = vmatprep.subr.mxu0 0.0
  %9182 = vmatpush1.msra.mxu0 0.0
  %9183 = vmatprep.subr.mxu0 0.0
  %9184 = vmatpush1.msra.mxu0 0.0
  %9185 = vmatprep.subr.mxu0 0.0
  %9186 = vmatpush1.msra.mxu0 0.0
  %9187 = vmatprep.subr.mxu0 0.0
  %9188 = vmatpush1.msra.mxu0 0.0
  %9189 = vmatprep.subr.mxu0 0.0
  %9190 = vmatpush1.msra.mxu0 0.0
  %9191 = vmatprep.subr.mxu0 0.0
  %9192 = vmatpush1.msra.mxu0 0.0
  %9193 = vmatprep.subr.mxu0 0.0
  %9194 = vmatpush1.msra.mxu0 0.0
  %9195 = vmatprep.subr.mxu0 0.0
  %9196 = vmatpush1.msra.mxu0 0.0
  %9197 = vmatprep.subr.mxu0 0.0
  %9198 = vmatpush1.msra.mxu0 0.0
  %9199 = vmatprep.subr.mxu0 0.0
  %9200 = vmatpush1.msra.mxu0 0.0
  %9201 = vmatprep.subr.mxu0 0.0
  %9202 = vmatpush1.msra.mxu0 0.0
  %9203 = vmatprep.subr.mxu0 0.0
  %9204 = vmatpush1.msra.mxu0 0.0
  %9205 = vmatprep.subr.mxu0 0.0
  %9206 = vmatpush1.msra.mxu0 0.0
  %9207 = vmatprep.subr.mxu0 0.0
  %9208 = vmatpush1.msra.mxu0 0.0
  %9209 = vmatprep.subr.mxu0 0.0
  %9210 = vmatpush1.msra.mxu0 0.0
  %9211 = vmatprep.subr.mxu0 0.0
  %9212 = vmatpush1.msra.mxu0 0.0
  %9213 = vmatprep.subr.mxu0 0.0
  %9214 = vmatpush1.msra.mxu0 0.0
  %9215 = vmatprep.subr.mxu0 0.0
  %9216 = vmatpush1.msra.mxu0 0.0
  %9217 = vmatprep.subr.mxu0 0.0
  %9218 = vmatpush1.msra.mxu0 0.0
  %9219 = vmatprep.subr.mxu0 0.0
  %9220 = vmatpush1.msra.mxu0 0.0
  %9221 = vmatprep.subr.mxu0 0.0
  %9222 = vmatpush1.msra.mxu0 0.0
  %9223 = vmatprep.subr.mxu0 0.0
  %9224 = vmatpush1.msra.mxu0 0.0
  %9225 = vmatprep.subr.mxu0 0.0
  %9226 = vmatpush1.msra.mxu0 0.0
  %9227 = vmatprep.subr.mxu0 0.0
  %9228 = vmatpush1.msra.mxu0 0.0
  %9229 = vmatprep.subr.mxu0 0.0
  %9230 = vmatpush1.msra.mxu0 0.0
  %9231 = vmatprep.subr.mxu0 0.0
  %9232 = vmatpush1.msra.mxu0 0.0
  %9233 = vmatprep.subr.mxu0 0.0
  %9234 = vmatpush1.msra.mxu0 0.0
  %9235 = vmatprep.mubr.f32.mxu0 0.0
  %9236 = vmatmul.mubr.f32.gmra.mrb[0].mxu0 %v9169
  %v9237 = vpop.f32.mrb[0].mxu0
  %v9238 = vadd.f32 0.0, %v9237
  %v9239 = vpop.f32.mrb[0].mxu0
  %9240 = vdwg.mxu0
  %v9241 = vadd.f32 %v9238, %v62
  %s9242 = scalar_lea.vmem %s7, 80
  %9243 = vst.msk [vmem:[%s9242] sm:$0xff] %vm1886, %v9241
  %s9244 = scalar_lea.vmem %s5, 80
  %v9245 = vld [vmem:[%s9244] sm:$0xff]
  %v9246 = vmul.f32 %v9241, 0.5
  %v9247 = vmul.f32 %v9246, 1.442695
  %v9248 = vpow.pop %v9247
  %9250 = vrot.lane.b32.xlu0 %v9248, 126
  %v9251 = vpop.permute.xlu0 %9250
  %v9253 = vmul.f32 %v9245, %v9251
  %v9254 = vadd.f32 %v9238, %v1899
  %v9256 = vsel %vm86, %v9253, 0
  %9258 = vmatprep.subr.mxu0 0.0
  %9259 = vmatpush1.msra.mxu0 %v1906
  %9260 = vmatprep.subr.mxu0 0.0
  %9261 = vmatpush1.msra.mxu0 0.0
  %9262 = vmatprep.subr.mxu0 0.0
  %9263 = vmatpush1.msra.mxu0 0.0
  %9264 = vmatprep.subr.mxu0 0.0
  %9265 = vmatpush1.msra.mxu0 0.0
  %9266 = vmatprep.subr.mxu0 0.0
  %9267 = vmatpush1.msra.mxu0 0.0
  %9268 = vmatprep.subr.mxu0 0.0
  %9269 = vmatpush1.msra.mxu0 0.0
  %9270 = vmatprep.subr.mxu0 0.0
  %9271 = vmatpush1.msra.mxu0 0.0
  %9272 = vmatprep.subr.mxu0 0.0
  %9273 = vmatpush1.msra.mxu0 0.0
  %9274 = vmatprep.subr.mxu0 0.0
  %9275 = vmatpush1.msra.mxu0 0.0
  %9276 = vmatprep.subr.mxu0 0.0
  %9277 = vmatpush1.msra.mxu0 0.0
  %9278 = vmatprep.subr.mxu0 0.0
  %9279 = vmatpush1.msra.mxu0 0.0
  %9280 = vmatprep.subr.mxu0 0.0
  %9281 = vmatpush1.msra.mxu0 0.0
  %9282 = vmatprep.subr.mxu0 0.0
  %9283 = vmatpush1.msra.mxu0 0.0
  %9284 = vmatprep.subr.mxu0 0.0
  %9285 = vmatpush1.msra.mxu0 0.0
  %9286 = vmatprep.subr.mxu0 0.0
  %9287 = vmatpush1.msra.mxu0 0.0
  %9288 = vmatprep.subr.mxu0 0.0
  %9289 = vmatpush1.msra.mxu0 0.0
  %9290 = vmatprep.subr.mxu0 0.0
  %9291 = vmatpush1.msra.mxu0 0.0
  %9292 = vmatprep.subr.mxu0 0.0
  %9293 = vmatpush1.msra.mxu0 0.0
  %9294 = vmatprep.subr.mxu0 0.0
  %9295 = vmatpush1.msra.mxu0 0.0
  %9296 = vmatprep.subr.mxu0 0.0
  %9297 = vmatpush1.msra.mxu0 0.0
  %9298 = vmatprep.subr.mxu0 0.0
  %9299 = vmatpush1.msra.mxu0 0.0
  %9300 = vmatprep.subr.mxu0 0.0
  %9301 = vmatpush1.msra.mxu0 0.0
  %9302 = vmatprep.subr.mxu0 0.0
  %9303 = vmatpush1.msra.mxu0 0.0
  %9304 = vmatprep.subr.mxu0 0.0
  %9305 = vmatpush1.msra.mxu0 0.0
  %9306 = vmatprep.subr.mxu0 0.0
  %9307 = vmatpush1.msra.mxu0 0.0
  %9308 = vmatprep.subr.mxu0 0.0
  %9309 = vmatpush1.msra.mxu0 0.0
  %9310 = vmatprep.subr.mxu0 0.0
  %9311 = vmatpush1.msra.mxu0 0.0
  %9312 = vmatprep.subr.mxu0 0.0
  %9313 = vmatpush1.msra.mxu0 0.0
  %9314 = vmatprep.subr.mxu0 0.0
  %9315 = vmatpush1.msra.mxu0 0.0
  %9316 = vmatprep.subr.mxu0 0.0
  %9317 = vmatpush1.msra.mxu0 0.0
  %9318 = vmatprep.subr.mxu0 0.0
  %9319 = vmatpush1.msra.mxu0 0.0
  %9320 = vmatprep.subr.mxu0 0.0
  %9321 = vmatpush1.msra.mxu0 0.0
  %9322 = vmatprep.mubr.f32.mxu0 0.0
  %9323 = vmatmul.mubr.f32.gmra.mrb[0].mxu0 %v9256
  %v9324 = vpop.f32.mrb[0].mxu0
  %v9325 = vadd.f32 0.0, %v9324
  %v9326 = vpop.f32.mrb[0].mxu0
  %9327 = vdwg.mxu0
  %9329 = vrot.lane.b32.xlu0 %v9325, 4
  %v9330 = vpop.permute.xlu0 %9329
  %v9332 = vadd.f32 %v9254, %v9330
  %v9333 = vmax.f32 %v9332, 0.0
  %9335 = vrot.lane.b32.xlu0 %v9333, 124
  %v9336 = vpop.permute.xlu0 %9335
  %9338 = vrot.lane.b32.xlu0 %v8701, 120
  %v9339 = vpop.permute.xlu0 %9338
  %v9341 = vsel %vm232, %v9336, %v9339
  %v9343 = vsel %vm1239, %v9341, 0
  %9345 = vmatprep.subr.mxu0 0.0
  %9346 = vmatpush1.msra.mxu0 %v32
  %9347 = vmatprep.subr.mxu0 0.0
  %9348 = vmatpush1.msra.mxu0 %v33
  %9349 = vmatprep.subr.mxu0 0.0
  %9350 = vmatpush1.msra.mxu0 %v34
  %9351 = vmatprep.subr.mxu0 0.0
  %9352 = vmatpush1.msra.mxu0 0.0
  %9353 = vmatprep.subr.mxu0 0.0
  %9354 = vmatpush1.msra.mxu0 0.0
  %9355 = vmatprep.subr.mxu0 0.0
  %9356 = vmatpush1.msra.mxu0 0.0
  %9357 = vmatprep.subr.mxu0 0.0
  %9358 = vmatpush1.msra.mxu0 0.0
  %9359 = vmatprep.subr.mxu0 0.0
  %9360 = vmatpush1.msra.mxu0 0.0
  %9361 = vmatprep.subr.mxu0 0.0
  %9362 = vmatpush1.msra.mxu0 0.0
  %9363 = vmatprep.subr.mxu0 0.0
  %9364 = vmatpush1.msra.mxu0 0.0
  %9365 = vmatprep.subr.mxu0 0.0
  %9366 = vmatpush1.msra.mxu0 0.0
  %9367 = vmatprep.subr.mxu0 0.0
  %9368 = vmatpush1.msra.mxu0 0.0
  %9369 = vmatprep.subr.mxu0 0.0
  %9370 = vmatpush1.msra.mxu0 0.0
  %9371 = vmatprep.subr.mxu0 0.0
  %9372 = vmatpush1.msra.mxu0 0.0
  %9373 = vmatprep.subr.mxu0 0.0
  %9374 = vmatpush1.msra.mxu0 0.0
  %9375 = vmatprep.subr.mxu0 0.0
  %9376 = vmatpush1.msra.mxu0 0.0
  %9377 = vmatprep.subr.mxu0 0.0
  %9378 = vmatpush1.msra.mxu0 0.0
  %9379 = vmatprep.subr.mxu0 0.0
  %9380 = vmatpush1.msra.mxu0 0.0
  %9381 = vmatprep.subr.mxu0 0.0
  %9382 = vmatpush1.msra.mxu0 0.0
  %9383 = vmatprep.subr.mxu0 0.0
  %9384 = vmatpush1.msra.mxu0 0.0
  %9385 = vmatprep.subr.mxu0 0.0
  %9386 = vmatpush1.msra.mxu0 0.0
  %9387 = vmatprep.subr.mxu0 0.0
  %9388 = vmatpush1.msra.mxu0 0.0
  %9389 = vmatprep.subr.mxu0 0.0
  %9390 = vmatpush1.msra.mxu0 0.0
  %9391 = vmatprep.subr.mxu0 0.0
  %9392 = vmatpush1.msra.mxu0 0.0
  %9393 = vmatprep.subr.mxu0 0.0
  %9394 = vmatpush1.msra.mxu0 0.0
  %9395 = vmatprep.subr.mxu0 0.0
  %9396 = vmatpush1.msra.mxu0 0.0
  %9397 = vmatprep.subr.mxu0 0.0
  %9398 = vmatpush1.msra.mxu0 0.0
  %9399 = vmatprep.subr.mxu0 0.0
  %9400 = vmatpush1.msra.mxu0 0.0
  %9401 = vmatprep.subr.mxu0 0.0
  %9402 = vmatpush1.msra.mxu0 0.0
  %9403 = vmatprep.subr.mxu0 0.0
  %9404 = vmatpush1.msra.mxu0 0.0
  %9405 = vmatprep.subr.mxu0 0.0
  %9406 = vmatpush1.msra.mxu0 0.0
  %9407 = vmatprep.subr.mxu0 0.0
  %9408 = vmatpush1.msra.mxu0 0.0
  %9409 = vmatprep.mubr.f32.mxu0 0.0
  %9410 = vmatmul.mubr.f32.gmra.mrb[0].mxu0 %v9343
  %v9411 = vpop.f32.mrb[0].mxu0
  %v9412 = vadd.f32 %v39, %v9411
  %v9413 = vpop.f32.mrb[0].mxu0
  %9414 = vdwg.mxu0
  %v9415 = vmul.f32 %v9412, 0.5
  %v9416 = vtanh.pop %v9415
  %v9417 = vmul.f32 %v9416, 0.5
  %v9418 = vadd.f32 %v9417, 0.5
  %v9419 = vtanh.pop %v9412
  %v9420 = vmul.f32 %v9418, %v8695
  %9422 = vrot.lane.b32.xlu0 %v9419, 112
  %v9423 = vpop.permute.xlu0 %9422
  %v9425 = vmul.f32 %v9418, %v9423
  %9427 = vrot.lane.b32.xlu0 %v9425, 8
  %v9428 = vpop.permute.xlu0 %9427
  %v9430 = vadd.f32 %v9420, %v9428
  %v9431 = vtanh.pop %v9430
  %9433 = vrot.lane.b32.xlu0 %v9431, 16
  %v9434 = vpop.permute.xlu0 %9433
  %v9436 = vmul.f32 %v9418, %v9434
  %9438 = vrot.lane.b32.xlu0 %v9436, 104
  %v9439 = vpop.permute.xlu0 %9438
  %v9440 = vsel %vm364, %v9439, 0
  %9442 = vmatprep.subr.mxu0 0.0
  %9443 = vmatpush1.msra.mxu0 %v42
  %9444 = vmatprep.subr.mxu0 0.0
  %9445 = vmatpush1.msra.mxu0 0.0
  %9446 = vmatprep.subr.mxu0 0.0
  %9447 = vmatpush1.msra.mxu0 0.0
  %9448 = vmatprep.subr.mxu0 0.0
  %9449 = vmatpush1.msra.mxu0 0.0
  %9450 = vmatprep.subr.mxu0 0.0
  %9451 = vmatpush1.msra.mxu0 0.0
  %9452 = vmatprep.subr.mxu0 0.0
  %9453 = vmatpush1.msra.mxu0 0.0
  %9454 = vmatprep.subr.mxu0 0.0
  %9455 = vmatpush1.msra.mxu0 0.0
  %9456 = vmatprep.subr.mxu0 0.0
  %9457 = vmatpush1.msra.mxu0 0.0
  %9458 = vmatprep.subr.mxu0 0.0
  %9459 = vmatpush1.msra.mxu0 0.0
  %9460 = vmatprep.subr.mxu0 0.0
  %9461 = vmatpush1.msra.mxu0 0.0
  %9462 = vmatprep.subr.mxu0 0.0
  %9463 = vmatpush1.msra.mxu0 0.0
  %9464 = vmatprep.subr.mxu0 0.0
  %9465 = vmatpush1.msra.mxu0 0.0
  %9466 = vmatprep.subr.mxu0 0.0
  %9467 = vmatpush1.msra.mxu0 0.0
  %9468 = vmatprep.subr.mxu0 0.0
  %9469 = vmatpush1.msra.mxu0 0.0
  %9470 = vmatprep.subr.mxu0 0.0
  %9471 = vmatpush1.msra.mxu0 0.0
  %9472 = vmatprep.subr.mxu0 0.0
  %9473 = vmatpush1.msra.mxu0 0.0
  %9474 = vmatprep.subr.mxu0 0.0
  %9475 = vmatpush1.msra.mxu0 0.0
  %9476 = vmatprep.subr.mxu0 0.0
  %9477 = vmatpush1.msra.mxu0 0.0
  %9478 = vmatprep.subr.mxu0 0.0
  %9479 = vmatpush1.msra.mxu0 0.0
  %9480 = vmatprep.subr.mxu0 0.0
  %9481 = vmatpush1.msra.mxu0 0.0
  %9482 = vmatprep.subr.mxu0 0.0
  %9483 = vmatpush1.msra.mxu0 0.0
  %9484 = vmatprep.subr.mxu0 0.0
  %9485 = vmatpush1.msra.mxu0 0.0
  %9486 = vmatprep.subr.mxu0 0.0
  %9487 = vmatpush1.msra.mxu0 0.0
  %9488 = vmatprep.subr.mxu0 0.0
  %9489 = vmatpush1.msra.mxu0 0.0
  %9490 = vmatprep.subr.mxu0 0.0
  %9491 = vmatpush1.msra.mxu0 0.0
  %9492 = vmatprep.subr.mxu0 0.0
  %9493 = vmatpush1.msra.mxu0 0.0
  %9494 = vmatprep.subr.mxu0 0.0
  %9495 = vmatpush1.msra.mxu0 0.0
  %9496 = vmatprep.subr.mxu0 0.0
  %9497 = vmatpush1.msra.mxu0 0.0
  %9498 = vmatprep.subr.mxu0 0.0
  %9499 = vmatpush1.msra.mxu0 0.0
  %9500 = vmatprep.subr.mxu0 0.0
  %9501 = vmatpush1.msra.mxu0 0.0
  %9502 = vmatprep.subr.mxu0 0.0
  %9503 = vmatpush1.msra.mxu0 0.0
  %9504 = vmatprep.subr.mxu0 0.0
  %9505 = vmatpush1.msra.mxu0 0.0
  %9506 = vmatprep.mubr.f32.mxu0 0.0
  %9507 = vmatmul.mubr.f32.gmra.mrb[0].mxu0 %v9440
  %v9508 = vpop.f32.mrb[0].mxu0
  %v9509 = vadd.f32 0.0, %v9508
  %v9510 = vpop.f32.mrb[0].mxu0
  %9511 = vdwg.mxu0
  %v9512 = vadd.f32 %v1232, %v9509
  %v9513 = vsub.f32 %v9509, %v1413
  %v9515 = vcombine.high %v9512, %v9512
  %v9517 = vunpack.c.l.s4 1966171168
  %v9518 = vunpack.c.0.s8 %v9517
  %v9519 = vlaneseq
  %v9520 = vshrl.u32 %v9519, 7
  %v9521 = vsub.s32 %v9518, %v9520
  %v9522 = vrot.slane %v9512, %v9521
  %v9524 = vunpack.c.l.s4 1966171168
  %v9525 = vunpack.c.0.s8 %v9524
  %v9526 = vlaneseq
  %v9527 = vshrl.u32 %v9526, 7
  %v9528 = vsub.s32 %v9525, %v9527
  %v9529 = vrot.slane %v9515, %v9528
  %v9530 = vcombine.high %v9522, %v9522
  %v9531 = vcombine.high %v9529, %v9529
  %v9533 = vunpack.c.l.s4 1966171168
  %v9534 = vunpack.c.0.s8 %v9533
  %v9535 = vlaneseq
  %v9536 = vshrl.u32 %v9535, 7
  %v9537 = vsub.s32 %v9534, %v9536
  %v9538 = vrot.slane %v9522, %v9537
  %v9540 = vunpack.c.l.s4 1966171168
  %v9541 = vunpack.c.0.s8 %v9540
  %v9542 = vlaneseq
  %v9543 = vshrl.u32 %v9542, 7
  %v9544 = vsub.s32 %v9541, %v9543
  %v9545 = vrot.slane %v9529, %v9544
  %v9547 = vunpack.c.l.s4 1966171168
  %v9548 = vunpack.c.0.s8 %v9547
  %v9549 = vlaneseq
  %v9550 = vshrl.u32 %v9549, 7
  %v9551 = vsub.s32 %v9548, %v9550
  %v9552 = vrot.slane %v9530, %v9551
  %v9554 = vunpack.c.l.s4 1966171168
  %v9555 = vunpack.c.0.s8 %v9554
  %v9556 = vlaneseq
  %v9557 = vshrl.u32 %v9556, 7
  %v9558 = vsub.s32 %v9555, %v9557
  %v9559 = vrot.slane %v9531, %v9558
  %v9560 = vcombine.high %v9538, %v9538
  %v9561 = vcombine.high %v9545, %v9545
  %v9562 = vcombine.high %v9552, %v9552
  %v9563 = vcombine.high %v9559, %v9559
  %v9564 = vlaneseq
  %v9565 = vshrl.u32 %v9564, 7
  %v9566 = vsub.s32 0, %v9565
  %v9567 = vrot.slane %v9538, %v9566
  %v9568 = vlaneseq
  %v9569 = vshrl.u32 %v9568, 7
  %v9570 = vsub.s32 0, %v9569
  %v9571 = vrot.slane %v9552, %v9570
  %v9572 = vlaneseq
  %v9573 = vshrl.u32 %v9572, 7
  %v9574 = vsub.s32 0, %v9573
  %v9575 = vrot.slane %v9560, %v9574
  %v9576 = vlaneseq
  %v9577 = vshrl.u32 %v9576, 7
  %v9578 = vsub.s32 0, %v9577
  %v9579 = vrot.slane %v9562, %v9578
  %v9580 = vlaneseq
  %v9581 = vshrl.u32 %v9580, 7
  %v9582 = vsub.s32 0, %v9581
  %v9583 = vrot.slane %v9545, %v9582
  %v9584 = vlaneseq
  %v9585 = vshrl.u32 %v9584, 7
  %v9586 = vsub.s32 0, %v9585
  %v9587 = vrot.slane %v9559, %v9586
  %v9588 = vlaneseq
  %v9589 = vshrl.u32 %v9588, 7
  %v9590 = vsub.s32 0, %v9589
  %v9591 = vrot.slane %v9561, %v9590
  %v9592 = vlaneseq
  %v9593 = vshrl.u32 %v9592, 7
  %v9594 = vsub.s32 0, %v9593
  %v9595 = vrot.slane %v9563, %v9594
  %9605 = vrot.lane.b32.xlu0 %v9513, 64
  %v9606 = vpop.permute.xlu0 %9605
  %v9608 = vadd.f32 %v9567, %v9606
  %v9609 = vadd.f32 %v9571, %v9606
  %v9610 = vadd.f32 %v9575, %v9606
  %v9611 = vadd.f32 %v9579, %v9606
  %v9612 = vadd.f32 %v9583, %v9606
  %v9613 = vadd.f32 %v9587, %v9606
  %v9614 = vadd.f32 %v9591, %v9606
  %v9615 = vadd.f32 %v9595, %v9606
  %v9616 = vmax.f32 %v9608, 0.0
  %v9617 = vmax.f32 %v9609, 0.0
  %v9618 = vmax.f32 %v9610, 0.0
  %v9619 = vmax.f32 %v9611, 0.0
  %v9620 = vmax.f32 %v9612, 0.0
  %v9621 = vmax.f32 %v9613, 0.0
  %v9622 = vmax.f32 %v9614, 0.0
  %v9623 = vmax.f32 %v9615, 0.0
  %v9625 = vsel %vm1526, %v9616, 0
  %v9628 = vsel %vm1526, %v9617, 0
  %v9631 = vsel %vm1526, %v9618, 0
  %v9634 = vsel %vm1526, %v9619, 0
  %v9637 = vsel %vm1526, %v9620, 0
  %v9640 = vsel %vm1526, %v9621, 0
  %v9643 = vsel %vm1526, %v9622, 0
  %v9646 = vsel %vm1526, %v9623, 0
  %9648 = vmatprep.subr.mxu0 0.0
  %9649 = vmatpush1.msra.mxu0 %v43
  %9650 = vmatprep.subr.mxu0 0.0
  %9651 = vmatpush1.msra.mxu0 %v44
  %9652 = vmatprep.subr.mxu0 0.0
  %9653 = vmatpush1.msra.mxu0 %v45
  %9654 = vmatprep.subr.mxu0 0.0
  %9655 = vmatpush1.msra.mxu0 %v46
  %9656 = vmatprep.subr.mxu0 0.0
  %9657 = vmatpush1.msra.mxu0 %v47
  %9658 = vmatprep.subr.mxu0 0.0
  %9659 = vmatpush1.msra.mxu0 %v48
  %9660 = vmatprep.subr.mxu0 0.0
  %9661 = vmatpush1.msra.mxu0 %v49
  %9662 = vmatprep.subr.mxu0 0.0
  %9663 = vmatpush1.msra.mxu0 %v50
  %9664 = vmatprep.subr.mxu0 0.0
  %9665 = vmatpush1.msra.mxu0 0.0
  %9666 = vmatprep.subr.mxu0 0.0
  %9667 = vmatpush1.msra.mxu0 0.0
  %9668 = vmatprep.subr.mxu0 0.0
  %9669 = vmatpush1.msra.mxu0 0.0
  %9670 = vmatprep.subr.mxu0 0.0
  %9671 = vmatpush1.msra.mxu0 0.0
  %9672 = vmatprep.subr.mxu0 0.0
  %9673 = vmatpush1.msra.mxu0 0.0
  %9674 = vmatprep.subr.mxu0 0.0
  %9675 = vmatpush1.msra.mxu0 0.0
  %9676 = vmatprep.subr.mxu0 0.0
  %9677 = vmatpush1.msra.mxu0 0.0
  %9678 = vmatprep.subr.mxu0 0.0
  %9679 = vmatpush1.msra.mxu0 0.0
  %9680 = vmatprep.subr.mxu0 0.0
  %9681 = vmatpush1.msra.mxu0 0.0
  %9682 = vmatprep.subr.mxu0 0.0
  %9683 = vmatpush1.msra.mxu0 0.0
  %9684 = vmatprep.subr.mxu0 0.0
  %9685 = vmatpush1.msra.mxu0 0.0
  %9686 = vmatprep.subr.mxu0 0.0
  %9687 = vmatpush1.msra.mxu0 0.0
  %9688 = vmatprep.subr.mxu0 0.0
  %9689 = vmatpush1.msra.mxu0 0.0
  %9690 = vmatprep.subr.mxu0 0.0
  %9691 = vmatpush1.msra.mxu0 0.0
  %9692 = vmatprep.subr.mxu0 0.0
  %9693 = vmatpush1.msra.mxu0 0.0
  %9694 = vmatprep.subr.mxu0 0.0
  %9695 = vmatpush1.msra.mxu0 0.0
  %9696 = vmatprep.subr.mxu0 0.0
  %9697 = vmatpush1.msra.mxu0 0.0
  %9698 = vmatprep.subr.mxu0 0.0
  %9699 = vmatpush1.msra.mxu0 0.0
  %9700 = vmatprep.subr.mxu0 0.0
  %9701 = vmatpush1.msra.mxu0 0.0
  %9702 = vmatprep.subr.mxu0 0.0
  %9703 = vmatpush1.msra.mxu0 0.0
  %9704 = vmatprep.subr.mxu0 0.0
  %9705 = vmatpush1.msra.mxu0 0.0
  %9706 = vmatprep.subr.mxu0 0.0
  %9707 = vmatpush1.msra.mxu0 0.0
  %9708 = vmatprep.subr.mxu0 0.0
  %9709 = vmatpush1.msra.mxu0 0.0
  %9710 = vmatprep.subr.mxu0 0.0
  %9711 = vmatpush1.msra.mxu0 0.0
  %9712 = vmatprep.mubr.f32.mxu0 0.0
  %9713 = vmatmul.mubr.f32.gmra.mrb[0].mxu0 %v9625
  %v9714 = vpop.f32.mrb[0].mxu0
  %v9715 = vadd.f32 %v55, %v9714
  %v9716 = vpop.f32.mrb[0].mxu0
  %9717 = vmatprep.mubr.f32.mxu0 0.0
  %9718 = vmatmul.mubr.f32.gmra.mrb[0].mxu0 %v9628
  %v9719 = vpop.f32.mrb[0].mxu0
  %v9720 = vadd.f32 %v55, %v9719
  %v9721 = vpop.f32.mrb[0].mxu0
  %9722 = vmatprep.mubr.f32.mxu0 0.0
  %9723 = vmatmul.mubr.f32.gmra.mrb[0].mxu0 %v9631
  %v9724 = vpop.f32.mrb[0].mxu0
  %v9725 = vadd.f32 %v55, %v9724
  %v9726 = vpop.f32.mrb[0].mxu0
  %9727 = vmatprep.mubr.f32.mxu0 0.0
  %9728 = vmatmul.mubr.f32.gmra.mrb[0].mxu0 %v9634
  %v9729 = vpop.f32.mrb[0].mxu0
  %v9730 = vadd.f32 %v55, %v9729
  %v9731 = vpop.f32.mrb[0].mxu0
  %9732 = vmatprep.mubr.f32.mxu0 0.0
  %9733 = vmatmul.mubr.f32.gmra.mrb[0].mxu0 %v9637
  %v9734 = vpop.f32.mrb[0].mxu0
  %v9735 = vadd.f32 %v55, %v9734
  %v9736 = vpop.f32.mrb[0].mxu0
  %9737 = vmatprep.mubr.f32.mxu0 0.0
  %9738 = vmatmul.mubr.f32.gmra.mrb[0].mxu0 %v9640
  %v9739 = vpop.f32.mrb[0].mxu0
  %v9740 = vadd.f32 %v55, %v9739
  %v9741 = vpop.f32.mrb[0].mxu0
  %9742 = vmatprep.mubr.f32.mxu0 0.0
  %9743 = vmatmul.mubr.f32.gmra.mrb[0].mxu0 %v9643
  %v9744 = vpop.f32.mrb[0].mxu0
  %v9745 = vadd.f32 %v55, %v9744
  %v9746 = vpop.f32.mrb[0].mxu0
  %9747 = vmatprep.mubr.f32.mxu0 0.0
  %9748 = vmatmul.mubr.f32.gmra.mrb[0].mxu0 %v9646
  %v9749 = vpop.f32.mrb[0].mxu0
  %v9750 = vadd.f32 %v55, %v9749
  %v9751 = vpop.f32.mrb[0].mxu0
  %9752 = vdwg.mxu0
  %v9753 = vmax.f32 %v9715, 0.0
  %v9754 = vmax.f32 %v9720, 0.0
  %v9755 = vmax.f32 %v9725, 0.0
  %v9756 = vmax.f32 %v9730, 0.0
  %v9757 = vmax.f32 %v9735, 0.0
  %v9758 = vmax.f32 %v9740, 0.0
  %v9759 = vmax.f32 %v9745, 0.0
  %v9760 = vmax.f32 %v9750, 0.0
  %s9761 = scalar_lea.vmem %s2, 88
  %v9762 = vld [vmem:[%s9761] sm:$0xff]
  %v9763 = vlaneseq
  %v9764 = vshrl.u32 %v9763, 7
  %v9765 = vsub.s32 0, %v9764
  %v9766 = vrot.slane %v9762, %v9765
  %9768 = vbcast.lane.b32.xlu0 %v9766, 256
  %v9769 = vpop.permute.xlu0 %9768
  %v9770 = vlaneseq
  %v9771 = vshrl.u32 %v9770, 7
  %v9772 = vsub.s32 1, %v9771
  %v9773 = vrot.slane %v9762, %v9772
  %9775 = vbcast.lane.b32.xlu0 %v9773, 256
  %v9776 = vpop.permute.xlu0 %9775
  %v9777 = vlaneseq
  %v9778 = vshrl.u32 %v9777, 7
  %v9779 = vsub.s32 2, %v9778
  %v9780 = vrot.slane %v9762, %v9779
  %9782 = vbcast.lane.b32.xlu0 %v9780, 256
  %v9783 = vpop.permute.xlu0 %9782
  %v9784 = vlaneseq
  %v9785 = vshrl.u32 %v9784, 7
  %v9786 = vsub.s32 3, %v9785
  %v9787 = vrot.slane %v9762, %v9786
  %9789 = vbcast.lane.b32.xlu0 %v9787, 256
  %v9790 = vpop.permute.xlu0 %9789
  %v9791 = vlaneseq
  %v9792 = vshrl.u32 %v9791, 7
  %v9793 = vsub.s32 4, %v9792
  %v9794 = vrot.slane %v9762, %v9793
  %9796 = vbcast.lane.b32.xlu0 %v9794, 256
  %v9797 = vpop.permute.xlu0 %9796
  %v9798 = vlaneseq
  %v9799 = vshrl.u32 %v9798, 7
  %v9800 = vsub.s32 5, %v9799
  %v9801 = vrot.slane %v9762, %v9800
  %9803 = vbcast.lane.b32.xlu0 %v9801, 256
  %v9804 = vpop.permute.xlu0 %9803
  %v9805 = vlaneseq
  %v9806 = vshrl.u32 %v9805, 7
  %v9807 = vsub.s32 6, %v9806
  %v9808 = vrot.slane %v9762, %v9807
  %9810 = vbcast.lane.b32.xlu0 %v9808, 256
  %v9811 = vpop.permute.xlu0 %9810
  %v9812 = vlaneseq
  %v9813 = vshrl.u32 %v9812, 7
  %v9814 = vsub.s32 7, %v9813
  %v9815 = vrot.slane %v9762, %v9814
  %9817 = vbcast.lane.b32.xlu0 %v9815, 256
  %v9818 = vpop.permute.xlu0 %9817
  %v9819 = vmul.f32 %v9753, %v9769
  %v9820 = vmul.f32 %v9754, %v9776
  %v9821 = vmul.f32 %v9755, %v9783
  %v9822 = vmul.f32 %v9756, %v9790
  %v9823 = vmul.f32 %v9757, %v9797
  %v9824 = vmul.f32 %v9758, %v9804
  %v9825 = vmul.f32 %v9759, %v9811
  %v9826 = vmul.f32 %v9760, %v9818
  %v9827 = vsel %vm364, %v9819, -inf
  %v9828 = vrot.slane %v9827, 4
  %v9829 = vmax.f32 %v9827, %v9828
  %v9830 = vrot.slane %v9829, 2
  %v9831 = vmax.f32 %v9829, %v9830
  %v9832 = vrot.slane %v9831, 1
  %v9833 = vmax.f32 %v9831, %v9832
  %v9834 = vsel %vm364, %v9820, -inf
  %v9835 = vrot.slane %v9834, 4
  %v9836 = vmax.f32 %v9834, %v9835
  %v9837 = vrot.slane %v9836, 2
  %v9838 = vmax.f32 %v9836, %v9837
  %v9839 = vrot.slane %v9838, 1
  %v9840 = vmax.f32 %v9838, %v9839
  %v9841 = vsel %vm364, %v9821, -inf
  %v9842 = vrot.slane %v9841, 4
  %v9843 = vmax.f32 %v9841, %v9842
  %v9844 = vrot.slane %v9843, 2
  %v9845 = vmax.f32 %v9843, %v9844
  %v9846 = vrot.slane %v9845, 1
  %v9847 = vmax.f32 %v9845, %v9846
  %v9848 = vsel %vm364, %v9822, -inf
  %v9849 = vrot.slane %v9848, 4
  %v9850 = vmax.f32 %v9848, %v9849
  %v9851 = vrot.slane %v9850, 2
  %v9852 = vmax.f32 %v9850, %v9851
  %v9853 = vrot.slane %v9852, 1
  %v9854 = vmax.f32 %v9852, %v9853
  %v9855 = vsel %vm364, %v9823, -inf
  %v9856 = vrot.slane %v9855, 4
  %v9857 = vmax.f32 %v9855, %v9856
  %v9858 = vrot.slane %v9857, 2
  %v9859 = vmax.f32 %v9857, %v9858
  %v9860 = vrot.slane %v9859, 1
  %v9861 = vmax.f32 %v9859, %v9860
  %v9862 = vsel %vm364, %v9824, -inf
  %v9863 = vrot.slane %v9862, 4
  %v9864 = vmax.f32 %v9862, %v9863
  %v9865 = vrot.slane %v9864, 2
  %v9866 = vmax.f32 %v9864, %v9865
  %v9867 = vrot.slane %v9866, 1
  %v9868 = vmax.f32 %v9866, %v9867
  %v9869 = vsel %vm364, %v9825, -inf
  %v9870 = vrot.slane %v9869, 4
  %v9871 = vmax.f32 %v9869, %v9870
  %v9872 = vrot.slane %v9871, 2
  %v9873 = vmax.f32 %v9871, %v9872
  %v9874 = vrot.slane %v9873, 1
  %v9875 = vmax.f32 %v9873, %v9874
  %v9876 = vsel %vm364, %v9826, -inf
  %v9877 = vrot.slane %v9876, 4
  %v9878 = vmax.f32 %v9876, %v9877
  %v9879 = vrot.slane %v9878, 2
  %v9880 = vmax.f32 %v9878, %v9879
  %v9881 = vrot.slane %v9880, 1
  %v9882 = vmax.f32 %v9880, %v9881
  %v9892 = vsel %vm1794, %v9840, %v9833
  %v9893 = vsel %vm1796, %v9847, %v9892
  %v9894 = vsel %vm1798, %v9854, %v9893
  %v9895 = vsel %vm1800, %v9861, %v9894
  %v9896 = vsel %vm1802, %v9868, %v9895
  %v9897 = vsel %vm1804, %v9875, %v9896
  %v9898 = vsel %vm1806, %v9882, %v9897
  %9899 = vrot.lane.b32.xlu0 %v9898, 8
  %v9900 = vpop.permute.xlu0 %9899
  %v9902 = vsel %vm364, %v9439, %v9900
  %v9904 = vsel %vm232, %v9902, 0
  %9906 = vmatprep.subr.mxu0 0.0
  %9907 = vmatpush1.msra.mxu0 %v56
  %9908 = vmatprep.subr.mxu0 0.0
  %9909 = vmatpush1.msra.mxu0 %v57
  %9910 = vmatprep.subr.mxu0 0.0
  %9911 = vmatpush1.msra.mxu0 0.0
  %9912 = vmatprep.subr.mxu0 0.0
  %9913 = vmatpush1.msra.mxu0 0.0
  %9914 = vmatprep.subr.mxu0 0.0
  %9915 = vmatpush1.msra.mxu0 0.0
  %9916 = vmatprep.subr.mxu0 0.0
  %9917 = vmatpush1.msra.mxu0 0.0
  %9918 = vmatprep.subr.mxu0 0.0
  %9919 = vmatpush1.msra.mxu0 0.0
  %9920 = vmatprep.subr.mxu0 0.0
  %9921 = vmatpush1.msra.mxu0 0.0
  %9922 = vmatprep.subr.mxu0 0.0
  %9923 = vmatpush1.msra.mxu0 0.0
  %9924 = vmatprep.subr.mxu0 0.0
  %9925 = vmatpush1.msra.mxu0 0.0
  %9926 = vmatprep.subr.mxu0 0.0
  %9927 = vmatpush1.msra.mxu0 0.0
  %9928 = vmatprep.subr.mxu0 0.0
  %9929 = vmatpush1.msra.mxu0 0.0
  %9930 = vmatprep.subr.mxu0 0.0
  %9931 = vmatpush1.msra.mxu0 0.0
  %9932 = vmatprep.subr.mxu0 0.0
  %9933 = vmatpush1.msra.mxu0 0.0
  %9934 = vmatprep.subr.mxu0 0.0
  %9935 = vmatpush1.msra.mxu0 0.0
  %9936 = vmatprep.subr.mxu0 0.0
  %9937 = vmatpush1.msra.mxu0 0.0
  %9938 = vmatprep.subr.mxu0 0.0
  %9939 = vmatpush1.msra.mxu0 0.0
  %9940 = vmatprep.subr.mxu0 0.0
  %9941 = vmatpush1.msra.mxu0 0.0
  %9942 = vmatprep.subr.mxu0 0.0
  %9943 = vmatpush1.msra.mxu0 0.0
  %9944 = vmatprep.subr.mxu0 0.0
  %9945 = vmatpush1.msra.mxu0 0.0
  %9946 = vmatprep.subr.mxu0 0.0
  %9947 = vmatpush1.msra.mxu0 0.0
  %9948 = vmatprep.subr.mxu0 0.0
  %9949 = vmatpush1.msra.mxu0 0.0
  %9950 = vmatprep.subr.mxu0 0.0
  %9951 = vmatpush1.msra.mxu0 0.0
  %9952 = vmatprep.subr.mxu0 0.0
  %9953 = vmatpush1.msra.mxu0 0.0
  %9954 = vmatprep.subr.mxu0 0.0
  %9955 = vmatpush1.msra.mxu0 0.0
  %9956 = vmatprep.subr.mxu0 0.0
  %9957 = vmatpush1.msra.mxu0 0.0
  %9958 = vmatprep.subr.mxu0 0.0
  %9959 = vmatpush1.msra.mxu0 0.0
  %9960 = vmatprep.subr.mxu0 0.0
  %9961 = vmatpush1.msra.mxu0 0.0
  %9962 = vmatprep.subr.mxu0 0.0
  %9963 = vmatpush1.msra.mxu0 0.0
  %9964 = vmatprep.subr.mxu0 0.0
  %9965 = vmatpush1.msra.mxu0 0.0
  %9966 = vmatprep.subr.mxu0 0.0
  %9967 = vmatpush1.msra.mxu0 0.0
  %9968 = vmatprep.subr.mxu0 0.0
  %9969 = vmatpush1.msra.mxu0 0.0
  %9970 = vmatprep.mubr.f32.mxu0 0.0
  %9971 = vmatmul.mubr.f32.gmra.mrb[0].mxu0 %v9904
  %v9972 = vpop.f32.mrb[0].mxu0
  %v9973 = vadd.f32 0.0, %v9972
  %v9974 = vpop.f32.mrb[0].mxu0
  %9975 = vdwg.mxu0
  %v9976 = vadd.f32 %v9973, %v62
  %s9977 = scalar_lea.vmem %s7, 88
  %9978 = vst.msk [vmem:[%s9977] sm:$0xff] %vm1886, %v9976
  // Predicated region
  $region30: #{mylstm_forward.1} parent=0 // pred_check
    _
  $region31: #{mylstm_forward.1} parent=0 // pred_check_branch
    %9980 = sbr.rel (0) target = $region33
  $region32: #{mylstm_forward.1} parent=0 // pred_region
    _
  $region33: #{mylstm_forward.1} parent=0 // pred_fallthru
    _
  // Predicated region
  $region34: #{mylstm_forward.1} parent=0 // pred_check
    _
  $region35: #{mylstm_forward.1} parent=0 // pred_check_branch
    %9982 = sbr.rel (0) target = $region37
  $region36: #{mylstm_forward.1} parent=0 // pred_region
    _
  $region37: #{mylstm_forward.1} parent=0 // pred_fallthru
    _

</llo_original>
